<compile_context>
chip_gen: v6e
topology: v6e:2x2x1
jax: 0.10.0
libtpu: 0.0.40
codegen_flags: <defaults>
</compile_context>

<pallas_src>
import functools
import math

import jax
import jax.numpy as jnp
from jax import lax
from jax.experimental import pallas as pl
from jax.experimental.pallas import tpu as pltpu

_LEAKY_SLOPE = 0.01  # F.leaky_relu default negative slope


# ----------------------------------------------------------------------------
# Fused Pallas kernel: lift-conv -> group-conv -> group-conv (VMEM resident)
# ----------------------------------------------------------------------------
def _timerev_fused_kernel(x_ref, w1_ref, w2_ref, w3_ref, o_ref, pad_ref, *,
                          H, W, K, slope):
    # x_ref : (bb, Cin, H*W)       bb batch elements, channels on sublanes,
    #                              flattened spatial axis on lanes (lane dense)
    # w*_ref: (K*K, c_out, c_in)   tap-major weights; w[kh*K+kw][co, ci]
    # o_ref : (bb, Cf, H*W)        lane-dense output (== flattened NCHW)
    # pad_ref: (Cmax, 128 + H*W + 128)  flat scratch with zero border bands
    HW = H * W
    p = (K - 1) // 2
    base = 128                       # lane-aligned start of the real data slab

    # Zero ONLY the two aligned 128-lane border bands flanking the data slab.
    # They provide the vertical 'same' padding and are never overwritten; the
    # interior is fully rewritten by every layer, so no full-scratch zeroing.
    zeros_band = jnp.zeros((pad_ref.shape[0], 128), jnp.float32)
    pad_ref[:, 0:128] = zeros_band
    pad_ref[:, base + HW:base + HW + 128] = zeros_band

    # Horizontal-validity masks (only dw != 0 taps need them; vertical
    # out-of-image reads hit the zero bands).  Shared by all layers / batches.
    q = lax.broadcasted_iota(jnp.int32, (1, HW), 1)
    ww = q % W
    masks = {}
    for dw in range(-p, p + 1):
        if dw == 0:
            continue
        masks[dw] = ((ww + dw >= 0) & (ww + dw < W)).astype(jnp.float32)

    def conv_same(act, w_ref, apply_act):
        # act: (c_in, HW) lane-dense.  One KxK 'same' conv = K*K accumulating
        # explicit 2-D MXU matmuls (c_out, c_in) x (c_in, HW); each tap is a
        # static lane-offset slice of the zero-bordered flat scratch.
        c_in = act.shape[0]
        c_out = w_ref.shape[1]
        pad_ref[0:c_in, base:base + HW] = act            # lane-aligned store
        acc = jnp.zeros((c_out, HW), jnp.float32)
        for kh in range(K):
            for kw in range(K):
                dh, dw = kh - p, kw - p
                s = base + dh * W + dw                   # static lane offset
                tap = pad_ref[0:c_in, s:s + HW]          # (c_in, HW)
                if dw != 0:
                    tap = tap * masks[dw]                # mask horizontal wrap
                acc = acc + lax.dot_general(
                    w_ref[kh * K + kw], tap,
                    dimension_numbers=(((1,), (0,)), ((), ())),
                    preferred_element_type=jnp.float32)  # (c_out, HW)
        if apply_act:
            acc = jnp.where(acc > 0, acc, slope * acc)   # leaky_relu (f32 VPU)
        return acc

    for b in range(x_ref.shape[0]):    # static: 1 (grid over B) or B (folded)
        a = x_ref[b].astype(jnp.float32)                 # (Cin, HW)
        a = conv_same(a, w1_ref, True)                   # (C1,  HW)
        a = conv_same(a, w2_ref, True)                   # (C1,  HW)
        a = conv_same(a, w3_ref, False)                  # (Cf,  HW)
        o_ref[b] = a.astype(o_ref.dtype)                 # lane-dense store


def _tensorcores_per_chip():
    """Best effort: v7x has 2 TensorCores per chip, v5e/v6e expose 1."""
    try:
        kind = jax.devices()[0].device_kind.lower()
    except Exception:
        return 1
    return 2 if "7" in kind else 1


def timerevnet_pallas(x_flat, w1_t, w2_t, w3_t, *, H, W, K, fold_batch=True):
    B, Cin, HW = x_flat.shape
    C1 = w1_t.shape[1]
    Cf = w3_t.shape[1]
    Cmax = max(Cin, C1, w2_t.shape[1])
    p = (K - 1) // 2
    assert p * (W + 1) <= 128, "tap offsets must fit inside the border band"

    bb = B if fold_batch else 1        # fold whole batch on single-TC chips
    kern = functools.partial(_timerev_fused_kernel, H=H, W=W, K=K,
                             slope=_LEAKY_SLOPE)
    return pl.pallas_call(
        kern,
        out_shape=jax.ShapeDtypeStruct((B, Cf, HW), x_flat.dtype),
        grid=(B // bb,),
        in_specs=[
            pl.BlockSpec((bb, Cin, HW), lambda b: (b, 0, 0)),
            # Constant index_maps: weights DMAed once, revisited afterwards.
            pl.BlockSpec(w1_t.shape, lambda b: (0, 0, 0)),
            pl.BlockSpec(w2_t.shape, lambda b: (0, 0, 0)),
            pl.BlockSpec(w3_t.shape, lambda b: (0, 0, 0)),
        ],
        out_specs=pl.BlockSpec((bb, Cf, HW), lambda b: (b, 0, 0)),
        scratch_shapes=[pltpu.VMEM((Cmax, 128 + HW + 128), jnp.float32)],
        compiler_params=pltpu.CompilerParams(
            dimension_semantics=("parallel",)),   # B split across v7x's 2 TCs
    )(x_flat, w1_t, w2_t, w3_t)


# ----------------------------------------------------------------------------
# Parameter construction / relaxed time-reversal weight generation (plain JAX)
# ----------------------------------------------------------------------------
def kaiming_uniform(key, shape):
    # torch.nn.init.kaiming_uniform_(a=sqrt(5)): bound = 1/sqrt(fan_in),
    # fan_in = shape[1] * prod(shape[2:]).
    fan_in = shape[1] * math.prod(shape[2:])
    bound = 1.0 / math.sqrt(fan_in)
    return jax.random.uniform(key, shape, jnp.float32, -bound, bound)


def lift_weight_oihw(kernel, relaxed_w):
    # kernel: (NB, O, I, K, K); time reversal = flip of first spatial axis.
    fb = jnp.stack([kernel, jnp.flip(kernel, axis=3)], axis=2)       # (NB,O,2,I,K,K)
    w = jnp.einsum('ng,nogikl->ogikl', relaxed_w, fb)                # (O,2,I,K,K)
    o, g, i, kh, kw = w.shape
    return w.reshape(o * g, i, kh, kw)                               # OIHW, g minor


def group_weight_oihw(kernel, relaxed_w):
    # kernel: (NB, O, I, 2, K, K); flip input-group axis + first spatial axis.
    fb = jnp.stack([kernel, jnp.flip(kernel, axis=(3, 4))], axis=2)  # (NB,O,2,I,2,K,K)
    w = jnp.einsum('ng,nogijkl->ogijkl', relaxed_w, fb)              # (O,2,I,2,K,K)
    o, g, i, gi, kh, kw = w.shape
    return w.reshape(o * g, i * gi, kh, kw)                          # OIHW


def _to_taps(w_oihw):
    # (co, ci, K, K) -> (K*K, co, ci): tap-major layout for the kernel's
    # per-tap (c_out, c_in) x (c_in, H*W) matmuls.
    co, ci, kh, kw = w_oihw.shape
    return jnp.transpose(w_oihw, (2, 3, 0, 1)).reshape(kh * kw, co, ci)


def init_timerevnet(key, in_channels, out_channels, kernel_size, hidden_dim,
                    num_filter_basis):
    k1, k2, k3 = jax.random.split(key, 3)
    K, NB = kernel_size, num_filter_basis
    return {
        # RelaxedTimeRev_LiftConv2d(in_channels, hidden_dim)
        'k1': kaiming_uniform(k1, (NB, hidden_dim, in_channels, K, K)),
        'rw1': jnp.ones((NB, 2), jnp.float32),
        # RelaxedTimeRev_GroupConv2d(hidden_dim, hidden_dim)
        'k2': kaiming_uniform(k2, (NB, hidden_dim, hidden_dim, 2, K, K)),
        'rw2': jnp.ones((NB, 2), jnp.float32),
        # RelaxedTimeRev_GroupConv2d(hidden_dim, out_channels)
        'k3': kaiming_uniform(k3, (NB, out_channels, hidden_dim, 2, K, K)),
        'rw3': jnp.ones((NB, 2), jnp.float32),
    }


def timerevnet_forward(params, x_nchw):
    K = params['k1'].shape[-1]
    B, Cin, H, W = x_nchw.shape
    w1 = lift_weight_oihw(params['k1'], params['rw1'])      # (2*hid, Cin,   K, K)
    w2 = group_weight_oihw(params['k2'], params['rw2'])     # (2*hid, 2*hid, K, K)
    w3 = group_weight_oihw(params['k3'], params['rw3'])     # (2*out, 2*hid, K, K)
    # Fold the trailing `.mean(2)` over the (minor) group axis into layer-3's
    # weights -- exact, since no nonlinearity follows the last conv.
    w3 = w3.reshape(w3.shape[0] // 2, 2, *w3.shape[1:]).mean(axis=1)
    x_flat = x_nchw.reshape(B, Cin, H * W)                  # free reshape (lane-dense NCHW)
    out_flat = timerevnet_pallas(
        x_flat, _to_taps(w1), _to_taps(w2), _to_taps(w3), H=H, W=W, K=K,
        fold_batch=(_tensorcores_per_chip() == 1))
    return out_flat.reshape(B, -1, H, W)                    # already NCHW order


# ----------------------------------------------------------------------------
# Pure-JAX reference (faithful, unfused: conv -> conv -> conv -> group mean)
# ----------------------------------------------------------------------------
def _ref_conv(x_nchw, w_oihw, negative_slope=None):
    p = (w_oihw.shape[-1] - 1) // 2
    y = lax.conv_general_dilated(
        x_nchw, w_oihw, window_strides=(1, 1), padding=[(p, p), (p, p)],
        dimension_numbers=('NCHW', 'OIHW', 'NCHW'))
    if negative_slope is not None:
        y = jnp.where(y > 0, y, negative_slope * y)
    return y


def timerevnet_forward_ref(params, x_nchw):
    x = _ref_conv(x_nchw, lift_weight_oihw(params['k1'], params['rw1']), _LEAKY_SLOPE)
    x = _ref_conv(x, group_weight_oihw(params['k2'], params['rw2']), _LEAKY_SLOPE)
    x = _ref_conv(x, group_weight_oihw(params['k3'], params['rw3']), None)
    B, C2, H, W = x.shape
    return x.reshape(B, C2 // 2, 2, H, W).mean(axis=2)


# ----------------------------------------------------------------------------
if __name__ == "__main__":
    key = jax.random.PRNGKey(0)
    pkey, xkey = jax.random.split(key)

    in_channels, out_channels = 4, 4
    kernel_size, hidden_dim, num_filter_basis = 3, 16, 2
    B, H, W = 2, 16, 16

    params = init_timerevnet(pkey, in_channels, out_channels, kernel_size,
                             hidden_dim, num_filter_basis)
    x = jax.random.normal(xkey, (B, in_channels, H, W), jnp.float32)

    out = jax.block_until_ready(jax.jit(timerevnet_forward)(params, x))
    ref = jax.block_until_ready(timerevnet_forward_ref(params, x))

    assert out.shape == (B, out_channels, H, W), out.shape
    max_err = float(jnp.max(jnp.abs(out - ref)))
    assert jnp.allclose(out, ref, atol=1e-3, rtol=1e-3), max_err

    print("KERNEL_OK")
</pallas_src>

<mosaic_0001>
module attributes {stable_mosaic.version = 11 : i64} {
  func.func @_timerev_fused_kernel(%arg0: i32, %arg1: memref<2x4x256xf32, #tpu.memory_space<vmem>>, %arg2: memref<9x32x4xf32, #tpu.memory_space<vmem>>, %arg3: memref<9x32x32xf32, #tpu.memory_space<vmem>>, %arg4: memref<9x4x32xf32, #tpu.memory_space<vmem>>, %arg5: memref<2x4x256xf32, #tpu.memory_space<vmem>>, %arg6: memref<32x512xf32, #tpu.memory_space<vmem>>) attributes {dimension_semantics = [#tpu.dimension_semantics<parallel>], iteration_bounds = array<i64: 1>, scalar_prefetch = 0 : i64, scratch_operands = 1 : i64, tpu.core_type = #tpu.core_type<tc>, window_params = [{transform_indices = @transform_0, window_bounds = array<i64: 2, 4, 256>}, {pipeline_mode = #tpu.pipeline_mode<synchronous>, transform_indices = @transform_1, window_bounds = array<i64: 9, 32, 4>}, {pipeline_mode = #tpu.pipeline_mode<synchronous>, transform_indices = @transform_2, window_bounds = array<i64: 9, 32, 32>}, {pipeline_mode = #tpu.pipeline_mode<synchronous>, transform_indices = @transform_3, window_bounds = array<i64: 9, 4, 32>}, {transform_indices = @transform_4, window_bounds = array<i64: 2, 4, 256>}]} {
    %cst = arith.constant 0.000000e+00 : f32
    %0 = vector.broadcast %cst : f32 to vector<32x128xf32>
    %c0 = arith.constant 0 : index
    %c0_0 = arith.constant 0 : index
    %1 = vector.load %arg6[%c0, %c0_0] : memref<32x512xf32, #tpu.memory_space<vmem>>, vector<32x128xf32>
    tpu.vector_store %arg6[%c0, %c0_0], %0 {strides = array<i32>} : memref<32x512xf32, #tpu.memory_space<vmem>>, vector<32x128xf32>,
    %c0_1 = arith.constant 0 : index
    %c384 = arith.constant 384 : index
    %2 = vector.load %arg6[%c0_1, %c384] : memref<32x512xf32, #tpu.memory_space<vmem>>, vector<32x128xf32>
    tpu.vector_store %arg6[%c0_1, %c384], %0 {strides = array<i32>} : memref<32x512xf32, #tpu.memory_space<vmem>>, vector<32x128xf32>,
    %3 = tpu.iota {dimensions = array<i32: 1>} : vector<1x256xi32>
    %c16_i32 = arith.constant 16 : i32
    %c0_i32 = arith.constant 0 : i32
    %4 = arith.cmpi eq, %c16_i32, %c0_i32 : i32
    %c1_i32 = arith.constant 1 : i32
    %5 = arith.select %4, %c1_i32, %c16_i32 : i32
    %6 = vector.broadcast %5 : i32 to vector<1x256xi32>
    %7 = arith.remsi %3, %6 : vector<1x256xi32>
    %c0_i32_2 = arith.constant 0 : i32
    %8 = vector.broadcast %c0_i32_2 : i32 to vector<1x256xi32>
    %9 = arith.cmpi ne, %7, %8 : vector<1x256xi32>
    %c0_i32_3 = arith.constant 0 : i32
    %10 = vector.broadcast %c0_i32_3 : i32 to vector<1x256xi32>
    %11 = arith.cmpi slt, %7, %10 : vector<1x256xi32>
    %c0_i32_4 = arith.constant 0 : i32
    %12 = arith.cmpi slt, %5, %c0_i32_4 : i32
    %13 = vector.broadcast %12 : i1 to vector<1x256xi1>
    %14 = vector.broadcast %13 : vector<1x256xi1> to vector<1x256xi1>
    %15 = arith.xori %11, %14 : vector<1x256xi1>
    %16 = arith.andi %15, %9 : vector<1x256xi1>
    %17 = vector.broadcast %5 : i32 to vector<1x256xi32>
    %18 = arith.addi %7, %17 : vector<1x256xi32>
    %19 = arith.select %16, %18, %7 : vector<1x256xi1>, vector<1x256xi32>
    %c-1_i32 = arith.constant -1 : i32
    %20 = vector.broadcast %c-1_i32 : i32 to vector<1x256xi32>
    %21 = arith.addi %19, %20 : vector<1x256xi32>
    %c0_i32_5 = arith.constant 0 : i32
    %22 = vector.broadcast %c0_i32_5 : i32 to vector<1x256xi32>
    %23 = arith.cmpi sge, %21, %22 : vector<1x256xi32>
    %c-1_i32_6 = arith.constant -1 : i32
    %24 = vector.broadcast %c-1_i32_6 : i32 to vector<1x256xi32>
    %25 = arith.addi %19, %24 : vector<1x256xi32>
    %c16_i32_7 = arith.constant 16 : i32
    %26 = vector.broadcast %c16_i32_7 : i32 to vector<1x256xi32>
    %27 = arith.cmpi slt, %25, %26 : vector<1x256xi32>
    %28 = arith.andi %23, %27 : vector<1x256xi1>
    %29 = arith.extui %28 : vector<1x256xi1> to vector<1x256xi32>
    %30 = arith.sitofp %29 : vector<1x256xi32> to vector<1x256xf32>
    %c1_i32_8 = arith.constant 1 : i32
    %31 = vector.broadcast %c1_i32_8 : i32 to vector<1x256xi32>
    %32 = arith.addi %19, %31 : vector<1x256xi32>
    %c0_i32_9 = arith.constant 0 : i32
    %33 = vector.broadcast %c0_i32_9 : i32 to vector<1x256xi32>
    %34 = arith.cmpi sge, %32, %33 : vector<1x256xi32>
    %c1_i32_10 = arith.constant 1 : i32
    %35 = vector.broadcast %c1_i32_10 : i32 to vector<1x256xi32>
    %36 = arith.addi %19, %35 : vector<1x256xi32>
    %c16_i32_11 = arith.constant 16 : i32
    %37 = vector.broadcast %c16_i32_11 : i32 to vector<1x256xi32>
    %38 = arith.cmpi slt, %36, %37 : vector<1x256xi32>
    %39 = arith.andi %34, %38 : vector<1x256xi1>
    %40 = arith.extui %39 : vector<1x256xi1> to vector<1x256xi32>
    %41 = arith.sitofp %40 : vector<1x256xi32> to vector<1x256xf32>
    %c0_12 = arith.constant 0 : index
    %c0_13 = arith.constant 0 : index
    %c0_14 = arith.constant 0 : index
    %42 = vector.load %arg1[%c0_12, %c0_13, %c0_14] : memref<2x4x256xf32, #tpu.memory_space<vmem>>, vector<1x4x256xf32>
    %43 = vector.shape_cast %42 : vector<1x4x256xf32> to vector<4x256xf32>
    %c0_15 = arith.constant 0 : index
    %c128 = arith.constant 128 : index
    %44 = vector.load %arg6[%c0_15, %c128] : memref<32x512xf32, #tpu.memory_space<vmem>>, vector<4x256xf32>
    tpu.vector_store %arg6[%c0_15, %c128], %43 {strides = array<i32>} : memref<32x512xf32, #tpu.memory_space<vmem>>, vector<4x256xf32>,
    %cst_16 = arith.constant 0.000000e+00 : f32
    %45 = vector.broadcast %cst_16 : f32 to vector<32x256xf32>
    %c0_17 = arith.constant 0 : index
    %c111 = arith.constant 111 : index
    %46 = vector.load %arg6[%c0_17, %c111] : memref<32x512xf32, #tpu.memory_space<vmem>>, vector<4x256xf32>
    %47 = vector.broadcast %30 : vector<1x256xf32> to vector<4x256xf32>
    %48 = arith.mulf %46, %47 : vector<4x256xf32>
    %c0_18 = arith.constant 0 : index
    %c0_19 = arith.constant 0 : index
    %c0_20 = arith.constant 0 : index
    %49 = vector.load %arg2[%c0_18, %c0_19, %c0_20] : memref<9x32x4xf32, #tpu.memory_space<vmem>>, vector<1x32x4xf32>
    %50 = vector.shape_cast %49 : vector<1x32x4xf32> to vector<32x4xf32>
    %cst_21 = arith.constant dense<0.000000e+00> : vector<32x256xf32>
    %51 = tpu.matmul %50, %48, %cst_21 {dimension_numbers = #tpu.dot_dimension_numbers<[1], [0], [0], [1], [0, 0, 1, 1], [], []>} : vector<32x4xf32>, vector<4x256xf32>, vector<32x256xf32> -> vector<32x256xf32>
    %52 = arith.addf %45, %51 : vector<32x256xf32>
    %c0_22 = arith.constant 0 : index
    %c112 = arith.constant 112 : index
    %53 = vector.load %arg6[%c0_22, %c112] : memref<32x512xf32, #tpu.memory_space<vmem>>, vector<4x256xf32>
    %c1 = arith.constant 1 : index
    %c0_23 = arith.constant 0 : index
    %c0_24 = arith.constant 0 : index
    %54 = vector.load %arg2[%c1, %c0_23, %c0_24] : memref<9x32x4xf32, #tpu.memory_space<vmem>>, vector<1x32x4xf32>
    %55 = vector.shape_cast %54 : vector<1x32x4xf32> to vector<32x4xf32>
    %cst_25 = arith.constant dense<0.000000e+00> : vector<32x256xf32>
    %56 = tpu.matmul %55, %53, %cst_25 {dimension_numbers = #tpu.dot_dimension_numbers<[1], [0], [0], [1], [0, 0, 1, 1], [], []>} : vector<32x4xf32>, vector<4x256xf32>, vector<32x256xf32> -> vector<32x256xf32>
    %57 = arith.addf %52, %56 : vector<32x256xf32>
    %c0_26 = arith.constant 0 : index
    %c113 = arith.constant 113 : index
    %58 = vector.load %arg6[%c0_26, %c113] : memref<32x512xf32, #tpu.memory_space<vmem>>, vector<4x256xf32>
    %59 = vector.broadcast %41 : vector<1x256xf32> to vector<4x256xf32>
    %60 = arith.mulf %58, %59 : vector<4x256xf32>
    %c2 = arith.constant 2 : index
    %c0_27 = arith.constant 0 : index
    %c0_28 = arith.constant 0 : index
    %61 = vector.load %arg2[%c2, %c0_27, %c0_28] : memref<9x32x4xf32, #tpu.memory_space<vmem>>, vector<1x32x4xf32>
    %62 = vector.shape_cast %61 : vector<1x32x4xf32> to vector<32x4xf32>
    %cst_29 = arith.constant dense<0.000000e+00> : vector<32x256xf32>
    %63 = tpu.matmul %62, %60, %cst_29 {dimension_numbers = #tpu.dot_dimension_numbers<[1], [0], [0], [1], [0, 0, 1, 1], [], []>} : vector<32x4xf32>, vector<4x256xf32>, vector<32x256xf32> -> vector<32x256xf32>
    %64 = arith.addf %57, %63 : vector<32x256xf32>
    %c0_30 = arith.constant 0 : index
    %c127 = arith.constant 127 : index
    %65 = vector.load %arg6[%c0_30, %c127] : memref<32x512xf32, #tpu.memory_space<vmem>>, vector<4x256xf32>
    %66 = vector.broadcast %30 : vector<1x256xf32> to vector<4x256xf32>
    %67 = arith.mulf %65, %66 : vector<4x256xf32>
    %c3 = arith.constant 3 : index
    %c0_31 = arith.constant 0 : index
    %c0_32 = arith.constant 0 : index
    %68 = vector.load %arg2[%c3, %c0_31, %c0_32] : memref<9x32x4xf32, #tpu.memory_space<vmem>>, vector<1x32x4xf32>
    %69 = vector.shape_cast %68 : vector<1x32x4xf32> to vector<32x4xf32>
    %cst_33 = arith.constant dense<0.000000e+00> : vector<32x256xf32>
    %70 = tpu.matmul %69, %67, %cst_33 {dimension_numbers = #tpu.dot_dimension_numbers<[1], [0], [0], [1], [0, 0, 1, 1], [], []>} : vector<32x4xf32>, vector<4x256xf32>, vector<32x256xf32> -> vector<32x256xf32>
    %71 = arith.addf %64, %70 : vector<32x256xf32>
    %c0_34 = arith.constant 0 : index
    %c128_35 = arith.constant 128 : index
    %72 = vector.load %arg6[%c0_34, %c128_35] : memref<32x512xf32, #tpu.memory_space<vmem>>, vector<4x256xf32>
    %c4 = arith.constant 4 : index
    %c0_36 = arith.constant 0 : index
    %c0_37 = arith.constant 0 : index
    %73 = vector.load %arg2[%c4, %c0_36, %c0_37] : memref<9x32x4xf32, #tpu.memory_space<vmem>>, vector<1x32x4xf32>
    %74 = vector.shape_cast %73 : vector<1x32x4xf32> to vector<32x4xf32>
    %cst_38 = arith.constant dense<0.000000e+00> : vector<32x256xf32>
    %75 = tpu.matmul %74, %72, %cst_38 {dimension_numbers = #tpu.dot_dimension_numbers<[1], [0], [0], [1], [0, 0, 1, 1], [], []>} : vector<32x4xf32>, vector<4x256xf32>, vector<32x256xf32> -> vector<32x256xf32>
    %76 = arith.addf %71, %75 : vector<32x256xf32>
    %c0_39 = arith.constant 0 : index
    %c129 = arith.constant 129 : index
    %77 = vector.load %arg6[%c0_39, %c129] : memref<32x512xf32, #tpu.memory_space<vmem>>, vector<4x256xf32>
    %78 = vector.broadcast %41 : vector<1x256xf32> to vector<4x256xf32>
    %79 = arith.mulf %77, %78 : vector<4x256xf32>
    %c5 = arith.constant 5 : index
    %c0_40 = arith.constant 0 : index
    %c0_41 = arith.constant 0 : index
    %80 = vector.load %arg2[%c5, %c0_40, %c0_41] : memref<9x32x4xf32, #tpu.memory_space<vmem>>, vector<1x32x4xf32>
    %81 = vector.shape_cast %80 : vector<1x32x4xf32> to vector<32x4xf32>
    %cst_42 = arith.constant dense<0.000000e+00> : vector<32x256xf32>
    %82 = tpu.matmul %81, %79, %cst_42 {dimension_numbers = #tpu.dot_dimension_numbers<[1], [0], [0], [1], [0, 0, 1, 1], [], []>} : vector<32x4xf32>, vector<4x256xf32>, vector<32x256xf32> -> vector<32x256xf32>
    %83 = arith.addf %76, %82 : vector<32x256xf32>
    %c0_43 = arith.constant 0 : index
    %c143 = arith.constant 143 : index
    %84 = vector.load %arg6[%c0_43, %c143] : memref<32x512xf32, #tpu.memory_space<vmem>>, vector<4x256xf32>
    %85 = vector.broadcast %30 : vector<1x256xf32> to vector<4x256xf32>
    %86 = arith.mulf %84, %85 : vector<4x256xf32>
    %c6 = arith.constant 6 : index
    %c0_44 = arith.constant 0 : index
    %c0_45 = arith.constant 0 : index
    %87 = vector.load %arg2[%c6, %c0_44, %c0_45] : memref<9x32x4xf32, #tpu.memory_space<vmem>>, vector<1x32x4xf32>
    %88 = vector.shape_cast %87 : vector<1x32x4xf32> to vector<32x4xf32>
    %cst_46 = arith.constant dense<0.000000e+00> : vector<32x256xf32>
    %89 = tpu.matmul %88, %86, %cst_46 {dimension_numbers = #tpu.dot_dimension_numbers<[1], [0], [0], [1], [0, 0, 1, 1], [], []>} : vector<32x4xf32>, vector<4x256xf32>, vector<32x256xf32> -> vector<32x256xf32>
    %90 = arith.addf %83, %89 : vector<32x256xf32>
    %c0_47 = arith.constant 0 : index
    %c144 = arith.constant 144 : index
    %91 = vector.load %arg6[%c0_47, %c144] : memref<32x512xf32, #tpu.memory_space<vmem>>, vector<4x256xf32>
    %c7 = arith.constant 7 : index
    %c0_48 = arith.constant 0 : index
    %c0_49 = arith.constant 0 : index
    %92 = vector.load %arg2[%c7, %c0_48, %c0_49] : memref<9x32x4xf32, #tpu.memory_space<vmem>>, vector<1x32x4xf32>
    %93 = vector.shape_cast %92 : vector<1x32x4xf32> to vector<32x4xf32>
    %cst_50 = arith.constant dense<0.000000e+00> : vector<32x256xf32>
    %94 = tpu.matmul %93, %91, %cst_50 {dimension_numbers = #tpu.dot_dimension_numbers<[1], [0], [0], [1], [0, 0, 1, 1], [], []>} : vector<32x4xf32>, vector<4x256xf32>, vector<32x256xf32> -> vector<32x256xf32>
    %95 = arith.addf %90, %94 : vector<32x256xf32>
    %c0_51 = arith.constant 0 : index
    %c145 = arith.constant 145 : index
    %96 = vector.load %arg6[%c0_51, %c145] : memref<32x512xf32, #tpu.memory_space<vmem>>, vector<4x256xf32>
    %97 = vector.broadcast %41 : vector<1x256xf32> to vector<4x256xf32>
    %98 = arith.mulf %96, %97 : vector<4x256xf32>
    %c8 = arith.constant 8 : index
    %c0_52 = arith.constant 0 : index
    %c0_53 = arith.constant 0 : index
    %99 = vector.load %arg2[%c8, %c0_52, %c0_53] : memref<9x32x4xf32, #tpu.memory_space<vmem>>, vector<1x32x4xf32>
    %100 = vector.shape_cast %99 : vector<1x32x4xf32> to vector<32x4xf32>
    %cst_54 = arith.constant dense<0.000000e+00> : vector<32x256xf32>
    %101 = tpu.matmul %100, %98, %cst_54 {dimension_numbers = #tpu.dot_dimension_numbers<[1], [0], [0], [1], [0, 0, 1, 1], [], []>} : vector<32x4xf32>, vector<4x256xf32>, vector<32x256xf32> -> vector<32x256xf32>
    %102 = arith.addf %95, %101 : vector<32x256xf32>
    %cst_55 = arith.constant 0.000000e+00 : f32
    %103 = vector.broadcast %cst_55 : f32 to vector<32x256xf32>
    %104 = arith.cmpf ogt, %102, %103 : vector<32x256xf32>
    %cst_56 = arith.constant 0.00999999977 : f32
    %105 = vector.broadcast %cst_56 : f32 to vector<32x256xf32>
    %106 = arith.mulf %105, %102 : vector<32x256xf32>
    %107 = arith.select %104, %102, %106 : vector<32x256xi1>, vector<32x256xf32>
    %c0_57 = arith.constant 0 : index
    %c128_58 = arith.constant 128 : index
    %108 = vector.load %arg6[%c0_57, %c128_58] : memref<32x512xf32, #tpu.memory_space<vmem>>, vector<32x256xf32>
    tpu.vector_store %arg6[%c0_57, %c128_58], %107 {strides = array<i32>} : memref<32x512xf32, #tpu.memory_space<vmem>>, vector<32x256xf32>,
    %cst_59 = arith.constant 0.000000e+00 : f32
    %109 = vector.broadcast %cst_59 : f32 to vector<32x256xf32>
    %c0_60 = arith.constant 0 : index
    %c111_61 = arith.constant 111 : index
    %110 = vector.load %arg6[%c0_60, %c111_61] : memref<32x512xf32, #tpu.memory_space<vmem>>, vector<32x256xf32>
    %111 = vector.broadcast %30 : vector<1x256xf32> to vector<32x256xf32>
    %112 = arith.mulf %110, %111 : vector<32x256xf32>
    %c0_62 = arith.constant 0 : index
    %c0_63 = arith.constant 0 : index
    %c0_64 = arith.constant 0 : index
    %113 = vector.load %arg3[%c0_62, %c0_63, %c0_64] : memref<9x32x32xf32, #tpu.memory_space<vmem>>, vector<1x32x32xf32>
    %114 = vector.shape_cast %113 : vector<1x32x32xf32> to vector<32x32xf32>
    %cst_65 = arith.constant dense<0.000000e+00> : vector<32x256xf32>
    %115 = tpu.matmul %114, %112, %cst_65 {dimension_numbers = #tpu.dot_dimension_numbers<[1], [0], [0], [1], [0, 0, 1, 1], [], []>} : vector<32x32xf32>, vector<32x256xf32>, vector<32x256xf32> -> vector<32x256xf32>
    %116 = arith.addf %109, %115 : vector<32x256xf32>
    %c0_66 = arith.constant 0 : index
    %c112_67 = arith.constant 112 : index
    %117 = vector.load %arg6[%c0_66, %c112_67] : memref<32x512xf32, #tpu.memory_space<vmem>>, vector<32x256xf32>
    %c1_68 = arith.constant 1 : index
    %c0_69 = arith.constant 0 : index
    %c0_70 = arith.constant 0 : index
    %118 = vector.load %arg3[%c1_68, %c0_69, %c0_70] : memref<9x32x32xf32, #tpu.memory_space<vmem>>, vector<1x32x32xf32>
    %119 = vector.shape_cast %118 : vector<1x32x32xf32> to vector<32x32xf32>
    %cst_71 = arith.constant dense<0.000000e+00> : vector<32x256xf32>
    %120 = tpu.matmul %119, %117, %cst_71 {dimension_numbers = #tpu.dot_dimension_numbers<[1], [0], [0], [1], [0, 0, 1, 1], [], []>} : vector<32x32xf32>, vector<32x256xf32>, vector<32x256xf32> -> vector<32x256xf32>
    %121 = arith.addf %116, %120 : vector<32x256xf32>
    %c0_72 = arith.constant 0 : index
    %c113_73 = arith.constant 113 : index
    %122 = vector.load %arg6[%c0_72, %c113_73] : memref<32x512xf32, #tpu.memory_space<vmem>>, vector<32x256xf32>
    %123 = vector.broadcast %41 : vector<1x256xf32> to vector<32x256xf32>
    %124 = arith.mulf %122, %123 : vector<32x256xf32>
    %c2_74 = arith.constant 2 : index
    %c0_75 = arith.constant 0 : index
    %c0_76 = arith.constant 0 : index
    %125 = vector.load %arg3[%c2_74, %c0_75, %c0_76] : memref<9x32x32xf32, #tpu.memory_space<vmem>>, vector<1x32x32xf32>
    %126 = vector.shape_cast %125 : vector<1x32x32xf32> to vector<32x32xf32>
    %cst_77 = arith.constant dense<0.000000e+00> : vector<32x256xf32>
    %127 = tpu.matmul %126, %124, %cst_77 {dimension_numbers = #tpu.dot_dimension_numbers<[1], [0], [0], [1], [0, 0, 1, 1], [], []>} : vector<32x32xf32>, vector<32x256xf32>, vector<32x256xf32> -> vector<32x256xf32>
    %128 = arith.addf %121, %127 : vector<32x256xf32>
    %c0_78 = arith.constant 0 : index
    %c127_79 = arith.constant 127 : index
    %129 = vector.load %arg6[%c0_78, %c127_79] : memref<32x512xf32, #tpu.memory_space<vmem>>, vector<32x256xf32>
    %130 = vector.broadcast %30 : vector<1x256xf32> to vector<32x256xf32>
    %131 = arith.mulf %129, %130 : vector<32x256xf32>
    %c3_80 = arith.constant 3 : index
    %c0_81 = arith.constant 0 : index
    %c0_82 = arith.constant 0 : index
    %132 = vector.load %arg3[%c3_80, %c0_81, %c0_82] : memref<9x32x32xf32, #tpu.memory_space<vmem>>, vector<1x32x32xf32>
    %133 = vector.shape_cast %132 : vector<1x32x32xf32> to vector<32x32xf32>
    %cst_83 = arith.constant dense<0.000000e+00> : vector<32x256xf32>
    %134 = tpu.matmul %133, %131, %cst_83 {dimension_numbers = #tpu.dot_dimension_numbers<[1], [0], [0], [1], [0, 0, 1, 1], [], []>} : vector<32x32xf32>, vector<32x256xf32>, vector<32x256xf32> -> vector<32x256xf32>
    %135 = arith.addf %128, %134 : vector<32x256xf32>
    %c0_84 = arith.constant 0 : index
    %c128_85 = arith.constant 128 : index
    %136 = vector.load %arg6[%c0_84, %c128_85] : memref<32x512xf32, #tpu.memory_space<vmem>>, vector<32x256xf32>
    %c4_86 = arith.constant 4 : index
    %c0_87 = arith.constant 0 : index
    %c0_88 = arith.constant 0 : index
    %137 = vector.load %arg3[%c4_86, %c0_87, %c0_88] : memref<9x32x32xf32, #tpu.memory_space<vmem>>, vector<1x32x32xf32>
    %138 = vector.shape_cast %137 : vector<1x32x32xf32> to vector<32x32xf32>
    %cst_89 = arith.constant dense<0.000000e+00> : vector<32x256xf32>
    %139 = tpu.matmul %138, %136, %cst_89 {dimension_numbers = #tpu.dot_dimension_numbers<[1], [0], [0], [1], [0, 0, 1, 1], [], []>} : vector<32x32xf32>, vector<32x256xf32>, vector<32x256xf32> -> vector<32x256xf32>
    %140 = arith.addf %135, %139 : vector<32x256xf32>
    %c0_90 = arith.constant 0 : index
    %c129_91 = arith.constant 129 : index
    %141 = vector.load %arg6[%c0_90, %c129_91] : memref<32x512xf32, #tpu.memory_space<vmem>>, vector<32x256xf32>
    %142 = vector.broadcast %41 : vector<1x256xf32> to vector<32x256xf32>
    %143 = arith.mulf %141, %142 : vector<32x256xf32>
    %c5_92 = arith.constant 5 : index
    %c0_93 = arith.constant 0 : index
    %c0_94 = arith.constant 0 : index
    %144 = vector.load %arg3[%c5_92, %c0_93, %c0_94] : memref<9x32x32xf32, #tpu.memory_space<vmem>>, vector<1x32x32xf32>
    %145 = vector.shape_cast %144 : vector<1x32x32xf32> to vector<32x32xf32>
    %cst_95 = arith.constant dense<0.000000e+00> : vector<32x256xf32>
    %146 = tpu.matmul %145, %143, %cst_95 {dimension_numbers = #tpu.dot_dimension_numbers<[1], [0], [0], [1], [0, 0, 1, 1], [], []>} : vector<32x32xf32>, vector<32x256xf32>, vector<32x256xf32> -> vector<32x256xf32>
    %147 = arith.addf %140, %146 : vector<32x256xf32>
    %c0_96 = arith.constant 0 : index
    %c143_97 = arith.constant 143 : index
    %148 = vector.load %arg6[%c0_96, %c143_97] : memref<32x512xf32, #tpu.memory_space<vmem>>, vector<32x256xf32>
    %149 = vector.broadcast %30 : vector<1x256xf32> to vector<32x256xf32>
    %150 = arith.mulf %148, %149 : vector<32x256xf32>
    %c6_98 = arith.constant 6 : index
    %c0_99 = arith.constant 0 : index
    %c0_100 = arith.constant 0 : index
    %151 = vector.load %arg3[%c6_98, %c0_99, %c0_100] : memref<9x32x32xf32, #tpu.memory_space<vmem>>, vector<1x32x32xf32>
    %152 = vector.shape_cast %151 : vector<1x32x32xf32> to vector<32x32xf32>
    %cst_101 = arith.constant dense<0.000000e+00> : vector<32x256xf32>
    %153 = tpu.matmul %152, %150, %cst_101 {dimension_numbers = #tpu.dot_dimension_numbers<[1], [0], [0], [1], [0, 0, 1, 1], [], []>} : vector<32x32xf32>, vector<32x256xf32>, vector<32x256xf32> -> vector<32x256xf32>
    %154 = arith.addf %147, %153 : vector<32x256xf32>
    %c0_102 = arith.constant 0 : index
    %c144_103 = arith.constant 144 : index
    %155 = vector.load %arg6[%c0_102, %c144_103] : memref<32x512xf32, #tpu.memory_space<vmem>>, vector<32x256xf32>
    %c7_104 = arith.constant 7 : index
    %c0_105 = arith.constant 0 : index
    %c0_106 = arith.constant 0 : index
    %156 = vector.load %arg3[%c7_104, %c0_105, %c0_106] : memref<9x32x32xf32, #tpu.memory_space<vmem>>, vector<1x32x32xf32>
    %157 = vector.shape_cast %156 : vector<1x32x32xf32> to vector<32x32xf32>
    %cst_107 = arith.constant dense<0.000000e+00> : vector<32x256xf32>
    %158 = tpu.matmul %157, %155, %cst_107 {dimension_numbers = #tpu.dot_dimension_numbers<[1], [0], [0], [1], [0, 0, 1, 1], [], []>} : vector<32x32xf32>, vector<32x256xf32>, vector<32x256xf32> -> vector<32x256xf32>
    %159 = arith.addf %154, %158 : vector<32x256xf32>
    %c0_108 = arith.constant 0 : index
    %c145_109 = arith.constant 145 : index
    %160 = vector.load %arg6[%c0_108, %c145_109] : memref<32x512xf32, #tpu.memory_space<vmem>>, vector<32x256xf32>
    %161 = vector.broadcast %41 : vector<1x256xf32> to vector<32x256xf32>
    %162 = arith.mulf %160, %161 : vector<32x256xf32>
    %c8_110 = arith.constant 8 : index
    %c0_111 = arith.constant 0 : index
    %c0_112 = arith.constant 0 : index
    %163 = vector.load %arg3[%c8_110, %c0_111, %c0_112] : memref<9x32x32xf32, #tpu.memory_space<vmem>>, vector<1x32x32xf32>
    %164 = vector.shape_cast %163 : vector<1x32x32xf32> to vector<32x32xf32>
    %cst_113 = arith.constant dense<0.000000e+00> : vector<32x256xf32>
    %165 = tpu.matmul %164, %162, %cst_113 {dimension_numbers = #tpu.dot_dimension_numbers<[1], [0], [0], [1], [0, 0, 1, 1], [], []>} : vector<32x32xf32>, vector<32x256xf32>, vector<32x256xf32> -> vector<32x256xf32>
    %166 = arith.addf %159, %165 : vector<32x256xf32>
    %cst_114 = arith.constant 0.000000e+00 : f32
    %167 = vector.broadcast %cst_114 : f32 to vector<32x256xf32>
    %168 = arith.cmpf ogt, %166, %167 : vector<32x256xf32>
    %cst_115 = arith.constant 0.00999999977 : f32
    %169 = vector.broadcast %cst_115 : f32 to vector<32x256xf32>
    %170 = arith.mulf %169, %166 : vector<32x256xf32>
    %171 = arith.select %168, %166, %170 : vector<32x256xi1>, vector<32x256xf32>
    %c0_116 = arith.constant 0 : index
    %c128_117 = arith.constant 128 : index
    %172 = vector.load %arg6[%c0_116, %c128_117] : memref<32x512xf32, #tpu.memory_space<vmem>>, vector<32x256xf32>
    tpu.vector_store %arg6[%c0_116, %c128_117], %171 {strides = array<i32>} : memref<32x512xf32, #tpu.memory_space<vmem>>, vector<32x256xf32>,
    %cst_118 = arith.constant 0.000000e+00 : f32
    %173 = vector.broadcast %cst_118 : f32 to vector<4x256xf32>
    %c0_119 = arith.constant 0 : index
    %c111_120 = arith.constant 111 : index
    %174 = vector.load %arg6[%c0_119, %c111_120] : memref<32x512xf32, #tpu.memory_space<vmem>>, vector<32x256xf32>
    %175 = vector.broadcast %30 : vector<1x256xf32> to vector<32x256xf32>
    %176 = arith.mulf %174, %175 : vector<32x256xf32>
    %c0_121 = arith.constant 0 : index
    %c0_122 = arith.constant 0 : index
    %c0_123 = arith.constant 0 : index
    %177 = vector.load %arg4[%c0_121, %c0_122, %c0_123] : memref<9x4x32xf32, #tpu.memory_space<vmem>>, vector<1x4x32xf32>
    %178 = vector.shape_cast %177 : vector<1x4x32xf32> to vector<4x32xf32>
    %cst_124 = arith.constant dense<0.000000e+00> : vector<4x256xf32>
    %179 = tpu.matmul %178, %176, %cst_124 {dimension_numbers = #tpu.dot_dimension_numbers<[1], [0], [0], [1], [0, 0, 1, 1], [], []>} : vector<4x32xf32>, vector<32x256xf32>, vector<4x256xf32> -> vector<4x256xf32>
    %180 = arith.addf %173, %179 : vector<4x256xf32>
    %c0_125 = arith.constant 0 : index
    %c112_126 = arith.constant 112 : index
    %181 = vector.load %arg6[%c0_125, %c112_126] : memref<32x512xf32, #tpu.memory_space<vmem>>, vector<32x256xf32>
    %c1_127 = arith.constant 1 : index
    %c0_128 = arith.constant 0 : index
    %c0_129 = arith.constant 0 : index
    %182 = vector.load %arg4[%c1_127, %c0_128, %c0_129] : memref<9x4x32xf32, #tpu.memory_space<vmem>>, vector<1x4x32xf32>
    %183 = vector.shape_cast %182 : vector<1x4x32xf32> to vector<4x32xf32>
    %cst_130 = arith.constant dense<0.000000e+00> : vector<4x256xf32>
    %184 = tpu.matmul %183, %181, %cst_130 {dimension_numbers = #tpu.dot_dimension_numbers<[1], [0], [0], [1], [0, 0, 1, 1], [], []>} : vector<4x32xf32>, vector<32x256xf32>, vector<4x256xf32> -> vector<4x256xf32>
    %185 = arith.addf %180, %184 : vector<4x256xf32>
    %c0_131 = arith.constant 0 : index
    %c113_132 = arith.constant 113 : index
    %186 = vector.load %arg6[%c0_131, %c113_132] : memref<32x512xf32, #tpu.memory_space<vmem>>, vector<32x256xf32>
    %187 = vector.broadcast %41 : vector<1x256xf32> to vector<32x256xf32>
    %188 = arith.mulf %186, %187 : vector<32x256xf32>
    %c2_133 = arith.constant 2 : index
    %c0_134 = arith.constant 0 : index
    %c0_135 = arith.constant 0 : index
    %189 = vector.load %arg4[%c2_133, %c0_134, %c0_135] : memref<9x4x32xf32, #tpu.memory_space<vmem>>, vector<1x4x32xf32>
    %190 = vector.shape_cast %189 : vector<1x4x32xf32> to vector<4x32xf32>
    %cst_136 = arith.constant dense<0.000000e+00> : vector<4x256xf32>
    %191 = tpu.matmul %190, %188, %cst_136 {dimension_numbers = #tpu.dot_dimension_numbers<[1], [0], [0], [1], [0, 0, 1, 1], [], []>} : vector<4x32xf32>, vector<32x256xf32>, vector<4x256xf32> -> vector<4x256xf32>
    %192 = arith.addf %185, %191 : vector<4x256xf32>
    %c0_137 = arith.constant 0 : index
    %c127_138 = arith.constant 127 : index
    %193 = vector.load %arg6[%c0_137, %c127_138] : memref<32x512xf32, #tpu.memory_space<vmem>>, vector<32x256xf32>
    %194 = vector.broadcast %30 : vector<1x256xf32> to vector<32x256xf32>
    %195 = arith.mulf %193, %194 : vector<32x256xf32>
    %c3_139 = arith.constant 3 : index
    %c0_140 = arith.constant 0 : index
    %c0_141 = arith.constant 0 : index
    %196 = vector.load %arg4[%c3_139, %c0_140, %c0_141] : memref<9x4x32xf32, #tpu.memory_space<vmem>>, vector<1x4x32xf32>
    %197 = vector.shape_cast %196 : vector<1x4x32xf32> to vector<4x32xf32>
    %cst_142 = arith.constant dense<0.000000e+00> : vector<4x256xf32>
    %198 = tpu.matmul %197, %195, %cst_142 {dimension_numbers = #tpu.dot_dimension_numbers<[1], [0], [0], [1], [0, 0, 1, 1], [], []>} : vector<4x32xf32>, vector<32x256xf32>, vector<4x256xf32> -> vector<4x256xf32>
    %199 = arith.addf %192, %198 : vector<4x256xf32>
    %c0_143 = arith.constant 0 : index
    %c128_144 = arith.constant 128 : index
    %200 = vector.load %arg6[%c0_143, %c128_144] : memref<32x512xf32, #tpu.memory_space<vmem>>, vector<32x256xf32>
    %c4_145 = arith.constant 4 : index
    %c0_146 = arith.constant 0 : index
    %c0_147 = arith.constant 0 : index
    %201 = vector.load %arg4[%c4_145, %c0_146, %c0_147] : memref<9x4x32xf32, #tpu.memory_space<vmem>>, vector<1x4x32xf32>
    %202 = vector.shape_cast %201 : vector<1x4x32xf32> to vector<4x32xf32>
    %cst_148 = arith.constant dense<0.000000e+00> : vector<4x256xf32>
    %203 = tpu.matmul %202, %200, %cst_148 {dimension_numbers = #tpu.dot_dimension_numbers<[1], [0], [0], [1], [0, 0, 1, 1], [], []>} : vector<4x32xf32>, vector<32x256xf32>, vector<4x256xf32> -> vector<4x256xf32>
    %204 = arith.addf %199, %203 : vector<4x256xf32>
    %c0_149 = arith.constant 0 : index
    %c129_150 = arith.constant 129 : index
    %205 = vector.load %arg6[%c0_149, %c129_150] : memref<32x512xf32, #tpu.memory_space<vmem>>, vector<32x256xf32>
    %206 = vector.broadcast %41 : vector<1x256xf32> to vector<32x256xf32>
    %207 = arith.mulf %205, %206 : vector<32x256xf32>
    %c5_151 = arith.constant 5 : index
    %c0_152 = arith.constant 0 : index
    %c0_153 = arith.constant 0 : index
    %208 = vector.load %arg4[%c5_151, %c0_152, %c0_153] : memref<9x4x32xf32, #tpu.memory_space<vmem>>, vector<1x4x32xf32>
    %209 = vector.shape_cast %208 : vector<1x4x32xf32> to vector<4x32xf32>
    %cst_154 = arith.constant dense<0.000000e+00> : vector<4x256xf32>
    %210 = tpu.matmul %209, %207, %cst_154 {dimension_numbers = #tpu.dot_dimension_numbers<[1], [0], [0], [1], [0, 0, 1, 1], [], []>} : vector<4x32xf32>, vector<32x256xf32>, vector<4x256xf32> -> vector<4x256xf32>
    %211 = arith.addf %204, %210 : vector<4x256xf32>
    %c0_155 = arith.constant 0 : index
    %c143_156 = arith.constant 143 : index
    %212 = vector.load %arg6[%c0_155, %c143_156] : memref<32x512xf32, #tpu.memory_space<vmem>>, vector<32x256xf32>
    %213 = vector.broadcast %30 : vector<1x256xf32> to vector<32x256xf32>
    %214 = arith.mulf %212, %213 : vector<32x256xf32>
    %c6_157 = arith.constant 6 : index
    %c0_158 = arith.constant 0 : index
    %c0_159 = arith.constant 0 : index
    %215 = vector.load %arg4[%c6_157, %c0_158, %c0_159] : memref<9x4x32xf32, #tpu.memory_space<vmem>>, vector<1x4x32xf32>
    %216 = vector.shape_cast %215 : vector<1x4x32xf32> to vector<4x32xf32>
    %cst_160 = arith.constant dense<0.000000e+00> : vector<4x256xf32>
    %217 = tpu.matmul %216, %214, %cst_160 {dimension_numbers = #tpu.dot_dimension_numbers<[1], [0], [0], [1], [0, 0, 1, 1], [], []>} : vector<4x32xf32>, vector<32x256xf32>, vector<4x256xf32> -> vector<4x256xf32>
    %218 = arith.addf %211, %217 : vector<4x256xf32>
    %c0_161 = arith.constant 0 : index
    %c144_162 = arith.constant 144 : index
    %219 = vector.load %arg6[%c0_161, %c144_162] : memref<32x512xf32, #tpu.memory_space<vmem>>, vector<32x256xf32>
    %c7_163 = arith.constant 7 : index
    %c0_164 = arith.constant 0 : index
    %c0_165 = arith.constant 0 : index
    %220 = vector.load %arg4[%c7_163, %c0_164, %c0_165] : memref<9x4x32xf32, #tpu.memory_space<vmem>>, vector<1x4x32xf32>
    %221 = vector.shape_cast %220 : vector<1x4x32xf32> to vector<4x32xf32>
    %cst_166 = arith.constant dense<0.000000e+00> : vector<4x256xf32>
    %222 = tpu.matmul %221, %219, %cst_166 {dimension_numbers = #tpu.dot_dimension_numbers<[1], [0], [0], [1], [0, 0, 1, 1], [], []>} : vector<4x32xf32>, vector<32x256xf32>, vector<4x256xf32> -> vector<4x256xf32>
    %223 = arith.addf %218, %222 : vector<4x256xf32>
    %c0_167 = arith.constant 0 : index
    %c145_168 = arith.constant 145 : index
    %224 = vector.load %arg6[%c0_167, %c145_168] : memref<32x512xf32, #tpu.memory_space<vmem>>, vector<32x256xf32>
    %225 = vector.broadcast %41 : vector<1x256xf32> to vector<32x256xf32>
    %226 = arith.mulf %224, %225 : vector<32x256xf32>
    %c8_169 = arith.constant 8 : index
    %c0_170 = arith.constant 0 : index
    %c0_171 = arith.constant 0 : index
    %227 = vector.load %arg4[%c8_169, %c0_170, %c0_171] : memref<9x4x32xf32, #tpu.memory_space<vmem>>, vector<1x4x32xf32>
    %228 = vector.shape_cast %227 : vector<1x4x32xf32> to vector<4x32xf32>
    %cst_172 = arith.constant dense<0.000000e+00> : vector<4x256xf32>
    %229 = tpu.matmul %228, %226, %cst_172 {dimension_numbers = #tpu.dot_dimension_numbers<[1], [0], [0], [1], [0, 0, 1, 1], [], []>} : vector<4x32xf32>, vector<32x256xf32>, vector<4x256xf32> -> vector<4x256xf32>
    %230 = arith.addf %223, %229 : vector<4x256xf32>
    %c0_173 = arith.constant 0 : index
    %c0_174 = arith.constant 0 : index
    %c0_175 = arith.constant 0 : index
    %231 = vector.load %arg5[%c0_173, %c0_174, %c0_175] : memref<2x4x256xf32, #tpu.memory_space<vmem>>, vector<1x4x256xf32>
    %232 = vector.shape_cast %231 : vector<1x4x256xf32> to vector<4x256xf32>
    %233 = vector.shape_cast %230 : vector<4x256xf32> to vector<1x4x256xf32>
    tpu.vector_store %arg5[%c0_173, %c0_174, %c0_175], %233 {strides = array<i32>} : memref<2x4x256xf32, #tpu.memory_space<vmem>>, vector<1x4x256xf32>,
    %c1_176 = arith.constant 1 : index
    %c0_177 = arith.constant 0 : index
    %c0_178 = arith.constant 0 : index
    %234 = vector.load %arg1[%c1_176, %c0_177, %c0_178] : memref<2x4x256xf32, #tpu.memory_space<vmem>>, vector<1x4x256xf32>
    %235 = vector.shape_cast %234 : vector<1x4x256xf32> to vector<4x256xf32>
    %c0_179 = arith.constant 0 : index
    %c128_180 = arith.constant 128 : index
    %236 = vector.load %arg6[%c0_179, %c128_180] : memref<32x512xf32, #tpu.memory_space<vmem>>, vector<4x256xf32>
    tpu.vector_store %arg6[%c0_179, %c128_180], %235 {strides = array<i32>} : memref<32x512xf32, #tpu.memory_space<vmem>>, vector<4x256xf32>,
    %cst_181 = arith.constant 0.000000e+00 : f32
    %237 = vector.broadcast %cst_181 : f32 to vector<32x256xf32>
    %c0_182 = arith.constant 0 : index
    %c111_183 = arith.constant 111 : index
    %238 = vector.load %arg6[%c0_182, %c111_183] : memref<32x512xf32, #tpu.memory_space<vmem>>, vector<4x256xf32>
    %239 = vector.broadcast %30 : vector<1x256xf32> to vector<4x256xf32>
    %240 = arith.mulf %238, %239 : vector<4x256xf32>
    %c0_184 = arith.constant 0 : index
    %c0_185 = arith.constant 0 : index
    %c0_186 = arith.constant 0 : index
    %241 = vector.load %arg2[%c0_184, %c0_185, %c0_186] : memref<9x32x4xf32, #tpu.memory_space<vmem>>, vector<1x32x4xf32>
    %242 = vector.shape_cast %241 : vector<1x32x4xf32> to vector<32x4xf32>
    %cst_187 = arith.constant dense<0.000000e+00> : vector<32x256xf32>
    %243 = tpu.matmul %242, %240, %cst_187 {dimension_numbers = #tpu.dot_dimension_numbers<[1], [0], [0], [1], [0, 0, 1, 1], [], []>} : vector<32x4xf32>, vector<4x256xf32>, vector<32x256xf32> -> vector<32x256xf32>
    %244 = arith.addf %237, %243 : vector<32x256xf32>
    %c0_188 = arith.constant 0 : index
    %c112_189 = arith.constant 112 : index
    %245 = vector.load %arg6[%c0_188, %c112_189] : memref<32x512xf32, #tpu.memory_space<vmem>>, vector<4x256xf32>
    %c1_190 = arith.constant 1 : index
    %c0_191 = arith.constant 0 : index
    %c0_192 = arith.constant 0 : index
    %246 = vector.load %arg2[%c1_190, %c0_191, %c0_192] : memref<9x32x4xf32, #tpu.memory_space<vmem>>, vector<1x32x4xf32>
    %247 = vector.shape_cast %246 : vector<1x32x4xf32> to vector<32x4xf32>
    %cst_193 = arith.constant dense<0.000000e+00> : vector<32x256xf32>
    %248 = tpu.matmul %247, %245, %cst_193 {dimension_numbers = #tpu.dot_dimension_numbers<[1], [0], [0], [1], [0, 0, 1, 1], [], []>} : vector<32x4xf32>, vector<4x256xf32>, vector<32x256xf32> -> vector<32x256xf32>
    %249 = arith.addf %244, %248 : vector<32x256xf32>
    %c0_194 = arith.constant 0 : index
    %c113_195 = arith.constant 113 : index
    %250 = vector.load %arg6[%c0_194, %c113_195] : memref<32x512xf32, #tpu.memory_space<vmem>>, vector<4x256xf32>
    %251 = vector.broadcast %41 : vector<1x256xf32> to vector<4x256xf32>
    %252 = arith.mulf %250, %251 : vector<4x256xf32>
    %c2_196 = arith.constant 2 : index
    %c0_197 = arith.constant 0 : index
    %c0_198 = arith.constant 0 : index
    %253 = vector.load %arg2[%c2_196, %c0_197, %c0_198] : memref<9x32x4xf32, #tpu.memory_space<vmem>>, vector<1x32x4xf32>
    %254 = vector.shape_cast %253 : vector<1x32x4xf32> to vector<32x4xf32>
    %cst_199 = arith.constant dense<0.000000e+00> : vector<32x256xf32>
    %255 = tpu.matmul %254, %252, %cst_199 {dimension_numbers = #tpu.dot_dimension_numbers<[1], [0], [0], [1], [0, 0, 1, 1], [], []>} : vector<32x4xf32>, vector<4x256xf32>, vector<32x256xf32> -> vector<32x256xf32>
    %256 = arith.addf %249, %255 : vector<32x256xf32>
    %c0_200 = arith.constant 0 : index
    %c127_201 = arith.constant 127 : index
    %257 = vector.load %arg6[%c0_200, %c127_201] : memref<32x512xf32, #tpu.memory_space<vmem>>, vector<4x256xf32>
    %258 = vector.broadcast %30 : vector<1x256xf32> to vector<4x256xf32>
    %259 = arith.mulf %257, %258 : vector<4x256xf32>
    %c3_202 = arith.constant 3 : index
    %c0_203 = arith.constant 0 : index
    %c0_204 = arith.constant 0 : index
    %260 = vector.load %arg2[%c3_202, %c0_203, %c0_204] : memref<9x32x4xf32, #tpu.memory_space<vmem>>, vector<1x32x4xf32>
    %261 = vector.shape_cast %260 : vector<1x32x4xf32> to vector<32x4xf32>
    %cst_205 = arith.constant dense<0.000000e+00> : vector<32x256xf32>
    %262 = tpu.matmul %261, %259, %cst_205 {dimension_numbers = #tpu.dot_dimension_numbers<[1], [0], [0], [1], [0, 0, 1, 1], [], []>} : vector<32x4xf32>, vector<4x256xf32>, vector<32x256xf32> -> vector<32x256xf32>
    %263 = arith.addf %256, %262 : vector<32x256xf32>
    %c0_206 = arith.constant 0 : index
    %c128_207 = arith.constant 128 : index
    %264 = vector.load %arg6[%c0_206, %c128_207] : memref<32x512xf32, #tpu.memory_space<vmem>>, vector<4x256xf32>
    %c4_208 = arith.constant 4 : index
    %c0_209 = arith.constant 0 : index
    %c0_210 = arith.constant 0 : index
    %265 = vector.load %arg2[%c4_208, %c0_209, %c0_210] : memref<9x32x4xf32, #tpu.memory_space<vmem>>, vector<1x32x4xf32>
    %266 = vector.shape_cast %265 : vector<1x32x4xf32> to vector<32x4xf32>
    %cst_211 = arith.constant dense<0.000000e+00> : vector<32x256xf32>
    %267 = tpu.matmul %266, %264, %cst_211 {dimension_numbers = #tpu.dot_dimension_numbers<[1], [0], [0], [1], [0, 0, 1, 1], [], []>} : vector<32x4xf32>, vector<4x256xf32>, vector<32x256xf32> -> vector<32x256xf32>
    %268 = arith.addf %263, %267 : vector<32x256xf32>
    %c0_212 = arith.constant 0 : index
    %c129_213 = arith.constant 129 : index
    %269 = vector.load %arg6[%c0_212, %c129_213] : memref<32x512xf32, #tpu.memory_space<vmem>>, vector<4x256xf32>
    %270 = vector.broadcast %41 : vector<1x256xf32> to vector<4x256xf32>
    %271 = arith.mulf %269, %270 : vector<4x256xf32>
    %c5_214 = arith.constant 5 : index
    %c0_215 = arith.constant 0 : index
    %c0_216 = arith.constant 0 : index
    %272 = vector.load %arg2[%c5_214, %c0_215, %c0_216] : memref<9x32x4xf32, #tpu.memory_space<vmem>>, vector<1x32x4xf32>
    %273 = vector.shape_cast %272 : vector<1x32x4xf32> to vector<32x4xf32>
    %cst_217 = arith.constant dense<0.000000e+00> : vector<32x256xf32>
    %274 = tpu.matmul %273, %271, %cst_217 {dimension_numbers = #tpu.dot_dimension_numbers<[1], [0], [0], [1], [0, 0, 1, 1], [], []>} : vector<32x4xf32>, vector<4x256xf32>, vector<32x256xf32> -> vector<32x256xf32>
    %275 = arith.addf %268, %274 : vector<32x256xf32>
    %c0_218 = arith.constant 0 : index
    %c143_219 = arith.constant 143 : index
    %276 = vector.load %arg6[%c0_218, %c143_219] : memref<32x512xf32, #tpu.memory_space<vmem>>, vector<4x256xf32>
    %277 = vector.broadcast %30 : vector<1x256xf32> to vector<4x256xf32>
    %278 = arith.mulf %276, %277 : vector<4x256xf32>
    %c6_220 = arith.constant 6 : index
    %c0_221 = arith.constant 0 : index
    %c0_222 = arith.constant 0 : index
    %279 = vector.load %arg2[%c6_220, %c0_221, %c0_222] : memref<9x32x4xf32, #tpu.memory_space<vmem>>, vector<1x32x4xf32>
    %280 = vector.shape_cast %279 : vector<1x32x4xf32> to vector<32x4xf32>
    %cst_223 = arith.constant dense<0.000000e+00> : vector<32x256xf32>
    %281 = tpu.matmul %280, %278, %cst_223 {dimension_numbers = #tpu.dot_dimension_numbers<[1], [0], [0], [1], [0, 0, 1, 1], [], []>} : vector<32x4xf32>, vector<4x256xf32>, vector<32x256xf32> -> vector<32x256xf32>
    %282 = arith.addf %275, %281 : vector<32x256xf32>
    %c0_224 = arith.constant 0 : index
    %c144_225 = arith.constant 144 : index
    %283 = vector.load %arg6[%c0_224, %c144_225] : memref<32x512xf32, #tpu.memory_space<vmem>>, vector<4x256xf32>
    %c7_226 = arith.constant 7 : index
    %c0_227 = arith.constant 0 : index
    %c0_228 = arith.constant 0 : index
    %284 = vector.load %arg2[%c7_226, %c0_227, %c0_228] : memref<9x32x4xf32, #tpu.memory_space<vmem>>, vector<1x32x4xf32>
    %285 = vector.shape_cast %284 : vector<1x32x4xf32> to vector<32x4xf32>
    %cst_229 = arith.constant dense<0.000000e+00> : vector<32x256xf32>
    %286 = tpu.matmul %285, %283, %cst_229 {dimension_numbers = #tpu.dot_dimension_numbers<[1], [0], [0], [1], [0, 0, 1, 1], [], []>} : vector<32x4xf32>, vector<4x256xf32>, vector<32x256xf32> -> vector<32x256xf32>
    %287 = arith.addf %282, %286 : vector<32x256xf32>
    %c0_230 = arith.constant 0 : index
    %c145_231 = arith.constant 145 : index
    %288 = vector.load %arg6[%c0_230, %c145_231] : memref<32x512xf32, #tpu.memory_space<vmem>>, vector<4x256xf32>
    %289 = vector.broadcast %41 : vector<1x256xf32> to vector<4x256xf32>
    %290 = arith.mulf %288, %289 : vector<4x256xf32>
    %c8_232 = arith.constant 8 : index
    %c0_233 = arith.constant 0 : index
    %c0_234 = arith.constant 0 : index
    %291 = vector.load %arg2[%c8_232, %c0_233, %c0_234] : memref<9x32x4xf32, #tpu.memory_space<vmem>>, vector<1x32x4xf32>
    %292 = vector.shape_cast %291 : vector<1x32x4xf32> to vector<32x4xf32>
    %cst_235 = arith.constant dense<0.000000e+00> : vector<32x256xf32>
    %293 = tpu.matmul %292, %290, %cst_235 {dimension_numbers = #tpu.dot_dimension_numbers<[1], [0], [0], [1], [0, 0, 1, 1], [], []>} : vector<32x4xf32>, vector<4x256xf32>, vector<32x256xf32> -> vector<32x256xf32>
    %294 = arith.addf %287, %293 : vector<32x256xf32>
    %cst_236 = arith.constant 0.000000e+00 : f32
    %295 = vector.broadcast %cst_236 : f32 to vector<32x256xf32>
    %296 = arith.cmpf ogt, %294, %295 : vector<32x256xf32>
    %cst_237 = arith.constant 0.00999999977 : f32
    %297 = vector.broadcast %cst_237 : f32 to vector<32x256xf32>
    %298 = arith.mulf %297, %294 : vector<32x256xf32>
    %299 = arith.select %296, %294, %298 : vector<32x256xi1>, vector<32x256xf32>
    %c0_238 = arith.constant 0 : index
    %c128_239 = arith.constant 128 : index
    %300 = vector.load %arg6[%c0_238, %c128_239] : memref<32x512xf32, #tpu.memory_space<vmem>>, vector<32x256xf32>
    tpu.vector_store %arg6[%c0_238, %c128_239], %299 {strides = array<i32>} : memref<32x512xf32, #tpu.memory_space<vmem>>, vector<32x256xf32>,
    %cst_240 = arith.constant 0.000000e+00 : f32
    %301 = vector.broadcast %cst_240 : f32 to vector<32x256xf32>
    %c0_241 = arith.constant 0 : index
    %c111_242 = arith.constant 111 : index
    %302 = vector.load %arg6[%c0_241, %c111_242] : memref<32x512xf32, #tpu.memory_space<vmem>>, vector<32x256xf32>
    %303 = vector.broadcast %30 : vector<1x256xf32> to vector<32x256xf32>
    %304 = arith.mulf %302, %303 : vector<32x256xf32>
    %c0_243 = arith.constant 0 : index
    %c0_244 = arith.constant 0 : index
    %c0_245 = arith.constant 0 : index
    %305 = vector.load %arg3[%c0_243, %c0_244, %c0_245] : memref<9x32x32xf32, #tpu.memory_space<vmem>>, vector<1x32x32xf32>
    %306 = vector.shape_cast %305 : vector<1x32x32xf32> to vector<32x32xf32>
    %cst_246 = arith.constant dense<0.000000e+00> : vector<32x256xf32>
    %307 = tpu.matmul %306, %304, %cst_246 {dimension_numbers = #tpu.dot_dimension_numbers<[1], [0], [0], [1], [0, 0, 1, 1], [], []>} : vector<32x32xf32>, vector<32x256xf32>, vector<32x256xf32> -> vector<32x256xf32>
    %308 = arith.addf %301, %307 : vector<32x256xf32>
    %c0_247 = arith.constant 0 : index
    %c112_248 = arith.constant 112 : index
    %309 = vector.load %arg6[%c0_247, %c112_248] : memref<32x512xf32, #tpu.memory_space<vmem>>, vector<32x256xf32>
    %c1_249 = arith.constant 1 : index
    %c0_250 = arith.constant 0 : index
    %c0_251 = arith.constant 0 : index
    %310 = vector.load %arg3[%c1_249, %c0_250, %c0_251] : memref<9x32x32xf32, #tpu.memory_space<vmem>>, vector<1x32x32xf32>
    %311 = vector.shape_cast %310 : vector<1x32x32xf32> to vector<32x32xf32>
    %cst_252 = arith.constant dense<0.000000e+00> : vector<32x256xf32>
    %312 = tpu.matmul %311, %309, %cst_252 {dimension_numbers = #tpu.dot_dimension_numbers<[1], [0], [0], [1], [0, 0, 1, 1], [], []>} : vector<32x32xf32>, vector<32x256xf32>, vector<32x256xf32> -> vector<32x256xf32>
    %313 = arith.addf %308, %312 : vector<32x256xf32>
    %c0_253 = arith.constant 0 : index
    %c113_254 = arith.constant 113 : index
    %314 = vector.load %arg6[%c0_253, %c113_254] : memref<32x512xf32, #tpu.memory_space<vmem>>, vector<32x256xf32>
    %315 = vector.broadcast %41 : vector<1x256xf32> to vector<32x256xf32>
    %316 = arith.mulf %314, %315 : vector<32x256xf32>
    %c2_255 = arith.constant 2 : index
    %c0_256 = arith.constant 0 : index
    %c0_257 = arith.constant 0 : index
    %317 = vector.load %arg3[%c2_255, %c0_256, %c0_257] : memref<9x32x32xf32, #tpu.memory_space<vmem>>, vector<1x32x32xf32>
    %318 = vector.shape_cast %317 : vector<1x32x32xf32> to vector<32x32xf32>
    %cst_258 = arith.constant dense<0.000000e+00> : vector<32x256xf32>
    %319 = tpu.matmul %318, %316, %cst_258 {dimension_numbers = #tpu.dot_dimension_numbers<[1], [0], [0], [1], [0, 0, 1, 1], [], []>} : vector<32x32xf32>, vector<32x256xf32>, vector<32x256xf32> -> vector<32x256xf32>
    %320 = arith.addf %313, %319 : vector<32x256xf32>
    %c0_259 = arith.constant 0 : index
    %c127_260 = arith.constant 127 : index
    %321 = vector.load %arg6[%c0_259, %c127_260] : memref<32x512xf32, #tpu.memory_space<vmem>>, vector<32x256xf32>
    %322 = vector.broadcast %30 : vector<1x256xf32> to vector<32x256xf32>
    %323 = arith.mulf %321, %322 : vector<32x256xf32>
    %c3_261 = arith.constant 3 : index
    %c0_262 = arith.constant 0 : index
    %c0_263 = arith.constant 0 : index
    %324 = vector.load %arg3[%c3_261, %c0_262, %c0_263] : memref<9x32x32xf32, #tpu.memory_space<vmem>>, vector<1x32x32xf32>
    %325 = vector.shape_cast %324 : vector<1x32x32xf32> to vector<32x32xf32>
    %cst_264 = arith.constant dense<0.000000e+00> : vector<32x256xf32>
    %326 = tpu.matmul %325, %323, %cst_264 {dimension_numbers = #tpu.dot_dimension_numbers<[1], [0], [0], [1], [0, 0, 1, 1], [], []>} : vector<32x32xf32>, vector<32x256xf32>, vector<32x256xf32> -> vector<32x256xf32>
    %327 = arith.addf %320, %326 : vector<32x256xf32>
    %c0_265 = arith.constant 0 : index
    %c128_266 = arith.constant 128 : index
    %328 = vector.load %arg6[%c0_265, %c128_266] : memref<32x512xf32, #tpu.memory_space<vmem>>, vector<32x256xf32>
    %c4_267 = arith.constant 4 : index
    %c0_268 = arith.constant 0 : index
    %c0_269 = arith.constant 0 : index
    %329 = vector.load %arg3[%c4_267, %c0_268, %c0_269] : memref<9x32x32xf32, #tpu.memory_space<vmem>>, vector<1x32x32xf32>
    %330 = vector.shape_cast %329 : vector<1x32x32xf32> to vector<32x32xf32>
    %cst_270 = arith.constant dense<0.000000e+00> : vector<32x256xf32>
    %331 = tpu.matmul %330, %328, %cst_270 {dimension_numbers = #tpu.dot_dimension_numbers<[1], [0], [0], [1], [0, 0, 1, 1], [], []>} : vector<32x32xf32>, vector<32x256xf32>, vector<32x256xf32> -> vector<32x256xf32>
    %332 = arith.addf %327, %331 : vector<32x256xf32>
    %c0_271 = arith.constant 0 : index
    %c129_272 = arith.constant 129 : index
    %333 = vector.load %arg6[%c0_271, %c129_272] : memref<32x512xf32, #tpu.memory_space<vmem>>, vector<32x256xf32>
    %334 = vector.broadcast %41 : vector<1x256xf32> to vector<32x256xf32>
    %335 = arith.mulf %333, %334 : vector<32x256xf32>
    %c5_273 = arith.constant 5 : index
    %c0_274 = arith.constant 0 : index
    %c0_275 = arith.constant 0 : index
    %336 = vector.load %arg3[%c5_273, %c0_274, %c0_275] : memref<9x32x32xf32, #tpu.memory_space<vmem>>, vector<1x32x32xf32>
    %337 = vector.shape_cast %336 : vector<1x32x32xf32> to vector<32x32xf32>
    %cst_276 = arith.constant dense<0.000000e+00> : vector<32x256xf32>
    %338 = tpu.matmul %337, %335, %cst_276 {dimension_numbers = #tpu.dot_dimension_numbers<[1], [0], [0], [1], [0, 0, 1, 1], [], []>} : vector<32x32xf32>, vector<32x256xf32>, vector<32x256xf32> -> vector<32x256xf32>
    %339 = arith.addf %332, %338 : vector<32x256xf32>
    %c0_277 = arith.constant 0 : index
    %c143_278 = arith.constant 143 : index
    %340 = vector.load %arg6[%c0_277, %c143_278] : memref<32x512xf32, #tpu.memory_space<vmem>>, vector<32x256xf32>
    %341 = vector.broadcast %30 : vector<1x256xf32> to vector<32x256xf32>
    %342 = arith.mulf %340, %341 : vector<32x256xf32>
    %c6_279 = arith.constant 6 : index
    %c0_280 = arith.constant 0 : index
    %c0_281 = arith.constant 0 : index
    %343 = vector.load %arg3[%c6_279, %c0_280, %c0_281] : memref<9x32x32xf32, #tpu.memory_space<vmem>>, vector<1x32x32xf32>
    %344 = vector.shape_cast %343 : vector<1x32x32xf32> to vector<32x32xf32>
    %cst_282 = arith.constant dense<0.000000e+00> : vector<32x256xf32>
    %345 = tpu.matmul %344, %342, %cst_282 {dimension_numbers = #tpu.dot_dimension_numbers<[1], [0], [0], [1], [0, 0, 1, 1], [], []>} : vector<32x32xf32>, vector<32x256xf32>, vector<32x256xf32> -> vector<32x256xf32>
    %346 = arith.addf %339, %345 : vector<32x256xf32>
    %c0_283 = arith.constant 0 : index
    %c144_284 = arith.constant 144 : index
    %347 = vector.load %arg6[%c0_283, %c144_284] : memref<32x512xf32, #tpu.memory_space<vmem>>, vector<32x256xf32>
    %c7_285 = arith.constant 7 : index
    %c0_286 = arith.constant 0 : index
    %c0_287 = arith.constant 0 : index
    %348 = vector.load %arg3[%c7_285, %c0_286, %c0_287] : memref<9x32x32xf32, #tpu.memory_space<vmem>>, vector<1x32x32xf32>
    %349 = vector.shape_cast %348 : vector<1x32x32xf32> to vector<32x32xf32>
    %cst_288 = arith.constant dense<0.000000e+00> : vector<32x256xf32>
    %350 = tpu.matmul %349, %347, %cst_288 {dimension_numbers = #tpu.dot_dimension_numbers<[1], [0], [0], [1], [0, 0, 1, 1], [], []>} : vector<32x32xf32>, vector<32x256xf32>, vector<32x256xf32> -> vector<32x256xf32>
    %351 = arith.addf %346, %350 : vector<32x256xf32>
    %c0_289 = arith.constant 0 : index
    %c145_290 = arith.constant 145 : index
    %352 = vector.load %arg6[%c0_289, %c145_290] : memref<32x512xf32, #tpu.memory_space<vmem>>, vector<32x256xf32>
    %353 = vector.broadcast %41 : vector<1x256xf32> to vector<32x256xf32>
    %354 = arith.mulf %352, %353 : vector<32x256xf32>
    %c8_291 = arith.constant 8 : index
    %c0_292 = arith.constant 0 : index
    %c0_293 = arith.constant 0 : index
    %355 = vector.load %arg3[%c8_291, %c0_292, %c0_293] : memref<9x32x32xf32, #tpu.memory_space<vmem>>, vector<1x32x32xf32>
    %356 = vector.shape_cast %355 : vector<1x32x32xf32> to vector<32x32xf32>
    %cst_294 = arith.constant dense<0.000000e+00> : vector<32x256xf32>
    %357 = tpu.matmul %356, %354, %cst_294 {dimension_numbers = #tpu.dot_dimension_numbers<[1], [0], [0], [1], [0, 0, 1, 1], [], []>} : vector<32x32xf32>, vector<32x256xf32>, vector<32x256xf32> -> vector<32x256xf32>
    %358 = arith.addf %351, %357 : vector<32x256xf32>
    %cst_295 = arith.constant 0.000000e+00 : f32
    %359 = vector.broadcast %cst_295 : f32 to vector<32x256xf32>
    %360 = arith.cmpf ogt, %358, %359 : vector<32x256xf32>
    %cst_296 = arith.constant 0.00999999977 : f32
    %361 = vector.broadcast %cst_296 : f32 to vector<32x256xf32>
    %362 = arith.mulf %361, %358 : vector<32x256xf32>
    %363 = arith.select %360, %358, %362 : vector<32x256xi1>, vector<32x256xf32>
    %c0_297 = arith.constant 0 : index
    %c128_298 = arith.constant 128 : index
    %364 = vector.load %arg6[%c0_297, %c128_298] : memref<32x512xf32, #tpu.memory_space<vmem>>, vector<32x256xf32>
    tpu.vector_store %arg6[%c0_297, %c128_298], %363 {strides = array<i32>} : memref<32x512xf32, #tpu.memory_space<vmem>>, vector<32x256xf32>,
    %cst_299 = arith.constant 0.000000e+00 : f32
    %365 = vector.broadcast %cst_299 : f32 to vector<4x256xf32>
    %c0_300 = arith.constant 0 : index
    %c111_301 = arith.constant 111 : index
    %366 = vector.load %arg6[%c0_300, %c111_301] : memref<32x512xf32, #tpu.memory_space<vmem>>, vector<32x256xf32>
    %367 = vector.broadcast %30 : vector<1x256xf32> to vector<32x256xf32>
    %368 = arith.mulf %366, %367 : vector<32x256xf32>
    %c0_302 = arith.constant 0 : index
    %c0_303 = arith.constant 0 : index
    %c0_304 = arith.constant 0 : index
    %369 = vector.load %arg4[%c0_302, %c0_303, %c0_304] : memref<9x4x32xf32, #tpu.memory_space<vmem>>, vector<1x4x32xf32>
    %370 = vector.shape_cast %369 : vector<1x4x32xf32> to vector<4x32xf32>
    %cst_305 = arith.constant dense<0.000000e+00> : vector<4x256xf32>
    %371 = tpu.matmul %370, %368, %cst_305 {dimension_numbers = #tpu.dot_dimension_numbers<[1], [0], [0], [1], [0, 0, 1, 1], [], []>} : vector<4x32xf32>, vector<32x256xf32>, vector<4x256xf32> -> vector<4x256xf32>
    %372 = arith.addf %365, %371 : vector<4x256xf32>
    %c0_306 = arith.constant 0 : index
    %c112_307 = arith.constant 112 : index
    %373 = vector.load %arg6[%c0_306, %c112_307] : memref<32x512xf32, #tpu.memory_space<vmem>>, vector<32x256xf32>
    %c1_308 = arith.constant 1 : index
    %c0_309 = arith.constant 0 : index
    %c0_310 = arith.constant 0 : index
    %374 = vector.load %arg4[%c1_308, %c0_309, %c0_310] : memref<9x4x32xf32, #tpu.memory_space<vmem>>, vector<1x4x32xf32>
    %375 = vector.shape_cast %374 : vector<1x4x32xf32> to vector<4x32xf32>
    %cst_311 = arith.constant dense<0.000000e+00> : vector<4x256xf32>
    %376 = tpu.matmul %375, %373, %cst_311 {dimension_numbers = #tpu.dot_dimension_numbers<[1], [0], [0], [1], [0, 0, 1, 1], [], []>} : vector<4x32xf32>, vector<32x256xf32>, vector<4x256xf32> -> vector<4x256xf32>
    %377 = arith.addf %372, %376 : vector<4x256xf32>
    %c0_312 = arith.constant 0 : index
    %c113_313 = arith.constant 113 : index
    %378 = vector.load %arg6[%c0_312, %c113_313] : memref<32x512xf32, #tpu.memory_space<vmem>>, vector<32x256xf32>
    %379 = vector.broadcast %41 : vector<1x256xf32> to vector<32x256xf32>
    %380 = arith.mulf %378, %379 : vector<32x256xf32>
    %c2_314 = arith.constant 2 : index
    %c0_315 = arith.constant 0 : index
    %c0_316 = arith.constant 0 : index
    %381 = vector.load %arg4[%c2_314, %c0_315, %c0_316] : memref<9x4x32xf32, #tpu.memory_space<vmem>>, vector<1x4x32xf32>
    %382 = vector.shape_cast %381 : vector<1x4x32xf32> to vector<4x32xf32>
    %cst_317 = arith.constant dense<0.000000e+00> : vector<4x256xf32>
    %383 = tpu.matmul %382, %380, %cst_317 {dimension_numbers = #tpu.dot_dimension_numbers<[1], [0], [0], [1], [0, 0, 1, 1], [], []>} : vector<4x32xf32>, vector<32x256xf32>, vector<4x256xf32> -> vector<4x256xf32>
    %384 = arith.addf %377, %383 : vector<4x256xf32>
    %c0_318 = arith.constant 0 : index
    %c127_319 = arith.constant 127 : index
    %385 = vector.load %arg6[%c0_318, %c127_319] : memref<32x512xf32, #tpu.memory_space<vmem>>, vector<32x256xf32>
    %386 = vector.broadcast %30 : vector<1x256xf32> to vector<32x256xf32>
    %387 = arith.mulf %385, %386 : vector<32x256xf32>
    %c3_320 = arith.constant 3 : index
    %c0_321 = arith.constant 0 : index
    %c0_322 = arith.constant 0 : index
    %388 = vector.load %arg4[%c3_320, %c0_321, %c0_322] : memref<9x4x32xf32, #tpu.memory_space<vmem>>, vector<1x4x32xf32>
    %389 = vector.shape_cast %388 : vector<1x4x32xf32> to vector<4x32xf32>
    %cst_323 = arith.constant dense<0.000000e+00> : vector<4x256xf32>
    %390 = tpu.matmul %389, %387, %cst_323 {dimension_numbers = #tpu.dot_dimension_numbers<[1], [0], [0], [1], [0, 0, 1, 1], [], []>} : vector<4x32xf32>, vector<32x256xf32>, vector<4x256xf32> -> vector<4x256xf32>
    %391 = arith.addf %384, %390 : vector<4x256xf32>
    %c0_324 = arith.constant 0 : index
    %c128_325 = arith.constant 128 : index
    %392 = vector.load %arg6[%c0_324, %c128_325] : memref<32x512xf32, #tpu.memory_space<vmem>>, vector<32x256xf32>
    %c4_326 = arith.constant 4 : index
    %c0_327 = arith.constant 0 : index
    %c0_328 = arith.constant 0 : index
    %393 = vector.load %arg4[%c4_326, %c0_327, %c0_328] : memref<9x4x32xf32, #tpu.memory_space<vmem>>, vector<1x4x32xf32>
    %394 = vector.shape_cast %393 : vector<1x4x32xf32> to vector<4x32xf32>
    %cst_329 = arith.constant dense<0.000000e+00> : vector<4x256xf32>
    %395 = tpu.matmul %394, %392, %cst_329 {dimension_numbers = #tpu.dot_dimension_numbers<[1], [0], [0], [1], [0, 0, 1, 1], [], []>} : vector<4x32xf32>, vector<32x256xf32>, vector<4x256xf32> -> vector<4x256xf32>
    %396 = arith.addf %391, %395 : vector<4x256xf32>
    %c0_330 = arith.constant 0 : index
    %c129_331 = arith.constant 129 : index
    %397 = vector.load %arg6[%c0_330, %c129_331] : memref<32x512xf32, #tpu.memory_space<vmem>>, vector<32x256xf32>
    %398 = vector.broadcast %41 : vector<1x256xf32> to vector<32x256xf32>
    %399 = arith.mulf %397, %398 : vector<32x256xf32>
    %c5_332 = arith.constant 5 : index
    %c0_333 = arith.constant 0 : index
    %c0_334 = arith.constant 0 : index
    %400 = vector.load %arg4[%c5_332, %c0_333, %c0_334] : memref<9x4x32xf32, #tpu.memory_space<vmem>>, vector<1x4x32xf32>
    %401 = vector.shape_cast %400 : vector<1x4x32xf32> to vector<4x32xf32>
    %cst_335 = arith.constant dense<0.000000e+00> : vector<4x256xf32>
    %402 = tpu.matmul %401, %399, %cst_335 {dimension_numbers = #tpu.dot_dimension_numbers<[1], [0], [0], [1], [0, 0, 1, 1], [], []>} : vector<4x32xf32>, vector<32x256xf32>, vector<4x256xf32> -> vector<4x256xf32>
    %403 = arith.addf %396, %402 : vector<4x256xf32>
    %c0_336 = arith.constant 0 : index
    %c143_337 = arith.constant 143 : index
    %404 = vector.load %arg6[%c0_336, %c143_337] : memref<32x512xf32, #tpu.memory_space<vmem>>, vector<32x256xf32>
    %405 = vector.broadcast %30 : vector<1x256xf32> to vector<32x256xf32>
    %406 = arith.mulf %404, %405 : vector<32x256xf32>
    %c6_338 = arith.constant 6 : index
    %c0_339 = arith.constant 0 : index
    %c0_340 = arith.constant 0 : index
    %407 = vector.load %arg4[%c6_338, %c0_339, %c0_340] : memref<9x4x32xf32, #tpu.memory_space<vmem>>, vector<1x4x32xf32>
    %408 = vector.shape_cast %407 : vector<1x4x32xf32> to vector<4x32xf32>
    %cst_341 = arith.constant dense<0.000000e+00> : vector<4x256xf32>
    %409 = tpu.matmul %408, %406, %cst_341 {dimension_numbers = #tpu.dot_dimension_numbers<[1], [0], [0], [1], [0, 0, 1, 1], [], []>} : vector<4x32xf32>, vector<32x256xf32>, vector<4x256xf32> -> vector<4x256xf32>
    %410 = arith.addf %403, %409 : vector<4x256xf32>
    %c0_342 = arith.constant 0 : index
    %c144_343 = arith.constant 144 : index
    %411 = vector.load %arg6[%c0_342, %c144_343] : memref<32x512xf32, #tpu.memory_space<vmem>>, vector<32x256xf32>
    %c7_344 = arith.constant 7 : index
    %c0_345 = arith.constant 0 : index
    %c0_346 = arith.constant 0 : index
    %412 = vector.load %arg4[%c7_344, %c0_345, %c0_346] : memref<9x4x32xf32, #tpu.memory_space<vmem>>, vector<1x4x32xf32>
    %413 = vector.shape_cast %412 : vector<1x4x32xf32> to vector<4x32xf32>
    %cst_347 = arith.constant dense<0.000000e+00> : vector<4x256xf32>
    %414 = tpu.matmul %413, %411, %cst_347 {dimension_numbers = #tpu.dot_dimension_numbers<[1], [0], [0], [1], [0, 0, 1, 1], [], []>} : vector<4x32xf32>, vector<32x256xf32>, vector<4x256xf32> -> vector<4x256xf32>
    %415 = arith.addf %410, %414 : vector<4x256xf32>
    %c0_348 = arith.constant 0 : index
    %c145_349 = arith.constant 145 : index
    %416 = vector.load %arg6[%c0_348, %c145_349] : memref<32x512xf32, #tpu.memory_space<vmem>>, vector<32x256xf32>
    %417 = vector.broadcast %41 : vector<1x256xf32> to vector<32x256xf32>
    %418 = arith.mulf %416, %417 : vector<32x256xf32>
    %c8_350 = arith.constant 8 : index
    %c0_351 = arith.constant 0 : index
    %c0_352 = arith.constant 0 : index
    %419 = vector.load %arg4[%c8_350, %c0_351, %c0_352] : memref<9x4x32xf32, #tpu.memory_space<vmem>>, vector<1x4x32xf32>
    %420 = vector.shape_cast %419 : vector<1x4x32xf32> to vector<4x32xf32>
    %cst_353 = arith.constant dense<0.000000e+00> : vector<4x256xf32>
    %421 = tpu.matmul %420, %418, %cst_353 {dimension_numbers = #tpu.dot_dimension_numbers<[1], [0], [0], [1], [0, 0, 1, 1], [], []>} : vector<4x32xf32>, vector<32x256xf32>, vector<4x256xf32> -> vector<4x256xf32>
    %422 = arith.addf %415, %421 : vector<4x256xf32>
    %c1_354 = arith.constant 1 : index
    %c0_355 = arith.constant 0 : index
    %c0_356 = arith.constant 0 : index
    %423 = vector.load %arg5[%c1_354, %c0_355, %c0_356] : memref<2x4x256xf32, #tpu.memory_space<vmem>>, vector<1x4x256xf32>
    %424 = vector.shape_cast %423 : vector<1x4x256xf32> to vector<4x256xf32>
    %425 = vector.shape_cast %422 : vector<4x256xf32> to vector<1x4x256xf32>
    tpu.vector_store %arg5[%c1_354, %c0_355, %c0_356], %425 {strides = array<i32>} : memref<2x4x256xf32, #tpu.memory_space<vmem>>, vector<1x4x256xf32>,
    return
  }
  func.func @transform_0(%arg0: i32) -> (i32, i32, i32) {
    %c0_i32 = arith.constant 0 : i32
    %c0_i32_0 = arith.constant 0 : i32
    %c0_i32_1 = arith.constant 0 : i32
    return %arg0, %c0_i32, %c0_i32_0 : i32, i32, i32
  }
  func.func @transform_1(%arg0: i32) -> (i32, i32, i32) {
    %c0_i32 = arith.constant 0 : i32
    %c0_i32_0 = arith.constant 0 : i32
    %c0_i32_1 = arith.constant 0 : i32
    %c0_i32_2 = arith.constant 0 : i32
    return %c0_i32, %c0_i32_0, %c0_i32_1 : i32, i32, i32
  }
  func.func @transform_2(%arg0: i32) -> (i32, i32, i32) {
    %c0_i32 = arith.constant 0 : i32
    %c0_i32_0 = arith.constant 0 : i32
    %c0_i32_1 = arith.constant 0 : i32
    %c0_i32_2 = arith.constant 0 : i32
    return %c0_i32, %c0_i32_0, %c0_i32_1 : i32, i32, i32
  }
  func.func @transform_3(%arg0: i32) -> (i32, i32, i32) {
    %c0_i32 = arith.constant 0 : i32
    %c0_i32_0 = arith.constant 0 : i32
    %c0_i32_1 = arith.constant 0 : i32
    %c0_i32_2 = arith.constant 0 : i32
    return %c0_i32, %c0_i32_0, %c0_i32_1 : i32, i32, i32
  }
  func.func @transform_4(%arg0: i32) -> (i32, i32, i32) {
    %c0_i32 = arith.constant 0 : i32
    %c0_i32_0 = arith.constant 0 : i32
    %c0_i32_1 = arith.constant 0 : i32
    return %arg0, %c0_i32, %c0_i32_0 : i32, i32, i32
  }
}

</mosaic_0001>

<llo_original>
// kernel: timerevnet_forward.1
$region0: #{timerevnet_forward.1}
  #allocation0 [shape = 'u32[]', space=smem, size = 0x4, offset = 0x4, fixed_abs, tag = 'smem constant byte address 0x4 - core index']
  #allocation1 [shape = 'u32[144,128]{1,0:T(1,128)}', space=vmem, size = 0x12000, scoped, tag = 'internal scratch']
  #allocation2 [shape = 'f32[32,512]{1,0:T(8,128)}', space=vmem, size = 0x10000, scoped, tag = 'scratch operand']
  %s0 = inlined_call_operand.vmem [shape: f32[2,4,256], index: 0, kind: input, shape index: {}]
  %s1 = inlined_call_operand.vmem [shape: f32[9,32,4], index: 1, kind: input, shape index: {}]
  %s2 = inlined_call_operand.vmem [shape: f32[9,32,32], index: 2, kind: input, shape index: {}]
  %s3 = inlined_call_operand.vmem [shape: f32[9,4,32], index: 3, kind: input, shape index: {}]
  %s4 = inlined_call_operand.vmem [shape: f32[2,4,256], index: 4, kind: output, shape index: {}]
  %s5 = sld [smem:[#allocation0]]
  $region26: #{timerevnet_forward.1} parent=0
    _
  %s7 = ssub.s32 1, %s5
  %s8 = scalar_select 0, %s7, %s5
  // Predicated region
  $region2: #{timerevnet_forward.1} parent=0 // pred_check
    _
  $region3: #{timerevnet_forward.1} parent=0 // pred_check_branch
    %10 = sbr.rel (0) target = $region5
  $region4: #{timerevnet_forward.1} parent=0 // pred_region
    _
  $region5: #{timerevnet_forward.1} parent=0 // pred_fallthru
    _
  // Predicated region
  $region6: #{timerevnet_forward.1} parent=0 // pred_check
    _
  $region7: #{timerevnet_forward.1} parent=0 // pred_check_branch
    %12 = sbr.rel (0) target = $region9
  $region8: #{timerevnet_forward.1} parent=0 // pred_region
    _
  $region9: #{timerevnet_forward.1} parent=0 // pred_fallthru
    _
  // Predicated region
  $region10: #{timerevnet_forward.1} parent=0 // pred_check
    _
  $region11: #{timerevnet_forward.1} parent=0 // pred_check_branch
    %14 = sbr.rel (0) target = $region13
  $region12: #{timerevnet_forward.1} parent=0 // pred_region
    _
  $region13: #{timerevnet_forward.1} parent=0 // pred_fallthru
    _
  // Predicated region
  $region14: #{timerevnet_forward.1} parent=0 // pred_check
    _
  $region15: #{timerevnet_forward.1} parent=0 // pred_check_branch
    %16 = sbr.rel (0) target = $region17
  $region16: #{timerevnet_forward.1} parent=0 // pred_region
    _
  $region17: #{timerevnet_forward.1} parent=0 // pred_fallthru
    _
  %17 = vst [vmem:[#allocation2] sm:$0xff] 0.0
  %18 = vst [vmem:[#allocation2 + $0x20] sm:$0xff] 0.0
  %19 = vst [vmem:[#allocation2 + $0x40] sm:$0xff] 0.0
  %20 = vst [vmem:[#allocation2 + $0x60] sm:$0xff] 0.0
  %21 = vst [vmem:[#allocation2 + $0x18] sm:$0xff] 0.0
  %22 = vst [vmem:[#allocation2 + $0x38] sm:$0xff] 0.0
  %23 = vst [vmem:[#allocation2 + $0x58] sm:$0xff] 0.0
  %24 = vst [vmem:[#allocation2 + $0x78] sm:$0xff] 0.0
  %v25 = vlaneseq
  %v26 = vand.u32 %v25, 127
  %v27 = vadd.s32 %v26, 128
  %vm28 = vcmp.lt.s32.totalorder %v26, 0
  %v29 = vsub.s32 0, %v26
  %v30 = vsel %vm28, %v29, %v26
  %v31 = vshrl.u32 %v30, 4
  %v32 = vand.u32 %v30, 15
  %v33 = vsub.s32 0, %v32
  %v34 = vsel %vm28, %v33, %v32
  %vm35 = vcmp.lt.s32.totalorder %v27, 0
  %v36 = vsub.s32 0, %v27
  %v37 = vsel %vm35, %v36, %v27
  %v38 = vshrl.u32 %v37, 4
  %v39 = vand.u32 %v37, 15
  %v40 = vsub.s32 0, %v39
  %v41 = vsel %vm35, %v40, %v39
  %vm42 = vcmp.ne.s32.totalorder %v34, 0
  %vm43 = vcmp.ne.s32.totalorder %v41, 0
  %vm44 = vcmp.lt.s32.totalorder %v34, 0
  %vm45 = vcmp.lt.s32.totalorder %v41, 0
  %vm46 = vmand %vm44, %vm42
  %vm47 = vmand %vm45, %vm43
  %v48 = vadd.s32 %v34, 16
  %v49 = vadd.s32 %v41, 16
  %v50 = vsel %vm46, %v48, %v34
  %v51 = vsel %vm47, %v49, %v41
  %v52 = vadd.s32 %v50, 4294967295
  %v53 = vadd.s32 %v51, 4294967295
  %vm54 = vcmp.ge.s32.totalorder %v52, 0
  %vm55 = vcmp.ge.s32.totalorder %v53, 0
  %vm56 = vcmp.lt.s32.totalorder %v52, 16
  %vm57 = vcmp.lt.s32.totalorder %v53, 16
  %vm58 = vmand %vm54, %vm56
  %vm59 = vmand %vm55, %vm57
  %v60 = vsel %vm58, 1, 0
  %v61 = vsel %vm59, 1, 0
  %v62 = vcvt.s32.f32 %v60
  %v63 = vcvt.s32.f32 %v61
  %v64 = vadd.s32 %v50, 1
  %v65 = vadd.s32 %v51, 1
  %vm66 = vcmp.ge.s32.totalorder %v64, 0
  %vm67 = vcmp.ge.s32.totalorder %v65, 0
  %vm68 = vcmp.lt.s32.totalorder %v64, 16
  %vm69 = vcmp.lt.s32.totalorder %v65, 16
  %vm70 = vmand %vm66, %vm68
  %vm71 = vmand %vm67, %vm69
  %v72 = vsel %vm70, 1, 0
  %v73 = vsel %vm71, 1, 0
  %v74 = vcvt.s32.f32 %v72
  %v75 = vcvt.s32.f32 %v73
  %v76 = vld [vmem:[%s0] sm:$0xff]
  %v78 = vcombine.high %v76, %v76
  %80 = vst [vmem:[#allocation2 + $0x8] sm:$0xf] %v76
  %81 = vst [vmem:[#allocation2 + $0x10] sm:$0xf] %v78
  %v82 = vld [vmem:[#allocation2] sm:$0xf]
  %v83 = vld [vmem:[#allocation2 + $0x8] sm:$0xf]
  %v84 = vld [vmem:[#allocation2 + $0x10] sm:$0xf]
  %87 = vrot.lane.b32.xlu0 %v62, 111
  %v88 = vpop.permute.xlu0 %87
  %89 = vrot.lane.b32.xlu0 %v63, 111
  %v90 = vpop.permute.xlu0 %89
  %vm91 = vcmask 908288
  %v92 = vsel %vm91, %v88, %v90
  %v96 = vmul.f32 %v82, %v88
  %v97 = vmul.f32 %v83, %v92
  %v98 = vmul.f32 %v84, %v90
  %v99 = vld [vmem:[%s1] sm:$0xff]
  %v100 = vld [vmem:[%s1 + $0x8] sm:$0xff]
  %v101 = vld [vmem:[%s1 + $0x10] sm:$0xff]
  %v102 = vld [vmem:[%s1 + $0x18] sm:$0xff]
  %s103 = scalar_lea.vmem %s1, 32
  %v104 = vld [vmem:[%s103] sm:$0xff]
  %v105 = vld [vmem:[%s103 + $0x8] sm:$0xff]
  %v106 = vld [vmem:[%s103 + $0x10] sm:$0xff]
  %v107 = vld [vmem:[%s103 + $0x18] sm:$0xff]
  %111 = vrot.lane.b32.xlu0 %v82, 16
  %v112 = vpop.permute.xlu0 %111
  %113 = vrot.lane.b32.xlu0 %v83, 16
  %v114 = vpop.permute.xlu0 %113
  %115 = vrot.lane.b32.xlu0 %v84, 16
  %v116 = vpop.permute.xlu0 %115
  %vm117 = vcmask 130048
  %v118 = vsel %vm117, %v112, %v114
  %v119 = vsel %vm117, %v114, %v116
  %vm120 = vcmask 31744
  %v122 = vsel %vm120, %v104, 0
  %v125 = vsel %vm120, %v105, 0
  %v128 = vsel %vm120, %v106, 0
  %v131 = vsel %vm120, %v107, 0
  %vm133 = vcmask 1043456
  %v134 = vsel %vm133, %v118, 0
  %v136 = vsel %vm133, %v119, 0
  %138 = vmatprep.subr.mxu0 0.0
  %139 = vmatpush1.msra.mxu0 0.0
  %140 = vmatprep.subr.mxu0 0.0
  %141 = vmatpush1.msra.mxu0 0.0
  %142 = vmatprep.subr.mxu0 0.0
  %143 = vmatpush1.msra.mxu0 0.0
  %144 = vmatprep.subr.mxu0 0.0
  %145 = vmatpush1.msra.mxu0 0.0
  %146 = vmatprep.subr.mxu0 0.0
  %147 = vmatpush1.msra.mxu0 0.0
  %148 = vmatprep.subr.mxu0 0.0
  %149 = vmatpush1.msra.mxu0 0.0
  %150 = vmatprep.subr.mxu0 0.0
  %151 = vmatpush1.msra.mxu0 0.0
  %152 = vmatprep.subr.mxu0 0.0
  %153 = vmatpush1.msra.mxu0 0.0
  %154 = vmatprep.subr.mxu0 0.0
  %155 = vmatpush1.msra.mxu0 0.0
  %156 = vmatprep.subr.mxu0 0.0
  %157 = vmatpush1.msra.mxu0 0.0
  %158 = vmatprep.subr.mxu0 0.0
  %159 = vmatpush1.msra.mxu0 0.0
  %160 = vmatprep.subr.mxu0 0.0
  %161 = vmatpush1.msra.mxu0 0.0
  %162 = vmatprep.subr.mxu0 0.0
  %163 = vmatpush1.msra.mxu0 0.0
  %164 = vmatprep.subr.mxu0 0.0
  %165 = vmatpush1.msra.mxu0 0.0
  %166 = vmatprep.subr.mxu0 0.0
  %167 = vmatpush1.msra.mxu0 0.0
  %168 = vmatprep.subr.mxu0 %v136
  %169 = vmatpush1.msra.mxu0 %v134
  %170 = vmatprep.subr.mxu0 0.0
  %171 = vmatpush2.msra.mxu0 0.0
  %172 = vmatprep.subr.mxu0 0.0
  %173 = vmatpush2.msra.mxu0 0.0
  %174 = vmatprep.subr.mxu0 0.0
  %175 = vmatpush2.msra.mxu0 0.0
  %176 = vmatprep.subr.mxu0 0.0
  %177 = vmatpush2.msra.mxu0 0.0
  %178 = vmatprep.subr.mxu0 0.0
  %179 = vmatpush2.msra.mxu0 0.0
  %180 = vmatprep.subr.mxu0 0.0
  %181 = vmatpush2.msra.mxu0 0.0
  %182 = vmatprep.subr.mxu0 0.0
  %183 = vmatpush2.msra.mxu0 0.0
  %184 = vmatprep.subr.mxu0 0.0
  %185 = vmatpush2.msra.mxu0 0.0
  %186 = vmatprep.subr.mxu0 0.0
  %187 = vmatpush2.msra.mxu0 0.0
  %188 = vmatprep.subr.mxu0 0.0
  %189 = vmatpush2.msra.mxu0 0.0
  %190 = vmatprep.subr.mxu0 0.0
  %191 = vmatpush2.msra.mxu0 0.0
  %192 = vmatprep.subr.mxu0 0.0
  %193 = vmatpush2.msra.mxu0 0.0
  %194 = vmatprep.subr.mxu0 0.0
  %195 = vmatpush2.msra.mxu0 0.0
  %196 = vmatprep.subr.mxu0 0.0
  %197 = vmatpush2.msra.mxu0 0.0
  %198 = vmatprep.subr.mxu0 0.0
  %199 = vmatpush2.msra.mxu0 0.0
  %200 = vmatprep.subr.mxu0 0.0
  %201 = vmatpush2.msra.mxu0 0.0
  %202 = vmatprep.mubr.f32.mxu0 0.0
  %203 = vmatmul.mubr.f32.gmra.mxu0 %v122
  %v204 = vpop.f32.mrf.mxu0
  %v205 = vadd.f32 0.0, %v204
  %v206 = vpop.f32.mrf.mxu0
  %v207 = vadd.f32 0.0, %v206
  %208 = vmatprep.mubr.f32.mxu0 0.0
  %209 = vmatmul.mubr.f32.gmra.mxu0 %v125
  %v210 = vpop.f32.mrf.mxu0
  %v211 = vadd.f32 0.0, %v210
  %v212 = vpop.f32.mrf.mxu0
  %v213 = vadd.f32 0.0, %v212
  %214 = vmatprep.mubr.f32.mxu0 0.0
  %215 = vmatmul.mubr.f32.gmra.mxu0 %v128
  %v216 = vpop.f32.mrf.mxu0
  %v217 = vadd.f32 0.0, %v216
  %v218 = vpop.f32.mrf.mxu0
  %v219 = vadd.f32 0.0, %v218
  %220 = vmatprep.mubr.f32.mxu0 0.0
  %221 = vmatmul.mubr.f32.gmra.mxu0 %v131
  %v222 = vpop.f32.mrf.mxu0
  %v223 = vadd.f32 0.0, %v222
  %v224 = vpop.f32.mrf.mxu0
  %v225 = vadd.f32 0.0, %v224
  %226 = vdwg.mxu0
  %230 = vrot.lane.b32.xlu0 %v96, 17
  %v231 = vpop.permute.xlu0 %230
  %232 = vrot.lane.b32.xlu0 %v97, 17
  %v233 = vpop.permute.xlu0 %232
  %234 = vrot.lane.b32.xlu0 %v98, 17
  %v235 = vpop.permute.xlu0 %234
  %vm236 = vcmask 138240
  %v237 = vsel %vm236, %v231, %v233
  %v238 = vsel %vm236, %v233, %v235
  %v240 = vsel %vm120, %v99, 0
  %v243 = vsel %vm120, %v100, 0
  %v246 = vsel %vm120, %v101, 0
  %v249 = vsel %vm120, %v102, 0
  %v251 = vsel %vm133, %v237, 0
  %v253 = vsel %vm133, %v238, 0
  %255 = vmatprep.subr.mxu0 0.0
  %256 = vmatpush1.msra.mxu0 0.0
  %257 = vmatprep.subr.mxu0 0.0
  %258 = vmatpush1.msra.mxu0 0.0
  %259 = vmatprep.subr.mxu0 0.0
  %260 = vmatpush1.msra.mxu0 0.0
  %261 = vmatprep.subr.mxu0 0.0
  %262 = vmatpush1.msra.mxu0 0.0
  %263 = vmatprep.subr.mxu0 0.0
  %264 = vmatpush1.msra.mxu0 0.0
  %265 = vmatprep.subr.mxu0 0.0
  %266 = vmatpush1.msra.mxu0 0.0
  %267 = vmatprep.subr.mxu0 0.0
  %268 = vmatpush1.msra.mxu0 0.0
  %269 = vmatprep.subr.mxu0 0.0
  %270 = vmatpush1.msra.mxu0 0.0
  %271 = vmatprep.subr.mxu0 0.0
  %272 = vmatpush1.msra.mxu0 0.0
  %273 = vmatprep.subr.mxu0 0.0
  %274 = vmatpush1.msra.mxu0 0.0
  %275 = vmatprep.subr.mxu0 0.0
  %276 = vmatpush1.msra.mxu0 0.0
  %277 = vmatprep.subr.mxu0 0.0
  %278 = vmatpush1.msra.mxu0 0.0
  %279 = vmatprep.subr.mxu0 0.0
  %280 = vmatpush1.msra.mxu0 0.0
  %281 = vmatprep.subr.mxu0 0.0
  %282 = vmatpush1.msra.mxu0 0.0
  %283 = vmatprep.subr.mxu0 0.0
  %284 = vmatpush1.msra.mxu0 0.0
  %285 = vmatprep.subr.mxu0 %v253
  %286 = vmatpush1.msra.mxu0 %v251
  %287 = vmatprep.subr.mxu0 0.0
  %288 = vmatpush2.msra.mxu0 0.0
  %289 = vmatprep.subr.mxu0 0.0
  %290 = vmatpush2.msra.mxu0 0.0
  %291 = vmatprep.subr.mxu0 0.0
  %292 = vmatpush2.msra.mxu0 0.0
  %293 = vmatprep.subr.mxu0 0.0
  %294 = vmatpush2.msra.mxu0 0.0
  %295 = vmatprep.subr.mxu0 0.0
  %296 = vmatpush2.msra.mxu0 0.0
  %297 = vmatprep.subr.mxu0 0.0
  %298 = vmatpush2.msra.mxu0 0.0
  %299 = vmatprep.subr.mxu0 0.0
  %300 = vmatpush2.msra.mxu0 0.0
  %301 = vmatprep.subr.mxu0 0.0
  %302 = vmatpush2.msra.mxu0 0.0
  %303 = vmatprep.subr.mxu0 0.0
  %304 = vmatpush2.msra.mxu0 0.0
  %305 = vmatprep.subr.mxu0 0.0
  %306 = vmatpush2.msra.mxu0 0.0
  %307 = vmatprep.subr.mxu0 0.0
  %308 = vmatpush2.msra.mxu0 0.0
  %309 = vmatprep.subr.mxu0 0.0
  %310 = vmatpush2.msra.mxu0 0.0
  %311 = vmatprep.subr.mxu0 0.0
  %312 = vmatpush2.msra.mxu0 0.0
  %313 = vmatprep.subr.mxu0 0.0
  %314 = vmatpush2.msra.mxu0 0.0
  %315 = vmatprep.subr.mxu0 0.0
  %316 = vmatpush2.msra.mxu0 0.0
  %317 = vmatprep.subr.mxu0 0.0
  %318 = vmatpush2.msra.mxu0 0.0
  %319 = vmatprep.mubr.f32.mxu0 0.0
  %320 = vmatmul.mubr.f32.gmra.mxu0 %v240
  %v321 = vpop.f32.mrf.mxu0
  %v322 = vadd.f32 %v205, %v321
  %v323 = vpop.f32.mrf.mxu0
  %v324 = vadd.f32 %v207, %v323
  %325 = vmatprep.mubr.f32.mxu0 0.0
  %326 = vmatmul.mubr.f32.gmra.mxu0 %v243
  %v327 = vpop.f32.mrf.mxu0
  %v328 = vadd.f32 %v211, %v327
  %v329 = vpop.f32.mrf.mxu0
  %v330 = vadd.f32 %v213, %v329
  %331 = vmatprep.mubr.f32.mxu0 0.0
  %332 = vmatmul.mubr.f32.gmra.mxu0 %v246
  %v333 = vpop.f32.mrf.mxu0
  %v334 = vadd.f32 %v217, %v333
  %v335 = vpop.f32.mrf.mxu0
  %v336 = vadd.f32 %v219, %v335
  %337 = vmatprep.mubr.f32.mxu0 0.0
  %338 = vmatmul.mubr.f32.gmra.mxu0 %v249
  %v339 = vpop.f32.mrf.mxu0
  %v340 = vadd.f32 %v223, %v339
  %v341 = vpop.f32.mrf.mxu0
  %v342 = vadd.f32 %v225, %v341
  %343 = vdwg.mxu0
  %346 = vrot.lane.b32.xlu0 %v74, 113
  %v347 = vpop.permute.xlu0 %346
  %348 = vrot.lane.b32.xlu0 %v75, 113
  %v349 = vpop.permute.xlu0 %348
  %vm350 = vcmask 924672
  %v351 = vsel %vm350, %v347, %v349
  %v355 = vmul.f32 %v82, %v347
  %v356 = vmul.f32 %v83, %v351
  %v357 = vmul.f32 %v84, %v349
  %s358 = scalar_lea.vmem %s1, 64
  %v359 = vld [vmem:[%s358] sm:$0xff]
  %v360 = vld [vmem:[%s358 + $0x8] sm:$0xff]
  %v361 = vld [vmem:[%s358 + $0x10] sm:$0xff]
  %v362 = vld [vmem:[%s358 + $0x18] sm:$0xff]
  %366 = vrot.lane.b32.xlu0 %v355, 15
  %v367 = vpop.permute.xlu0 %366
  %368 = vrot.lane.b32.xlu0 %v356, 15
  %v369 = vpop.permute.xlu0 %368
  %370 = vrot.lane.b32.xlu0 %v357, 15
  %v371 = vpop.permute.xlu0 %370
  %vm372 = vcmask 121856
  %v373 = vsel %vm372, %v367, %v369
  %v374 = vsel %vm372, %v369, %v371
  %v376 = vsel %vm120, %v359, 0
  %v379 = vsel %vm120, %v360, 0
  %v382 = vsel %vm120, %v361, 0
  %v385 = vsel %vm120, %v362, 0
  %v387 = vsel %vm133, %v373, 0
  %v389 = vsel %vm133, %v374, 0
  %391 = vmatprep.subr.mxu0 0.0
  %392 = vmatpush1.msra.mxu0 0.0
  %393 = vmatprep.subr.mxu0 0.0
  %394 = vmatpush1.msra.mxu0 0.0
  %395 = vmatprep.subr.mxu0 0.0
  %396 = vmatpush1.msra.mxu0 0.0
  %397 = vmatprep.subr.mxu0 0.0
  %398 = vmatpush1.msra.mxu0 0.0
  %399 = vmatprep.subr.mxu0 0.0
  %400 = vmatpush1.msra.mxu0 0.0
  %401 = vmatprep.subr.mxu0 0.0
  %402 = vmatpush1.msra.mxu0 0.0
  %403 = vmatprep.subr.mxu0 0.0
  %404 = vmatpush1.msra.mxu0 0.0
  %405 = vmatprep.subr.mxu0 0.0
  %406 = vmatpush1.msra.mxu0 0.0
  %407 = vmatprep.subr.mxu0 0.0
  %408 = vmatpush1.msra.mxu0 0.0
  %409 = vmatprep.subr.mxu0 0.0
  %410 = vmatpush1.msra.mxu0 0.0
  %411 = vmatprep.subr.mxu0 0.0
  %412 = vmatpush1.msra.mxu0 0.0
  %413 = vmatprep.subr.mxu0 0.0
  %414 = vmatpush1.msra.mxu0 0.0
  %415 = vmatprep.subr.mxu0 0.0
  %416 = vmatpush1.msra.mxu0 0.0
  %417 = vmatprep.subr.mxu0 0.0
  %418 = vmatpush1.msra.mxu0 0.0
  %419 = vmatprep.subr.mxu0 0.0
  %420 = vmatpush1.msra.mxu0 0.0
  %421 = vmatprep.subr.mxu0 %v389
  %422 = vmatpush1.msra.mxu0 %v387
  %423 = vmatprep.subr.mxu0 0.0
  %424 = vmatpush2.msra.mxu0 0.0
  %425 = vmatprep.subr.mxu0 0.0
  %426 = vmatpush2.msra.mxu0 0.0
  %427 = vmatprep.subr.mxu0 0.0
  %428 = vmatpush2.msra.mxu0 0.0
  %429 = vmatprep.subr.mxu0 0.0
  %430 = vmatpush2.msra.mxu0 0.0
  %431 = vmatprep.subr.mxu0 0.0
  %432 = vmatpush2.msra.mxu0 0.0
  %433 = vmatprep.subr.mxu0 0.0
  %434 = vmatpush2.msra.mxu0 0.0
  %435 = vmatprep.subr.mxu0 0.0
  %436 = vmatpush2.msra.mxu0 0.0
  %437 = vmatprep.subr.mxu0 0.0
  %438 = vmatpush2.msra.mxu0 0.0
  %439 = vmatprep.subr.mxu0 0.0
  %440 = vmatpush2.msra.mxu0 0.0
  %441 = vmatprep.subr.mxu0 0.0
  %442 = vmatpush2.msra.mxu0 0.0
  %443 = vmatprep.subr.mxu0 0.0
  %444 = vmatpush2.msra.mxu0 0.0
  %445 = vmatprep.subr.mxu0 0.0
  %446 = vmatpush2.msra.mxu0 0.0
  %447 = vmatprep.subr.mxu0 0.0
  %448 = vmatpush2.msra.mxu0 0.0
  %449 = vmatprep.subr.mxu0 0.0
  %450 = vmatpush2.msra.mxu0 0.0
  %451 = vmatprep.subr.mxu0 0.0
  %452 = vmatpush2.msra.mxu0 0.0
  %453 = vmatprep.subr.mxu0 0.0
  %454 = vmatpush2.msra.mxu0 0.0
  %455 = vmatprep.mubr.f32.mxu0 0.0
  %456 = vmatmul.mubr.f32.gmra.mxu0 %v376
  %v457 = vpop.f32.mrf.mxu0
  %v458 = vadd.f32 0.0, %v457
  %v459 = vpop.f32.mrf.mxu0
  %v460 = vadd.f32 0.0, %v459
  %461 = vmatprep.mubr.f32.mxu0 0.0
  %462 = vmatmul.mubr.f32.gmra.mxu0 %v379
  %v463 = vpop.f32.mrf.mxu0
  %v464 = vadd.f32 0.0, %v463
  %v465 = vpop.f32.mrf.mxu0
  %v466 = vadd.f32 0.0, %v465
  %467 = vmatprep.mubr.f32.mxu0 0.0
  %468 = vmatmul.mubr.f32.gmra.mxu0 %v382
  %v469 = vpop.f32.mrf.mxu0
  %v470 = vadd.f32 0.0, %v469
  %v471 = vpop.f32.mrf.mxu0
  %v472 = vadd.f32 0.0, %v471
  %473 = vmatprep.mubr.f32.mxu0 0.0
  %474 = vmatmul.mubr.f32.gmra.mxu0 %v385
  %v475 = vpop.f32.mrf.mxu0
  %v476 = vadd.f32 0.0, %v475
  %v477 = vpop.f32.mrf.mxu0
  %v478 = vadd.f32 0.0, %v477
  %479 = vdwg.mxu0
  %v480 = vadd.f32 %v322, %v458
  %v481 = vadd.f32 %v324, %v460
  %v482 = vadd.f32 %v328, %v464
  %v483 = vadd.f32 %v330, %v466
  %v484 = vadd.f32 %v334, %v470
  %v485 = vadd.f32 %v336, %v472
  %v486 = vadd.f32 %v340, %v476
  %v487 = vadd.f32 %v342, %v478
  %488 = vrot.lane.b32.xlu0 %v62, 127
  %v489 = vpop.permute.xlu0 %488
  %490 = vrot.lane.b32.xlu0 %v63, 127
  %v491 = vpop.permute.xlu0 %490
  %vm492 = vcmask 1039360
  %v493 = vsel %vm492, %v489, %v491
  %v497 = vmul.f32 %v82, %v489
  %v498 = vmul.f32 %v83, %v493
  %v499 = vmul.f32 %v84, %v491
  %s500 = scalar_lea.vmem %s1, 96
  %v501 = vld [vmem:[%s500] sm:$0xff]
  %v502 = vld [vmem:[%s500 + $0x8] sm:$0xff]
  %v503 = vld [vmem:[%s500 + $0x10] sm:$0xff]
  %v504 = vld [vmem:[%s500 + $0x18] sm:$0xff]
  %508 = vrot.lane.b32.xlu0 %v497, 1
  %v509 = vpop.permute.xlu0 %508
  %510 = vrot.lane.b32.xlu0 %v498, 1
  %v511 = vpop.permute.xlu0 %510
  %512 = vrot.lane.b32.xlu0 %v499, 1
  %v513 = vpop.permute.xlu0 %512
  %vm514 = vcmask 7168
  %v515 = vsel %vm514, %v509, %v511
  %v516 = vsel %vm514, %v511, %v513
  %v518 = vsel %vm120, %v501, 0
  %v521 = vsel %vm120, %v502, 0
  %v524 = vsel %vm120, %v503, 0
  %v527 = vsel %vm120, %v504, 0
  %v529 = vsel %vm133, %v515, 0
  %v531 = vsel %vm133, %v516, 0
  %533 = vmatprep.subr.mxu0 0.0
  %534 = vmatpush1.msra.mxu0 0.0
  %535 = vmatprep.subr.mxu0 0.0
  %536 = vmatpush1.msra.mxu0 0.0
  %537 = vmatprep.subr.mxu0 0.0
  %538 = vmatpush1.msra.mxu0 0.0
  %539 = vmatprep.subr.mxu0 0.0
  %540 = vmatpush1.msra.mxu0 0.0
  %541 = vmatprep.subr.mxu0 0.0
  %542 = vmatpush1.msra.mxu0 0.0
  %543 = vmatprep.subr.mxu0 0.0
  %544 = vmatpush1.msra.mxu0 0.0
  %545 = vmatprep.subr.mxu0 0.0
  %546 = vmatpush1.msra.mxu0 0.0
  %547 = vmatprep.subr.mxu0 0.0
  %548 = vmatpush1.msra.mxu0 0.0
  %549 = vmatprep.subr.mxu0 0.0
  %550 = vmatpush1.msra.mxu0 0.0
  %551 = vmatprep.subr.mxu0 0.0
  %552 = vmatpush1.msra.mxu0 0.0
  %553 = vmatprep.subr.mxu0 0.0
  %554 = vmatpush1.msra.mxu0 0.0
  %555 = vmatprep.subr.mxu0 0.0
  %556 = vmatpush1.msra.mxu0 0.0
  %557 = vmatprep.subr.mxu0 0.0
  %558 = vmatpush1.msra.mxu0 0.0
  %559 = vmatprep.subr.mxu0 0.0
  %560 = vmatpush1.msra.mxu0 0.0
  %561 = vmatprep.subr.mxu0 0.0
  %562 = vmatpush1.msra.mxu0 0.0
  %563 = vmatprep.subr.mxu0 %v531
  %564 = vmatpush1.msra.mxu0 %v529
  %565 = vmatprep.subr.mxu0 0.0
  %566 = vmatpush2.msra.mxu0 0.0
  %567 = vmatprep.subr.mxu0 0.0
  %568 = vmatpush2.msra.mxu0 0.0
  %569 = vmatprep.subr.mxu0 0.0
  %570 = vmatpush2.msra.mxu0 0.0
  %571 = vmatprep.subr.mxu0 0.0
  %572 = vmatpush2.msra.mxu0 0.0
  %573 = vmatprep.subr.mxu0 0.0
  %574 = vmatpush2.msra.mxu0 0.0
  %575 = vmatprep.subr.mxu0 0.0
  %576 = vmatpush2.msra.mxu0 0.0
  %577 = vmatprep.subr.mxu0 0.0
  %578 = vmatpush2.msra.mxu0 0.0
  %579 = vmatprep.subr.mxu0 0.0
  %580 = vmatpush2.msra.mxu0 0.0
  %581 = vmatprep.subr.mxu0 0.0
  %582 = vmatpush2.msra.mxu0 0.0
  %583 = vmatprep.subr.mxu0 0.0
  %584 = vmatpush2.msra.mxu0 0.0
  %585 = vmatprep.subr.mxu0 0.0
  %586 = vmatpush2.msra.mxu0 0.0
  %587 = vmatprep.subr.mxu0 0.0
  %588 = vmatpush2.msra.mxu0 0.0
  %589 = vmatprep.subr.mxu0 0.0
  %590 = vmatpush2.msra.mxu0 0.0
  %591 = vmatprep.subr.mxu0 0.0
  %592 = vmatpush2.msra.mxu0 0.0
  %593 = vmatprep.subr.mxu0 0.0
  %594 = vmatpush2.msra.mxu0 0.0
  %595 = vmatprep.subr.mxu0 0.0
  %596 = vmatpush2.msra.mxu0 0.0
  %597 = vmatprep.mubr.f32.mxu0 0.0
  %598 = vmatmul.mubr.f32.gmra.mxu0 %v518
  %v599 = vpop.f32.mrf.mxu0
  %v600 = vadd.f32 0.0, %v599
  %v601 = vpop.f32.mrf.mxu0
  %v602 = vadd.f32 0.0, %v601
  %603 = vmatprep.mubr.f32.mxu0 0.0
  %604 = vmatmul.mubr.f32.gmra.mxu0 %v521
  %v605 = vpop.f32.mrf.mxu0
  %v606 = vadd.f32 0.0, %v605
  %v607 = vpop.f32.mrf.mxu0
  %v608 = vadd.f32 0.0, %v607
  %609 = vmatprep.mubr.f32.mxu0 0.0
  %610 = vmatmul.mubr.f32.gmra.mxu0 %v524
  %v611 = vpop.f32.mrf.mxu0
  %v612 = vadd.f32 0.0, %v611
  %v613 = vpop.f32.mrf.mxu0
  %v614 = vadd.f32 0.0, %v613
  %615 = vmatprep.mubr.f32.mxu0 0.0
  %616 = vmatmul.mubr.f32.gmra.mxu0 %v527
  %v617 = vpop.f32.mrf.mxu0
  %v618 = vadd.f32 0.0, %v617
  %v619 = vpop.f32.mrf.mxu0
  %v620 = vadd.f32 0.0, %v619
  %621 = vdwg.mxu0
  %v622 = vadd.f32 %v480, %v600
  %v623 = vadd.f32 %v481, %v602
  %v624 = vadd.f32 %v482, %v606
  %v625 = vadd.f32 %v483, %v608
  %v626 = vadd.f32 %v484, %v612
  %v627 = vadd.f32 %v485, %v614
  %v628 = vadd.f32 %v486, %v618
  %v629 = vadd.f32 %v487, %v620
  %s630 = scalar_lea.vmem %s1, 128
  %v631 = vld [vmem:[%s630] sm:$0xff]
  %v632 = vld [vmem:[%s630 + $0x8] sm:$0xff]
  %v633 = vld [vmem:[%s630 + $0x10] sm:$0xff]
  %v634 = vld [vmem:[%s630 + $0x18] sm:$0xff]
  %v636 = vsel %vm120, %v631, 0
  %v639 = vsel %vm120, %v632, 0
  %v642 = vsel %vm120, %v633, 0
  %v645 = vsel %vm120, %v634, 0
  %v647 = vsel %vm133, %v83, 0
  %v649 = vsel %vm133, %v84, 0
  %651 = vmatprep.subr.mxu0 0.0
  %652 = vmatpush1.msra.mxu0 0.0
  %653 = vmatprep.subr.mxu0 0.0
  %654 = vmatpush1.msra.mxu0 0.0
  %655 = vmatprep.subr.mxu0 0.0
  %656 = vmatpush1.msra.mxu0 0.0
  %657 = vmatprep.subr.mxu0 0.0
  %658 = vmatpush1.msra.mxu0 0.0
  %659 = vmatprep.subr.mxu0 0.0
  %660 = vmatpush1.msra.mxu0 0.0
  %661 = vmatprep.subr.mxu0 0.0
  %662 = vmatpush1.msra.mxu0 0.0
  %663 = vmatprep.subr.mxu0 0.0
  %664 = vmatpush1.msra.mxu0 0.0
  %665 = vmatprep.subr.mxu0 0.0
  %666 = vmatpush1.msra.mxu0 0.0
  %667 = vmatprep.subr.mxu0 0.0
  %668 = vmatpush1.msra.mxu0 0.0
  %669 = vmatprep.subr.mxu0 0.0
  %670 = vmatpush1.msra.mxu0 0.0
  %671 = vmatprep.subr.mxu0 0.0
  %672 = vmatpush1.msra.mxu0 0.0
  %673 = vmatprep.subr.mxu0 0.0
  %674 = vmatpush1.msra.mxu0 0.0
  %675 = vmatprep.subr.mxu0 0.0
  %676 = vmatpush1.msra.mxu0 0.0
  %677 = vmatprep.subr.mxu0 0.0
  %678 = vmatpush1.msra.mxu0 0.0
  %679 = vmatprep.subr.mxu0 0.0
  %680 = vmatpush1.msra.mxu0 0.0
  %681 = vmatprep.subr.mxu0 %v649
  %682 = vmatpush1.msra.mxu0 %v647
  %683 = vmatprep.subr.mxu0 0.0
  %684 = vmatpush2.msra.mxu0 0.0
  %685 = vmatprep.subr.mxu0 0.0
  %686 = vmatpush2.msra.mxu0 0.0
  %687 = vmatprep.subr.mxu0 0.0
  %688 = vmatpush2.msra.mxu0 0.0
  %689 = vmatprep.subr.mxu0 0.0
  %690 = vmatpush2.msra.mxu0 0.0
  %691 = vmatprep.subr.mxu0 0.0
  %692 = vmatpush2.msra.mxu0 0.0
  %693 = vmatprep.subr.mxu0 0.0
  %694 = vmatpush2.msra.mxu0 0.0
  %695 = vmatprep.subr.mxu0 0.0
  %696 = vmatpush2.msra.mxu0 0.0
  %697 = vmatprep.subr.mxu0 0.0
  %698 = vmatpush2.msra.mxu0 0.0
  %699 = vmatprep.subr.mxu0 0.0
  %700 = vmatpush2.msra.mxu0 0.0
  %701 = vmatprep.subr.mxu0 0.0
  %702 = vmatpush2.msra.mxu0 0.0
  %703 = vmatprep.subr.mxu0 0.0
  %704 = vmatpush2.msra.mxu0 0.0
  %705 = vmatprep.subr.mxu0 0.0
  %706 = vmatpush2.msra.mxu0 0.0
  %707 = vmatprep.subr.mxu0 0.0
  %708 = vmatpush2.msra.mxu0 0.0
  %709 = vmatprep.subr.mxu0 0.0
  %710 = vmatpush2.msra.mxu0 0.0
  %711 = vmatprep.subr.mxu0 0.0
  %712 = vmatpush2.msra.mxu0 0.0
  %713 = vmatprep.subr.mxu0 0.0
  %714 = vmatpush2.msra.mxu0 0.0
  %715 = vmatprep.mubr.f32.mxu0 0.0
  %716 = vmatmul.mubr.f32.gmra.mxu0 %v636
  %v717 = vpop.f32.mrf.mxu0
  %v718 = vadd.f32 0.0, %v717
  %v719 = vpop.f32.mrf.mxu0
  %v720 = vadd.f32 0.0, %v719
  %721 = vmatprep.mubr.f32.mxu0 0.0
  %722 = vmatmul.mubr.f32.gmra.mxu0 %v639
  %v723 = vpop.f32.mrf.mxu0
  %v724 = vadd.f32 0.0, %v723
  %v725 = vpop.f32.mrf.mxu0
  %v726 = vadd.f32 0.0, %v725
  %727 = vmatprep.mubr.f32.mxu0 0.0
  %728 = vmatmul.mubr.f32.gmra.mxu0 %v642
  %v729 = vpop.f32.mrf.mxu0
  %v730 = vadd.f32 0.0, %v729
  %v731 = vpop.f32.mrf.mxu0
  %v732 = vadd.f32 0.0, %v731
  %733 = vmatprep.mubr.f32.mxu0 0.0
  %734 = vmatmul.mubr.f32.gmra.mxu0 %v645
  %v735 = vpop.f32.mrf.mxu0
  %v736 = vadd.f32 0.0, %v735
  %v737 = vpop.f32.mrf.mxu0
  %v738 = vadd.f32 0.0, %v737
  %739 = vdwg.mxu0
  %v740 = vadd.f32 %v622, %v718
  %v741 = vadd.f32 %v623, %v720
  %v742 = vadd.f32 %v624, %v724
  %v743 = vadd.f32 %v625, %v726
  %v744 = vadd.f32 %v626, %v730
  %v745 = vadd.f32 %v627, %v732
  %v746 = vadd.f32 %v628, %v736
  %v747 = vadd.f32 %v629, %v738
  %v748 = vld [vmem:[#allocation2 + $0x8] sm:$0xf]
  %v749 = vld [vmem:[#allocation2 + $0x10] sm:$0xf]
  %v750 = vld [vmem:[#allocation2 + $0x18] sm:$0xf]
  %751 = vrot.lane.b32.xlu0 %v74, 1
  %v752 = vpop.permute.xlu0 %751
  %753 = vrot.lane.b32.xlu0 %v75, 1
  %v754 = vpop.permute.xlu0 %753
  %v755 = vsel %vm514, %v752, %v754
  %v759 = vmul.f32 %v748, %v752
  %v760 = vmul.f32 %v749, %v755
  %v761 = vmul.f32 %v750, %v754
  %s762 = scalar_lea.vmem %s1, 160
  %v763 = vld [vmem:[%s762] sm:$0xff]
  %v764 = vld [vmem:[%s762 + $0x8] sm:$0xff]
  %v765 = vld [vmem:[%s762 + $0x10] sm:$0xff]
  %v766 = vld [vmem:[%s762 + $0x18] sm:$0xff]
  %770 = vrot.lane.b32.xlu0 %v759, 127
  %v771 = vpop.permute.xlu0 %770
  %772 = vrot.lane.b32.xlu0 %v760, 127
  %v773 = vpop.permute.xlu0 %772
  %774 = vrot.lane.b32.xlu0 %v761, 127
  %v775 = vpop.permute.xlu0 %774
  %v776 = vsel %vm492, %v771, %v773
  %v777 = vsel %vm492, %v773, %v775
  %v779 = vsel %vm120, %v763, 0
  %v782 = vsel %vm120, %v764, 0
  %v785 = vsel %vm120, %v765, 0
  %v788 = vsel %vm120, %v766, 0
  %v790 = vsel %vm133, %v776, 0
  %v792 = vsel %vm133, %v777, 0
  %794 = vmatprep.subr.mxu0 0.0
  %795 = vmatpush1.msra.mxu0 0.0
  %796 = vmatprep.subr.mxu0 0.0
  %797 = vmatpush1.msra.mxu0 0.0
  %798 = vmatprep.subr.mxu0 0.0
  %799 = vmatpush1.msra.mxu0 0.0
  %800 = vmatprep.subr.mxu0 0.0
  %801 = vmatpush1.msra.mxu0 0.0
  %802 = vmatprep.subr.mxu0 0.0
  %803 = vmatpush1.msra.mxu0 0.0
  %804 = vmatprep.subr.mxu0 0.0
  %805 = vmatpush1.msra.mxu0 0.0
  %806 = vmatprep.subr.mxu0 0.0
  %807 = vmatpush1.msra.mxu0 0.0
  %808 = vmatprep.subr.mxu0 0.0
  %809 = vmatpush1.msra.mxu0 0.0
  %810 = vmatprep.subr.mxu0 0.0
  %811 = vmatpush1.msra.mxu0 0.0
  %812 = vmatprep.subr.mxu0 0.0
  %813 = vmatpush1.msra.mxu0 0.0
  %814 = vmatprep.subr.mxu0 0.0
  %815 = vmatpush1.msra.mxu0 0.0
  %816 = vmatprep.subr.mxu0 0.0
  %817 = vmatpush1.msra.mxu0 0.0
  %818 = vmatprep.subr.mxu0 0.0
  %819 = vmatpush1.msra.mxu0 0.0
  %820 = vmatprep.subr.mxu0 0.0
  %821 = vmatpush1.msra.mxu0 0.0
  %822 = vmatprep.subr.mxu0 0.0
  %823 = vmatpush1.msra.mxu0 0.0
  %824 = vmatprep.subr.mxu0 %v792
  %825 = vmatpush1.msra.mxu0 %v790
  %826 = vmatprep.subr.mxu0 0.0
  %827 = vmatpush2.msra.mxu0 0.0
  %828 = vmatprep.subr.mxu0 0.0
  %829 = vmatpush2.msra.mxu0 0.0
  %830 = vmatprep.subr.mxu0 0.0
  %831 = vmatpush2.msra.mxu0 0.0
  %832 = vmatprep.subr.mxu0 0.0
  %833 = vmatpush2.msra.mxu0 0.0
  %834 = vmatprep.subr.mxu0 0.0
  %835 = vmatpush2.msra.mxu0 0.0
  %836 = vmatprep.subr.mxu0 0.0
  %837 = vmatpush2.msra.mxu0 0.0
  %838 = vmatprep.subr.mxu0 0.0
  %839 = vmatpush2.msra.mxu0 0.0
  %840 = vmatprep.subr.mxu0 0.0
  %841 = vmatpush2.msra.mxu0 0.0
  %842 = vmatprep.subr.mxu0 0.0
  %843 = vmatpush2.msra.mxu0 0.0
  %844 = vmatprep.subr.mxu0 0.0
  %845 = vmatpush2.msra.mxu0 0.0
  %846 = vmatprep.subr.mxu0 0.0
  %847 = vmatpush2.msra.mxu0 0.0
  %848 = vmatprep.subr.mxu0 0.0
  %849 = vmatpush2.msra.mxu0 0.0
  %850 = vmatprep.subr.mxu0 0.0
  %851 = vmatpush2.msra.mxu0 0.0
  %852 = vmatprep.subr.mxu0 0.0
  %853 = vmatpush2.msra.mxu0 0.0
  %854 = vmatprep.subr.mxu0 0.0
  %855 = vmatpush2.msra.mxu0 0.0
  %856 = vmatprep.subr.mxu0 0.0
  %857 = vmatpush2.msra.mxu0 0.0
  %858 = vmatprep.mubr.f32.mxu0 0.0
  %859 = vmatmul.mubr.f32.gmra.mxu0 %v779
  %v860 = vpop.f32.mrf.mxu0
  %v861 = vadd.f32 0.0, %v860
  %v862 = vpop.f32.mrf.mxu0
  %v863 = vadd.f32 0.0, %v862
  %864 = vmatprep.mubr.f32.mxu0 0.0
  %865 = vmatmul.mubr.f32.gmra.mxu0 %v782
  %v866 = vpop.f32.mrf.mxu0
  %v867 = vadd.f32 0.0, %v866
  %v868 = vpop.f32.mrf.mxu0
  %v869 = vadd.f32 0.0, %v868
  %870 = vmatprep.mubr.f32.mxu0 0.0
  %871 = vmatmul.mubr.f32.gmra.mxu0 %v785
  %v872 = vpop.f32.mrf.mxu0
  %v873 = vadd.f32 0.0, %v872
  %v874 = vpop.f32.mrf.mxu0
  %v875 = vadd.f32 0.0, %v874
  %876 = vmatprep.mubr.f32.mxu0 0.0
  %877 = vmatmul.mubr.f32.gmra.mxu0 %v788
  %v878 = vpop.f32.mrf.mxu0
  %v879 = vadd.f32 0.0, %v878
  %v880 = vpop.f32.mrf.mxu0
  %v881 = vadd.f32 0.0, %v880
  %882 = vdwg.mxu0
  %v883 = vadd.f32 %v740, %v861
  %v884 = vadd.f32 %v741, %v863
  %v885 = vadd.f32 %v742, %v867
  %v886 = vadd.f32 %v743, %v869
  %v887 = vadd.f32 %v744, %v873
  %v888 = vadd.f32 %v745, %v875
  %v889 = vadd.f32 %v746, %v879
  %v890 = vadd.f32 %v747, %v881
  %891 = vrot.lane.b32.xlu0 %v62, 15
  %v892 = vpop.permute.xlu0 %891
  %893 = vrot.lane.b32.xlu0 %v63, 15
  %v894 = vpop.permute.xlu0 %893
  %v895 = vsel %vm372, %v892, %v894
  %v899 = vmul.f32 %v748, %v892
  %v900 = vmul.f32 %v749, %v895
  %v901 = vmul.f32 %v750, %v894
  %s902 = scalar_lea.vmem %s1, 192
  %v903 = vld [vmem:[%s902] sm:$0xff]
  %v904 = vld [vmem:[%s902 + $0x8] sm:$0xff]
  %v905 = vld [vmem:[%s902 + $0x10] sm:$0xff]
  %v906 = vld [vmem:[%s902 + $0x18] sm:$0xff]
  %910 = vrot.lane.b32.xlu0 %v899, 113
  %v911 = vpop.permute.xlu0 %910
  %912 = vrot.lane.b32.xlu0 %v900, 113
  %v913 = vpop.permute.xlu0 %912
  %914 = vrot.lane.b32.xlu0 %v901, 113
  %v915 = vpop.permute.xlu0 %914
  %v916 = vsel %vm350, %v911, %v913
  %v917 = vsel %vm350, %v913, %v915
  %v919 = vsel %vm120, %v903, 0
  %v922 = vsel %vm120, %v904, 0
  %v925 = vsel %vm120, %v905, 0
  %v928 = vsel %vm120, %v906, 0
  %v930 = vsel %vm133, %v916, 0
  %v932 = vsel %vm133, %v917, 0
  %934 = vmatprep.subr.mxu0 0.0
  %935 = vmatpush1.msra.mxu0 0.0
  %936 = vmatprep.subr.mxu0 0.0
  %937 = vmatpush1.msra.mxu0 0.0
  %938 = vmatprep.subr.mxu0 0.0
  %939 = vmatpush1.msra.mxu0 0.0
  %940 = vmatprep.subr.mxu0 0.0
  %941 = vmatpush1.msra.mxu0 0.0
  %942 = vmatprep.subr.mxu0 0.0
  %943 = vmatpush1.msra.mxu0 0.0
  %944 = vmatprep.subr.mxu0 0.0
  %945 = vmatpush1.msra.mxu0 0.0
  %946 = vmatprep.subr.mxu0 0.0
  %947 = vmatpush1.msra.mxu0 0.0
  %948 = vmatprep.subr.mxu0 0.0
  %949 = vmatpush1.msra.mxu0 0.0
  %950 = vmatprep.subr.mxu0 0.0
  %951 = vmatpush1.msra.mxu0 0.0
  %952 = vmatprep.subr.mxu0 0.0
  %953 = vmatpush1.msra.mxu0 0.0
  %954 = vmatprep.subr.mxu0 0.0
  %955 = vmatpush1.msra.mxu0 0.0
  %956 = vmatprep.subr.mxu0 0.0
  %957 = vmatpush1.msra.mxu0 0.0
  %958 = vmatprep.subr.mxu0 0.0
  %959 = vmatpush1.msra.mxu0 0.0
  %960 = vmatprep.subr.mxu0 0.0
  %961 = vmatpush1.msra.mxu0 0.0
  %962 = vmatprep.subr.mxu0 0.0
  %963 = vmatpush1.msra.mxu0 0.0
  %964 = vmatprep.subr.mxu0 %v932
  %965 = vmatpush1.msra.mxu0 %v930
  %966 = vmatprep.subr.mxu0 0.0
  %967 = vmatpush2.msra.mxu0 0.0
  %968 = vmatprep.subr.mxu0 0.0
  %969 = vmatpush2.msra.mxu0 0.0
  %970 = vmatprep.subr.mxu0 0.0
  %971 = vmatpush2.msra.mxu0 0.0
  %972 = vmatprep.subr.mxu0 0.0
  %973 = vmatpush2.msra.mxu0 0.0
  %974 = vmatprep.subr.mxu0 0.0
  %975 = vmatpush2.msra.mxu0 0.0
  %976 = vmatprep.subr.mxu0 0.0
  %977 = vmatpush2.msra.mxu0 0.0
  %978 = vmatprep.subr.mxu0 0.0
  %979 = vmatpush2.msra.mxu0 0.0
  %980 = vmatprep.subr.mxu0 0.0
  %981 = vmatpush2.msra.mxu0 0.0
  %982 = vmatprep.subr.mxu0 0.0
  %983 = vmatpush2.msra.mxu0 0.0
  %984 = vmatprep.subr.mxu0 0.0
  %985 = vmatpush2.msra.mxu0 0.0
  %986 = vmatprep.subr.mxu0 0.0
  %987 = vmatpush2.msra.mxu0 0.0
  %988 = vmatprep.subr.mxu0 0.0
  %989 = vmatpush2.msra.mxu0 0.0
  %990 = vmatprep.subr.mxu0 0.0
  %991 = vmatpush2.msra.mxu0 0.0
  %992 = vmatprep.subr.mxu0 0.0
  %993 = vmatpush2.msra.mxu0 0.0
  %994 = vmatprep.subr.mxu0 0.0
  %995 = vmatpush2.msra.mxu0 0.0
  %996 = vmatprep.subr.mxu0 0.0
  %997 = vmatpush2.msra.mxu0 0.0
  %998 = vmatprep.mubr.f32.mxu0 0.0
  %999 = vmatmul.mubr.f32.gmra.mxu0 %v919
  %v1000 = vpop.f32.mrf.mxu0
  %v1001 = vadd.f32 0.0, %v1000
  %v1002 = vpop.f32.mrf.mxu0
  %v1003 = vadd.f32 0.0, %v1002
  %1004 = vmatprep.mubr.f32.mxu0 0.0
  %1005 = vmatmul.mubr.f32.gmra.mxu0 %v922
  %v1006 = vpop.f32.mrf.mxu0
  %v1007 = vadd.f32 0.0, %v1006
  %v1008 = vpop.f32.mrf.mxu0
  %v1009 = vadd.f32 0.0, %v1008
  %1010 = vmatprep.mubr.f32.mxu0 0.0
  %1011 = vmatmul.mubr.f32.gmra.mxu0 %v925
  %v1012 = vpop.f32.mrf.mxu0
  %v1013 = vadd.f32 0.0, %v1012
  %v1014 = vpop.f32.mrf.mxu0
  %v1015 = vadd.f32 0.0, %v1014
  %1016 = vmatprep.mubr.f32.mxu0 0.0
  %1017 = vmatmul.mubr.f32.gmra.mxu0 %v928
  %v1018 = vpop.f32.mrf.mxu0
  %v1019 = vadd.f32 0.0, %v1018
  %v1020 = vpop.f32.mrf.mxu0
  %v1021 = vadd.f32 0.0, %v1020
  %1022 = vdwg.mxu0
  %v1023 = vadd.f32 %v883, %v1001
  %v1024 = vadd.f32 %v884, %v1003
  %v1025 = vadd.f32 %v885, %v1007
  %v1026 = vadd.f32 %v886, %v1009
  %v1027 = vadd.f32 %v887, %v1013
  %v1028 = vadd.f32 %v888, %v1015
  %v1029 = vadd.f32 %v889, %v1019
  %v1030 = vadd.f32 %v890, %v1021
  %s1031 = scalar_lea.vmem %s1, 224
  %v1032 = vld [vmem:[%s1031] sm:$0xff]
  %v1033 = vld [vmem:[%s1031 + $0x8] sm:$0xff]
  %v1034 = vld [vmem:[%s1031 + $0x10] sm:$0xff]
  %v1035 = vld [vmem:[%s1031 + $0x18] sm:$0xff]
  %1039 = vrot.lane.b32.xlu0 %v748, 112
  %v1040 = vpop.permute.xlu0 %1039
  %1041 = vrot.lane.b32.xlu0 %v749, 112
  %v1042 = vpop.permute.xlu0 %1041
  %1043 = vrot.lane.b32.xlu0 %v750, 112
  %v1044 = vpop.permute.xlu0 %1043
  %vm1045 = vcmask 916480
  %v1046 = vsel %vm1045, %v1040, %v1042
  %v1047 = vsel %vm1045, %v1042, %v1044
  %v1049 = vsel %vm120, %v1032, 0
  %v1052 = vsel %vm120, %v1033, 0
  %v1055 = vsel %vm120, %v1034, 0
  %v1058 = vsel %vm120, %v1035, 0
  %v1060 = vsel %vm133, %v1046, 0
  %v1062 = vsel %vm133, %v1047, 0
  %1064 = vmatprep.subr.mxu0 0.0
  %1065 = vmatpush1.msra.mxu0 0.0
  %1066 = vmatprep.subr.mxu0 0.0
  %1067 = vmatpush1.msra.mxu0 0.0
  %1068 = vmatprep.subr.mxu0 0.0
  %1069 = vmatpush1.msra.mxu0 0.0
  %1070 = vmatprep.subr.mxu0 0.0
  %1071 = vmatpush1.msra.mxu0 0.0
  %1072 = vmatprep.subr.mxu0 0.0
  %1073 = vmatpush1.msra.mxu0 0.0
  %1074 = vmatprep.subr.mxu0 0.0
  %1075 = vmatpush1.msra.mxu0 0.0
  %1076 = vmatprep.subr.mxu0 0.0
  %1077 = vmatpush1.msra.mxu0 0.0
  %1078 = vmatprep.subr.mxu0 0.0
  %1079 = vmatpush1.msra.mxu0 0.0
  %1080 = vmatprep.subr.mxu0 0.0
  %1081 = vmatpush1.msra.mxu0 0.0
  %1082 = vmatprep.subr.mxu0 0.0
  %1083 = vmatpush1.msra.mxu0 0.0
  %1084 = vmatprep.subr.mxu0 0.0
  %1085 = vmatpush1.msra.mxu0 0.0
  %1086 = vmatprep.subr.mxu0 0.0
  %1087 = vmatpush1.msra.mxu0 0.0
  %1088 = vmatprep.subr.mxu0 0.0
  %1089 = vmatpush1.msra.mxu0 0.0
  %1090 = vmatprep.subr.mxu0 0.0
  %1091 = vmatpush1.msra.mxu0 0.0
  %1092 = vmatprep.subr.mxu0 0.0
  %1093 = vmatpush1.msra.mxu0 0.0
  %1094 = vmatprep.subr.mxu0 %v1062
  %1095 = vmatpush1.msra.mxu0 %v1060
  %1096 = vmatprep.subr.mxu0 0.0
  %1097 = vmatpush2.msra.mxu0 0.0
  %1098 = vmatprep.subr.mxu0 0.0
  %1099 = vmatpush2.msra.mxu0 0.0
  %1100 = vmatprep.subr.mxu0 0.0
  %1101 = vmatpush2.msra.mxu0 0.0
  %1102 = vmatprep.subr.mxu0 0.0
  %1103 = vmatpush2.msra.mxu0 0.0
  %1104 = vmatprep.subr.mxu0 0.0
  %1105 = vmatpush2.msra.mxu0 0.0
  %1106 = vmatprep.subr.mxu0 0.0
  %1107 = vmatpush2.msra.mxu0 0.0
  %1108 = vmatprep.subr.mxu0 0.0
  %1109 = vmatpush2.msra.mxu0 0.0
  %1110 = vmatprep.subr.mxu0 0.0
  %1111 = vmatpush2.msra.mxu0 0.0
  %1112 = vmatprep.subr.mxu0 0.0
  %1113 = vmatpush2.msra.mxu0 0.0
  %1114 = vmatprep.subr.mxu0 0.0
  %1115 = vmatpush2.msra.mxu0 0.0
  %1116 = vmatprep.subr.mxu0 0.0
  %1117 = vmatpush2.msra.mxu0 0.0
  %1118 = vmatprep.subr.mxu0 0.0
  %1119 = vmatpush2.msra.mxu0 0.0
  %1120 = vmatprep.subr.mxu0 0.0
  %1121 = vmatpush2.msra.mxu0 0.0
  %1122 = vmatprep.subr.mxu0 0.0
  %1123 = vmatpush2.msra.mxu0 0.0
  %1124 = vmatprep.subr.mxu0 0.0
  %1125 = vmatpush2.msra.mxu0 0.0
  %1126 = vmatprep.subr.mxu0 0.0
  %1127 = vmatpush2.msra.mxu0 0.0
  %1128 = vmatprep.mubr.f32.mxu0 0.0
  %1129 = vmatmul.mubr.f32.gmra.mxu0 %v1049
  %v1130 = vpop.f32.mrf.mxu0
  %v1131 = vadd.f32 0.0, %v1130
  %v1132 = vpop.f32.mrf.mxu0
  %v1133 = vadd.f32 0.0, %v1132
  %1134 = vmatprep.mubr.f32.mxu0 0.0
  %1135 = vmatmul.mubr.f32.gmra.mxu0 %v1052
  %v1136 = vpop.f32.mrf.mxu0
  %v1137 = vadd.f32 0.0, %v1136
  %v1138 = vpop.f32.mrf.mxu0
  %v1139 = vadd.f32 0.0, %v1138
  %1140 = vmatprep.mubr.f32.mxu0 0.0
  %1141 = vmatmul.mubr.f32.gmra.mxu0 %v1055
  %v1142 = vpop.f32.mrf.mxu0
  %v1143 = vadd.f32 0.0, %v1142
  %v1144 = vpop.f32.mrf.mxu0
  %v1145 = vadd.f32 0.0, %v1144
  %1146 = vmatprep.mubr.f32.mxu0 0.0
  %1147 = vmatmul.mubr.f32.gmra.mxu0 %v1058
  %v1148 = vpop.f32.mrf.mxu0
  %v1149 = vadd.f32 0.0, %v1148
  %v1150 = vpop.f32.mrf.mxu0
  %v1151 = vadd.f32 0.0, %v1150
  %1152 = vdwg.mxu0
  %v1153 = vadd.f32 %v1023, %v1131
  %v1154 = vadd.f32 %v1024, %v1133
  %v1155 = vadd.f32 %v1025, %v1137
  %v1156 = vadd.f32 %v1026, %v1139
  %v1157 = vadd.f32 %v1027, %v1143
  %v1158 = vadd.f32 %v1028, %v1145
  %v1159 = vadd.f32 %v1029, %v1149
  %v1160 = vadd.f32 %v1030, %v1151
  %1161 = vrot.lane.b32.xlu0 %v74, 17
  %v1162 = vpop.permute.xlu0 %1161
  %1163 = vrot.lane.b32.xlu0 %v75, 17
  %v1164 = vpop.permute.xlu0 %1163
  %v1165 = vsel %vm236, %v1162, %v1164
  %v1169 = vmul.f32 %v748, %v1162
  %v1170 = vmul.f32 %v749, %v1165
  %v1171 = vmul.f32 %v750, %v1164
  %s1172 = scalar_lea.vmem %s1, 256
  %v1173 = vld [vmem:[%s1172] sm:$0xff]
  %v1174 = vld [vmem:[%s1172 + $0x8] sm:$0xff]
  %v1175 = vld [vmem:[%s1172 + $0x10] sm:$0xff]
  %v1176 = vld [vmem:[%s1172 + $0x18] sm:$0xff]
  %1180 = vrot.lane.b32.xlu0 %v1169, 111
  %v1181 = vpop.permute.xlu0 %1180
  %1182 = vrot.lane.b32.xlu0 %v1170, 111
  %v1183 = vpop.permute.xlu0 %1182
  %1184 = vrot.lane.b32.xlu0 %v1171, 111
  %v1185 = vpop.permute.xlu0 %1184
  %v1186 = vsel %vm91, %v1181, %v1183
  %v1187 = vsel %vm91, %v1183, %v1185
  %v1189 = vsel %vm120, %v1173, 0
  %v1192 = vsel %vm120, %v1174, 0
  %v1195 = vsel %vm120, %v1175, 0
  %v1198 = vsel %vm120, %v1176, 0
  %v1200 = vsel %vm133, %v1186, 0
  %v1202 = vsel %vm133, %v1187, 0
  %1204 = vmatprep.subr.mxu0 0.0
  %1205 = vmatpush1.msra.mxu0 0.0
  %1206 = vmatprep.subr.mxu0 0.0
  %1207 = vmatpush1.msra.mxu0 0.0
  %1208 = vmatprep.subr.mxu0 0.0
  %1209 = vmatpush1.msra.mxu0 0.0
  %1210 = vmatprep.subr.mxu0 0.0
  %1211 = vmatpush1.msra.mxu0 0.0
  %1212 = vmatprep.subr.mxu0 0.0
  %1213 = vmatpush1.msra.mxu0 0.0
  %1214 = vmatprep.subr.mxu0 0.0
  %1215 = vmatpush1.msra.mxu0 0.0
  %1216 = vmatprep.subr.mxu0 0.0
  %1217 = vmatpush1.msra.mxu0 0.0
  %1218 = vmatprep.subr.mxu0 0.0
  %1219 = vmatpush1.msra.mxu0 0.0
  %1220 = vmatprep.subr.mxu0 0.0
  %1221 = vmatpush1.msra.mxu0 0.0
  %1222 = vmatprep.subr.mxu0 0.0
  %1223 = vmatpush1.msra.mxu0 0.0
  %1224 = vmatprep.subr.mxu0 0.0
  %1225 = vmatpush1.msra.mxu0 0.0
  %1226 = vmatprep.subr.mxu0 0.0
  %1227 = vmatpush1.msra.mxu0 0.0
  %1228 = vmatprep.subr.mxu0 0.0
  %1229 = vmatpush1.msra.mxu0 0.0
  %1230 = vmatprep.subr.mxu0 0.0
  %1231 = vmatpush1.msra.mxu0 0.0
  %1232 = vmatprep.subr.mxu0 0.0
  %1233 = vmatpush1.msra.mxu0 0.0
  %1234 = vmatprep.subr.mxu0 %v1202
  %1235 = vmatpush1.msra.mxu0 %v1200
  %1236 = vmatprep.subr.mxu0 0.0
  %1237 = vmatpush2.msra.mxu0 0.0
  %1238 = vmatprep.subr.mxu0 0.0
  %1239 = vmatpush2.msra.mxu0 0.0
  %1240 = vmatprep.subr.mxu0 0.0
  %1241 = vmatpush2.msra.mxu0 0.0
  %1242 = vmatprep.subr.mxu0 0.0
  %1243 = vmatpush2.msra.mxu0 0.0
  %1244 = vmatprep.subr.mxu0 0.0
  %1245 = vmatpush2.msra.mxu0 0.0
  %1246 = vmatprep.subr.mxu0 0.0
  %1247 = vmatpush2.msra.mxu0 0.0
  %1248 = vmatprep.subr.mxu0 0.0
  %1249 = vmatpush2.msra.mxu0 0.0
  %1250 = vmatprep.subr.mxu0 0.0
  %1251 = vmatpush2.msra.mxu0 0.0
  %1252 = vmatprep.subr.mxu0 0.0
  %1253 = vmatpush2.msra.mxu0 0.0
  %1254 = vmatprep.subr.mxu0 0.0
  %1255 = vmatpush2.msra.mxu0 0.0
  %1256 = vmatprep.subr.mxu0 0.0
  %1257 = vmatpush2.msra.mxu0 0.0
  %1258 = vmatprep.subr.mxu0 0.0
  %1259 = vmatpush2.msra.mxu0 0.0
  %1260 = vmatprep.subr.mxu0 0.0
  %1261 = vmatpush2.msra.mxu0 0.0
  %1262 = vmatprep.subr.mxu0 0.0
  %1263 = vmatpush2.msra.mxu0 0.0
  %1264 = vmatprep.subr.mxu0 0.0
  %1265 = vmatpush2.msra.mxu0 0.0
  %1266 = vmatprep.subr.mxu0 0.0
  %1267 = vmatpush2.msra.mxu0 0.0
  %1268 = vmatprep.mubr.f32.mxu0 0.0
  %1269 = vmatmul.mubr.f32.gmra.mxu0 %v1189
  %v1270 = vpop.f32.mrf.mxu0
  %v1271 = vadd.f32 0.0, %v1270
  %v1272 = vpop.f32.mrf.mxu0
  %v1273 = vadd.f32 0.0, %v1272
  %1274 = vmatprep.mubr.f32.mxu0 0.0
  %1275 = vmatmul.mubr.f32.gmra.mxu0 %v1192
  %v1276 = vpop.f32.mrf.mxu0
  %v1277 = vadd.f32 0.0, %v1276
  %v1278 = vpop.f32.mrf.mxu0
  %v1279 = vadd.f32 0.0, %v1278
  %1280 = vmatprep.mubr.f32.mxu0 0.0
  %1281 = vmatmul.mubr.f32.gmra.mxu0 %v1195
  %v1282 = vpop.f32.mrf.mxu0
  %v1283 = vadd.f32 0.0, %v1282
  %v1284 = vpop.f32.mrf.mxu0
  %v1285 = vadd.f32 0.0, %v1284
  %1286 = vmatprep.mubr.f32.mxu0 0.0
  %1287 = vmatmul.mubr.f32.gmra.mxu0 %v1198
  %v1288 = vpop.f32.mrf.mxu0
  %v1289 = vadd.f32 0.0, %v1288
  %v1290 = vpop.f32.mrf.mxu0
  %v1291 = vadd.f32 0.0, %v1290
  %1292 = vdwg.mxu0
  %v1293 = vadd.f32 %v1153, %v1271
  %v1294 = vadd.f32 %v1154, %v1273
  %v1295 = vadd.f32 %v1155, %v1277
  %v1296 = vadd.f32 %v1156, %v1279
  %v1297 = vadd.f32 %v1157, %v1283
  %v1298 = vadd.f32 %v1158, %v1285
  %v1299 = vadd.f32 %v1159, %v1289
  %v1300 = vadd.f32 %v1160, %v1291
  %vm1301 = vcmp.gt.f32.partialorder %v1293, 0.0
  %vm1302 = vcmp.gt.f32.partialorder %v1294, 0.0
  %vm1303 = vcmp.gt.f32.partialorder %v1295, 0.0
  %vm1304 = vcmp.gt.f32.partialorder %v1296, 0.0
  %vm1305 = vcmp.gt.f32.partialorder %v1297, 0.0
  %vm1306 = vcmp.gt.f32.partialorder %v1298, 0.0
  %vm1307 = vcmp.gt.f32.partialorder %v1299, 0.0
  %vm1308 = vcmp.gt.f32.partialorder %v1300, 0.0
  %v1309 = vmul.f32 %v1293, 0.01
  %v1310 = vmul.f32 %v1294, 0.01
  %v1311 = vmul.f32 %v1295, 0.01
  %v1312 = vmul.f32 %v1296, 0.01
  %v1313 = vmul.f32 %v1297, 0.01
  %v1314 = vmul.f32 %v1298, 0.01
  %v1315 = vmul.f32 %v1299, 0.01
  %v1316 = vmul.f32 %v1300, 0.01
  %v1317 = vsel %vm1301, %v1293, %v1309
  %v1318 = vsel %vm1302, %v1294, %v1310
  %v1319 = vsel %vm1303, %v1295, %v1311
  %v1320 = vsel %vm1304, %v1296, %v1312
  %v1321 = vsel %vm1305, %v1297, %v1313
  %v1322 = vsel %vm1306, %v1298, %v1314
  %v1323 = vsel %vm1307, %v1299, %v1315
  %v1324 = vsel %vm1308, %v1300, %v1316
  %1325 = vst [vmem:[#allocation2 + $0x8] sm:$0xff] %v1317
  %1326 = vst [vmem:[#allocation2 + $0x10] sm:$0xff] %v1318
  %1327 = vst [vmem:[#allocation2 + $0x28] sm:$0xff] %v1319
  %1328 = vst [vmem:[#allocation2 + $0x30] sm:$0xff] %v1320
  %1329 = vst [vmem:[#allocation2 + $0x48] sm:$0xff] %v1321
  %1330 = vst [vmem:[#allocation2 + $0x50] sm:$0xff] %v1322
  %1331 = vst [vmem:[#allocation2 + $0x68] sm:$0xff] %v1323
  %1332 = vst [vmem:[#allocation2 + $0x70] sm:$0xff] %v1324
  %v1333 = vld [vmem:[#allocation2] sm:$0xff]
  %v1334 = vld [vmem:[#allocation2 + $0x8] sm:$0xff]
  %v1335 = vld [vmem:[#allocation2 + $0x10] sm:$0xff]
  %v1336 = vld [vmem:[#allocation2 + $0x20] sm:$0xff]
  %v1337 = vld [vmem:[#allocation2 + $0x28] sm:$0xff]
  %v1338 = vld [vmem:[#allocation2 + $0x30] sm:$0xff]
  %v1339 = vld [vmem:[#allocation2 + $0x40] sm:$0xff]
  %v1340 = vld [vmem:[#allocation2 + $0x48] sm:$0xff]
  %v1341 = vld [vmem:[#allocation2 + $0x50] sm:$0xff]
  %v1342 = vld [vmem:[#allocation2 + $0x60] sm:$0xff]
  %v1343 = vld [vmem:[#allocation2 + $0x68] sm:$0xff]
  %v1344 = vld [vmem:[#allocation2 + $0x70] sm:$0xff]
  %v1345 = vmul.f32 %v1333, %v88
  %v1346 = vmul.f32 %v1334, %v92
  %v1347 = vmul.f32 %v1335, %v90
  %v1348 = vmul.f32 %v1336, %v88
  %v1349 = vmul.f32 %v1337, %v92
  %v1350 = vmul.f32 %v1338, %v90
  %v1351 = vmul.f32 %v1339, %v88
  %v1352 = vmul.f32 %v1340, %v92
  %v1353 = vmul.f32 %v1341, %v90
  %v1354 = vmul.f32 %v1342, %v88
  %v1355 = vmul.f32 %v1343, %v92
  %v1356 = vmul.f32 %v1344, %v90
  %v1357 = vld [vmem:[%s2] sm:$0xff]
  %v1358 = vld [vmem:[%s2 + $0x8] sm:$0xff]
  %v1359 = vld [vmem:[%s2 + $0x10] sm:$0xff]
  %v1360 = vld [vmem:[%s2 + $0x18] sm:$0xff]
  %s1361 = scalar_lea.vmem %s2, 32
  %v1362 = vld [vmem:[%s1361] sm:$0xff]
  %v1363 = vld [vmem:[%s1361 + $0x8] sm:$0xff]
  %v1364 = vld [vmem:[%s1361 + $0x10] sm:$0xff]
  %v1365 = vld [vmem:[%s1361 + $0x18] sm:$0xff]
  %1378 = vrot.lane.b32.xlu0 %v1333, 16
  %v1379 = vpop.permute.xlu0 %1378
  %1380 = vrot.lane.b32.xlu0 %v1334, 16
  %v1381 = vpop.permute.xlu0 %1380
  %1382 = vrot.lane.b32.xlu0 %v1335, 16
  %v1383 = vpop.permute.xlu0 %1382
  %1384 = vrot.lane.b32.xlu0 %v1336, 16
  %v1385 = vpop.permute.xlu0 %1384
  %1386 = vrot.lane.b32.xlu0 %v1337, 16
  %v1387 = vpop.permute.xlu0 %1386
  %1388 = vrot.lane.b32.xlu0 %v1338, 16
  %v1389 = vpop.permute.xlu0 %1388
  %1390 = vrot.lane.b32.xlu0 %v1339, 16
  %v1391 = vpop.permute.xlu0 %1390
  %1392 = vrot.lane.b32.xlu0 %v1340, 16
  %v1393 = vpop.permute.xlu0 %1392
  %1394 = vrot.lane.b32.xlu0 %v1341, 16
  %v1395 = vpop.permute.xlu0 %1394
  %1396 = vrot.lane.b32.xlu0 %v1342, 16
  %v1397 = vpop.permute.xlu0 %1396
  %1398 = vrot.lane.b32.xlu0 %v1343, 16
  %v1399 = vpop.permute.xlu0 %1398
  %1400 = vrot.lane.b32.xlu0 %v1344, 16
  %v1401 = vpop.permute.xlu0 %1400
  %v1402 = vsel %vm117, %v1379, %v1381
  %v1403 = vsel %vm117, %v1381, %v1383
  %v1404 = vsel %vm117, %v1385, %v1387
  %v1405 = vsel %vm117, %v1387, %v1389
  %v1406 = vsel %vm117, %v1391, %v1393
  %v1407 = vsel %vm117, %v1393, %v1395
  %v1408 = vsel %vm117, %v1397, %v1399
  %v1409 = vsel %vm117, %v1399, %v1401
  %vm1418 = vcmask 261120
  %v1420 = vsel %vm1418, %v1362, 0
  %v1423 = vsel %vm1418, %v1363, 0
  %v1426 = vsel %vm1418, %v1364, 0
  %v1429 = vsel %vm1418, %v1365, 0
  %1431 = vmatprep.subr.mxu0 0.0
  %1432 = vmatpush1.msra.mxu0 0.0
  %1433 = vmatprep.subr.mxu0 0.0
  %1434 = vmatpush1.msra.mxu0 0.0
  %1435 = vmatprep.subr.mxu0 0.0
  %1436 = vmatpush1.msra.mxu0 0.0
  %1437 = vmatprep.subr.mxu0 0.0
  %1438 = vmatpush1.msra.mxu0 0.0
  %1439 = vmatprep.subr.mxu0 0.0
  %1440 = vmatpush1.msra.mxu0 0.0
  %1441 = vmatprep.subr.mxu0 0.0
  %1442 = vmatpush1.msra.mxu0 0.0
  %1443 = vmatprep.subr.mxu0 0.0
  %1444 = vmatpush1.msra.mxu0 0.0
  %1445 = vmatprep.subr.mxu0 0.0
  %1446 = vmatpush1.msra.mxu0 0.0
  %1447 = vmatprep.subr.mxu0 0.0
  %1448 = vmatpush1.msra.mxu0 0.0
  %1449 = vmatprep.subr.mxu0 0.0
  %1450 = vmatpush1.msra.mxu0 0.0
  %1451 = vmatprep.subr.mxu0 0.0
  %1452 = vmatpush1.msra.mxu0 0.0
  %1453 = vmatprep.subr.mxu0 0.0
  %1454 = vmatpush1.msra.mxu0 0.0
  %1455 = vmatprep.subr.mxu0 %v1409
  %1456 = vmatpush1.msra.mxu0 %v1408
  %1457 = vmatprep.subr.mxu0 %v1407
  %1458 = vmatpush1.msra.mxu0 %v1406
  %1459 = vmatprep.subr.mxu0 %v1405
  %1460 = vmatpush1.msra.mxu0 %v1404
  %1461 = vmatprep.subr.mxu0 %v1403
  %1462 = vmatpush1.msra.mxu0 %v1402
  %1463 = vmatprep.subr.mxu0 0.0
  %1464 = vmatpush2.msra.mxu0 0.0
  %1465 = vmatprep.subr.mxu0 0.0
  %1466 = vmatpush2.msra.mxu0 0.0
  %1467 = vmatprep.subr.mxu0 0.0
  %1468 = vmatpush2.msra.mxu0 0.0
  %1469 = vmatprep.subr.mxu0 0.0
  %1470 = vmatpush2.msra.mxu0 0.0
  %1471 = vmatprep.subr.mxu0 0.0
  %1472 = vmatpush2.msra.mxu0 0.0
  %1473 = vmatprep.subr.mxu0 0.0
  %1474 = vmatpush2.msra.mxu0 0.0
  %1475 = vmatprep.subr.mxu0 0.0
  %1476 = vmatpush2.msra.mxu0 0.0
  %1477 = vmatprep.subr.mxu0 0.0
  %1478 = vmatpush2.msra.mxu0 0.0
  %1479 = vmatprep.subr.mxu0 0.0
  %1480 = vmatpush2.msra.mxu0 0.0
  %1481 = vmatprep.subr.mxu0 0.0
  %1482 = vmatpush2.msra.mxu0 0.0
  %1483 = vmatprep.subr.mxu0 0.0
  %1484 = vmatpush2.msra.mxu0 0.0
  %1485 = vmatprep.subr.mxu0 0.0
  %1486 = vmatpush2.msra.mxu0 0.0
  %1487 = vmatprep.subr.mxu0 0.0
  %1488 = vmatpush2.msra.mxu0 0.0
  %1489 = vmatprep.subr.mxu0 0.0
  %1490 = vmatpush2.msra.mxu0 0.0
  %1491 = vmatprep.subr.mxu0 0.0
  %1492 = vmatpush2.msra.mxu0 0.0
  %1493 = vmatprep.subr.mxu0 0.0
  %1494 = vmatpush2.msra.mxu0 0.0
  %1495 = vmatprep.mubr.f32.mxu0 0.0
  %1496 = vmatmul.mubr.f32.gmra.mxu0 %v1420
  %v1497 = vpop.f32.mrf.mxu0
  %v1498 = vadd.f32 0.0, %v1497
  %v1499 = vpop.f32.mrf.mxu0
  %v1500 = vadd.f32 0.0, %v1499
  %1501 = vmatprep.mubr.f32.mxu0 0.0
  %1502 = vmatmul.mubr.f32.gmra.mxu0 %v1423
  %v1503 = vpop.f32.mrf.mxu0
  %v1504 = vadd.f32 0.0, %v1503
  %v1505 = vpop.f32.mrf.mxu0
  %v1506 = vadd.f32 0.0, %v1505
  %1507 = vmatprep.mubr.f32.mxu0 0.0
  %1508 = vmatmul.mubr.f32.gmra.mxu0 %v1426
  %v1509 = vpop.f32.mrf.mxu0
  %v1510 = vadd.f32 0.0, %v1509
  %v1511 = vpop.f32.mrf.mxu0
  %v1512 = vadd.f32 0.0, %v1511
  %1513 = vmatprep.mubr.f32.mxu0 0.0
  %1514 = vmatmul.mubr.f32.gmra.mxu0 %v1429
  %v1515 = vpop.f32.mrf.mxu0
  %v1516 = vadd.f32 0.0, %v1515
  %v1517 = vpop.f32.mrf.mxu0
  %v1518 = vadd.f32 0.0, %v1517
  %1519 = vdwg.mxu0
  %1532 = vrot.lane.b32.xlu0 %v1345, 17
  %v1533 = vpop.permute.xlu0 %1532
  %1534 = vrot.lane.b32.xlu0 %v1346, 17
  %v1535 = vpop.permute.xlu0 %1534
  %1536 = vrot.lane.b32.xlu0 %v1347, 17
  %v1537 = vpop.permute.xlu0 %1536
  %1538 = vrot.lane.b32.xlu0 %v1348, 17
  %v1539 = vpop.permute.xlu0 %1538
  %1540 = vrot.lane.b32.xlu0 %v1349, 17
  %v1541 = vpop.permute.xlu0 %1540
  %1542 = vrot.lane.b32.xlu0 %v1350, 17
  %v1543 = vpop.permute.xlu0 %1542
  %1544 = vrot.lane.b32.xlu0 %v1351, 17
  %v1545 = vpop.permute.xlu0 %1544
  %1546 = vrot.lane.b32.xlu0 %v1352, 17
  %v1547 = vpop.permute.xlu0 %1546
  %1548 = vrot.lane.b32.xlu0 %v1353, 17
  %v1549 = vpop.permute.xlu0 %1548
  %1550 = vrot.lane.b32.xlu0 %v1354, 17
  %v1551 = vpop.permute.xlu0 %1550
  %1552 = vrot.lane.b32.xlu0 %v1355, 17
  %v1553 = vpop.permute.xlu0 %1552
  %1554 = vrot.lane.b32.xlu0 %v1356, 17
  %v1555 = vpop.permute.xlu0 %1554
  %v1556 = vsel %vm236, %v1533, %v1535
  %v1557 = vsel %vm236, %v1535, %v1537
  %v1558 = vsel %vm236, %v1539, %v1541
  %v1559 = vsel %vm236, %v1541, %v1543
  %v1560 = vsel %vm236, %v1545, %v1547
  %v1561 = vsel %vm236, %v1547, %v1549
  %v1562 = vsel %vm236, %v1551, %v1553
  %v1563 = vsel %vm236, %v1553, %v1555
  %v1573 = vsel %vm1418, %v1357, 0
  %v1576 = vsel %vm1418, %v1358, 0
  %v1579 = vsel %vm1418, %v1359, 0
  %v1582 = vsel %vm1418, %v1360, 0
  %1584 = vmatprep.subr.mxu0 0.0
  %1585 = vmatpush1.msra.mxu0 0.0
  %1586 = vmatprep.subr.mxu0 0.0
  %1587 = vmatpush1.msra.mxu0 0.0
  %1588 = vmatprep.subr.mxu0 0.0
  %1589 = vmatpush1.msra.mxu0 0.0
  %1590 = vmatprep.subr.mxu0 0.0
  %1591 = vmatpush1.msra.mxu0 0.0
  %1592 = vmatprep.subr.mxu0 0.0
  %1593 = vmatpush1.msra.mxu0 0.0
  %1594 = vmatprep.subr.mxu0 0.0
  %1595 = vmatpush1.msra.mxu0 0.0
  %1596 = vmatprep.subr.mxu0 0.0
  %1597 = vmatpush1.msra.mxu0 0.0
  %1598 = vmatprep.subr.mxu0 0.0
  %1599 = vmatpush1.msra.mxu0 0.0
  %1600 = vmatprep.subr.mxu0 0.0
  %1601 = vmatpush1.msra.mxu0 0.0
  %1602 = vmatprep.subr.mxu0 0.0
  %1603 = vmatpush1.msra.mxu0 0.0
  %1604 = vmatprep.subr.mxu0 0.0
  %1605 = vmatpush1.msra.mxu0 0.0
  %1606 = vmatprep.subr.mxu0 0.0
  %1607 = vmatpush1.msra.mxu0 0.0
  %1608 = vmatprep.subr.mxu0 %v1563
  %1609 = vmatpush1.msra.mxu0 %v1562
  %1610 = vmatprep.subr.mxu0 %v1561
  %1611 = vmatpush1.msra.mxu0 %v1560
  %1612 = vmatprep.subr.mxu0 %v1559
  %1613 = vmatpush1.msra.mxu0 %v1558
  %1614 = vmatprep.subr.mxu0 %v1557
  %1615 = vmatpush1.msra.mxu0 %v1556
  %1616 = vmatprep.subr.mxu0 0.0
  %1617 = vmatpush2.msra.mxu0 0.0
  %1618 = vmatprep.subr.mxu0 0.0
  %1619 = vmatpush2.msra.mxu0 0.0
  %1620 = vmatprep.subr.mxu0 0.0
  %1621 = vmatpush2.msra.mxu0 0.0
  %1622 = vmatprep.subr.mxu0 0.0
  %1623 = vmatpush2.msra.mxu0 0.0
  %1624 = vmatprep.subr.mxu0 0.0
  %1625 = vmatpush2.msra.mxu0 0.0
  %1626 = vmatprep.subr.mxu0 0.0
  %1627 = vmatpush2.msra.mxu0 0.0
  %1628 = vmatprep.subr.mxu0 0.0
  %1629 = vmatpush2.msra.mxu0 0.0
  %1630 = vmatprep.subr.mxu0 0.0
  %1631 = vmatpush2.msra.mxu0 0.0
  %1632 = vmatprep.subr.mxu0 0.0
  %1633 = vmatpush2.msra.mxu0 0.0
  %1634 = vmatprep.subr.mxu0 0.0
  %1635 = vmatpush2.msra.mxu0 0.0
  %1636 = vmatprep.subr.mxu0 0.0
  %1637 = vmatpush2.msra.mxu0 0.0
  %1638 = vmatprep.subr.mxu0 0.0
  %1639 = vmatpush2.msra.mxu0 0.0
  %1640 = vmatprep.subr.mxu0 0.0
  %1641 = vmatpush2.msra.mxu0 0.0
  %1642 = vmatprep.subr.mxu0 0.0
  %1643 = vmatpush2.msra.mxu0 0.0
  %1644 = vmatprep.subr.mxu0 0.0
  %1645 = vmatpush2.msra.mxu0 0.0
  %1646 = vmatprep.subr.mxu0 0.0
  %1647 = vmatpush2.msra.mxu0 0.0
  %1648 = vmatprep.mubr.f32.mxu0 0.0
  %1649 = vmatmul.mubr.f32.gmra.mxu0 %v1573
  %v1650 = vpop.f32.mrf.mxu0
  %v1651 = vadd.f32 %v1498, %v1650
  %v1652 = vpop.f32.mrf.mxu0
  %v1653 = vadd.f32 %v1500, %v1652
  %1654 = vmatprep.mubr.f32.mxu0 0.0
  %1655 = vmatmul.mubr.f32.gmra.mxu0 %v1576
  %v1656 = vpop.f32.mrf.mxu0
  %v1657 = vadd.f32 %v1504, %v1656
  %v1658 = vpop.f32.mrf.mxu0
  %v1659 = vadd.f32 %v1506, %v1658
  %1660 = vmatprep.mubr.f32.mxu0 0.0
  %1661 = vmatmul.mubr.f32.gmra.mxu0 %v1579
  %v1662 = vpop.f32.mrf.mxu0
  %v1663 = vadd.f32 %v1510, %v1662
  %v1664 = vpop.f32.mrf.mxu0
  %v1665 = vadd.f32 %v1512, %v1664
  %1666 = vmatprep.mubr.f32.mxu0 0.0
  %1667 = vmatmul.mubr.f32.gmra.mxu0 %v1582
  %v1668 = vpop.f32.mrf.mxu0
  %v1669 = vadd.f32 %v1516, %v1668
  %v1670 = vpop.f32.mrf.mxu0
  %v1671 = vadd.f32 %v1518, %v1670
  %1672 = vdwg.mxu0
  %v1673 = vmul.f32 %v1333, %v347
  %v1674 = vmul.f32 %v1334, %v351
  %v1675 = vmul.f32 %v1335, %v349
  %v1676 = vmul.f32 %v1336, %v347
  %v1677 = vmul.f32 %v1337, %v351
  %v1678 = vmul.f32 %v1338, %v349
  %v1679 = vmul.f32 %v1339, %v347
  %v1680 = vmul.f32 %v1340, %v351
  %v1681 = vmul.f32 %v1341, %v349
  %v1682 = vmul.f32 %v1342, %v347
  %v1683 = vmul.f32 %v1343, %v351
  %v1684 = vmul.f32 %v1344, %v349
  %s1685 = scalar_lea.vmem %s2, 64
  %v1686 = vld [vmem:[%s1685] sm:$0xff]
  %v1687 = vld [vmem:[%s1685 + $0x8] sm:$0xff]
  %v1688 = vld [vmem:[%s1685 + $0x10] sm:$0xff]
  %v1689 = vld [vmem:[%s1685 + $0x18] sm:$0xff]
  %1702 = vrot.lane.b32.xlu0 %v1673, 15
  %v1703 = vpop.permute.xlu0 %1702
  %1704 = vrot.lane.b32.xlu0 %v1674, 15
  %v1705 = vpop.permute.xlu0 %1704
  %1706 = vrot.lane.b32.xlu0 %v1675, 15
  %v1707 = vpop.permute.xlu0 %1706
  %1708 = vrot.lane.b32.xlu0 %v1676, 15
  %v1709 = vpop.permute.xlu0 %1708
  %1710 = vrot.lane.b32.xlu0 %v1677, 15
  %v1711 = vpop.permute.xlu0 %1710
  %1712 = vrot.lane.b32.xlu0 %v1678, 15
  %v1713 = vpop.permute.xlu0 %1712
  %1714 = vrot.lane.b32.xlu0 %v1679, 15
  %v1715 = vpop.permute.xlu0 %1714
  %1716 = vrot.lane.b32.xlu0 %v1680, 15
  %v1717 = vpop.permute.xlu0 %1716
  %1718 = vrot.lane.b32.xlu0 %v1681, 15
  %v1719 = vpop.permute.xlu0 %1718
  %1720 = vrot.lane.b32.xlu0 %v1682, 15
  %v1721 = vpop.permute.xlu0 %1720
  %1722 = vrot.lane.b32.xlu0 %v1683, 15
  %v1723 = vpop.permute.xlu0 %1722
  %1724 = vrot.lane.b32.xlu0 %v1684, 15
  %v1725 = vpop.permute.xlu0 %1724
  %v1726 = vsel %vm372, %v1703, %v1705
  %v1727 = vsel %vm372, %v1705, %v1707
  %v1728 = vsel %vm372, %v1709, %v1711
  %v1729 = vsel %vm372, %v1711, %v1713
  %v1730 = vsel %vm372, %v1715, %v1717
  %v1731 = vsel %vm372, %v1717, %v1719
  %v1732 = vsel %vm372, %v1721, %v1723
  %v1733 = vsel %vm372, %v1723, %v1725
  %v1743 = vsel %vm1418, %v1686, 0
  %v1746 = vsel %vm1418, %v1687, 0
  %v1749 = vsel %vm1418, %v1688, 0
  %v1752 = vsel %vm1418, %v1689, 0
  %1754 = vmatprep.subr.mxu0 0.0
  %1755 = vmatpush1.msra.mxu0 0.0
  %1756 = vmatprep.subr.mxu0 0.0
  %1757 = vmatpush1.msra.mxu0 0.0
  %1758 = vmatprep.subr.mxu0 0.0
  %1759 = vmatpush1.msra.mxu0 0.0
  %1760 = vmatprep.subr.mxu0 0.0
  %1761 = vmatpush1.msra.mxu0 0.0
  %1762 = vmatprep.subr.mxu0 0.0
  %1763 = vmatpush1.msra.mxu0 0.0
  %1764 = vmatprep.subr.mxu0 0.0
  %1765 = vmatpush1.msra.mxu0 0.0
  %1766 = vmatprep.subr.mxu0 0.0
  %1767 = vmatpush1.msra.mxu0 0.0
  %1768 = vmatprep.subr.mxu0 0.0
  %1769 = vmatpush1.msra.mxu0 0.0
  %1770 = vmatprep.subr.mxu0 0.0
  %1771 = vmatpush1.msra.mxu0 0.0
  %1772 = vmatprep.subr.mxu0 0.0
  %1773 = vmatpush1.msra.mxu0 0.0
  %1774 = vmatprep.subr.mxu0 0.0
  %1775 = vmatpush1.msra.mxu0 0.0
  %1776 = vmatprep.subr.mxu0 0.0
  %1777 = vmatpush1.msra.mxu0 0.0
  %1778 = vmatprep.subr.mxu0 %v1733
  %1779 = vmatpush1.msra.mxu0 %v1732
  %1780 = vmatprep.subr.mxu0 %v1731
  %1781 = vmatpush1.msra.mxu0 %v1730
  %1782 = vmatprep.subr.mxu0 %v1729
  %1783 = vmatpush1.msra.mxu0 %v1728
  %1784 = vmatprep.subr.mxu0 %v1727
  %1785 = vmatpush1.msra.mxu0 %v1726
  %1786 = vmatprep.subr.mxu0 0.0
  %1787 = vmatpush2.msra.mxu0 0.0
  %1788 = vmatprep.subr.mxu0 0.0
  %1789 = vmatpush2.msra.mxu0 0.0
  %1790 = vmatprep.subr.mxu0 0.0
  %1791 = vmatpush2.msra.mxu0 0.0
  %1792 = vmatprep.subr.mxu0 0.0
  %1793 = vmatpush2.msra.mxu0 0.0
  %1794 = vmatprep.subr.mxu0 0.0
  %1795 = vmatpush2.msra.mxu0 0.0
  %1796 = vmatprep.subr.mxu0 0.0
  %1797 = vmatpush2.msra.mxu0 0.0
  %1798 = vmatprep.subr.mxu0 0.0
  %1799 = vmatpush2.msra.mxu0 0.0
  %1800 = vmatprep.subr.mxu0 0.0
  %1801 = vmatpush2.msra.mxu0 0.0
  %1802 = vmatprep.subr.mxu0 0.0
  %1803 = vmatpush2.msra.mxu0 0.0
  %1804 = vmatprep.subr.mxu0 0.0
  %1805 = vmatpush2.msra.mxu0 0.0
  %1806 = vmatprep.subr.mxu0 0.0
  %1807 = vmatpush2.msra.mxu0 0.0
  %1808 = vmatprep.subr.mxu0 0.0
  %1809 = vmatpush2.msra.mxu0 0.0
  %1810 = vmatprep.subr.mxu0 0.0
  %1811 = vmatpush2.msra.mxu0 0.0
  %1812 = vmatprep.subr.mxu0 0.0
  %1813 = vmatpush2.msra.mxu0 0.0
  %1814 = vmatprep.subr.mxu0 0.0
  %1815 = vmatpush2.msra.mxu0 0.0
  %1816 = vmatprep.subr.mxu0 0.0
  %1817 = vmatpush2.msra.mxu0 0.0
  %1818 = vmatprep.mubr.f32.mxu0 0.0
  %1819 = vmatmul.mubr.f32.gmra.mxu0 %v1743
  %v1820 = vpop.f32.mrf.mxu0
  %v1821 = vadd.f32 0.0, %v1820
  %v1822 = vpop.f32.mrf.mxu0
  %v1823 = vadd.f32 0.0, %v1822
  %1824 = vmatprep.mubr.f32.mxu0 0.0
  %1825 = vmatmul.mubr.f32.gmra.mxu0 %v1746
  %v1826 = vpop.f32.mrf.mxu0
  %v1827 = vadd.f32 0.0, %v1826
  %v1828 = vpop.f32.mrf.mxu0
  %v1829 = vadd.f32 0.0, %v1828
  %1830 = vmatprep.mubr.f32.mxu0 0.0
  %1831 = vmatmul.mubr.f32.gmra.mxu0 %v1749
  %v1832 = vpop.f32.mrf.mxu0
  %v1833 = vadd.f32 0.0, %v1832
  %v1834 = vpop.f32.mrf.mxu0
  %v1835 = vadd.f32 0.0, %v1834
  %1836 = vmatprep.mubr.f32.mxu0 0.0
  %1837 = vmatmul.mubr.f32.gmra.mxu0 %v1752
  %v1838 = vpop.f32.mrf.mxu0
  %v1839 = vadd.f32 0.0, %v1838
  %v1840 = vpop.f32.mrf.mxu0
  %v1841 = vadd.f32 0.0, %v1840
  %1842 = vdwg.mxu0
  %v1843 = vadd.f32 %v1651, %v1821
  %v1844 = vadd.f32 %v1653, %v1823
  %v1845 = vadd.f32 %v1657, %v1827
  %v1846 = vadd.f32 %v1659, %v1829
  %v1847 = vadd.f32 %v1663, %v1833
  %v1848 = vadd.f32 %v1665, %v1835
  %v1849 = vadd.f32 %v1669, %v1839
  %v1850 = vadd.f32 %v1671, %v1841
  %v1851 = vmul.f32 %v1333, %v489
  %v1852 = vmul.f32 %v1334, %v493
  %v1853 = vmul.f32 %v1335, %v491
  %v1854 = vmul.f32 %v1336, %v489
  %v1855 = vmul.f32 %v1337, %v493
  %v1856 = vmul.f32 %v1338, %v491
  %v1857 = vmul.f32 %v1339, %v489
  %v1858 = vmul.f32 %v1340, %v493
  %v1859 = vmul.f32 %v1341, %v491
  %v1860 = vmul.f32 %v1342, %v489
  %v1861 = vmul.f32 %v1343, %v493
  %v1862 = vmul.f32 %v1344, %v491
  %s1863 = scalar_lea.vmem %s2, 96
  %v1864 = vld [vmem:[%s1863] sm:$0xff]
  %v1865 = vld [vmem:[%s1863 + $0x8] sm:$0xff]
  %v1866 = vld [vmem:[%s1863 + $0x10] sm:$0xff]
  %v1867 = vld [vmem:[%s1863 + $0x18] sm:$0xff]
  %1880 = vrot.lane.b32.xlu0 %v1851, 1
  %v1881 = vpop.permute.xlu0 %1880
  %1882 = vrot.lane.b32.xlu0 %v1852, 1
  %v1883 = vpop.permute.xlu0 %1882
  %1884 = vrot.lane.b32.xlu0 %v1853, 1
  %v1885 = vpop.permute.xlu0 %1884
  %1886 = vrot.lane.b32.xlu0 %v1854, 1
  %v1887 = vpop.permute.xlu0 %1886
  %1888 = vrot.lane.b32.xlu0 %v1855, 1
  %v1889 = vpop.permute.xlu0 %1888
  %1890 = vrot.lane.b32.xlu0 %v1856, 1
  %v1891 = vpop.permute.xlu0 %1890
  %1892 = vrot.lane.b32.xlu0 %v1857, 1
  %v1893 = vpop.permute.xlu0 %1892
  %1894 = vrot.lane.b32.xlu0 %v1858, 1
  %v1895 = vpop.permute.xlu0 %1894
  %1896 = vrot.lane.b32.xlu0 %v1859, 1
  %v1897 = vpop.permute.xlu0 %1896
  %1898 = vrot.lane.b32.xlu0 %v1860, 1
  %v1899 = vpop.permute.xlu0 %1898
  %1900 = vrot.lane.b32.xlu0 %v1861, 1
  %v1901 = vpop.permute.xlu0 %1900
  %1902 = vrot.lane.b32.xlu0 %v1862, 1
  %v1903 = vpop.permute.xlu0 %1902
  %v1904 = vsel %vm514, %v1881, %v1883
  %v1905 = vsel %vm514, %v1883, %v1885
  %v1906 = vsel %vm514, %v1887, %v1889
  %v1907 = vsel %vm514, %v1889, %v1891
  %v1908 = vsel %vm514, %v1893, %v1895
  %v1909 = vsel %vm514, %v1895, %v1897
  %v1910 = vsel %vm514, %v1899, %v1901
  %v1911 = vsel %vm514, %v1901, %v1903
  %v1921 = vsel %vm1418, %v1864, 0
  %v1924 = vsel %vm1418, %v1865, 0
  %v1927 = vsel %vm1418, %v1866, 0
  %v1930 = vsel %vm1418, %v1867, 0
  %1932 = vmatprep.subr.mxu0 0.0
  %1933 = vmatpush1.msra.mxu0 0.0
  %1934 = vmatprep.subr.mxu0 0.0
  %1935 = vmatpush1.msra.mxu0 0.0
  %1936 = vmatprep.subr.mxu0 0.0
  %1937 = vmatpush1.msra.mxu0 0.0
  %1938 = vmatprep.subr.mxu0 0.0
  %1939 = vmatpush1.msra.mxu0 0.0
  %1940 = vmatprep.subr.mxu0 0.0
  %1941 = vmatpush1.msra.mxu0 0.0
  %1942 = vmatprep.subr.mxu0 0.0
  %1943 = vmatpush1.msra.mxu0 0.0
  %1944 = vmatprep.subr.mxu0 0.0
  %1945 = vmatpush1.msra.mxu0 0.0
  %1946 = vmatprep.subr.mxu0 0.0
  %1947 = vmatpush1.msra.mxu0 0.0
  %1948 = vmatprep.subr.mxu0 0.0
  %1949 = vmatpush1.msra.mxu0 0.0
  %1950 = vmatprep.subr.mxu0 0.0
  %1951 = vmatpush1.msra.mxu0 0.0
  %1952 = vmatprep.subr.mxu0 0.0
  %1953 = vmatpush1.msra.mxu0 0.0
  %1954 = vmatprep.subr.mxu0 0.0
  %1955 = vmatpush1.msra.mxu0 0.0
  %1956 = vmatprep.subr.mxu0 %v1911
  %1957 = vmatpush1.msra.mxu0 %v1910
  %1958 = vmatprep.subr.mxu0 %v1909
  %1959 = vmatpush1.msra.mxu0 %v1908
  %1960 = vmatprep.subr.mxu0 %v1907
  %1961 = vmatpush1.msra.mxu0 %v1906
  %1962 = vmatprep.subr.mxu0 %v1905
  %1963 = vmatpush1.msra.mxu0 %v1904
  %1964 = vmatprep.subr.mxu0 0.0
  %1965 = vmatpush2.msra.mxu0 0.0
  %1966 = vmatprep.subr.mxu0 0.0
  %1967 = vmatpush2.msra.mxu0 0.0
  %1968 = vmatprep.subr.mxu0 0.0
  %1969 = vmatpush2.msra.mxu0 0.0
  %1970 = vmatprep.subr.mxu0 0.0
  %1971 = vmatpush2.msra.mxu0 0.0
  %1972 = vmatprep.subr.mxu0 0.0
  %1973 = vmatpush2.msra.mxu0 0.0
  %1974 = vmatprep.subr.mxu0 0.0
  %1975 = vmatpush2.msra.mxu0 0.0
  %1976 = vmatprep.subr.mxu0 0.0
  %1977 = vmatpush2.msra.mxu0 0.0
  %1978 = vmatprep.subr.mxu0 0.0
  %1979 = vmatpush2.msra.mxu0 0.0
  %1980 = vmatprep.subr.mxu0 0.0
  %1981 = vmatpush2.msra.mxu0 0.0
  %1982 = vmatprep.subr.mxu0 0.0
  %1983 = vmatpush2.msra.mxu0 0.0
  %1984 = vmatprep.subr.mxu0 0.0
  %1985 = vmatpush2.msra.mxu0 0.0
  %1986 = vmatprep.subr.mxu0 0.0
  %1987 = vmatpush2.msra.mxu0 0.0
  %1988 = vmatprep.subr.mxu0 0.0
  %1989 = vmatpush2.msra.mxu0 0.0
  %1990 = vmatprep.subr.mxu0 0.0
  %1991 = vmatpush2.msra.mxu0 0.0
  %1992 = vmatprep.subr.mxu0 0.0
  %1993 = vmatpush2.msra.mxu0 0.0
  %1994 = vmatprep.subr.mxu0 0.0
  %1995 = vmatpush2.msra.mxu0 0.0
  %1996 = vmatprep.mubr.f32.mxu0 0.0
  %1997 = vmatmul.mubr.f32.gmra.mxu0 %v1921
  %v1998 = vpop.f32.mrf.mxu0
  %v1999 = vadd.f32 0.0, %v1998
  %v2000 = vpop.f32.mrf.mxu0
  %v2001 = vadd.f32 0.0, %v2000
  %2002 = vmatprep.mubr.f32.mxu0 0.0
  %2003 = vmatmul.mubr.f32.gmra.mxu0 %v1924
  %v2004 = vpop.f32.mrf.mxu0
  %v2005 = vadd.f32 0.0, %v2004
  %v2006 = vpop.f32.mrf.mxu0
  %v2007 = vadd.f32 0.0, %v2006
  %2008 = vmatprep.mubr.f32.mxu0 0.0
  %2009 = vmatmul.mubr.f32.gmra.mxu0 %v1927
  %v2010 = vpop.f32.mrf.mxu0
  %v2011 = vadd.f32 0.0, %v2010
  %v2012 = vpop.f32.mrf.mxu0
  %v2013 = vadd.f32 0.0, %v2012
  %2014 = vmatprep.mubr.f32.mxu0 0.0
  %2015 = vmatmul.mubr.f32.gmra.mxu0 %v1930
  %v2016 = vpop.f32.mrf.mxu0
  %v2017 = vadd.f32 0.0, %v2016
  %v2018 = vpop.f32.mrf.mxu0
  %v2019 = vadd.f32 0.0, %v2018
  %2020 = vdwg.mxu0
  %v2021 = vadd.f32 %v1843, %v1999
  %v2022 = vadd.f32 %v1844, %v2001
  %v2023 = vadd.f32 %v1845, %v2005
  %v2024 = vadd.f32 %v1846, %v2007
  %v2025 = vadd.f32 %v1847, %v2011
  %v2026 = vadd.f32 %v1848, %v2013
  %v2027 = vadd.f32 %v1849, %v2017
  %v2028 = vadd.f32 %v1850, %v2019
  %s2029 = scalar_lea.vmem %s2, 128
  %v2030 = vld [vmem:[%s2029] sm:$0xff]
  %v2031 = vld [vmem:[%s2029 + $0x8] sm:$0xff]
  %v2032 = vld [vmem:[%s2029 + $0x10] sm:$0xff]
  %v2033 = vld [vmem:[%s2029 + $0x18] sm:$0xff]
  %v2035 = vsel %vm1418, %v2030, 0
  %v2038 = vsel %vm1418, %v2031, 0
  %v2041 = vsel %vm1418, %v2032, 0
  %v2044 = vsel %vm1418, %v2033, 0
  %2046 = vmatprep.subr.mxu0 0.0
  %2047 = vmatpush1.msra.mxu0 0.0
  %2048 = vmatprep.subr.mxu0 0.0
  %2049 = vmatpush1.msra.mxu0 0.0
  %2050 = vmatprep.subr.mxu0 0.0
  %2051 = vmatpush1.msra.mxu0 0.0
  %2052 = vmatprep.subr.mxu0 0.0
  %2053 = vmatpush1.msra.mxu0 0.0
  %2054 = vmatprep.subr.mxu0 0.0
  %2055 = vmatpush1.msra.mxu0 0.0
  %2056 = vmatprep.subr.mxu0 0.0
  %2057 = vmatpush1.msra.mxu0 0.0
  %2058 = vmatprep.subr.mxu0 0.0
  %2059 = vmatpush1.msra.mxu0 0.0
  %2060 = vmatprep.subr.mxu0 0.0
  %2061 = vmatpush1.msra.mxu0 0.0
  %2062 = vmatprep.subr.mxu0 0.0
  %2063 = vmatpush1.msra.mxu0 0.0
  %2064 = vmatprep.subr.mxu0 0.0
  %2065 = vmatpush1.msra.mxu0 0.0
  %2066 = vmatprep.subr.mxu0 0.0
  %2067 = vmatpush1.msra.mxu0 0.0
  %2068 = vmatprep.subr.mxu0 0.0
  %2069 = vmatpush1.msra.mxu0 0.0
  %2070 = vmatprep.subr.mxu0 %v1344
  %2071 = vmatpush1.msra.mxu0 %v1343
  %2072 = vmatprep.subr.mxu0 %v1341
  %2073 = vmatpush1.msra.mxu0 %v1340
  %2074 = vmatprep.subr.mxu0 %v1338
  %2075 = vmatpush1.msra.mxu0 %v1337
  %2076 = vmatprep.subr.mxu0 %v1335
  %2077 = vmatpush1.msra.mxu0 %v1334
  %2078 = vmatprep.subr.mxu0 0.0
  %2079 = vmatpush2.msra.mxu0 0.0
  %2080 = vmatprep.subr.mxu0 0.0
  %2081 = vmatpush2.msra.mxu0 0.0
  %2082 = vmatprep.subr.mxu0 0.0
  %2083 = vmatpush2.msra.mxu0 0.0
  %2084 = vmatprep.subr.mxu0 0.0
  %2085 = vmatpush2.msra.mxu0 0.0
  %2086 = vmatprep.subr.mxu0 0.0
  %2087 = vmatpush2.msra.mxu0 0.0
  %2088 = vmatprep.subr.mxu0 0.0
  %2089 = vmatpush2.msra.mxu0 0.0
  %2090 = vmatprep.subr.mxu0 0.0
  %2091 = vmatpush2.msra.mxu0 0.0
  %2092 = vmatprep.subr.mxu0 0.0
  %2093 = vmatpush2.msra.mxu0 0.0
  %2094 = vmatprep.subr.mxu0 0.0
  %2095 = vmatpush2.msra.mxu0 0.0
  %2096 = vmatprep.subr.mxu0 0.0
  %2097 = vmatpush2.msra.mxu0 0.0
  %2098 = vmatprep.subr.mxu0 0.0
  %2099 = vmatpush2.msra.mxu0 0.0
  %2100 = vmatprep.subr.mxu0 0.0
  %2101 = vmatpush2.msra.mxu0 0.0
  %2102 = vmatprep.subr.mxu0 0.0
  %2103 = vmatpush2.msra.mxu0 0.0
  %2104 = vmatprep.subr.mxu0 0.0
  %2105 = vmatpush2.msra.mxu0 0.0
  %2106 = vmatprep.subr.mxu0 0.0
  %2107 = vmatpush2.msra.mxu0 0.0
  %2108 = vmatprep.subr.mxu0 0.0
  %2109 = vmatpush2.msra.mxu0 0.0
  %2110 = vmatprep.mubr.f32.mxu0 0.0
  %2111 = vmatmul.mubr.f32.gmra.mxu0 %v2035
  %v2112 = vpop.f32.mrf.mxu0
  %v2113 = vadd.f32 0.0, %v2112
  %v2114 = vpop.f32.mrf.mxu0
  %v2115 = vadd.f32 0.0, %v2114
  %2116 = vmatprep.mubr.f32.mxu0 0.0
  %2117 = vmatmul.mubr.f32.gmra.mxu0 %v2038
  %v2118 = vpop.f32.mrf.mxu0
  %v2119 = vadd.f32 0.0, %v2118
  %v2120 = vpop.f32.mrf.mxu0
  %v2121 = vadd.f32 0.0, %v2120
  %2122 = vmatprep.mubr.f32.mxu0 0.0
  %2123 = vmatmul.mubr.f32.gmra.mxu0 %v2041
  %v2124 = vpop.f32.mrf.mxu0
  %v2125 = vadd.f32 0.0, %v2124
  %v2126 = vpop.f32.mrf.mxu0
  %v2127 = vadd.f32 0.0, %v2126
  %2128 = vmatprep.mubr.f32.mxu0 0.0
  %2129 = vmatmul.mubr.f32.gmra.mxu0 %v2044
  %v2130 = vpop.f32.mrf.mxu0
  %v2131 = vadd.f32 0.0, %v2130
  %v2132 = vpop.f32.mrf.mxu0
  %v2133 = vadd.f32 0.0, %v2132
  %2134 = vdwg.mxu0
  %v2135 = vadd.f32 %v2021, %v2113
  %v2136 = vadd.f32 %v2022, %v2115
  %v2137 = vadd.f32 %v2023, %v2119
  %v2138 = vadd.f32 %v2024, %v2121
  %v2139 = vadd.f32 %v2025, %v2125
  %v2140 = vadd.f32 %v2026, %v2127
  %v2141 = vadd.f32 %v2027, %v2131
  %v2142 = vadd.f32 %v2028, %v2133
  %v2143 = vld [vmem:[#allocation2 + $0x8] sm:$0xff]
  %v2144 = vld [vmem:[#allocation2 + $0x10] sm:$0xff]
  %v2145 = vld [vmem:[#allocation2 + $0x18] sm:$0xff]
  %v2146 = vld [vmem:[#allocation2 + $0x28] sm:$0xff]
  %v2147 = vld [vmem:[#allocation2 + $0x30] sm:$0xff]
  %v2148 = vld [vmem:[#allocation2 + $0x38] sm:$0xff]
  %v2149 = vld [vmem:[#allocation2 + $0x48] sm:$0xff]
  %v2150 = vld [vmem:[#allocation2 + $0x50] sm:$0xff]
  %v2151 = vld [vmem:[#allocation2 + $0x58] sm:$0xff]
  %v2152 = vld [vmem:[#allocation2 + $0x68] sm:$0xff]
  %v2153 = vld [vmem:[#allocation2 + $0x70] sm:$0xff]
  %v2154 = vld [vmem:[#allocation2 + $0x78] sm:$0xff]
  %v2155 = vmul.f32 %v2143, %v752
  %v2156 = vmul.f32 %v2144, %v755
  %v2157 = vmul.f32 %v2145, %v754
  %v2158 = vmul.f32 %v2146, %v752
  %v2159 = vmul.f32 %v2147, %v755
  %v2160 = vmul.f32 %v2148, %v754
  %v2161 = vmul.f32 %v2149, %v752
  %v2162 = vmul.f32 %v2150, %v755
  %v2163 = vmul.f32 %v2151, %v754
  %v2164 = vmul.f32 %v2152, %v752
  %v2165 = vmul.f32 %v2153, %v755
  %v2166 = vmul.f32 %v2154, %v754
  %s2167 = scalar_lea.vmem %s2, 160
  %v2168 = vld [vmem:[%s2167] sm:$0xff]
  %v2169 = vld [vmem:[%s2167 + $0x8] sm:$0xff]
  %v2170 = vld [vmem:[%s2167 + $0x10] sm:$0xff]
  %v2171 = vld [vmem:[%s2167 + $0x18] sm:$0xff]
  %2184 = vrot.lane.b32.xlu0 %v2155, 127
  %v2185 = vpop.permute.xlu0 %2184
  %2186 = vrot.lane.b32.xlu0 %v2156, 127
  %v2187 = vpop.permute.xlu0 %2186
  %2188 = vrot.lane.b32.xlu0 %v2157, 127
  %v2189 = vpop.permute.xlu0 %2188
  %2190 = vrot.lane.b32.xlu0 %v2158, 127
  %v2191 = vpop.permute.xlu0 %2190
  %2192 = vrot.lane.b32.xlu0 %v2159, 127
  %v2193 = vpop.permute.xlu0 %2192
  %2194 = vrot.lane.b32.xlu0 %v2160, 127
  %v2195 = vpop.permute.xlu0 %2194
  %2196 = vrot.lane.b32.xlu0 %v2161, 127
  %v2197 = vpop.permute.xlu0 %2196
  %2198 = vrot.lane.b32.xlu0 %v2162, 127
  %v2199 = vpop.permute.xlu0 %2198
  %2200 = vrot.lane.b32.xlu0 %v2163, 127
  %v2201 = vpop.permute.xlu0 %2200
  %2202 = vrot.lane.b32.xlu0 %v2164, 127
  %v2203 = vpop.permute.xlu0 %2202
  %2204 = vrot.lane.b32.xlu0 %v2165, 127
  %v2205 = vpop.permute.xlu0 %2204
  %2206 = vrot.lane.b32.xlu0 %v2166, 127
  %v2207 = vpop.permute.xlu0 %2206
  %v2208 = vsel %vm492, %v2185, %v2187
  %v2209 = vsel %vm492, %v2187, %v2189
  %v2210 = vsel %vm492, %v2191, %v2193
  %v2211 = vsel %vm492, %v2193, %v2195
  %v2212 = vsel %vm492, %v2197, %v2199
  %v2213 = vsel %vm492, %v2199, %v2201
  %v2214 = vsel %vm492, %v2203, %v2205
  %v2215 = vsel %vm492, %v2205, %v2207
  %v2225 = vsel %vm1418, %v2168, 0
  %v2228 = vsel %vm1418, %v2169, 0
  %v2231 = vsel %vm1418, %v2170, 0
  %v2234 = vsel %vm1418, %v2171, 0
  %2236 = vmatprep.subr.mxu0 0.0
  %2237 = vmatpush1.msra.mxu0 0.0
  %2238 = vmatprep.subr.mxu0 0.0
  %2239 = vmatpush1.msra.mxu0 0.0
  %2240 = vmatprep.subr.mxu0 0.0
  %2241 = vmatpush1.msra.mxu0 0.0
  %2242 = vmatprep.subr.mxu0 0.0
  %2243 = vmatpush1.msra.mxu0 0.0
  %2244 = vmatprep.subr.mxu0 0.0
  %2245 = vmatpush1.msra.mxu0 0.0
  %2246 = vmatprep.subr.mxu0 0.0
  %2247 = vmatpush1.msra.mxu0 0.0
  %2248 = vmatprep.subr.mxu0 0.0
  %2249 = vmatpush1.msra.mxu0 0.0
  %2250 = vmatprep.subr.mxu0 0.0
  %2251 = vmatpush1.msra.mxu0 0.0
  %2252 = vmatprep.subr.mxu0 0.0
  %2253 = vmatpush1.msra.mxu0 0.0
  %2254 = vmatprep.subr.mxu0 0.0
  %2255 = vmatpush1.msra.mxu0 0.0
  %2256 = vmatprep.subr.mxu0 0.0
  %2257 = vmatpush1.msra.mxu0 0.0
  %2258 = vmatprep.subr.mxu0 0.0
  %2259 = vmatpush1.msra.mxu0 0.0
  %2260 = vmatprep.subr.mxu0 %v2215
  %2261 = vmatpush1.msra.mxu0 %v2214
  %2262 = vmatprep.subr.mxu0 %v2213
  %2263 = vmatpush1.msra.mxu0 %v2212
  %2264 = vmatprep.subr.mxu0 %v2211
  %2265 = vmatpush1.msra.mxu0 %v2210
  %2266 = vmatprep.subr.mxu0 %v2209
  %2267 = vmatpush1.msra.mxu0 %v2208
  %2268 = vmatprep.subr.mxu0 0.0
  %2269 = vmatpush2.msra.mxu0 0.0
  %2270 = vmatprep.subr.mxu0 0.0
  %2271 = vmatpush2.msra.mxu0 0.0
  %2272 = vmatprep.subr.mxu0 0.0
  %2273 = vmatpush2.msra.mxu0 0.0
  %2274 = vmatprep.subr.mxu0 0.0
  %2275 = vmatpush2.msra.mxu0 0.0
  %2276 = vmatprep.subr.mxu0 0.0
  %2277 = vmatpush2.msra.mxu0 0.0
  %2278 = vmatprep.subr.mxu0 0.0
  %2279 = vmatpush2.msra.mxu0 0.0
  %2280 = vmatprep.subr.mxu0 0.0
  %2281 = vmatpush2.msra.mxu0 0.0
  %2282 = vmatprep.subr.mxu0 0.0
  %2283 = vmatpush2.msra.mxu0 0.0
  %2284 = vmatprep.subr.mxu0 0.0
  %2285 = vmatpush2.msra.mxu0 0.0
  %2286 = vmatprep.subr.mxu0 0.0
  %2287 = vmatpush2.msra.mxu0 0.0
  %2288 = vmatprep.subr.mxu0 0.0
  %2289 = vmatpush2.msra.mxu0 0.0
  %2290 = vmatprep.subr.mxu0 0.0
  %2291 = vmatpush2.msra.mxu0 0.0
  %2292 = vmatprep.subr.mxu0 0.0
  %2293 = vmatpush2.msra.mxu0 0.0
  %2294 = vmatprep.subr.mxu0 0.0
  %2295 = vmatpush2.msra.mxu0 0.0
  %2296 = vmatprep.subr.mxu0 0.0
  %2297 = vmatpush2.msra.mxu0 0.0
  %2298 = vmatprep.subr.mxu0 0.0
  %2299 = vmatpush2.msra.mxu0 0.0
  %2300 = vmatprep.mubr.f32.mxu0 0.0
  %2301 = vmatmul.mubr.f32.gmra.mxu0 %v2225
  %v2302 = vpop.f32.mrf.mxu0
  %v2303 = vadd.f32 0.0, %v2302
  %v2304 = vpop.f32.mrf.mxu0
  %v2305 = vadd.f32 0.0, %v2304
  %2306 = vmatprep.mubr.f32.mxu0 0.0
  %2307 = vmatmul.mubr.f32.gmra.mxu0 %v2228
  %v2308 = vpop.f32.mrf.mxu0
  %v2309 = vadd.f32 0.0, %v2308
  %v2310 = vpop.f32.mrf.mxu0
  %v2311 = vadd.f32 0.0, %v2310
  %2312 = vmatprep.mubr.f32.mxu0 0.0
  %2313 = vmatmul.mubr.f32.gmra.mxu0 %v2231
  %v2314 = vpop.f32.mrf.mxu0
  %v2315 = vadd.f32 0.0, %v2314
  %v2316 = vpop.f32.mrf.mxu0
  %v2317 = vadd.f32 0.0, %v2316
  %2318 = vmatprep.mubr.f32.mxu0 0.0
  %2319 = vmatmul.mubr.f32.gmra.mxu0 %v2234
  %v2320 = vpop.f32.mrf.mxu0
  %v2321 = vadd.f32 0.0, %v2320
  %v2322 = vpop.f32.mrf.mxu0
  %v2323 = vadd.f32 0.0, %v2322
  %2324 = vdwg.mxu0
  %v2325 = vadd.f32 %v2135, %v2303
  %v2326 = vadd.f32 %v2136, %v2305
  %v2327 = vadd.f32 %v2137, %v2309
  %v2328 = vadd.f32 %v2138, %v2311
  %v2329 = vadd.f32 %v2139, %v2315
  %v2330 = vadd.f32 %v2140, %v2317
  %v2331 = vadd.f32 %v2141, %v2321
  %v2332 = vadd.f32 %v2142, %v2323
  %v2333 = vmul.f32 %v2143, %v892
  %v2334 = vmul.f32 %v2144, %v895
  %v2335 = vmul.f32 %v2145, %v894
  %v2336 = vmul.f32 %v2146, %v892
  %v2337 = vmul.f32 %v2147, %v895
  %v2338 = vmul.f32 %v2148, %v894
  %v2339 = vmul.f32 %v2149, %v892
  %v2340 = vmul.f32 %v2150, %v895
  %v2341 = vmul.f32 %v2151, %v894
  %v2342 = vmul.f32 %v2152, %v892
  %v2343 = vmul.f32 %v2153, %v895
  %v2344 = vmul.f32 %v2154, %v894
  %s2345 = scalar_lea.vmem %s2, 192
  %v2346 = vld [vmem:[%s2345] sm:$0xff]
  %v2347 = vld [vmem:[%s2345 + $0x8] sm:$0xff]
  %v2348 = vld [vmem:[%s2345 + $0x10] sm:$0xff]
  %v2349 = vld [vmem:[%s2345 + $0x18] sm:$0xff]
  %2362 = vrot.lane.b32.xlu0 %v2333, 113
  %v2363 = vpop.permute.xlu0 %2362
  %2364 = vrot.lane.b32.xlu0 %v2334, 113
  %v2365 = vpop.permute.xlu0 %2364
  %2366 = vrot.lane.b32.xlu0 %v2335, 113
  %v2367 = vpop.permute.xlu0 %2366
  %2368 = vrot.lane.b32.xlu0 %v2336, 113
  %v2369 = vpop.permute.xlu0 %2368
  %2370 = vrot.lane.b32.xlu0 %v2337, 113
  %v2371 = vpop.permute.xlu0 %2370
  %2372 = vrot.lane.b32.xlu0 %v2338, 113
  %v2373 = vpop.permute.xlu0 %2372
  %2374 = vrot.lane.b32.xlu0 %v2339, 113
  %v2375 = vpop.permute.xlu0 %2374
  %2376 = vrot.lane.b32.xlu0 %v2340, 113
  %v2377 = vpop.permute.xlu0 %2376
  %2378 = vrot.lane.b32.xlu0 %v2341, 113
  %v2379 = vpop.permute.xlu0 %2378
  %2380 = vrot.lane.b32.xlu0 %v2342, 113
  %v2381 = vpop.permute.xlu0 %2380
  %2382 = vrot.lane.b32.xlu0 %v2343, 113
  %v2383 = vpop.permute.xlu0 %2382
  %2384 = vrot.lane.b32.xlu0 %v2344, 113
  %v2385 = vpop.permute.xlu0 %2384
  %v2386 = vsel %vm350, %v2363, %v2365
  %v2387 = vsel %vm350, %v2365, %v2367
  %v2388 = vsel %vm350, %v2369, %v2371
  %v2389 = vsel %vm350, %v2371, %v2373
  %v2390 = vsel %vm350, %v2375, %v2377
  %v2391 = vsel %vm350, %v2377, %v2379
  %v2392 = vsel %vm350, %v2381, %v2383
  %v2393 = vsel %vm350, %v2383, %v2385
  %v2403 = vsel %vm1418, %v2346, 0
  %v2406 = vsel %vm1418, %v2347, 0
  %v2409 = vsel %vm1418, %v2348, 0
  %v2412 = vsel %vm1418, %v2349, 0
  %2414 = vmatprep.subr.mxu0 0.0
  %2415 = vmatpush1.msra.mxu0 0.0
  %2416 = vmatprep.subr.mxu0 0.0
  %2417 = vmatpush1.msra.mxu0 0.0
  %2418 = vmatprep.subr.mxu0 0.0
  %2419 = vmatpush1.msra.mxu0 0.0
  %2420 = vmatprep.subr.mxu0 0.0
  %2421 = vmatpush1.msra.mxu0 0.0
  %2422 = vmatprep.subr.mxu0 0.0
  %2423 = vmatpush1.msra.mxu0 0.0
  %2424 = vmatprep.subr.mxu0 0.0
  %2425 = vmatpush1.msra.mxu0 0.0
  %2426 = vmatprep.subr.mxu0 0.0
  %2427 = vmatpush1.msra.mxu0 0.0
  %2428 = vmatprep.subr.mxu0 0.0
  %2429 = vmatpush1.msra.mxu0 0.0
  %2430 = vmatprep.subr.mxu0 0.0
  %2431 = vmatpush1.msra.mxu0 0.0
  %2432 = vmatprep.subr.mxu0 0.0
  %2433 = vmatpush1.msra.mxu0 0.0
  %2434 = vmatprep.subr.mxu0 0.0
  %2435 = vmatpush1.msra.mxu0 0.0
  %2436 = vmatprep.subr.mxu0 0.0
  %2437 = vmatpush1.msra.mxu0 0.0
  %2438 = vmatprep.subr.mxu0 %v2393
  %2439 = vmatpush1.msra.mxu0 %v2392
  %2440 = vmatprep.subr.mxu0 %v2391
  %2441 = vmatpush1.msra.mxu0 %v2390
  %2442 = vmatprep.subr.mxu0 %v2389
  %2443 = vmatpush1.msra.mxu0 %v2388
  %2444 = vmatprep.subr.mxu0 %v2387
  %2445 = vmatpush1.msra.mxu0 %v2386
  %2446 = vmatprep.subr.mxu0 0.0
  %2447 = vmatpush2.msra.mxu0 0.0
  %2448 = vmatprep.subr.mxu0 0.0
  %2449 = vmatpush2.msra.mxu0 0.0
  %2450 = vmatprep.subr.mxu0 0.0
  %2451 = vmatpush2.msra.mxu0 0.0
  %2452 = vmatprep.subr.mxu0 0.0
  %2453 = vmatpush2.msra.mxu0 0.0
  %2454 = vmatprep.subr.mxu0 0.0
  %2455 = vmatpush2.msra.mxu0 0.0
  %2456 = vmatprep.subr.mxu0 0.0
  %2457 = vmatpush2.msra.mxu0 0.0
  %2458 = vmatprep.subr.mxu0 0.0
  %2459 = vmatpush2.msra.mxu0 0.0
  %2460 = vmatprep.subr.mxu0 0.0
  %2461 = vmatpush2.msra.mxu0 0.0
  %2462 = vmatprep.subr.mxu0 0.0
  %2463 = vmatpush2.msra.mxu0 0.0
  %2464 = vmatprep.subr.mxu0 0.0
  %2465 = vmatpush2.msra.mxu0 0.0
  %2466 = vmatprep.subr.mxu0 0.0
  %2467 = vmatpush2.msra.mxu0 0.0
  %2468 = vmatprep.subr.mxu0 0.0
  %2469 = vmatpush2.msra.mxu0 0.0
  %2470 = vmatprep.subr.mxu0 0.0
  %2471 = vmatpush2.msra.mxu0 0.0
  %2472 = vmatprep.subr.mxu0 0.0
  %2473 = vmatpush2.msra.mxu0 0.0
  %2474 = vmatprep.subr.mxu0 0.0
  %2475 = vmatpush2.msra.mxu0 0.0
  %2476 = vmatprep.subr.mxu0 0.0
  %2477 = vmatpush2.msra.mxu0 0.0
  %2478 = vmatprep.mubr.f32.mxu0 0.0
  %2479 = vmatmul.mubr.f32.gmra.mxu0 %v2403
  %v2480 = vpop.f32.mrf.mxu0
  %v2481 = vadd.f32 0.0, %v2480
  %v2482 = vpop.f32.mrf.mxu0
  %v2483 = vadd.f32 0.0, %v2482
  %2484 = vmatprep.mubr.f32.mxu0 0.0
  %2485 = vmatmul.mubr.f32.gmra.mxu0 %v2406
  %v2486 = vpop.f32.mrf.mxu0
  %v2487 = vadd.f32 0.0, %v2486
  %v2488 = vpop.f32.mrf.mxu0
  %v2489 = vadd.f32 0.0, %v2488
  %2490 = vmatprep.mubr.f32.mxu0 0.0
  %2491 = vmatmul.mubr.f32.gmra.mxu0 %v2409
  %v2492 = vpop.f32.mrf.mxu0
  %v2493 = vadd.f32 0.0, %v2492
  %v2494 = vpop.f32.mrf.mxu0
  %v2495 = vadd.f32 0.0, %v2494
  %2496 = vmatprep.mubr.f32.mxu0 0.0
  %2497 = vmatmul.mubr.f32.gmra.mxu0 %v2412
  %v2498 = vpop.f32.mrf.mxu0
  %v2499 = vadd.f32 0.0, %v2498
  %v2500 = vpop.f32.mrf.mxu0
  %v2501 = vadd.f32 0.0, %v2500
  %2502 = vdwg.mxu0
  %v2503 = vadd.f32 %v2325, %v2481
  %v2504 = vadd.f32 %v2326, %v2483
  %v2505 = vadd.f32 %v2327, %v2487
  %v2506 = vadd.f32 %v2328, %v2489
  %v2507 = vadd.f32 %v2329, %v2493
  %v2508 = vadd.f32 %v2330, %v2495
  %v2509 = vadd.f32 %v2331, %v2499
  %v2510 = vadd.f32 %v2332, %v2501
  %s2511 = scalar_lea.vmem %s2, 224
  %v2512 = vld [vmem:[%s2511] sm:$0xff]
  %v2513 = vld [vmem:[%s2511 + $0x8] sm:$0xff]
  %v2514 = vld [vmem:[%s2511 + $0x10] sm:$0xff]
  %v2515 = vld [vmem:[%s2511 + $0x18] sm:$0xff]
  %2528 = vrot.lane.b32.xlu0 %v2143, 112
  %v2529 = vpop.permute.xlu0 %2528
  %2530 = vrot.lane.b32.xlu0 %v2144, 112
  %v2531 = vpop.permute.xlu0 %2530
  %2532 = vrot.lane.b32.xlu0 %v2145, 112
  %v2533 = vpop.permute.xlu0 %2532
  %2534 = vrot.lane.b32.xlu0 %v2146, 112
  %v2535 = vpop.permute.xlu0 %2534
  %2536 = vrot.lane.b32.xlu0 %v2147, 112
  %v2537 = vpop.permute.xlu0 %2536
  %2538 = vrot.lane.b32.xlu0 %v2148, 112
  %v2539 = vpop.permute.xlu0 %2538
  %2540 = vrot.lane.b32.xlu0 %v2149, 112
  %v2541 = vpop.permute.xlu0 %2540
  %2542 = vrot.lane.b32.xlu0 %v2150, 112
  %v2543 = vpop.permute.xlu0 %2542
  %2544 = vrot.lane.b32.xlu0 %v2151, 112
  %v2545 = vpop.permute.xlu0 %2544
  %2546 = vrot.lane.b32.xlu0 %v2152, 112
  %v2547 = vpop.permute.xlu0 %2546
  %2548 = vrot.lane.b32.xlu0 %v2153, 112
  %v2549 = vpop.permute.xlu0 %2548
  %2550 = vrot.lane.b32.xlu0 %v2154, 112
  %v2551 = vpop.permute.xlu0 %2550
  %v2552 = vsel %vm1045, %v2529, %v2531
  %v2553 = vsel %vm1045, %v2531, %v2533
  %v2554 = vsel %vm1045, %v2535, %v2537
  %v2555 = vsel %vm1045, %v2537, %v2539
  %v2556 = vsel %vm1045, %v2541, %v2543
  %v2557 = vsel %vm1045, %v2543, %v2545
  %v2558 = vsel %vm1045, %v2547, %v2549
  %v2559 = vsel %vm1045, %v2549, %v2551
  %v2569 = vsel %vm1418, %v2512, 0
  %v2572 = vsel %vm1418, %v2513, 0
  %v2575 = vsel %vm1418, %v2514, 0
  %v2578 = vsel %vm1418, %v2515, 0
  %2580 = vmatprep.subr.mxu0 0.0
  %2581 = vmatpush1.msra.mxu0 0.0
  %2582 = vmatprep.subr.mxu0 0.0
  %2583 = vmatpush1.msra.mxu0 0.0
  %2584 = vmatprep.subr.mxu0 0.0
  %2585 = vmatpush1.msra.mxu0 0.0
  %2586 = vmatprep.subr.mxu0 0.0
  %2587 = vmatpush1.msra.mxu0 0.0
  %2588 = vmatprep.subr.mxu0 0.0
  %2589 = vmatpush1.msra.mxu0 0.0
  %2590 = vmatprep.subr.mxu0 0.0
  %2591 = vmatpush1.msra.mxu0 0.0
  %2592 = vmatprep.subr.mxu0 0.0
  %2593 = vmatpush1.msra.mxu0 0.0
  %2594 = vmatprep.subr.mxu0 0.0
  %2595 = vmatpush1.msra.mxu0 0.0
  %2596 = vmatprep.subr.mxu0 0.0
  %2597 = vmatpush1.msra.mxu0 0.0
  %2598 = vmatprep.subr.mxu0 0.0
  %2599 = vmatpush1.msra.mxu0 0.0
  %2600 = vmatprep.subr.mxu0 0.0
  %2601 = vmatpush1.msra.mxu0 0.0
  %2602 = vmatprep.subr.mxu0 0.0
  %2603 = vmatpush1.msra.mxu0 0.0
  %2604 = vmatprep.subr.mxu0 %v2559
  %2605 = vmatpush1.msra.mxu0 %v2558
  %2606 = vmatprep.subr.mxu0 %v2557
  %2607 = vmatpush1.msra.mxu0 %v2556
  %2608 = vmatprep.subr.mxu0 %v2555
  %2609 = vmatpush1.msra.mxu0 %v2554
  %2610 = vmatprep.subr.mxu0 %v2553
  %2611 = vmatpush1.msra.mxu0 %v2552
  %2612 = vmatprep.subr.mxu0 0.0
  %2613 = vmatpush2.msra.mxu0 0.0
  %2614 = vmatprep.subr.mxu0 0.0
  %2615 = vmatpush2.msra.mxu0 0.0
  %2616 = vmatprep.subr.mxu0 0.0
  %2617 = vmatpush2.msra.mxu0 0.0
  %2618 = vmatprep.subr.mxu0 0.0
  %2619 = vmatpush2.msra.mxu0 0.0
  %2620 = vmatprep.subr.mxu0 0.0
  %2621 = vmatpush2.msra.mxu0 0.0
  %2622 = vmatprep.subr.mxu0 0.0
  %2623 = vmatpush2.msra.mxu0 0.0
  %2624 = vmatprep.subr.mxu0 0.0
  %2625 = vmatpush2.msra.mxu0 0.0
  %2626 = vmatprep.subr.mxu0 0.0
  %2627 = vmatpush2.msra.mxu0 0.0
  %2628 = vmatprep.subr.mxu0 0.0
  %2629 = vmatpush2.msra.mxu0 0.0
  %2630 = vmatprep.subr.mxu0 0.0
  %2631 = vmatpush2.msra.mxu0 0.0
  %2632 = vmatprep.subr.mxu0 0.0
  %2633 = vmatpush2.msra.mxu0 0.0
  %2634 = vmatprep.subr.mxu0 0.0
  %2635 = vmatpush2.msra.mxu0 0.0
  %2636 = vmatprep.subr.mxu0 0.0
  %2637 = vmatpush2.msra.mxu0 0.0
  %2638 = vmatprep.subr.mxu0 0.0
  %2639 = vmatpush2.msra.mxu0 0.0
  %2640 = vmatprep.subr.mxu0 0.0
  %2641 = vmatpush2.msra.mxu0 0.0
  %2642 = vmatprep.subr.mxu0 0.0
  %2643 = vmatpush2.msra.mxu0 0.0
  %2644 = vmatprep.mubr.f32.mxu0 0.0
  %2645 = vmatmul.mubr.f32.gmra.mxu0 %v2569
  %v2646 = vpop.f32.mrf.mxu0
  %v2647 = vadd.f32 0.0, %v2646
  %v2648 = vpop.f32.mrf.mxu0
  %v2649 = vadd.f32 0.0, %v2648
  %2650 = vmatprep.mubr.f32.mxu0 0.0
  %2651 = vmatmul.mubr.f32.gmra.mxu0 %v2572
  %v2652 = vpop.f32.mrf.mxu0
  %v2653 = vadd.f32 0.0, %v2652
  %v2654 = vpop.f32.mrf.mxu0
  %v2655 = vadd.f32 0.0, %v2654
  %2656 = vmatprep.mubr.f32.mxu0 0.0
  %2657 = vmatmul.mubr.f32.gmra.mxu0 %v2575
  %v2658 = vpop.f32.mrf.mxu0
  %v2659 = vadd.f32 0.0, %v2658
  %v2660 = vpop.f32.mrf.mxu0
  %v2661 = vadd.f32 0.0, %v2660
  %2662 = vmatprep.mubr.f32.mxu0 0.0
  %2663 = vmatmul.mubr.f32.gmra.mxu0 %v2578
  %v2664 = vpop.f32.mrf.mxu0
  %v2665 = vadd.f32 0.0, %v2664
  %v2666 = vpop.f32.mrf.mxu0
  %v2667 = vadd.f32 0.0, %v2666
  %2668 = vdwg.mxu0
  %v2669 = vadd.f32 %v2503, %v2647
  %v2670 = vadd.f32 %v2504, %v2649
  %v2671 = vadd.f32 %v2505, %v2653
  %v2672 = vadd.f32 %v2506, %v2655
  %v2673 = vadd.f32 %v2507, %v2659
  %v2674 = vadd.f32 %v2508, %v2661
  %v2675 = vadd.f32 %v2509, %v2665
  %v2676 = vadd.f32 %v2510, %v2667
  %v2677 = vmul.f32 %v2143, %v1162
  %v2678 = vmul.f32 %v2144, %v1165
  %v2679 = vmul.f32 %v2145, %v1164
  %v2680 = vmul.f32 %v2146, %v1162
  %v2681 = vmul.f32 %v2147, %v1165
  %v2682 = vmul.f32 %v2148, %v1164
  %v2683 = vmul.f32 %v2149, %v1162
  %v2684 = vmul.f32 %v2150, %v1165
  %v2685 = vmul.f32 %v2151, %v1164
  %v2686 = vmul.f32 %v2152, %v1162
  %v2687 = vmul.f32 %v2153, %v1165
  %v2688 = vmul.f32 %v2154, %v1164
  %s2689 = scalar_lea.vmem %s2, 256
  %v2690 = vld [vmem:[%s2689] sm:$0xff]
  %v2691 = vld [vmem:[%s2689 + $0x8] sm:$0xff]
  %v2692 = vld [vmem:[%s2689 + $0x10] sm:$0xff]
  %v2693 = vld [vmem:[%s2689 + $0x18] sm:$0xff]
  %2706 = vrot.lane.b32.xlu0 %v2677, 111
  %v2707 = vpop.permute.xlu0 %2706
  %2708 = vrot.lane.b32.xlu0 %v2678, 111
  %v2709 = vpop.permute.xlu0 %2708
  %2710 = vrot.lane.b32.xlu0 %v2679, 111
  %v2711 = vpop.permute.xlu0 %2710
  %2712 = vrot.lane.b32.xlu0 %v2680, 111
  %v2713 = vpop.permute.xlu0 %2712
  %2714 = vrot.lane.b32.xlu0 %v2681, 111
  %v2715 = vpop.permute.xlu0 %2714
  %2716 = vrot.lane.b32.xlu0 %v2682, 111
  %v2717 = vpop.permute.xlu0 %2716
  %2718 = vrot.lane.b32.xlu0 %v2683, 111
  %v2719 = vpop.permute.xlu0 %2718
  %2720 = vrot.lane.b32.xlu0 %v2684, 111
  %v2721 = vpop.permute.xlu0 %2720
  %2722 = vrot.lane.b32.xlu0 %v2685, 111
  %v2723 = vpop.permute.xlu0 %2722
  %2724 = vrot.lane.b32.xlu0 %v2686, 111
  %v2725 = vpop.permute.xlu0 %2724
  %2726 = vrot.lane.b32.xlu0 %v2687, 111
  %v2727 = vpop.permute.xlu0 %2726
  %2728 = vrot.lane.b32.xlu0 %v2688, 111
  %v2729 = vpop.permute.xlu0 %2728
  %v2730 = vsel %vm91, %v2707, %v2709
  %v2731 = vsel %vm91, %v2709, %v2711
  %v2732 = vsel %vm91, %v2713, %v2715
  %v2733 = vsel %vm91, %v2715, %v2717
  %v2734 = vsel %vm91, %v2719, %v2721
  %v2735 = vsel %vm91, %v2721, %v2723
  %v2736 = vsel %vm91, %v2725, %v2727
  %v2737 = vsel %vm91, %v2727, %v2729
  %v2747 = vsel %vm1418, %v2690, 0
  %v2750 = vsel %vm1418, %v2691, 0
  %v2753 = vsel %vm1418, %v2692, 0
  %v2756 = vsel %vm1418, %v2693, 0
  %2758 = vmatprep.subr.mxu0 0.0
  %2759 = vmatpush1.msra.mxu0 0.0
  %2760 = vmatprep.subr.mxu0 0.0
  %2761 = vmatpush1.msra.mxu0 0.0
  %2762 = vmatprep.subr.mxu0 0.0
  %2763 = vmatpush1.msra.mxu0 0.0
  %2764 = vmatprep.subr.mxu0 0.0
  %2765 = vmatpush1.msra.mxu0 0.0
  %2766 = vmatprep.subr.mxu0 0.0
  %2767 = vmatpush1.msra.mxu0 0.0
  %2768 = vmatprep.subr.mxu0 0.0
  %2769 = vmatpush1.msra.mxu0 0.0
  %2770 = vmatprep.subr.mxu0 0.0
  %2771 = vmatpush1.msra.mxu0 0.0
  %2772 = vmatprep.subr.mxu0 0.0
  %2773 = vmatpush1.msra.mxu0 0.0
  %2774 = vmatprep.subr.mxu0 0.0
  %2775 = vmatpush1.msra.mxu0 0.0
  %2776 = vmatprep.subr.mxu0 0.0
  %2777 = vmatpush1.msra.mxu0 0.0
  %2778 = vmatprep.subr.mxu0 0.0
  %2779 = vmatpush1.msra.mxu0 0.0
  %2780 = vmatprep.subr.mxu0 0.0
  %2781 = vmatpush1.msra.mxu0 0.0
  %2782 = vmatprep.subr.mxu0 %v2737
  %2783 = vmatpush1.msra.mxu0 %v2736
  %2784 = vmatprep.subr.mxu0 %v2735
  %2785 = vmatpush1.msra.mxu0 %v2734
  %2786 = vmatprep.subr.mxu0 %v2733
  %2787 = vmatpush1.msra.mxu0 %v2732
  %2788 = vmatprep.subr.mxu0 %v2731
  %2789 = vmatpush1.msra.mxu0 %v2730
  %2790 = vmatprep.subr.mxu0 0.0
  %2791 = vmatpush2.msra.mxu0 0.0
  %2792 = vmatprep.subr.mxu0 0.0
  %2793 = vmatpush2.msra.mxu0 0.0
  %2794 = vmatprep.subr.mxu0 0.0
  %2795 = vmatpush2.msra.mxu0 0.0
  %2796 = vmatprep.subr.mxu0 0.0
  %2797 = vmatpush2.msra.mxu0 0.0
  %2798 = vmatprep.subr.mxu0 0.0
  %2799 = vmatpush2.msra.mxu0 0.0
  %2800 = vmatprep.subr.mxu0 0.0
  %2801 = vmatpush2.msra.mxu0 0.0
  %2802 = vmatprep.subr.mxu0 0.0
  %2803 = vmatpush2.msra.mxu0 0.0
  %2804 = vmatprep.subr.mxu0 0.0
  %2805 = vmatpush2.msra.mxu0 0.0
  %2806 = vmatprep.subr.mxu0 0.0
  %2807 = vmatpush2.msra.mxu0 0.0
  %2808 = vmatprep.subr.mxu0 0.0
  %2809 = vmatpush2.msra.mxu0 0.0
  %2810 = vmatprep.subr.mxu0 0.0
  %2811 = vmatpush2.msra.mxu0 0.0
  %2812 = vmatprep.subr.mxu0 0.0
  %2813 = vmatpush2.msra.mxu0 0.0
  %2814 = vmatprep.subr.mxu0 0.0
  %2815 = vmatpush2.msra.mxu0 0.0
  %2816 = vmatprep.subr.mxu0 0.0
  %2817 = vmatpush2.msra.mxu0 0.0
  %2818 = vmatprep.subr.mxu0 0.0
  %2819 = vmatpush2.msra.mxu0 0.0
  %2820 = vmatprep.subr.mxu0 0.0
  %2821 = vmatpush2.msra.mxu0 0.0
  %2822 = vmatprep.mubr.f32.mxu0 0.0
  %2823 = vmatmul.mubr.f32.gmra.mxu0 %v2747
  %v2824 = vpop.f32.mrf.mxu0
  %v2825 = vadd.f32 0.0, %v2824
  %v2826 = vpop.f32.mrf.mxu0
  %v2827 = vadd.f32 0.0, %v2826
  %2828 = vmatprep.mubr.f32.mxu0 0.0
  %2829 = vmatmul.mubr.f32.gmra.mxu0 %v2750
  %v2830 = vpop.f32.mrf.mxu0
  %v2831 = vadd.f32 0.0, %v2830
  %v2832 = vpop.f32.mrf.mxu0
  %v2833 = vadd.f32 0.0, %v2832
  %2834 = vmatprep.mubr.f32.mxu0 0.0
  %2835 = vmatmul.mubr.f32.gmra.mxu0 %v2753
  %v2836 = vpop.f32.mrf.mxu0
  %v2837 = vadd.f32 0.0, %v2836
  %v2838 = vpop.f32.mrf.mxu0
  %v2839 = vadd.f32 0.0, %v2838
  %2840 = vmatprep.mubr.f32.mxu0 0.0
  %2841 = vmatmul.mubr.f32.gmra.mxu0 %v2756
  %v2842 = vpop.f32.mrf.mxu0
  %v2843 = vadd.f32 0.0, %v2842
  %v2844 = vpop.f32.mrf.mxu0
  %v2845 = vadd.f32 0.0, %v2844
  %2846 = vdwg.mxu0
  %v2847 = vadd.f32 %v2669, %v2825
  %v2848 = vadd.f32 %v2670, %v2827
  %v2849 = vadd.f32 %v2671, %v2831
  %v2850 = vadd.f32 %v2672, %v2833
  %v2851 = vadd.f32 %v2673, %v2837
  %v2852 = vadd.f32 %v2674, %v2839
  %v2853 = vadd.f32 %v2675, %v2843
  %v2854 = vadd.f32 %v2676, %v2845
  %vm2855 = vcmp.gt.f32.partialorder %v2847, 0.0
  %vm2856 = vcmp.gt.f32.partialorder %v2848, 0.0
  %vm2857 = vcmp.gt.f32.partialorder %v2849, 0.0
  %vm2858 = vcmp.gt.f32.partialorder %v2850, 0.0
  %vm2859 = vcmp.gt.f32.partialorder %v2851, 0.0
  %vm2860 = vcmp.gt.f32.partialorder %v2852, 0.0
  %vm2861 = vcmp.gt.f32.partialorder %v2853, 0.0
  %vm2862 = vcmp.gt.f32.partialorder %v2854, 0.0
  %v2863 = vmul.f32 %v2847, 0.01
  %v2864 = vmul.f32 %v2848, 0.01
  %v2865 = vmul.f32 %v2849, 0.01
  %v2866 = vmul.f32 %v2850, 0.01
  %v2867 = vmul.f32 %v2851, 0.01
  %v2868 = vmul.f32 %v2852, 0.01
  %v2869 = vmul.f32 %v2853, 0.01
  %v2870 = vmul.f32 %v2854, 0.01
  %v2871 = vsel %vm2855, %v2847, %v2863
  %v2872 = vsel %vm2856, %v2848, %v2864
  %v2873 = vsel %vm2857, %v2849, %v2865
  %v2874 = vsel %vm2858, %v2850, %v2866
  %v2875 = vsel %vm2859, %v2851, %v2867
  %v2876 = vsel %vm2860, %v2852, %v2868
  %v2877 = vsel %vm2861, %v2853, %v2869
  %v2878 = vsel %vm2862, %v2854, %v2870
  %2879 = vst [vmem:[#allocation2 + $0x8] sm:$0xff] %v2871
  %2880 = vst [vmem:[#allocation2 + $0x10] sm:$0xff] %v2872
  %2881 = vst [vmem:[#allocation2 + $0x28] sm:$0xff] %v2873
  %2882 = vst [vmem:[#allocation2 + $0x30] sm:$0xff] %v2874
  %2883 = vst [vmem:[#allocation2 + $0x48] sm:$0xff] %v2875
  %2884 = vst [vmem:[#allocation2 + $0x50] sm:$0xff] %v2876
  %2885 = vst [vmem:[#allocation2 + $0x68] sm:$0xff] %v2877
  %2886 = vst [vmem:[#allocation2 + $0x70] sm:$0xff] %v2878
  %v2887 = vld [vmem:[#allocation2] sm:$0xff]
  %v2888 = vld [vmem:[#allocation2 + $0x8] sm:$0xff]
  %v2889 = vld [vmem:[#allocation2 + $0x10] sm:$0xff]
  %v2890 = vld [vmem:[#allocation2 + $0x20] sm:$0xff]
  %v2891 = vld [vmem:[#allocation2 + $0x28] sm:$0xff]
  %v2892 = vld [vmem:[#allocation2 + $0x30] sm:$0xff]
  %v2893 = vld [vmem:[#allocation2 + $0x40] sm:$0xff]
  %v2894 = vld [vmem:[#allocation2 + $0x48] sm:$0xff]
  %v2895 = vld [vmem:[#allocation2 + $0x50] sm:$0xff]
  %v2896 = vld [vmem:[#allocation2 + $0x60] sm:$0xff]
  %v2897 = vld [vmem:[#allocation2 + $0x68] sm:$0xff]
  %v2898 = vld [vmem:[#allocation2 + $0x70] sm:$0xff]
  %v2899 = vmul.f32 %v2887, %v88
  %v2900 = vmul.f32 %v2888, %v92
  %v2901 = vmul.f32 %v2889, %v90
  %v2902 = vmul.f32 %v2890, %v88
  %v2903 = vmul.f32 %v2891, %v92
  %v2904 = vmul.f32 %v2892, %v90
  %v2905 = vmul.f32 %v2893, %v88
  %v2906 = vmul.f32 %v2894, %v92
  %v2907 = vmul.f32 %v2895, %v90
  %v2908 = vmul.f32 %v2896, %v88
  %v2909 = vmul.f32 %v2897, %v92
  %v2910 = vmul.f32 %v2898, %v90
  %v2911 = vld [vmem:[%s3] sm:$0xf]
  %s2912 = scalar_lea.vmem %s3, 4
  %v2913 = vld [vmem:[%s2912] sm:$0xf]
  %2926 = vrot.lane.b32.xlu0 %v2887, 16
  %v2927 = vpop.permute.xlu0 %2926
  %2928 = vrot.lane.b32.xlu0 %v2888, 16
  %v2929 = vpop.permute.xlu0 %2928
  %2930 = vrot.lane.b32.xlu0 %v2889, 16
  %v2931 = vpop.permute.xlu0 %2930
  %2932 = vrot.lane.b32.xlu0 %v2890, 16
  %v2933 = vpop.permute.xlu0 %2932
  %2934 = vrot.lane.b32.xlu0 %v2891, 16
  %v2935 = vpop.permute.xlu0 %2934
  %2936 = vrot.lane.b32.xlu0 %v2892, 16
  %v2937 = vpop.permute.xlu0 %2936
  %2938 = vrot.lane.b32.xlu0 %v2893, 16
  %v2939 = vpop.permute.xlu0 %2938
  %2940 = vrot.lane.b32.xlu0 %v2894, 16
  %v2941 = vpop.permute.xlu0 %2940
  %2942 = vrot.lane.b32.xlu0 %v2895, 16
  %v2943 = vpop.permute.xlu0 %2942
  %2944 = vrot.lane.b32.xlu0 %v2896, 16
  %v2945 = vpop.permute.xlu0 %2944
  %2946 = vrot.lane.b32.xlu0 %v2897, 16
  %v2947 = vpop.permute.xlu0 %2946
  %2948 = vrot.lane.b32.xlu0 %v2898, 16
  %v2949 = vpop.permute.xlu0 %2948
  %v2950 = vsel %vm117, %v2927, %v2929
  %v2951 = vsel %vm117, %v2929, %v2931
  %v2952 = vsel %vm117, %v2933, %v2935
  %v2953 = vsel %vm117, %v2935, %v2937
  %v2954 = vsel %vm117, %v2939, %v2941
  %v2955 = vsel %vm117, %v2941, %v2943
  %v2956 = vsel %vm117, %v2945, %v2947
  %v2957 = vsel %vm117, %v2947, %v2949
  %v2967 = vsel %vm1418, %v2913, 0
  %2969 = vmatprep.subr.mxu0 0.0
  %2970 = vmatpush1.msra.mxu0 0.0
  %2971 = vmatprep.subr.mxu0 0.0
  %2972 = vmatpush1.msra.mxu0 0.0
  %2973 = vmatprep.subr.mxu0 0.0
  %2974 = vmatpush1.msra.mxu0 0.0
  %2975 = vmatprep.subr.mxu0 0.0
  %2976 = vmatpush1.msra.mxu0 0.0
  %2977 = vmatprep.subr.mxu0 0.0
  %2978 = vmatpush1.msra.mxu0 0.0
  %2979 = vmatprep.subr.mxu0 0.0
  %2980 = vmatpush1.msra.mxu0 0.0
  %2981 = vmatprep.subr.mxu0 0.0
  %2982 = vmatpush1.msra.mxu0 0.0
  %2983 = vmatprep.subr.mxu0 0.0
  %2984 = vmatpush1.msra.mxu0 0.0
  %2985 = vmatprep.subr.mxu0 0.0
  %2986 = vmatpush1.msra.mxu0 0.0
  %2987 = vmatprep.subr.mxu0 0.0
  %2988 = vmatpush1.msra.mxu0 0.0
  %2989 = vmatprep.subr.mxu0 0.0
  %2990 = vmatpush1.msra.mxu0 0.0
  %2991 = vmatprep.subr.mxu0 0.0
  %2992 = vmatpush1.msra.mxu0 0.0
  %2993 = vmatprep.subr.mxu0 %v2957
  %2994 = vmatpush1.msra.mxu0 %v2956
  %2995 = vmatprep.subr.mxu0 %v2955
  %2996 = vmatpush1.msra.mxu0 %v2954
  %2997 = vmatprep.subr.mxu0 %v2953
  %2998 = vmatpush1.msra.mxu0 %v2952
  %2999 = vmatprep.subr.mxu0 %v2951
  %3000 = vmatpush1.msra.mxu0 %v2950
  %3001 = vmatprep.subr.mxu0 0.0
  %3002 = vmatpush2.msra.mxu0 0.0
  %3003 = vmatprep.subr.mxu0 0.0
  %3004 = vmatpush2.msra.mxu0 0.0
  %3005 = vmatprep.subr.mxu0 0.0
  %3006 = vmatpush2.msra.mxu0 0.0
  %3007 = vmatprep.subr.mxu0 0.0
  %3008 = vmatpush2.msra.mxu0 0.0
  %3009 = vmatprep.subr.mxu0 0.0
  %3010 = vmatpush2.msra.mxu0 0.0
  %3011 = vmatprep.subr.mxu0 0.0
  %3012 = vmatpush2.msra.mxu0 0.0
  %3013 = vmatprep.subr.mxu0 0.0
  %3014 = vmatpush2.msra.mxu0 0.0
  %3015 = vmatprep.subr.mxu0 0.0
  %3016 = vmatpush2.msra.mxu0 0.0
  %3017 = vmatprep.subr.mxu0 0.0
  %3018 = vmatpush2.msra.mxu0 0.0
  %3019 = vmatprep.subr.mxu0 0.0
  %3020 = vmatpush2.msra.mxu0 0.0
  %3021 = vmatprep.subr.mxu0 0.0
  %3022 = vmatpush2.msra.mxu0 0.0
  %3023 = vmatprep.subr.mxu0 0.0
  %3024 = vmatpush2.msra.mxu0 0.0
  %3025 = vmatprep.subr.mxu0 0.0
  %3026 = vmatpush2.msra.mxu0 0.0
  %3027 = vmatprep.subr.mxu0 0.0
  %3028 = vmatpush2.msra.mxu0 0.0
  %3029 = vmatprep.subr.mxu0 0.0
  %3030 = vmatpush2.msra.mxu0 0.0
  %3031 = vmatprep.subr.mxu0 0.0
  %3032 = vmatpush2.msra.mxu0 0.0
  %3033 = vmatprep.mubr.f32.mxu0 0.0
  %3034 = vmatmul.mubr.f32.gmra.mxu0 %v2967
  %v3035 = vpop.f32.mrf.mxu0
  %v3036 = vadd.f32 0.0, %v3035
  %v3037 = vpop.f32.mrf.mxu0
  %v3038 = vadd.f32 0.0, %v3037
  %3039 = vdwg.mxu0
  %3052 = vrot.lane.b32.xlu0 %v2899, 17
  %v3053 = vpop.permute.xlu0 %3052
  %3054 = vrot.lane.b32.xlu0 %v2900, 17
  %v3055 = vpop.permute.xlu0 %3054
  %3056 = vrot.lane.b32.xlu0 %v2901, 17
  %v3057 = vpop.permute.xlu0 %3056
  %3058 = vrot.lane.b32.xlu0 %v2902, 17
  %v3059 = vpop.permute.xlu0 %3058
  %3060 = vrot.lane.b32.xlu0 %v2903, 17
  %v3061 = vpop.permute.xlu0 %3060
  %3062 = vrot.lane.b32.xlu0 %v2904, 17
  %v3063 = vpop.permute.xlu0 %3062
  %3064 = vrot.lane.b32.xlu0 %v2905, 17
  %v3065 = vpop.permute.xlu0 %3064
  %3066 = vrot.lane.b32.xlu0 %v2906, 17
  %v3067 = vpop.permute.xlu0 %3066
  %3068 = vrot.lane.b32.xlu0 %v2907, 17
  %v3069 = vpop.permute.xlu0 %3068
  %3070 = vrot.lane.b32.xlu0 %v2908, 17
  %v3071 = vpop.permute.xlu0 %3070
  %3072 = vrot.lane.b32.xlu0 %v2909, 17
  %v3073 = vpop.permute.xlu0 %3072
  %3074 = vrot.lane.b32.xlu0 %v2910, 17
  %v3075 = vpop.permute.xlu0 %3074
  %v3076 = vsel %vm236, %v3053, %v3055
  %v3077 = vsel %vm236, %v3055, %v3057
  %v3078 = vsel %vm236, %v3059, %v3061
  %v3079 = vsel %vm236, %v3061, %v3063
  %v3080 = vsel %vm236, %v3065, %v3067
  %v3081 = vsel %vm236, %v3067, %v3069
  %v3082 = vsel %vm236, %v3071, %v3073
  %v3083 = vsel %vm236, %v3073, %v3075
  %v3093 = vsel %vm1418, %v2911, 0
  %3095 = vmatprep.subr.mxu0 0.0
  %3096 = vmatpush1.msra.mxu0 0.0
  %3097 = vmatprep.subr.mxu0 0.0
  %3098 = vmatpush1.msra.mxu0 0.0
  %3099 = vmatprep.subr.mxu0 0.0
  %3100 = vmatpush1.msra.mxu0 0.0
  %3101 = vmatprep.subr.mxu0 0.0
  %3102 = vmatpush1.msra.mxu0 0.0
  %3103 = vmatprep.subr.mxu0 0.0
  %3104 = vmatpush1.msra.mxu0 0.0
  %3105 = vmatprep.subr.mxu0 0.0
  %3106 = vmatpush1.msra.mxu0 0.0
  %3107 = vmatprep.subr.mxu0 0.0
  %3108 = vmatpush1.msra.mxu0 0.0
  %3109 = vmatprep.subr.mxu0 0.0
  %3110 = vmatpush1.msra.mxu0 0.0
  %3111 = vmatprep.subr.mxu0 0.0
  %3112 = vmatpush1.msra.mxu0 0.0
  %3113 = vmatprep.subr.mxu0 0.0
  %3114 = vmatpush1.msra.mxu0 0.0
  %3115 = vmatprep.subr.mxu0 0.0
  %3116 = vmatpush1.msra.mxu0 0.0
  %3117 = vmatprep.subr.mxu0 0.0
  %3118 = vmatpush1.msra.mxu0 0.0
  %3119 = vmatprep.subr.mxu0 %v3083
  %3120 = vmatpush1.msra.mxu0 %v3082
  %3121 = vmatprep.subr.mxu0 %v3081
  %3122 = vmatpush1.msra.mxu0 %v3080
  %3123 = vmatprep.subr.mxu0 %v3079
  %3124 = vmatpush1.msra.mxu0 %v3078
  %3125 = vmatprep.subr.mxu0 %v3077
  %3126 = vmatpush1.msra.mxu0 %v3076
  %3127 = vmatprep.subr.mxu0 0.0
  %3128 = vmatpush2.msra.mxu0 0.0
  %3129 = vmatprep.subr.mxu0 0.0
  %3130 = vmatpush2.msra.mxu0 0.0
  %3131 = vmatprep.subr.mxu0 0.0
  %3132 = vmatpush2.msra.mxu0 0.0
  %3133 = vmatprep.subr.mxu0 0.0
  %3134 = vmatpush2.msra.mxu0 0.0
  %3135 = vmatprep.subr.mxu0 0.0
  %3136 = vmatpush2.msra.mxu0 0.0
  %3137 = vmatprep.subr.mxu0 0.0
  %3138 = vmatpush2.msra.mxu0 0.0
  %3139 = vmatprep.subr.mxu0 0.0
  %3140 = vmatpush2.msra.mxu0 0.0
  %3141 = vmatprep.subr.mxu0 0.0
  %3142 = vmatpush2.msra.mxu0 0.0
  %3143 = vmatprep.subr.mxu0 0.0
  %3144 = vmatpush2.msra.mxu0 0.0
  %3145 = vmatprep.subr.mxu0 0.0
  %3146 = vmatpush2.msra.mxu0 0.0
  %3147 = vmatprep.subr.mxu0 0.0
  %3148 = vmatpush2.msra.mxu0 0.0
  %3149 = vmatprep.subr.mxu0 0.0
  %3150 = vmatpush2.msra.mxu0 0.0
  %3151 = vmatprep.subr.mxu0 0.0
  %3152 = vmatpush2.msra.mxu0 0.0
  %3153 = vmatprep.subr.mxu0 0.0
  %3154 = vmatpush2.msra.mxu0 0.0
  %3155 = vmatprep.subr.mxu0 0.0
  %3156 = vmatpush2.msra.mxu0 0.0
  %3157 = vmatprep.subr.mxu0 0.0
  %3158 = vmatpush2.msra.mxu0 0.0
  %3159 = vmatprep.mubr.f32.mxu0 0.0
  %3160 = vmatmul.mubr.f32.gmra.mxu0 %v3093
  %v3161 = vpop.f32.mrf.mxu0
  %v3162 = vadd.f32 %v3036, %v3161
  %v3163 = vpop.f32.mrf.mxu0
  %v3164 = vadd.f32 %v3038, %v3163
  %3165 = vdwg.mxu0
  %v3166 = vmul.f32 %v2887, %v347
  %v3167 = vmul.f32 %v2888, %v351
  %v3168 = vmul.f32 %v2889, %v349
  %v3169 = vmul.f32 %v2890, %v347
  %v3170 = vmul.f32 %v2891, %v351
  %v3171 = vmul.f32 %v2892, %v349
  %v3172 = vmul.f32 %v2893, %v347
  %v3173 = vmul.f32 %v2894, %v351
  %v3174 = vmul.f32 %v2895, %v349
  %v3175 = vmul.f32 %v2896, %v347
  %v3176 = vmul.f32 %v2897, %v351
  %v3177 = vmul.f32 %v2898, %v349
  %s3178 = scalar_lea.vmem %s3, 8
  %v3179 = vld [vmem:[%s3178] sm:$0xf]
  %3192 = vrot.lane.b32.xlu0 %v3166, 15
  %v3193 = vpop.permute.xlu0 %3192
  %3194 = vrot.lane.b32.xlu0 %v3167, 15
  %v3195 = vpop.permute.xlu0 %3194
  %3196 = vrot.lane.b32.xlu0 %v3168, 15
  %v3197 = vpop.permute.xlu0 %3196
  %3198 = vrot.lane.b32.xlu0 %v3169, 15
  %v3199 = vpop.permute.xlu0 %3198
  %3200 = vrot.lane.b32.xlu0 %v3170, 15
  %v3201 = vpop.permute.xlu0 %3200
  %3202 = vrot.lane.b32.xlu0 %v3171, 15
  %v3203 = vpop.permute.xlu0 %3202
  %3204 = vrot.lane.b32.xlu0 %v3172, 15
  %v3205 = vpop.permute.xlu0 %3204
  %3206 = vrot.lane.b32.xlu0 %v3173, 15
  %v3207 = vpop.permute.xlu0 %3206
  %3208 = vrot.lane.b32.xlu0 %v3174, 15
  %v3209 = vpop.permute.xlu0 %3208
  %3210 = vrot.lane.b32.xlu0 %v3175, 15
  %v3211 = vpop.permute.xlu0 %3210
  %3212 = vrot.lane.b32.xlu0 %v3176, 15
  %v3213 = vpop.permute.xlu0 %3212
  %3214 = vrot.lane.b32.xlu0 %v3177, 15
  %v3215 = vpop.permute.xlu0 %3214
  %v3216 = vsel %vm372, %v3193, %v3195
  %v3217 = vsel %vm372, %v3195, %v3197
  %v3218 = vsel %vm372, %v3199, %v3201
  %v3219 = vsel %vm372, %v3201, %v3203
  %v3220 = vsel %vm372, %v3205, %v3207
  %v3221 = vsel %vm372, %v3207, %v3209
  %v3222 = vsel %vm372, %v3211, %v3213
  %v3223 = vsel %vm372, %v3213, %v3215
  %v3233 = vsel %vm1418, %v3179, 0
  %3235 = vmatprep.subr.mxu0 0.0
  %3236 = vmatpush1.msra.mxu0 0.0
  %3237 = vmatprep.subr.mxu0 0.0
  %3238 = vmatpush1.msra.mxu0 0.0
  %3239 = vmatprep.subr.mxu0 0.0
  %3240 = vmatpush1.msra.mxu0 0.0
  %3241 = vmatprep.subr.mxu0 0.0
  %3242 = vmatpush1.msra.mxu0 0.0
  %3243 = vmatprep.subr.mxu0 0.0
  %3244 = vmatpush1.msra.mxu0 0.0
  %3245 = vmatprep.subr.mxu0 0.0
  %3246 = vmatpush1.msra.mxu0 0.0
  %3247 = vmatprep.subr.mxu0 0.0
  %3248 = vmatpush1.msra.mxu0 0.0
  %3249 = vmatprep.subr.mxu0 0.0
  %3250 = vmatpush1.msra.mxu0 0.0
  %3251 = vmatprep.subr.mxu0 0.0
  %3252 = vmatpush1.msra.mxu0 0.0
  %3253 = vmatprep.subr.mxu0 0.0
  %3254 = vmatpush1.msra.mxu0 0.0
  %3255 = vmatprep.subr.mxu0 0.0
  %3256 = vmatpush1.msra.mxu0 0.0
  %3257 = vmatprep.subr.mxu0 0.0
  %3258 = vmatpush1.msra.mxu0 0.0
  %3259 = vmatprep.subr.mxu0 %v3223
  %3260 = vmatpush1.msra.mxu0 %v3222
  %3261 = vmatprep.subr.mxu0 %v3221
  %3262 = vmatpush1.msra.mxu0 %v3220
  %3263 = vmatprep.subr.mxu0 %v3219
  %3264 = vmatpush1.msra.mxu0 %v3218
  %3265 = vmatprep.subr.mxu0 %v3217
  %3266 = vmatpush1.msra.mxu0 %v3216
  %3267 = vmatprep.subr.mxu0 0.0
  %3268 = vmatpush2.msra.mxu0 0.0
  %3269 = vmatprep.subr.mxu0 0.0
  %3270 = vmatpush2.msra.mxu0 0.0
  %3271 = vmatprep.subr.mxu0 0.0
  %3272 = vmatpush2.msra.mxu0 0.0
  %3273 = vmatprep.subr.mxu0 0.0
  %3274 = vmatpush2.msra.mxu0 0.0
  %3275 = vmatprep.subr.mxu0 0.0
  %3276 = vmatpush2.msra.mxu0 0.0
  %3277 = vmatprep.subr.mxu0 0.0
  %3278 = vmatpush2.msra.mxu0 0.0
  %3279 = vmatprep.subr.mxu0 0.0
  %3280 = vmatpush2.msra.mxu0 0.0
  %3281 = vmatprep.subr.mxu0 0.0
  %3282 = vmatpush2.msra.mxu0 0.0
  %3283 = vmatprep.subr.mxu0 0.0
  %3284 = vmatpush2.msra.mxu0 0.0
  %3285 = vmatprep.subr.mxu0 0.0
  %3286 = vmatpush2.msra.mxu0 0.0
  %3287 = vmatprep.subr.mxu0 0.0
  %3288 = vmatpush2.msra.mxu0 0.0
  %3289 = vmatprep.subr.mxu0 0.0
  %3290 = vmatpush2.msra.mxu0 0.0
  %3291 = vmatprep.subr.mxu0 0.0
  %3292 = vmatpush2.msra.mxu0 0.0
  %3293 = vmatprep.subr.mxu0 0.0
  %3294 = vmatpush2.msra.mxu0 0.0
  %3295 = vmatprep.subr.mxu0 0.0
  %3296 = vmatpush2.msra.mxu0 0.0
  %3297 = vmatprep.subr.mxu0 0.0
  %3298 = vmatpush2.msra.mxu0 0.0
  %3299 = vmatprep.mubr.f32.mxu0 0.0
  %3300 = vmatmul.mubr.f32.gmra.mxu0 %v3233
  %v3301 = vpop.f32.mrf.mxu0
  %v3302 = vadd.f32 0.0, %v3301
  %v3303 = vpop.f32.mrf.mxu0
  %v3304 = vadd.f32 0.0, %v3303
  %3305 = vdwg.mxu0
  %v3306 = vadd.f32 %v3162, %v3302
  %v3307 = vadd.f32 %v3164, %v3304
  %v3308 = vmul.f32 %v2887, %v489
  %v3309 = vmul.f32 %v2888, %v493
  %v3310 = vmul.f32 %v2889, %v491
  %v3311 = vmul.f32 %v2890, %v489
  %v3312 = vmul.f32 %v2891, %v493
  %v3313 = vmul.f32 %v2892, %v491
  %v3314 = vmul.f32 %v2893, %v489
  %v3315 = vmul.f32 %v2894, %v493
  %v3316 = vmul.f32 %v2895, %v491
  %v3317 = vmul.f32 %v2896, %v489
  %v3318 = vmul.f32 %v2897, %v493
  %v3319 = vmul.f32 %v2898, %v491
  %s3320 = scalar_lea.vmem %s3, 12
  %v3321 = vld [vmem:[%s3320] sm:$0xf]
  %3334 = vrot.lane.b32.xlu0 %v3308, 1
  %v3335 = vpop.permute.xlu0 %3334
  %3336 = vrot.lane.b32.xlu0 %v3309, 1
  %v3337 = vpop.permute.xlu0 %3336
  %3338 = vrot.lane.b32.xlu0 %v3310, 1
  %v3339 = vpop.permute.xlu0 %3338
  %3340 = vrot.lane.b32.xlu0 %v3311, 1
  %v3341 = vpop.permute.xlu0 %3340
  %3342 = vrot.lane.b32.xlu0 %v3312, 1
  %v3343 = vpop.permute.xlu0 %3342
  %3344 = vrot.lane.b32.xlu0 %v3313, 1
  %v3345 = vpop.permute.xlu0 %3344
  %3346 = vrot.lane.b32.xlu0 %v3314, 1
  %v3347 = vpop.permute.xlu0 %3346
  %3348 = vrot.lane.b32.xlu0 %v3315, 1
  %v3349 = vpop.permute.xlu0 %3348
  %3350 = vrot.lane.b32.xlu0 %v3316, 1
  %v3351 = vpop.permute.xlu0 %3350
  %3352 = vrot.lane.b32.xlu0 %v3317, 1
  %v3353 = vpop.permute.xlu0 %3352
  %3354 = vrot.lane.b32.xlu0 %v3318, 1
  %v3355 = vpop.permute.xlu0 %3354
  %3356 = vrot.lane.b32.xlu0 %v3319, 1
  %v3357 = vpop.permute.xlu0 %3356
  %v3358 = vsel %vm514, %v3335, %v3337
  %v3359 = vsel %vm514, %v3337, %v3339
  %v3360 = vsel %vm514, %v3341, %v3343
  %v3361 = vsel %vm514, %v3343, %v3345
  %v3362 = vsel %vm514, %v3347, %v3349
  %v3363 = vsel %vm514, %v3349, %v3351
  %v3364 = vsel %vm514, %v3353, %v3355
  %v3365 = vsel %vm514, %v3355, %v3357
  %v3375 = vsel %vm1418, %v3321, 0
  %3377 = vmatprep.subr.mxu0 0.0
  %3378 = vmatpush1.msra.mxu0 0.0
  %3379 = vmatprep.subr.mxu0 0.0
  %3380 = vmatpush1.msra.mxu0 0.0
  %3381 = vmatprep.subr.mxu0 0.0
  %3382 = vmatpush1.msra.mxu0 0.0
  %3383 = vmatprep.subr.mxu0 0.0
  %3384 = vmatpush1.msra.mxu0 0.0
  %3385 = vmatprep.subr.mxu0 0.0
  %3386 = vmatpush1.msra.mxu0 0.0
  %3387 = vmatprep.subr.mxu0 0.0
  %3388 = vmatpush1.msra.mxu0 0.0
  %3389 = vmatprep.subr.mxu0 0.0
  %3390 = vmatpush1.msra.mxu0 0.0
  %3391 = vmatprep.subr.mxu0 0.0
  %3392 = vmatpush1.msra.mxu0 0.0
  %3393 = vmatprep.subr.mxu0 0.0
  %3394 = vmatpush1.msra.mxu0 0.0
  %3395 = vmatprep.subr.mxu0 0.0
  %3396 = vmatpush1.msra.mxu0 0.0
  %3397 = vmatprep.subr.mxu0 0.0
  %3398 = vmatpush1.msra.mxu0 0.0
  %3399 = vmatprep.subr.mxu0 0.0
  %3400 = vmatpush1.msra.mxu0 0.0
  %3401 = vmatprep.subr.mxu0 %v3365
  %3402 = vmatpush1.msra.mxu0 %v3364
  %3403 = vmatprep.subr.mxu0 %v3363
  %3404 = vmatpush1.msra.mxu0 %v3362
  %3405 = vmatprep.subr.mxu0 %v3361
  %3406 = vmatpush1.msra.mxu0 %v3360
  %3407 = vmatprep.subr.mxu0 %v3359
  %3408 = vmatpush1.msra.mxu0 %v3358
  %3409 = vmatprep.subr.mxu0 0.0
  %3410 = vmatpush2.msra.mxu0 0.0
  %3411 = vmatprep.subr.mxu0 0.0
  %3412 = vmatpush2.msra.mxu0 0.0
  %3413 = vmatprep.subr.mxu0 0.0
  %3414 = vmatpush2.msra.mxu0 0.0
  %3415 = vmatprep.subr.mxu0 0.0
  %3416 = vmatpush2.msra.mxu0 0.0
  %3417 = vmatprep.subr.mxu0 0.0
  %3418 = vmatpush2.msra.mxu0 0.0
  %3419 = vmatprep.subr.mxu0 0.0
  %3420 = vmatpush2.msra.mxu0 0.0
  %3421 = vmatprep.subr.mxu0 0.0
  %3422 = vmatpush2.msra.mxu0 0.0
  %3423 = vmatprep.subr.mxu0 0.0
  %3424 = vmatpush2.msra.mxu0 0.0
  %3425 = vmatprep.subr.mxu0 0.0
  %3426 = vmatpush2.msra.mxu0 0.0
  %3427 = vmatprep.subr.mxu0 0.0
  %3428 = vmatpush2.msra.mxu0 0.0
  %3429 = vmatprep.subr.mxu0 0.0
  %3430 = vmatpush2.msra.mxu0 0.0
  %3431 = vmatprep.subr.mxu0 0.0
  %3432 = vmatpush2.msra.mxu0 0.0
  %3433 = vmatprep.subr.mxu0 0.0
  %3434 = vmatpush2.msra.mxu0 0.0
  %3435 = vmatprep.subr.mxu0 0.0
  %3436 = vmatpush2.msra.mxu0 0.0
  %3437 = vmatprep.subr.mxu0 0.0
  %3438 = vmatpush2.msra.mxu0 0.0
  %3439 = vmatprep.subr.mxu0 0.0
  %3440 = vmatpush2.msra.mxu0 0.0
  %3441 = vmatprep.mubr.f32.mxu0 0.0
  %3442 = vmatmul.mubr.f32.gmra.mxu0 %v3375
  %v3443 = vpop.f32.mrf.mxu0
  %v3444 = vadd.f32 0.0, %v3443
  %v3445 = vpop.f32.mrf.mxu0
  %v3446 = vadd.f32 0.0, %v3445
  %3447 = vdwg.mxu0
  %v3448 = vadd.f32 %v3306, %v3444
  %v3449 = vadd.f32 %v3307, %v3446
  %s3450 = scalar_lea.vmem %s3, 16
  %v3451 = vld [vmem:[%s3450] sm:$0xf]
  %v3453 = vsel %vm1418, %v3451, 0
  %3455 = vmatprep.subr.mxu0 0.0
  %3456 = vmatpush1.msra.mxu0 0.0
  %3457 = vmatprep.subr.mxu0 0.0
  %3458 = vmatpush1.msra.mxu0 0.0
  %3459 = vmatprep.subr.mxu0 0.0
  %3460 = vmatpush1.msra.mxu0 0.0
  %3461 = vmatprep.subr.mxu0 0.0
  %3462 = vmatpush1.msra.mxu0 0.0
  %3463 = vmatprep.subr.mxu0 0.0
  %3464 = vmatpush1.msra.mxu0 0.0
  %3465 = vmatprep.subr.mxu0 0.0
  %3466 = vmatpush1.msra.mxu0 0.0
  %3467 = vmatprep.subr.mxu0 0.0
  %3468 = vmatpush1.msra.mxu0 0.0
  %3469 = vmatprep.subr.mxu0 0.0
  %3470 = vmatpush1.msra.mxu0 0.0
  %3471 = vmatprep.subr.mxu0 0.0
  %3472 = vmatpush1.msra.mxu0 0.0
  %3473 = vmatprep.subr.mxu0 0.0
  %3474 = vmatpush1.msra.mxu0 0.0
  %3475 = vmatprep.subr.mxu0 0.0
  %3476 = vmatpush1.msra.mxu0 0.0
  %3477 = vmatprep.subr.mxu0 0.0
  %3478 = vmatpush1.msra.mxu0 0.0
  %3479 = vmatprep.subr.mxu0 %v2898
  %3480 = vmatpush1.msra.mxu0 %v2897
  %3481 = vmatprep.subr.mxu0 %v2895
  %3482 = vmatpush1.msra.mxu0 %v2894
  %3483 = vmatprep.subr.mxu0 %v2892
  %3484 = vmatpush1.msra.mxu0 %v2891
  %3485 = vmatprep.subr.mxu0 %v2889
  %3486 = vmatpush1.msra.mxu0 %v2888
  %3487 = vmatprep.subr.mxu0 0.0
  %3488 = vmatpush2.msra.mxu0 0.0
  %3489 = vmatprep.subr.mxu0 0.0
  %3490 = vmatpush2.msra.mxu0 0.0
  %3491 = vmatprep.subr.mxu0 0.0
  %3492 = vmatpush2.msra.mxu0 0.0
  %3493 = vmatprep.subr.mxu0 0.0
  %3494 = vmatpush2.msra.mxu0 0.0
  %3495 = vmatprep.subr.mxu0 0.0
  %3496 = vmatpush2.msra.mxu0 0.0
  %3497 = vmatprep.subr.mxu0 0.0
  %3498 = vmatpush2.msra.mxu0 0.0
  %3499 = vmatprep.subr.mxu0 0.0
  %3500 = vmatpush2.msra.mxu0 0.0
  %3501 = vmatprep.subr.mxu0 0.0
  %3502 = vmatpush2.msra.mxu0 0.0
  %3503 = vmatprep.subr.mxu0 0.0
  %3504 = vmatpush2.msra.mxu0 0.0
  %3505 = vmatprep.subr.mxu0 0.0
  %3506 = vmatpush2.msra.mxu0 0.0
  %3507 = vmatprep.subr.mxu0 0.0
  %3508 = vmatpush2.msra.mxu0 0.0
  %3509 = vmatprep.subr.mxu0 0.0
  %3510 = vmatpush2.msra.mxu0 0.0
  %3511 = vmatprep.subr.mxu0 0.0
  %3512 = vmatpush2.msra.mxu0 0.0
  %3513 = vmatprep.subr.mxu0 0.0
  %3514 = vmatpush2.msra.mxu0 0.0
  %3515 = vmatprep.subr.mxu0 0.0
  %3516 = vmatpush2.msra.mxu0 0.0
  %3517 = vmatprep.subr.mxu0 0.0
  %3518 = vmatpush2.msra.mxu0 0.0
  %3519 = vmatprep.mubr.f32.mxu0 0.0
  %3520 = vmatmul.mubr.f32.gmra.mxu0 %v3453
  %v3521 = vpop.f32.mrf.mxu0
  %v3522 = vadd.f32 0.0, %v3521
  %v3523 = vpop.f32.mrf.mxu0
  %v3524 = vadd.f32 0.0, %v3523
  %3525 = vdwg.mxu0
  %v3526 = vadd.f32 %v3448, %v3522
  %v3527 = vadd.f32 %v3449, %v3524
  %v3528 = vld [vmem:[#allocation2 + $0x8] sm:$0xff]
  %v3529 = vld [vmem:[#allocation2 + $0x10] sm:$0xff]
  %v3530 = vld [vmem:[#allocation2 + $0x18] sm:$0xff]
  %v3531 = vld [vmem:[#allocation2 + $0x28] sm:$0xff]
  %v3532 = vld [vmem:[#allocation2 + $0x30] sm:$0xff]
  %v3533 = vld [vmem:[#allocation2 + $0x38] sm:$0xff]
  %v3534 = vld [vmem:[#allocation2 + $0x48] sm:$0xff]
  %v3535 = vld [vmem:[#allocation2 + $0x50] sm:$0xff]
  %v3536 = vld [vmem:[#allocation2 + $0x58] sm:$0xff]
  %v3537 = vld [vmem:[#allocation2 + $0x68] sm:$0xff]
  %v3538 = vld [vmem:[#allocation2 + $0x70] sm:$0xff]
  %v3539 = vld [vmem:[#allocation2 + $0x78] sm:$0xff]
  %v3540 = vmul.f32 %v3528, %v752
  %v3541 = vmul.f32 %v3529, %v755
  %v3542 = vmul.f32 %v3530, %v754
  %v3543 = vmul.f32 %v3531, %v752
  %v3544 = vmul.f32 %v3532, %v755
  %v3545 = vmul.f32 %v3533, %v754
  %v3546 = vmul.f32 %v3534, %v752
  %v3547 = vmul.f32 %v3535, %v755
  %v3548 = vmul.f32 %v3536, %v754
  %v3549 = vmul.f32 %v3537, %v752
  %v3550 = vmul.f32 %v3538, %v755
  %v3551 = vmul.f32 %v3539, %v754
  %s3552 = scalar_lea.vmem %s3, 20
  %v3553 = vld [vmem:[%s3552] sm:$0xf]
  %3566 = vrot.lane.b32.xlu0 %v3540, 127
  %v3567 = vpop.permute.xlu0 %3566
  %3568 = vrot.lane.b32.xlu0 %v3541, 127
  %v3569 = vpop.permute.xlu0 %3568
  %3570 = vrot.lane.b32.xlu0 %v3542, 127
  %v3571 = vpop.permute.xlu0 %3570
  %3572 = vrot.lane.b32.xlu0 %v3543, 127
  %v3573 = vpop.permute.xlu0 %3572
  %3574 = vrot.lane.b32.xlu0 %v3544, 127
  %v3575 = vpop.permute.xlu0 %3574
  %3576 = vrot.lane.b32.xlu0 %v3545, 127
  %v3577 = vpop.permute.xlu0 %3576
  %3578 = vrot.lane.b32.xlu0 %v3546, 127
  %v3579 = vpop.permute.xlu0 %3578
  %3580 = vrot.lane.b32.xlu0 %v3547, 127
  %v3581 = vpop.permute.xlu0 %3580
  %3582 = vrot.lane.b32.xlu0 %v3548, 127
  %v3583 = vpop.permute.xlu0 %3582
  %3584 = vrot.lane.b32.xlu0 %v3549, 127
  %v3585 = vpop.permute.xlu0 %3584
  %3586 = vrot.lane.b32.xlu0 %v3550, 127
  %v3587 = vpop.permute.xlu0 %3586
  %3588 = vrot.lane.b32.xlu0 %v3551, 127
  %v3589 = vpop.permute.xlu0 %3588
  %v3590 = vsel %vm492, %v3567, %v3569
  %v3591 = vsel %vm492, %v3569, %v3571
  %v3592 = vsel %vm492, %v3573, %v3575
  %v3593 = vsel %vm492, %v3575, %v3577
  %v3594 = vsel %vm492, %v3579, %v3581
  %v3595 = vsel %vm492, %v3581, %v3583
  %v3596 = vsel %vm492, %v3585, %v3587
  %v3597 = vsel %vm492, %v3587, %v3589
  %v3607 = vsel %vm1418, %v3553, 0
  %3609 = vmatprep.subr.mxu0 0.0
  %3610 = vmatpush1.msra.mxu0 0.0
  %3611 = vmatprep.subr.mxu0 0.0
  %3612 = vmatpush1.msra.mxu0 0.0
  %3613 = vmatprep.subr.mxu0 0.0
  %3614 = vmatpush1.msra.mxu0 0.0
  %3615 = vmatprep.subr.mxu0 0.0
  %3616 = vmatpush1.msra.mxu0 0.0
  %3617 = vmatprep.subr.mxu0 0.0
  %3618 = vmatpush1.msra.mxu0 0.0
  %3619 = vmatprep.subr.mxu0 0.0
  %3620 = vmatpush1.msra.mxu0 0.0
  %3621 = vmatprep.subr.mxu0 0.0
  %3622 = vmatpush1.msra.mxu0 0.0
  %3623 = vmatprep.subr.mxu0 0.0
  %3624 = vmatpush1.msra.mxu0 0.0
  %3625 = vmatprep.subr.mxu0 0.0
  %3626 = vmatpush1.msra.mxu0 0.0
  %3627 = vmatprep.subr.mxu0 0.0
  %3628 = vmatpush1.msra.mxu0 0.0
  %3629 = vmatprep.subr.mxu0 0.0
  %3630 = vmatpush1.msra.mxu0 0.0
  %3631 = vmatprep.subr.mxu0 0.0
  %3632 = vmatpush1.msra.mxu0 0.0
  %3633 = vmatprep.subr.mxu0 %v3597
  %3634 = vmatpush1.msra.mxu0 %v3596
  %3635 = vmatprep.subr.mxu0 %v3595
  %3636 = vmatpush1.msra.mxu0 %v3594
  %3637 = vmatprep.subr.mxu0 %v3593
  %3638 = vmatpush1.msra.mxu0 %v3592
  %3639 = vmatprep.subr.mxu0 %v3591
  %3640 = vmatpush1.msra.mxu0 %v3590
  %3641 = vmatprep.subr.mxu0 0.0
  %3642 = vmatpush2.msra.mxu0 0.0
  %3643 = vmatprep.subr.mxu0 0.0
  %3644 = vmatpush2.msra.mxu0 0.0
  %3645 = vmatprep.subr.mxu0 0.0
  %3646 = vmatpush2.msra.mxu0 0.0
  %3647 = vmatprep.subr.mxu0 0.0
  %3648 = vmatpush2.msra.mxu0 0.0
  %3649 = vmatprep.subr.mxu0 0.0
  %3650 = vmatpush2.msra.mxu0 0.0
  %3651 = vmatprep.subr.mxu0 0.0
  %3652 = vmatpush2.msra.mxu0 0.0
  %3653 = vmatprep.subr.mxu0 0.0
  %3654 = vmatpush2.msra.mxu0 0.0
  %3655 = vmatprep.subr.mxu0 0.0
  %3656 = vmatpush2.msra.mxu0 0.0
  %3657 = vmatprep.subr.mxu0 0.0
  %3658 = vmatpush2.msra.mxu0 0.0
  %3659 = vmatprep.subr.mxu0 0.0
  %3660 = vmatpush2.msra.mxu0 0.0
  %3661 = vmatprep.subr.mxu0 0.0
  %3662 = vmatpush2.msra.mxu0 0.0
  %3663 = vmatprep.subr.mxu0 0.0
  %3664 = vmatpush2.msra.mxu0 0.0
  %3665 = vmatprep.subr.mxu0 0.0
  %3666 = vmatpush2.msra.mxu0 0.0
  %3667 = vmatprep.subr.mxu0 0.0
  %3668 = vmatpush2.msra.mxu0 0.0
  %3669 = vmatprep.subr.mxu0 0.0
  %3670 = vmatpush2.msra.mxu0 0.0
  %3671 = vmatprep.subr.mxu0 0.0
  %3672 = vmatpush2.msra.mxu0 0.0
  %3673 = vmatprep.mubr.f32.mxu0 0.0
  %3674 = vmatmul.mubr.f32.gmra.mxu0 %v3607
  %v3675 = vpop.f32.mrf.mxu0
  %v3676 = vadd.f32 0.0, %v3675
  %v3677 = vpop.f32.mrf.mxu0
  %v3678 = vadd.f32 0.0, %v3677
  %3679 = vdwg.mxu0
  %v3680 = vadd.f32 %v3526, %v3676
  %v3681 = vadd.f32 %v3527, %v3678
  %v3682 = vmul.f32 %v3528, %v892
  %v3683 = vmul.f32 %v3529, %v895
  %v3684 = vmul.f32 %v3530, %v894
  %v3685 = vmul.f32 %v3531, %v892
  %v3686 = vmul.f32 %v3532, %v895
  %v3687 = vmul.f32 %v3533, %v894
  %v3688 = vmul.f32 %v3534, %v892
  %v3689 = vmul.f32 %v3535, %v895
  %v3690 = vmul.f32 %v3536, %v894
  %v3691 = vmul.f32 %v3537, %v892
  %v3692 = vmul.f32 %v3538, %v895
  %v3693 = vmul.f32 %v3539, %v894
  %s3694 = scalar_lea.vmem %s3, 24
  %v3695 = vld [vmem:[%s3694] sm:$0xf]
  %3708 = vrot.lane.b32.xlu0 %v3682, 113
  %v3709 = vpop.permute.xlu0 %3708
  %3710 = vrot.lane.b32.xlu0 %v3683, 113
  %v3711 = vpop.permute.xlu0 %3710
  %3712 = vrot.lane.b32.xlu0 %v3684, 113
  %v3713 = vpop.permute.xlu0 %3712
  %3714 = vrot.lane.b32.xlu0 %v3685, 113
  %v3715 = vpop.permute.xlu0 %3714
  %3716 = vrot.lane.b32.xlu0 %v3686, 113
  %v3717 = vpop.permute.xlu0 %3716
  %3718 = vrot.lane.b32.xlu0 %v3687, 113
  %v3719 = vpop.permute.xlu0 %3718
  %3720 = vrot.lane.b32.xlu0 %v3688, 113
  %v3721 = vpop.permute.xlu0 %3720
  %3722 = vrot.lane.b32.xlu0 %v3689, 113
  %v3723 = vpop.permute.xlu0 %3722
  %3724 = vrot.lane.b32.xlu0 %v3690, 113
  %v3725 = vpop.permute.xlu0 %3724
  %3726 = vrot.lane.b32.xlu0 %v3691, 113
  %v3727 = vpop.permute.xlu0 %3726
  %3728 = vrot.lane.b32.xlu0 %v3692, 113
  %v3729 = vpop.permute.xlu0 %3728
  %3730 = vrot.lane.b32.xlu0 %v3693, 113
  %v3731 = vpop.permute.xlu0 %3730
  %v3732 = vsel %vm350, %v3709, %v3711
  %v3733 = vsel %vm350, %v3711, %v3713
  %v3734 = vsel %vm350, %v3715, %v3717
  %v3735 = vsel %vm350, %v3717, %v3719
  %v3736 = vsel %vm350, %v3721, %v3723
  %v3737 = vsel %vm350, %v3723, %v3725
  %v3738 = vsel %vm350, %v3727, %v3729
  %v3739 = vsel %vm350, %v3729, %v3731
  %v3749 = vsel %vm1418, %v3695, 0
  %3751 = vmatprep.subr.mxu0 0.0
  %3752 = vmatpush1.msra.mxu0 0.0
  %3753 = vmatprep.subr.mxu0 0.0
  %3754 = vmatpush1.msra.mxu0 0.0
  %3755 = vmatprep.subr.mxu0 0.0
  %3756 = vmatpush1.msra.mxu0 0.0
  %3757 = vmatprep.subr.mxu0 0.0
  %3758 = vmatpush1.msra.mxu0 0.0
  %3759 = vmatprep.subr.mxu0 0.0
  %3760 = vmatpush1.msra.mxu0 0.0
  %3761 = vmatprep.subr.mxu0 0.0
  %3762 = vmatpush1.msra.mxu0 0.0
  %3763 = vmatprep.subr.mxu0 0.0
  %3764 = vmatpush1.msra.mxu0 0.0
  %3765 = vmatprep.subr.mxu0 0.0
  %3766 = vmatpush1.msra.mxu0 0.0
  %3767 = vmatprep.subr.mxu0 0.0
  %3768 = vmatpush1.msra.mxu0 0.0
  %3769 = vmatprep.subr.mxu0 0.0
  %3770 = vmatpush1.msra.mxu0 0.0
  %3771 = vmatprep.subr.mxu0 0.0
  %3772 = vmatpush1.msra.mxu0 0.0
  %3773 = vmatprep.subr.mxu0 0.0
  %3774 = vmatpush1.msra.mxu0 0.0
  %3775 = vmatprep.subr.mxu0 %v3739
  %3776 = vmatpush1.msra.mxu0 %v3738
  %3777 = vmatprep.subr.mxu0 %v3737
  %3778 = vmatpush1.msra.mxu0 %v3736
  %3779 = vmatprep.subr.mxu0 %v3735
  %3780 = vmatpush1.msra.mxu0 %v3734
  %3781 = vmatprep.subr.mxu0 %v3733
  %3782 = vmatpush1.msra.mxu0 %v3732
  %3783 = vmatprep.subr.mxu0 0.0
  %3784 = vmatpush2.msra.mxu0 0.0
  %3785 = vmatprep.subr.mxu0 0.0
  %3786 = vmatpush2.msra.mxu0 0.0
  %3787 = vmatprep.subr.mxu0 0.0
  %3788 = vmatpush2.msra.mxu0 0.0
  %3789 = vmatprep.subr.mxu0 0.0
  %3790 = vmatpush2.msra.mxu0 0.0
  %3791 = vmatprep.subr.mxu0 0.0
  %3792 = vmatpush2.msra.mxu0 0.0
  %3793 = vmatprep.subr.mxu0 0.0
  %3794 = vmatpush2.msra.mxu0 0.0
  %3795 = vmatprep.subr.mxu0 0.0
  %3796 = vmatpush2.msra.mxu0 0.0
  %3797 = vmatprep.subr.mxu0 0.0
  %3798 = vmatpush2.msra.mxu0 0.0
  %3799 = vmatprep.subr.mxu0 0.0
  %3800 = vmatpush2.msra.mxu0 0.0
  %3801 = vmatprep.subr.mxu0 0.0
  %3802 = vmatpush2.msra.mxu0 0.0
  %3803 = vmatprep.subr.mxu0 0.0
  %3804 = vmatpush2.msra.mxu0 0.0
  %3805 = vmatprep.subr.mxu0 0.0
  %3806 = vmatpush2.msra.mxu0 0.0
  %3807 = vmatprep.subr.mxu0 0.0
  %3808 = vmatpush2.msra.mxu0 0.0
  %3809 = vmatprep.subr.mxu0 0.0
  %3810 = vmatpush2.msra.mxu0 0.0
  %3811 = vmatprep.subr.mxu0 0.0
  %3812 = vmatpush2.msra.mxu0 0.0
  %3813 = vmatprep.subr.mxu0 0.0
  %3814 = vmatpush2.msra.mxu0 0.0
  %3815 = vmatprep.mubr.f32.mxu0 0.0
  %3816 = vmatmul.mubr.f32.gmra.mxu0 %v3749
  %v3817 = vpop.f32.mrf.mxu0
  %v3818 = vadd.f32 0.0, %v3817
  %v3819 = vpop.f32.mrf.mxu0
  %v3820 = vadd.f32 0.0, %v3819
  %3821 = vdwg.mxu0
  %v3822 = vadd.f32 %v3680, %v3818
  %v3823 = vadd.f32 %v3681, %v3820
  %s3824 = scalar_lea.vmem %s3, 28
  %v3825 = vld [vmem:[%s3824] sm:$0xf]
  %3838 = vrot.lane.b32.xlu0 %v3528, 112
  %v3839 = vpop.permute.xlu0 %3838
  %3840 = vrot.lane.b32.xlu0 %v3529, 112
  %v3841 = vpop.permute.xlu0 %3840
  %3842 = vrot.lane.b32.xlu0 %v3530, 112
  %v3843 = vpop.permute.xlu0 %3842
  %3844 = vrot.lane.b32.xlu0 %v3531, 112
  %v3845 = vpop.permute.xlu0 %3844
  %3846 = vrot.lane.b32.xlu0 %v3532, 112
  %v3847 = vpop.permute.xlu0 %3846
  %3848 = vrot.lane.b32.xlu0 %v3533, 112
  %v3849 = vpop.permute.xlu0 %3848
  %3850 = vrot.lane.b32.xlu0 %v3534, 112
  %v3851 = vpop.permute.xlu0 %3850
  %3852 = vrot.lane.b32.xlu0 %v3535, 112
  %v3853 = vpop.permute.xlu0 %3852
  %3854 = vrot.lane.b32.xlu0 %v3536, 112
  %v3855 = vpop.permute.xlu0 %3854
  %3856 = vrot.lane.b32.xlu0 %v3537, 112
  %v3857 = vpop.permute.xlu0 %3856
  %3858 = vrot.lane.b32.xlu0 %v3538, 112
  %v3859 = vpop.permute.xlu0 %3858
  %3860 = vrot.lane.b32.xlu0 %v3539, 112
  %v3861 = vpop.permute.xlu0 %3860
  %v3862 = vsel %vm1045, %v3839, %v3841
  %v3863 = vsel %vm1045, %v3841, %v3843
  %v3864 = vsel %vm1045, %v3845, %v3847
  %v3865 = vsel %vm1045, %v3847, %v3849
  %v3866 = vsel %vm1045, %v3851, %v3853
  %v3867 = vsel %vm1045, %v3853, %v3855
  %v3868 = vsel %vm1045, %v3857, %v3859
  %v3869 = vsel %vm1045, %v3859, %v3861
  %v3879 = vsel %vm1418, %v3825, 0
  %3881 = vmatprep.subr.mxu0 0.0
  %3882 = vmatpush1.msra.mxu0 0.0
  %3883 = vmatprep.subr.mxu0 0.0
  %3884 = vmatpush1.msra.mxu0 0.0
  %3885 = vmatprep.subr.mxu0 0.0
  %3886 = vmatpush1.msra.mxu0 0.0
  %3887 = vmatprep.subr.mxu0 0.0
  %3888 = vmatpush1.msra.mxu0 0.0
  %3889 = vmatprep.subr.mxu0 0.0
  %3890 = vmatpush1.msra.mxu0 0.0
  %3891 = vmatprep.subr.mxu0 0.0
  %3892 = vmatpush1.msra.mxu0 0.0
  %3893 = vmatprep.subr.mxu0 0.0
  %3894 = vmatpush1.msra.mxu0 0.0
  %3895 = vmatprep.subr.mxu0 0.0
  %3896 = vmatpush1.msra.mxu0 0.0
  %3897 = vmatprep.subr.mxu0 0.0
  %3898 = vmatpush1.msra.mxu0 0.0
  %3899 = vmatprep.subr.mxu0 0.0
  %3900 = vmatpush1.msra.mxu0 0.0
  %3901 = vmatprep.subr.mxu0 0.0
  %3902 = vmatpush1.msra.mxu0 0.0
  %3903 = vmatprep.subr.mxu0 0.0
  %3904 = vmatpush1.msra.mxu0 0.0
  %3905 = vmatprep.subr.mxu0 %v3869
  %3906 = vmatpush1.msra.mxu0 %v3868
  %3907 = vmatprep.subr.mxu0 %v3867
  %3908 = vmatpush1.msra.mxu0 %v3866
  %3909 = vmatprep.subr.mxu0 %v3865
  %3910 = vmatpush1.msra.mxu0 %v3864
  %3911 = vmatprep.subr.mxu0 %v3863
  %3912 = vmatpush1.msra.mxu0 %v3862
  %3913 = vmatprep.subr.mxu0 0.0
  %3914 = vmatpush2.msra.mxu0 0.0
  %3915 = vmatprep.subr.mxu0 0.0
  %3916 = vmatpush2.msra.mxu0 0.0
  %3917 = vmatprep.subr.mxu0 0.0
  %3918 = vmatpush2.msra.mxu0 0.0
  %3919 = vmatprep.subr.mxu0 0.0
  %3920 = vmatpush2.msra.mxu0 0.0
  %3921 = vmatprep.subr.mxu0 0.0
  %3922 = vmatpush2.msra.mxu0 0.0
  %3923 = vmatprep.subr.mxu0 0.0
  %3924 = vmatpush2.msra.mxu0 0.0
  %3925 = vmatprep.subr.mxu0 0.0
  %3926 = vmatpush2.msra.mxu0 0.0
  %3927 = vmatprep.subr.mxu0 0.0
  %3928 = vmatpush2.msra.mxu0 0.0
  %3929 = vmatprep.subr.mxu0 0.0
  %3930 = vmatpush2.msra.mxu0 0.0
  %3931 = vmatprep.subr.mxu0 0.0
  %3932 = vmatpush2.msra.mxu0 0.0
  %3933 = vmatprep.subr.mxu0 0.0
  %3934 = vmatpush2.msra.mxu0 0.0
  %3935 = vmatprep.subr.mxu0 0.0
  %3936 = vmatpush2.msra.mxu0 0.0
  %3937 = vmatprep.subr.mxu0 0.0
  %3938 = vmatpush2.msra.mxu0 0.0
  %3939 = vmatprep.subr.mxu0 0.0
  %3940 = vmatpush2.msra.mxu0 0.0
  %3941 = vmatprep.subr.mxu0 0.0
  %3942 = vmatpush2.msra.mxu0 0.0
  %3943 = vmatprep.subr.mxu0 0.0
  %3944 = vmatpush2.msra.mxu0 0.0
  %3945 = vmatprep.mubr.f32.mxu0 0.0
  %3946 = vmatmul.mubr.f32.gmra.mxu0 %v3879
  %v3947 = vpop.f32.mrf.mxu0
  %v3948 = vadd.f32 0.0, %v3947
  %v3949 = vpop.f32.mrf.mxu0
  %v3950 = vadd.f32 0.0, %v3949
  %3951 = vdwg.mxu0
  %v3952 = vadd.f32 %v3822, %v3948
  %v3953 = vadd.f32 %v3823, %v3950
  %v3954 = vmul.f32 %v3528, %v1162
  %v3955 = vmul.f32 %v3529, %v1165
  %v3956 = vmul.f32 %v3530, %v1164
  %v3957 = vmul.f32 %v3531, %v1162
  %v3958 = vmul.f32 %v3532, %v1165
  %v3959 = vmul.f32 %v3533, %v1164
  %v3960 = vmul.f32 %v3534, %v1162
  %v3961 = vmul.f32 %v3535, %v1165
  %v3962 = vmul.f32 %v3536, %v1164
  %v3963 = vmul.f32 %v3537, %v1162
  %v3964 = vmul.f32 %v3538, %v1165
  %v3965 = vmul.f32 %v3539, %v1164
  %s3966 = scalar_lea.vmem %s3, 32
  %v3967 = vld [vmem:[%s3966] sm:$0xf]
  %3980 = vrot.lane.b32.xlu0 %v3954, 111
  %v3981 = vpop.permute.xlu0 %3980
  %3982 = vrot.lane.b32.xlu0 %v3955, 111
  %v3983 = vpop.permute.xlu0 %3982
  %3984 = vrot.lane.b32.xlu0 %v3956, 111
  %v3985 = vpop.permute.xlu0 %3984
  %3986 = vrot.lane.b32.xlu0 %v3957, 111
  %v3987 = vpop.permute.xlu0 %3986
  %3988 = vrot.lane.b32.xlu0 %v3958, 111
  %v3989 = vpop.permute.xlu0 %3988
  %3990 = vrot.lane.b32.xlu0 %v3959, 111
  %v3991 = vpop.permute.xlu0 %3990
  %3992 = vrot.lane.b32.xlu0 %v3960, 111
  %v3993 = vpop.permute.xlu0 %3992
  %3994 = vrot.lane.b32.xlu0 %v3961, 111
  %v3995 = vpop.permute.xlu0 %3994
  %3996 = vrot.lane.b32.xlu0 %v3962, 111
  %v3997 = vpop.permute.xlu0 %3996
  %3998 = vrot.lane.b32.xlu0 %v3963, 111
  %v3999 = vpop.permute.xlu0 %3998
  %4000 = vrot.lane.b32.xlu0 %v3964, 111
  %v4001 = vpop.permute.xlu0 %4000
  %4002 = vrot.lane.b32.xlu0 %v3965, 111
  %v4003 = vpop.permute.xlu0 %4002
  %v4004 = vsel %vm91, %v3981, %v3983
  %v4005 = vsel %vm91, %v3983, %v3985
  %v4006 = vsel %vm91, %v3987, %v3989
  %v4007 = vsel %vm91, %v3989, %v3991
  %v4008 = vsel %vm91, %v3993, %v3995
  %v4009 = vsel %vm91, %v3995, %v3997
  %v4010 = vsel %vm91, %v3999, %v4001
  %v4011 = vsel %vm91, %v4001, %v4003
  %v4021 = vsel %vm1418, %v3967, 0
  %4023 = vmatprep.subr.mxu0 0.0
  %4024 = vmatpush1.msra.mxu0 0.0
  %4025 = vmatprep.subr.mxu0 0.0
  %4026 = vmatpush1.msra.mxu0 0.0
  %4027 = vmatprep.subr.mxu0 0.0
  %4028 = vmatpush1.msra.mxu0 0.0
  %4029 = vmatprep.subr.mxu0 0.0
  %4030 = vmatpush1.msra.mxu0 0.0
  %4031 = vmatprep.subr.mxu0 0.0
  %4032 = vmatpush1.msra.mxu0 0.0
  %4033 = vmatprep.subr.mxu0 0.0
  %4034 = vmatpush1.msra.mxu0 0.0
  %4035 = vmatprep.subr.mxu0 0.0
  %4036 = vmatpush1.msra.mxu0 0.0
  %4037 = vmatprep.subr.mxu0 0.0
  %4038 = vmatpush1.msra.mxu0 0.0
  %4039 = vmatprep.subr.mxu0 0.0
  %4040 = vmatpush1.msra.mxu0 0.0
  %4041 = vmatprep.subr.mxu0 0.0
  %4042 = vmatpush1.msra.mxu0 0.0
  %4043 = vmatprep.subr.mxu0 0.0
  %4044 = vmatpush1.msra.mxu0 0.0
  %4045 = vmatprep.subr.mxu0 0.0
  %4046 = vmatpush1.msra.mxu0 0.0
  %4047 = vmatprep.subr.mxu0 %v4011
  %4048 = vmatpush1.msra.mxu0 %v4010
  %4049 = vmatprep.subr.mxu0 %v4009
  %4050 = vmatpush1.msra.mxu0 %v4008
  %4051 = vmatprep.subr.mxu0 %v4007
  %4052 = vmatpush1.msra.mxu0 %v4006
  %4053 = vmatprep.subr.mxu0 %v4005
  %4054 = vmatpush1.msra.mxu0 %v4004
  %4055 = vmatprep.subr.mxu0 0.0
  %4056 = vmatpush2.msra.mxu0 0.0
  %4057 = vmatprep.subr.mxu0 0.0
  %4058 = vmatpush2.msra.mxu0 0.0
  %4059 = vmatprep.subr.mxu0 0.0
  %4060 = vmatpush2.msra.mxu0 0.0
  %4061 = vmatprep.subr.mxu0 0.0
  %4062 = vmatpush2.msra.mxu0 0.0
  %4063 = vmatprep.subr.mxu0 0.0
  %4064 = vmatpush2.msra.mxu0 0.0
  %4065 = vmatprep.subr.mxu0 0.0
  %4066 = vmatpush2.msra.mxu0 0.0
  %4067 = vmatprep.subr.mxu0 0.0
  %4068 = vmatpush2.msra.mxu0 0.0
  %4069 = vmatprep.subr.mxu0 0.0
  %4070 = vmatpush2.msra.mxu0 0.0
  %4071 = vmatprep.subr.mxu0 0.0
  %4072 = vmatpush2.msra.mxu0 0.0
  %4073 = vmatprep.subr.mxu0 0.0
  %4074 = vmatpush2.msra.mxu0 0.0
  %4075 = vmatprep.subr.mxu0 0.0
  %4076 = vmatpush2.msra.mxu0 0.0
  %4077 = vmatprep.subr.mxu0 0.0
  %4078 = vmatpush2.msra.mxu0 0.0
  %4079 = vmatprep.subr.mxu0 0.0
  %4080 = vmatpush2.msra.mxu0 0.0
  %4081 = vmatprep.subr.mxu0 0.0
  %4082 = vmatpush2.msra.mxu0 0.0
  %4083 = vmatprep.subr.mxu0 0.0
  %4084 = vmatpush2.msra.mxu0 0.0
  %4085 = vmatprep.subr.mxu0 0.0
  %4086 = vmatpush2.msra.mxu0 0.0
  %4087 = vmatprep.mubr.f32.mxu0 0.0
  %4088 = vmatmul.mubr.f32.gmra.mxu0 %v4021
  %v4089 = vpop.f32.mrf.mxu0
  %v4090 = vadd.f32 0.0, %v4089
  %v4091 = vpop.f32.mrf.mxu0
  %v4092 = vadd.f32 0.0, %v4091
  %4093 = vdwg.mxu0
  %v4094 = vadd.f32 %v3952, %v4090
  %v4095 = vadd.f32 %v3953, %v4092
  %v4098 = vcombine.low %v4094, %v4095
  %4100 = vst [vmem:[%s4] sm:$0xff] %v4098
  %s4101 = scalar_lea.vmem %s0, 8
  %v4102 = vld [vmem:[%s4101] sm:$0xff]
  %v4104 = vcombine.high %v4102, %v4102
  %4106 = vst [vmem:[#allocation2 + $0x8] sm:$0xf] %v4102
  %4107 = vst [vmem:[#allocation2 + $0x10] sm:$0xf] %v4104
  %v4108 = vld [vmem:[#allocation2] sm:$0xf]
  %v4109 = vld [vmem:[#allocation2 + $0x8] sm:$0xf]
  %v4110 = vld [vmem:[#allocation2 + $0x10] sm:$0xf]
  %v4111 = vmul.f32 %v4108, %v88
  %v4112 = vmul.f32 %v4109, %v92
  %v4113 = vmul.f32 %v4110, %v90
  %v4114 = vld [vmem:[%s1] sm:$0xff]
  %v4115 = vld [vmem:[%s1 + $0x8] sm:$0xff]
  %v4116 = vld [vmem:[%s1 + $0x10] sm:$0xff]
  %v4117 = vld [vmem:[%s1 + $0x18] sm:$0xff]
  %v4118 = vld [vmem:[%s103] sm:$0xff]
  %v4119 = vld [vmem:[%s103 + $0x8] sm:$0xff]
  %v4120 = vld [vmem:[%s103 + $0x10] sm:$0xff]
  %v4121 = vld [vmem:[%s103 + $0x18] sm:$0xff]
  %4125 = vrot.lane.b32.xlu0 %v4108, 16
  %v4126 = vpop.permute.xlu0 %4125
  %4127 = vrot.lane.b32.xlu0 %v4109, 16
  %v4128 = vpop.permute.xlu0 %4127
  %4129 = vrot.lane.b32.xlu0 %v4110, 16
  %v4130 = vpop.permute.xlu0 %4129
  %v4131 = vsel %vm117, %v4126, %v4128
  %v4132 = vsel %vm117, %v4128, %v4130
  %v4134 = vsel %vm120, %v4118, 0
  %v4137 = vsel %vm120, %v4119, 0
  %v4140 = vsel %vm120, %v4120, 0
  %v4143 = vsel %vm120, %v4121, 0
  %v4145 = vsel %vm133, %v4131, 0
  %v4147 = vsel %vm133, %v4132, 0
  %4149 = vmatprep.subr.mxu0 0.0
  %4150 = vmatpush1.msra.mxu0 0.0
  %4151 = vmatprep.subr.mxu0 0.0
  %4152 = vmatpush1.msra.mxu0 0.0
  %4153 = vmatprep.subr.mxu0 0.0
  %4154 = vmatpush1.msra.mxu0 0.0
  %4155 = vmatprep.subr.mxu0 0.0
  %4156 = vmatpush1.msra.mxu0 0.0
  %4157 = vmatprep.subr.mxu0 0.0
  %4158 = vmatpush1.msra.mxu0 0.0
  %4159 = vmatprep.subr.mxu0 0.0
  %4160 = vmatpush1.msra.mxu0 0.0
  %4161 = vmatprep.subr.mxu0 0.0
  %4162 = vmatpush1.msra.mxu0 0.0
  %4163 = vmatprep.subr.mxu0 0.0
  %4164 = vmatpush1.msra.mxu0 0.0
  %4165 = vmatprep.subr.mxu0 0.0
  %4166 = vmatpush1.msra.mxu0 0.0
  %4167 = vmatprep.subr.mxu0 0.0
  %4168 = vmatpush1.msra.mxu0 0.0
  %4169 = vmatprep.subr.mxu0 0.0
  %4170 = vmatpush1.msra.mxu0 0.0
  %4171 = vmatprep.subr.mxu0 0.0
  %4172 = vmatpush1.msra.mxu0 0.0
  %4173 = vmatprep.subr.mxu0 0.0
  %4174 = vmatpush1.msra.mxu0 0.0
  %4175 = vmatprep.subr.mxu0 0.0
  %4176 = vmatpush1.msra.mxu0 0.0
  %4177 = vmatprep.subr.mxu0 0.0
  %4178 = vmatpush1.msra.mxu0 0.0
  %4179 = vmatprep.subr.mxu0 %v4147
  %4180 = vmatpush1.msra.mxu0 %v4145
  %4181 = vmatprep.subr.mxu0 0.0
  %4182 = vmatpush2.msra.mxu0 0.0
  %4183 = vmatprep.subr.mxu0 0.0
  %4184 = vmatpush2.msra.mxu0 0.0
  %4185 = vmatprep.subr.mxu0 0.0
  %4186 = vmatpush2.msra.mxu0 0.0
  %4187 = vmatprep.subr.mxu0 0.0
  %4188 = vmatpush2.msra.mxu0 0.0
  %4189 = vmatprep.subr.mxu0 0.0
  %4190 = vmatpush2.msra.mxu0 0.0
  %4191 = vmatprep.subr.mxu0 0.0
  %4192 = vmatpush2.msra.mxu0 0.0
  %4193 = vmatprep.subr.mxu0 0.0
  %4194 = vmatpush2.msra.mxu0 0.0
  %4195 = vmatprep.subr.mxu0 0.0
  %4196 = vmatpush2.msra.mxu0 0.0
  %4197 = vmatprep.subr.mxu0 0.0
  %4198 = vmatpush2.msra.mxu0 0.0
  %4199 = vmatprep.subr.mxu0 0.0
  %4200 = vmatpush2.msra.mxu0 0.0
  %4201 = vmatprep.subr.mxu0 0.0
  %4202 = vmatpush2.msra.mxu0 0.0
  %4203 = vmatprep.subr.mxu0 0.0
  %4204 = vmatpush2.msra.mxu0 0.0
  %4205 = vmatprep.subr.mxu0 0.0
  %4206 = vmatpush2.msra.mxu0 0.0
  %4207 = vmatprep.subr.mxu0 0.0
  %4208 = vmatpush2.msra.mxu0 0.0
  %4209 = vmatprep.subr.mxu0 0.0
  %4210 = vmatpush2.msra.mxu0 0.0
  %4211 = vmatprep.subr.mxu0 0.0
  %4212 = vmatpush2.msra.mxu0 0.0
  %4213 = vmatprep.mubr.f32.mxu0 0.0
  %4214 = vmatmul.mubr.f32.gmra.mxu0 %v4134
  %v4215 = vpop.f32.mrf.mxu0
  %v4216 = vadd.f32 0.0, %v4215
  %v4217 = vpop.f32.mrf.mxu0
  %v4218 = vadd.f32 0.0, %v4217
  %4219 = vmatprep.mubr.f32.mxu0 0.0
  %4220 = vmatmul.mubr.f32.gmra.mxu0 %v4137
  %v4221 = vpop.f32.mrf.mxu0
  %v4222 = vadd.f32 0.0, %v4221
  %v4223 = vpop.f32.mrf.mxu0
  %v4224 = vadd.f32 0.0, %v4223
  %4225 = vmatprep.mubr.f32.mxu0 0.0
  %4226 = vmatmul.mubr.f32.gmra.mxu0 %v4140
  %v4227 = vpop.f32.mrf.mxu0
  %v4228 = vadd.f32 0.0, %v4227
  %v4229 = vpop.f32.mrf.mxu0
  %v4230 = vadd.f32 0.0, %v4229
  %4231 = vmatprep.mubr.f32.mxu0 0.0
  %4232 = vmatmul.mubr.f32.gmra.mxu0 %v4143
  %v4233 = vpop.f32.mrf.mxu0
  %v4234 = vadd.f32 0.0, %v4233
  %v4235 = vpop.f32.mrf.mxu0
  %v4236 = vadd.f32 0.0, %v4235
  %4237 = vdwg.mxu0
  %4241 = vrot.lane.b32.xlu0 %v4111, 17
  %v4242 = vpop.permute.xlu0 %4241
  %4243 = vrot.lane.b32.xlu0 %v4112, 17
  %v4244 = vpop.permute.xlu0 %4243
  %4245 = vrot.lane.b32.xlu0 %v4113, 17
  %v4246 = vpop.permute.xlu0 %4245
  %v4247 = vsel %vm236, %v4242, %v4244
  %v4248 = vsel %vm236, %v4244, %v4246
  %v4250 = vsel %vm120, %v4114, 0
  %v4253 = vsel %vm120, %v4115, 0
  %v4256 = vsel %vm120, %v4116, 0
  %v4259 = vsel %vm120, %v4117, 0
  %v4261 = vsel %vm133, %v4247, 0
  %v4263 = vsel %vm133, %v4248, 0
  %4265 = vmatprep.subr.mxu0 0.0
  %4266 = vmatpush1.msra.mxu0 0.0
  %4267 = vmatprep.subr.mxu0 0.0
  %4268 = vmatpush1.msra.mxu0 0.0
  %4269 = vmatprep.subr.mxu0 0.0
  %4270 = vmatpush1.msra.mxu0 0.0
  %4271 = vmatprep.subr.mxu0 0.0
  %4272 = vmatpush1.msra.mxu0 0.0
  %4273 = vmatprep.subr.mxu0 0.0
  %4274 = vmatpush1.msra.mxu0 0.0
  %4275 = vmatprep.subr.mxu0 0.0
  %4276 = vmatpush1.msra.mxu0 0.0
  %4277 = vmatprep.subr.mxu0 0.0
  %4278 = vmatpush1.msra.mxu0 0.0
  %4279 = vmatprep.subr.mxu0 0.0
  %4280 = vmatpush1.msra.mxu0 0.0
  %4281 = vmatprep.subr.mxu0 0.0
  %4282 = vmatpush1.msra.mxu0 0.0
  %4283 = vmatprep.subr.mxu0 0.0
  %4284 = vmatpush1.msra.mxu0 0.0
  %4285 = vmatprep.subr.mxu0 0.0
  %4286 = vmatpush1.msra.mxu0 0.0
  %4287 = vmatprep.subr.mxu0 0.0
  %4288 = vmatpush1.msra.mxu0 0.0
  %4289 = vmatprep.subr.mxu0 0.0
  %4290 = vmatpush1.msra.mxu0 0.0
  %4291 = vmatprep.subr.mxu0 0.0
  %4292 = vmatpush1.msra.mxu0 0.0
  %4293 = vmatprep.subr.mxu0 0.0
  %4294 = vmatpush1.msra.mxu0 0.0
  %4295 = vmatprep.subr.mxu0 %v4263
  %4296 = vmatpush1.msra.mxu0 %v4261
  %4297 = vmatprep.subr.mxu0 0.0
  %4298 = vmatpush2.msra.mxu0 0.0
  %4299 = vmatprep.subr.mxu0 0.0
  %4300 = vmatpush2.msra.mxu0 0.0
  %4301 = vmatprep.subr.mxu0 0.0
  %4302 = vmatpush2.msra.mxu0 0.0
  %4303 = vmatprep.subr.mxu0 0.0
  %4304 = vmatpush2.msra.mxu0 0.0
  %4305 = vmatprep.subr.mxu0 0.0
  %4306 = vmatpush2.msra.mxu0 0.0
  %4307 = vmatprep.subr.mxu0 0.0
  %4308 = vmatpush2.msra.mxu0 0.0
  %4309 = vmatprep.subr.mxu0 0.0
  %4310 = vmatpush2.msra.mxu0 0.0
  %4311 = vmatprep.subr.mxu0 0.0
  %4312 = vmatpush2.msra.mxu0 0.0
  %4313 = vmatprep.subr.mxu0 0.0
  %4314 = vmatpush2.msra.mxu0 0.0
  %4315 = vmatprep.subr.mxu0 0.0
  %4316 = vmatpush2.msra.mxu0 0.0
  %4317 = vmatprep.subr.mxu0 0.0
  %4318 = vmatpush2.msra.mxu0 0.0
  %4319 = vmatprep.subr.mxu0 0.0
  %4320 = vmatpush2.msra.mxu0 0.0
  %4321 = vmatprep.subr.mxu0 0.0
  %4322 = vmatpush2.msra.mxu0 0.0
  %4323 = vmatprep.subr.mxu0 0.0
  %4324 = vmatpush2.msra.mxu0 0.0
  %4325 = vmatprep.subr.mxu0 0.0
  %4326 = vmatpush2.msra.mxu0 0.0
  %4327 = vmatprep.subr.mxu0 0.0
  %4328 = vmatpush2.msra.mxu0 0.0
  %4329 = vmatprep.mubr.f32.mxu0 0.0
  %4330 = vmatmul.mubr.f32.gmra.mxu0 %v4250
  %v4331 = vpop.f32.mrf.mxu0
  %v4332 = vadd.f32 %v4216, %v4331
  %v4333 = vpop.f32.mrf.mxu0
  %v4334 = vadd.f32 %v4218, %v4333
  %4335 = vmatprep.mubr.f32.mxu0 0.0
  %4336 = vmatmul.mubr.f32.gmra.mxu0 %v4253
  %v4337 = vpop.f32.mrf.mxu0
  %v4338 = vadd.f32 %v4222, %v4337
  %v4339 = vpop.f32.mrf.mxu0
  %v4340 = vadd.f32 %v4224, %v4339
  %4341 = vmatprep.mubr.f32.mxu0 0.0
  %4342 = vmatmul.mubr.f32.gmra.mxu0 %v4256
  %v4343 = vpop.f32.mrf.mxu0
  %v4344 = vadd.f32 %v4228, %v4343
  %v4345 = vpop.f32.mrf.mxu0
  %v4346 = vadd.f32 %v4230, %v4345
  %4347 = vmatprep.mubr.f32.mxu0 0.0
  %4348 = vmatmul.mubr.f32.gmra.mxu0 %v4259
  %v4349 = vpop.f32.mrf.mxu0
  %v4350 = vadd.f32 %v4234, %v4349
  %v4351 = vpop.f32.mrf.mxu0
  %v4352 = vadd.f32 %v4236, %v4351
  %4353 = vdwg.mxu0
  %v4354 = vmul.f32 %v4108, %v347
  %v4355 = vmul.f32 %v4109, %v351
  %v4356 = vmul.f32 %v4110, %v349
  %v4357 = vld [vmem:[%s358] sm:$0xff]
  %v4358 = vld [vmem:[%s358 + $0x8] sm:$0xff]
  %v4359 = vld [vmem:[%s358 + $0x10] sm:$0xff]
  %v4360 = vld [vmem:[%s358 + $0x18] sm:$0xff]
  %4364 = vrot.lane.b32.xlu0 %v4354, 15
  %v4365 = vpop.permute.xlu0 %4364
  %4366 = vrot.lane.b32.xlu0 %v4355, 15
  %v4367 = vpop.permute.xlu0 %4366
  %4368 = vrot.lane.b32.xlu0 %v4356, 15
  %v4369 = vpop.permute.xlu0 %4368
  %v4370 = vsel %vm372, %v4365, %v4367
  %v4371 = vsel %vm372, %v4367, %v4369
  %v4373 = vsel %vm120, %v4357, 0
  %v4376 = vsel %vm120, %v4358, 0
  %v4379 = vsel %vm120, %v4359, 0
  %v4382 = vsel %vm120, %v4360, 0
  %v4384 = vsel %vm133, %v4370, 0
  %v4386 = vsel %vm133, %v4371, 0
  %4388 = vmatprep.subr.mxu0 0.0
  %4389 = vmatpush1.msra.mxu0 0.0
  %4390 = vmatprep.subr.mxu0 0.0
  %4391 = vmatpush1.msra.mxu0 0.0
  %4392 = vmatprep.subr.mxu0 0.0
  %4393 = vmatpush1.msra.mxu0 0.0
  %4394 = vmatprep.subr.mxu0 0.0
  %4395 = vmatpush1.msra.mxu0 0.0
  %4396 = vmatprep.subr.mxu0 0.0
  %4397 = vmatpush1.msra.mxu0 0.0
  %4398 = vmatprep.subr.mxu0 0.0
  %4399 = vmatpush1.msra.mxu0 0.0
  %4400 = vmatprep.subr.mxu0 0.0
  %4401 = vmatpush1.msra.mxu0 0.0
  %4402 = vmatprep.subr.mxu0 0.0
  %4403 = vmatpush1.msra.mxu0 0.0
  %4404 = vmatprep.subr.mxu0 0.0
  %4405 = vmatpush1.msra.mxu0 0.0
  %4406 = vmatprep.subr.mxu0 0.0
  %4407 = vmatpush1.msra.mxu0 0.0
  %4408 = vmatprep.subr.mxu0 0.0
  %4409 = vmatpush1.msra.mxu0 0.0
  %4410 = vmatprep.subr.mxu0 0.0
  %4411 = vmatpush1.msra.mxu0 0.0
  %4412 = vmatprep.subr.mxu0 0.0
  %4413 = vmatpush1.msra.mxu0 0.0
  %4414 = vmatprep.subr.mxu0 0.0
  %4415 = vmatpush1.msra.mxu0 0.0
  %4416 = vmatprep.subr.mxu0 0.0
  %4417 = vmatpush1.msra.mxu0 0.0
  %4418 = vmatprep.subr.mxu0 %v4386
  %4419 = vmatpush1.msra.mxu0 %v4384
  %4420 = vmatprep.subr.mxu0 0.0
  %4421 = vmatpush2.msra.mxu0 0.0
  %4422 = vmatprep.subr.mxu0 0.0
  %4423 = vmatpush2.msra.mxu0 0.0
  %4424 = vmatprep.subr.mxu0 0.0
  %4425 = vmatpush2.msra.mxu0 0.0
  %4426 = vmatprep.subr.mxu0 0.0
  %4427 = vmatpush2.msra.mxu0 0.0
  %4428 = vmatprep.subr.mxu0 0.0
  %4429 = vmatpush2.msra.mxu0 0.0
  %4430 = vmatprep.subr.mxu0 0.0
  %4431 = vmatpush2.msra.mxu0 0.0
  %4432 = vmatprep.subr.mxu0 0.0
  %4433 = vmatpush2.msra.mxu0 0.0
  %4434 = vmatprep.subr.mxu0 0.0
  %4435 = vmatpush2.msra.mxu0 0.0
  %4436 = vmatprep.subr.mxu0 0.0
  %4437 = vmatpush2.msra.mxu0 0.0
  %4438 = vmatprep.subr.mxu0 0.0
  %4439 = vmatpush2.msra.mxu0 0.0
  %4440 = vmatprep.subr.mxu0 0.0
  %4441 = vmatpush2.msra.mxu0 0.0
  %4442 = vmatprep.subr.mxu0 0.0
  %4443 = vmatpush2.msra.mxu0 0.0
  %4444 = vmatprep.subr.mxu0 0.0
  %4445 = vmatpush2.msra.mxu0 0.0
  %4446 = vmatprep.subr.mxu0 0.0
  %4447 = vmatpush2.msra.mxu0 0.0
  %4448 = vmatprep.subr.mxu0 0.0
  %4449 = vmatpush2.msra.mxu0 0.0
  %4450 = vmatprep.subr.mxu0 0.0
  %4451 = vmatpush2.msra.mxu0 0.0
  %4452 = vmatprep.mubr.f32.mxu0 0.0
  %4453 = vmatmul.mubr.f32.gmra.mxu0 %v4373
  %v4454 = vpop.f32.mrf.mxu0
  %v4455 = vadd.f32 0.0, %v4454
  %v4456 = vpop.f32.mrf.mxu0
  %v4457 = vadd.f32 0.0, %v4456
  %4458 = vmatprep.mubr.f32.mxu0 0.0
  %4459 = vmatmul.mubr.f32.gmra.mxu0 %v4376
  %v4460 = vpop.f32.mrf.mxu0
  %v4461 = vadd.f32 0.0, %v4460
  %v4462 = vpop.f32.mrf.mxu0
  %v4463 = vadd.f32 0.0, %v4462
  %4464 = vmatprep.mubr.f32.mxu0 0.0
  %4465 = vmatmul.mubr.f32.gmra.mxu0 %v4379
  %v4466 = vpop.f32.mrf.mxu0
  %v4467 = vadd.f32 0.0, %v4466
  %v4468 = vpop.f32.mrf.mxu0
  %v4469 = vadd.f32 0.0, %v4468
  %4470 = vmatprep.mubr.f32.mxu0 0.0
  %4471 = vmatmul.mubr.f32.gmra.mxu0 %v4382
  %v4472 = vpop.f32.mrf.mxu0
  %v4473 = vadd.f32 0.0, %v4472
  %v4474 = vpop.f32.mrf.mxu0
  %v4475 = vadd.f32 0.0, %v4474
  %4476 = vdwg.mxu0
  %v4477 = vadd.f32 %v4332, %v4455
  %v4478 = vadd.f32 %v4334, %v4457
  %v4479 = vadd.f32 %v4338, %v4461
  %v4480 = vadd.f32 %v4340, %v4463
  %v4481 = vadd.f32 %v4344, %v4467
  %v4482 = vadd.f32 %v4346, %v4469
  %v4483 = vadd.f32 %v4350, %v4473
  %v4484 = vadd.f32 %v4352, %v4475
  %v4485 = vmul.f32 %v4108, %v489
  %v4486 = vmul.f32 %v4109, %v493
  %v4487 = vmul.f32 %v4110, %v491
  %v4488 = vld [vmem:[%s500] sm:$0xff]
  %v4489 = vld [vmem:[%s500 + $0x8] sm:$0xff]
  %v4490 = vld [vmem:[%s500 + $0x10] sm:$0xff]
  %v4491 = vld [vmem:[%s500 + $0x18] sm:$0xff]
  %4495 = vrot.lane.b32.xlu0 %v4485, 1
  %v4496 = vpop.permute.xlu0 %4495
  %4497 = vrot.lane.b32.xlu0 %v4486, 1
  %v4498 = vpop.permute.xlu0 %4497
  %4499 = vrot.lane.b32.xlu0 %v4487, 1
  %v4500 = vpop.permute.xlu0 %4499
  %v4501 = vsel %vm514, %v4496, %v4498
  %v4502 = vsel %vm514, %v4498, %v4500
  %v4504 = vsel %vm120, %v4488, 0
  %v4507 = vsel %vm120, %v4489, 0
  %v4510 = vsel %vm120, %v4490, 0
  %v4513 = vsel %vm120, %v4491, 0
  %v4515 = vsel %vm133, %v4501, 0
  %v4517 = vsel %vm133, %v4502, 0
  %4519 = vmatprep.subr.mxu0 0.0
  %4520 = vmatpush1.msra.mxu0 0.0
  %4521 = vmatprep.subr.mxu0 0.0
  %4522 = vmatpush1.msra.mxu0 0.0
  %4523 = vmatprep.subr.mxu0 0.0
  %4524 = vmatpush1.msra.mxu0 0.0
  %4525 = vmatprep.subr.mxu0 0.0
  %4526 = vmatpush1.msra.mxu0 0.0
  %4527 = vmatprep.subr.mxu0 0.0
  %4528 = vmatpush1.msra.mxu0 0.0
  %4529 = vmatprep.subr.mxu0 0.0
  %4530 = vmatpush1.msra.mxu0 0.0
  %4531 = vmatprep.subr.mxu0 0.0
  %4532 = vmatpush1.msra.mxu0 0.0
  %4533 = vmatprep.subr.mxu0 0.0
  %4534 = vmatpush1.msra.mxu0 0.0
  %4535 = vmatprep.subr.mxu0 0.0
  %4536 = vmatpush1.msra.mxu0 0.0
  %4537 = vmatprep.subr.mxu0 0.0
  %4538 = vmatpush1.msra.mxu0 0.0
  %4539 = vmatprep.subr.mxu0 0.0
  %4540 = vmatpush1.msra.mxu0 0.0
  %4541 = vmatprep.subr.mxu0 0.0
  %4542 = vmatpush1.msra.mxu0 0.0
  %4543 = vmatprep.subr.mxu0 0.0
  %4544 = vmatpush1.msra.mxu0 0.0
  %4545 = vmatprep.subr.mxu0 0.0
  %4546 = vmatpush1.msra.mxu0 0.0
  %4547 = vmatprep.subr.mxu0 0.0
  %4548 = vmatpush1.msra.mxu0 0.0
  %4549 = vmatprep.subr.mxu0 %v4517
  %4550 = vmatpush1.msra.mxu0 %v4515
  %4551 = vmatprep.subr.mxu0 0.0
  %4552 = vmatpush2.msra.mxu0 0.0
  %4553 = vmatprep.subr.mxu0 0.0
  %4554 = vmatpush2.msra.mxu0 0.0
  %4555 = vmatprep.subr.mxu0 0.0
  %4556 = vmatpush2.msra.mxu0 0.0
  %4557 = vmatprep.subr.mxu0 0.0
  %4558 = vmatpush2.msra.mxu0 0.0
  %4559 = vmatprep.subr.mxu0 0.0
  %4560 = vmatpush2.msra.mxu0 0.0
  %4561 = vmatprep.subr.mxu0 0.0
  %4562 = vmatpush2.msra.mxu0 0.0
  %4563 = vmatprep.subr.mxu0 0.0
  %4564 = vmatpush2.msra.mxu0 0.0
  %4565 = vmatprep.subr.mxu0 0.0
  %4566 = vmatpush2.msra.mxu0 0.0
  %4567 = vmatprep.subr.mxu0 0.0
  %4568 = vmatpush2.msra.mxu0 0.0
  %4569 = vmatprep.subr.mxu0 0.0
  %4570 = vmatpush2.msra.mxu0 0.0
  %4571 = vmatprep.subr.mxu0 0.0
  %4572 = vmatpush2.msra.mxu0 0.0
  %4573 = vmatprep.subr.mxu0 0.0
  %4574 = vmatpush2.msra.mxu0 0.0
  %4575 = vmatprep.subr.mxu0 0.0
  %4576 = vmatpush2.msra.mxu0 0.0
  %4577 = vmatprep.subr.mxu0 0.0
  %4578 = vmatpush2.msra.mxu0 0.0
  %4579 = vmatprep.subr.mxu0 0.0
  %4580 = vmatpush2.msra.mxu0 0.0
  %4581 = vmatprep.subr.mxu0 0.0
  %4582 = vmatpush2.msra.mxu0 0.0
  %4583 = vmatprep.mubr.f32.mxu0 0.0
  %4584 = vmatmul.mubr.f32.gmra.mxu0 %v4504
  %v4585 = vpop.f32.mrf.mxu0
  %v4586 = vadd.f32 0.0, %v4585
  %v4587 = vpop.f32.mrf.mxu0
  %v4588 = vadd.f32 0.0, %v4587
  %4589 = vmatprep.mubr.f32.mxu0 0.0
  %4590 = vmatmul.mubr.f32.gmra.mxu0 %v4507
  %v4591 = vpop.f32.mrf.mxu0
  %v4592 = vadd.f32 0.0, %v4591
  %v4593 = vpop.f32.mrf.mxu0
  %v4594 = vadd.f32 0.0, %v4593
  %4595 = vmatprep.mubr.f32.mxu0 0.0
  %4596 = vmatmul.mubr.f32.gmra.mxu0 %v4510
  %v4597 = vpop.f32.mrf.mxu0
  %v4598 = vadd.f32 0.0, %v4597
  %v4599 = vpop.f32.mrf.mxu0
  %v4600 = vadd.f32 0.0, %v4599
  %4601 = vmatprep.mubr.f32.mxu0 0.0
  %4602 = vmatmul.mubr.f32.gmra.mxu0 %v4513
  %v4603 = vpop.f32.mrf.mxu0
  %v4604 = vadd.f32 0.0, %v4603
  %v4605 = vpop.f32.mrf.mxu0
  %v4606 = vadd.f32 0.0, %v4605
  %4607 = vdwg.mxu0
  %v4608 = vadd.f32 %v4477, %v4586
  %v4609 = vadd.f32 %v4478, %v4588
  %v4610 = vadd.f32 %v4479, %v4592
  %v4611 = vadd.f32 %v4480, %v4594
  %v4612 = vadd.f32 %v4481, %v4598
  %v4613 = vadd.f32 %v4482, %v4600
  %v4614 = vadd.f32 %v4483, %v4604
  %v4615 = vadd.f32 %v4484, %v4606
  %v4616 = vld [vmem:[%s630] sm:$0xff]
  %v4617 = vld [vmem:[%s630 + $0x8] sm:$0xff]
  %v4618 = vld [vmem:[%s630 + $0x10] sm:$0xff]
  %v4619 = vld [vmem:[%s630 + $0x18] sm:$0xff]
  %v4621 = vsel %vm120, %v4616, 0
  %v4624 = vsel %vm120, %v4617, 0
  %v4627 = vsel %vm120, %v4618, 0
  %v4630 = vsel %vm120, %v4619, 0
  %v4632 = vsel %vm133, %v4109, 0
  %v4634 = vsel %vm133, %v4110, 0
  %4636 = vmatprep.subr.mxu0 0.0
  %4637 = vmatpush1.msra.mxu0 0.0
  %4638 = vmatprep.subr.mxu0 0.0
  %4639 = vmatpush1.msra.mxu0 0.0
  %4640 = vmatprep.subr.mxu0 0.0
  %4641 = vmatpush1.msra.mxu0 0.0
  %4642 = vmatprep.subr.mxu0 0.0
  %4643 = vmatpush1.msra.mxu0 0.0
  %4644 = vmatprep.subr.mxu0 0.0
  %4645 = vmatpush1.msra.mxu0 0.0
  %4646 = vmatprep.subr.mxu0 0.0
  %4647 = vmatpush1.msra.mxu0 0.0
  %4648 = vmatprep.subr.mxu0 0.0
  %4649 = vmatpush1.msra.mxu0 0.0
  %4650 = vmatprep.subr.mxu0 0.0
  %4651 = vmatpush1.msra.mxu0 0.0
  %4652 = vmatprep.subr.mxu0 0.0
  %4653 = vmatpush1.msra.mxu0 0.0
  %4654 = vmatprep.subr.mxu0 0.0
  %4655 = vmatpush1.msra.mxu0 0.0
  %4656 = vmatprep.subr.mxu0 0.0
  %4657 = vmatpush1.msra.mxu0 0.0
  %4658 = vmatprep.subr.mxu0 0.0
  %4659 = vmatpush1.msra.mxu0 0.0
  %4660 = vmatprep.subr.mxu0 0.0
  %4661 = vmatpush1.msra.mxu0 0.0
  %4662 = vmatprep.subr.mxu0 0.0
  %4663 = vmatpush1.msra.mxu0 0.0
  %4664 = vmatprep.subr.mxu0 0.0
  %4665 = vmatpush1.msra.mxu0 0.0
  %4666 = vmatprep.subr.mxu0 %v4634
  %4667 = vmatpush1.msra.mxu0 %v4632
  %4668 = vmatprep.subr.mxu0 0.0
  %4669 = vmatpush2.msra.mxu0 0.0
  %4670 = vmatprep.subr.mxu0 0.0
  %4671 = vmatpush2.msra.mxu0 0.0
  %4672 = vmatprep.subr.mxu0 0.0
  %4673 = vmatpush2.msra.mxu0 0.0
  %4674 = vmatprep.subr.mxu0 0.0
  %4675 = vmatpush2.msra.mxu0 0.0
  %4676 = vmatprep.subr.mxu0 0.0
  %4677 = vmatpush2.msra.mxu0 0.0
  %4678 = vmatprep.subr.mxu0 0.0
  %4679 = vmatpush2.msra.mxu0 0.0
  %4680 = vmatprep.subr.mxu0 0.0
  %4681 = vmatpush2.msra.mxu0 0.0
  %4682 = vmatprep.subr.mxu0 0.0
  %4683 = vmatpush2.msra.mxu0 0.0
  %4684 = vmatprep.subr.mxu0 0.0
  %4685 = vmatpush2.msra.mxu0 0.0
  %4686 = vmatprep.subr.mxu0 0.0
  %4687 = vmatpush2.msra.mxu0 0.0
  %4688 = vmatprep.subr.mxu0 0.0
  %4689 = vmatpush2.msra.mxu0 0.0
  %4690 = vmatprep.subr.mxu0 0.0
  %4691 = vmatpush2.msra.mxu0 0.0
  %4692 = vmatprep.subr.mxu0 0.0
  %4693 = vmatpush2.msra.mxu0 0.0
  %4694 = vmatprep.subr.mxu0 0.0
  %4695 = vmatpush2.msra.mxu0 0.0
  %4696 = vmatprep.subr.mxu0 0.0
  %4697 = vmatpush2.msra.mxu0 0.0
  %4698 = vmatprep.subr.mxu0 0.0
  %4699 = vmatpush2.msra.mxu0 0.0
  %4700 = vmatprep.mubr.f32.mxu0 0.0
  %4701 = vmatmul.mubr.f32.gmra.mxu0 %v4621
  %v4702 = vpop.f32.mrf.mxu0
  %v4703 = vadd.f32 0.0, %v4702
  %v4704 = vpop.f32.mrf.mxu0
  %v4705 = vadd.f32 0.0, %v4704
  %4706 = vmatprep.mubr.f32.mxu0 0.0
  %4707 = vmatmul.mubr.f32.gmra.mxu0 %v4624
  %v4708 = vpop.f32.mrf.mxu0
  %v4709 = vadd.f32 0.0, %v4708
  %v4710 = vpop.f32.mrf.mxu0
  %v4711 = vadd.f32 0.0, %v4710
  %4712 = vmatprep.mubr.f32.mxu0 0.0
  %4713 = vmatmul.mubr.f32.gmra.mxu0 %v4627
  %v4714 = vpop.f32.mrf.mxu0
  %v4715 = vadd.f32 0.0, %v4714
  %v4716 = vpop.f32.mrf.mxu0
  %v4717 = vadd.f32 0.0, %v4716
  %4718 = vmatprep.mubr.f32.mxu0 0.0
  %4719 = vmatmul.mubr.f32.gmra.mxu0 %v4630
  %v4720 = vpop.f32.mrf.mxu0
  %v4721 = vadd.f32 0.0, %v4720
  %v4722 = vpop.f32.mrf.mxu0
  %v4723 = vadd.f32 0.0, %v4722
  %4724 = vdwg.mxu0
  %v4725 = vadd.f32 %v4608, %v4703
  %v4726 = vadd.f32 %v4609, %v4705
  %v4727 = vadd.f32 %v4610, %v4709
  %v4728 = vadd.f32 %v4611, %v4711
  %v4729 = vadd.f32 %v4612, %v4715
  %v4730 = vadd.f32 %v4613, %v4717
  %v4731 = vadd.f32 %v4614, %v4721
  %v4732 = vadd.f32 %v4615, %v4723
  %v4733 = vld [vmem:[#allocation2 + $0x8] sm:$0xf]
  %v4734 = vld [vmem:[#allocation2 + $0x10] sm:$0xf]
  %v4735 = vld [vmem:[#allocation2 + $0x18] sm:$0xf]
  %v4736 = vmul.f32 %v4733, %v752
  %v4737 = vmul.f32 %v4734, %v755
  %v4738 = vmul.f32 %v4735, %v754
  %v4739 = vld [vmem:[%s762] sm:$0xff]
  %v4740 = vld [vmem:[%s762 + $0x8] sm:$0xff]
  %v4741 = vld [vmem:[%s762 + $0x10] sm:$0xff]
  %v4742 = vld [vmem:[%s762 + $0x18] sm:$0xff]
  %4746 = vrot.lane.b32.xlu0 %v4736, 127
  %v4747 = vpop.permute.xlu0 %4746
  %4748 = vrot.lane.b32.xlu0 %v4737, 127
  %v4749 = vpop.permute.xlu0 %4748
  %4750 = vrot.lane.b32.xlu0 %v4738, 127
  %v4751 = vpop.permute.xlu0 %4750
  %v4752 = vsel %vm492, %v4747, %v4749
  %v4753 = vsel %vm492, %v4749, %v4751
  %v4755 = vsel %vm120, %v4739, 0
  %v4758 = vsel %vm120, %v4740, 0
  %v4761 = vsel %vm120, %v4741, 0
  %v4764 = vsel %vm120, %v4742, 0
  %v4766 = vsel %vm133, %v4752, 0
  %v4768 = vsel %vm133, %v4753, 0
  %4770 = vmatprep.subr.mxu0 0.0
  %4771 = vmatpush1.msra.mxu0 0.0
  %4772 = vmatprep.subr.mxu0 0.0
  %4773 = vmatpush1.msra.mxu0 0.0
  %4774 = vmatprep.subr.mxu0 0.0
  %4775 = vmatpush1.msra.mxu0 0.0
  %4776 = vmatprep.subr.mxu0 0.0
  %4777 = vmatpush1.msra.mxu0 0.0
  %4778 = vmatprep.subr.mxu0 0.0
  %4779 = vmatpush1.msra.mxu0 0.0
  %4780 = vmatprep.subr.mxu0 0.0
  %4781 = vmatpush1.msra.mxu0 0.0
  %4782 = vmatprep.subr.mxu0 0.0
  %4783 = vmatpush1.msra.mxu0 0.0
  %4784 = vmatprep.subr.mxu0 0.0
  %4785 = vmatpush1.msra.mxu0 0.0
  %4786 = vmatprep.subr.mxu0 0.0
  %4787 = vmatpush1.msra.mxu0 0.0
  %4788 = vmatprep.subr.mxu0 0.0
  %4789 = vmatpush1.msra.mxu0 0.0
  %4790 = vmatprep.subr.mxu0 0.0
  %4791 = vmatpush1.msra.mxu0 0.0
  %4792 = vmatprep.subr.mxu0 0.0
  %4793 = vmatpush1.msra.mxu0 0.0
  %4794 = vmatprep.subr.mxu0 0.0
  %4795 = vmatpush1.msra.mxu0 0.0
  %4796 = vmatprep.subr.mxu0 0.0
  %4797 = vmatpush1.msra.mxu0 0.0
  %4798 = vmatprep.subr.mxu0 0.0
  %4799 = vmatpush1.msra.mxu0 0.0
  %4800 = vmatprep.subr.mxu0 %v4768
  %4801 = vmatpush1.msra.mxu0 %v4766
  %4802 = vmatprep.subr.mxu0 0.0
  %4803 = vmatpush2.msra.mxu0 0.0
  %4804 = vmatprep.subr.mxu0 0.0
  %4805 = vmatpush2.msra.mxu0 0.0
  %4806 = vmatprep.subr.mxu0 0.0
  %4807 = vmatpush2.msra.mxu0 0.0
  %4808 = vmatprep.subr.mxu0 0.0
  %4809 = vmatpush2.msra.mxu0 0.0
  %4810 = vmatprep.subr.mxu0 0.0
  %4811 = vmatpush2.msra.mxu0 0.0
  %4812 = vmatprep.subr.mxu0 0.0
  %4813 = vmatpush2.msra.mxu0 0.0
  %4814 = vmatprep.subr.mxu0 0.0
  %4815 = vmatpush2.msra.mxu0 0.0
  %4816 = vmatprep.subr.mxu0 0.0
  %4817 = vmatpush2.msra.mxu0 0.0
  %4818 = vmatprep.subr.mxu0 0.0
  %4819 = vmatpush2.msra.mxu0 0.0
  %4820 = vmatprep.subr.mxu0 0.0
  %4821 = vmatpush2.msra.mxu0 0.0
  %4822 = vmatprep.subr.mxu0 0.0
  %4823 = vmatpush2.msra.mxu0 0.0
  %4824 = vmatprep.subr.mxu0 0.0
  %4825 = vmatpush2.msra.mxu0 0.0
  %4826 = vmatprep.subr.mxu0 0.0
  %4827 = vmatpush2.msra.mxu0 0.0
  %4828 = vmatprep.subr.mxu0 0.0
  %4829 = vmatpush2.msra.mxu0 0.0
  %4830 = vmatprep.subr.mxu0 0.0
  %4831 = vmatpush2.msra.mxu0 0.0
  %4832 = vmatprep.subr.mxu0 0.0
  %4833 = vmatpush2.msra.mxu0 0.0
  %4834 = vmatprep.mubr.f32.mxu0 0.0
  %4835 = vmatmul.mubr.f32.gmra.mxu0 %v4755
  %v4836 = vpop.f32.mrf.mxu0
  %v4837 = vadd.f32 0.0, %v4836
  %v4838 = vpop.f32.mrf.mxu0
  %v4839 = vadd.f32 0.0, %v4838
  %4840 = vmatprep.mubr.f32.mxu0 0.0
  %4841 = vmatmul.mubr.f32.gmra.mxu0 %v4758
  %v4842 = vpop.f32.mrf.mxu0
  %v4843 = vadd.f32 0.0, %v4842
  %v4844 = vpop.f32.mrf.mxu0
  %v4845 = vadd.f32 0.0, %v4844
  %4846 = vmatprep.mubr.f32.mxu0 0.0
  %4847 = vmatmul.mubr.f32.gmra.mxu0 %v4761
  %v4848 = vpop.f32.mrf.mxu0
  %v4849 = vadd.f32 0.0, %v4848
  %v4850 = vpop.f32.mrf.mxu0
  %v4851 = vadd.f32 0.0, %v4850
  %4852 = vmatprep.mubr.f32.mxu0 0.0
  %4853 = vmatmul.mubr.f32.gmra.mxu0 %v4764
  %v4854 = vpop.f32.mrf.mxu0
  %v4855 = vadd.f32 0.0, %v4854
  %v4856 = vpop.f32.mrf.mxu0
  %v4857 = vadd.f32 0.0, %v4856
  %4858 = vdwg.mxu0
  %v4859 = vadd.f32 %v4725, %v4837
  %v4860 = vadd.f32 %v4726, %v4839
  %v4861 = vadd.f32 %v4727, %v4843
  %v4862 = vadd.f32 %v4728, %v4845
  %v4863 = vadd.f32 %v4729, %v4849
  %v4864 = vadd.f32 %v4730, %v4851
  %v4865 = vadd.f32 %v4731, %v4855
  %v4866 = vadd.f32 %v4732, %v4857
  %v4867 = vmul.f32 %v4733, %v892
  %v4868 = vmul.f32 %v4734, %v895
  %v4869 = vmul.f32 %v4735, %v894
  %v4870 = vld [vmem:[%s902] sm:$0xff]
  %v4871 = vld [vmem:[%s902 + $0x8] sm:$0xff]
  %v4872 = vld [vmem:[%s902 + $0x10] sm:$0xff]
  %v4873 = vld [vmem:[%s902 + $0x18] sm:$0xff]
  %4877 = vrot.lane.b32.xlu0 %v4867, 113
  %v4878 = vpop.permute.xlu0 %4877
  %4879 = vrot.lane.b32.xlu0 %v4868, 113
  %v4880 = vpop.permute.xlu0 %4879
  %4881 = vrot.lane.b32.xlu0 %v4869, 113
  %v4882 = vpop.permute.xlu0 %4881
  %v4883 = vsel %vm350, %v4878, %v4880
  %v4884 = vsel %vm350, %v4880, %v4882
  %v4886 = vsel %vm120, %v4870, 0
  %v4889 = vsel %vm120, %v4871, 0
  %v4892 = vsel %vm120, %v4872, 0
  %v4895 = vsel %vm120, %v4873, 0
  %v4897 = vsel %vm133, %v4883, 0
  %v4899 = vsel %vm133, %v4884, 0
  %4901 = vmatprep.subr.mxu0 0.0
  %4902 = vmatpush1.msra.mxu0 0.0
  %4903 = vmatprep.subr.mxu0 0.0
  %4904 = vmatpush1.msra.mxu0 0.0
  %4905 = vmatprep.subr.mxu0 0.0
  %4906 = vmatpush1.msra.mxu0 0.0
  %4907 = vmatprep.subr.mxu0 0.0
  %4908 = vmatpush1.msra.mxu0 0.0
  %4909 = vmatprep.subr.mxu0 0.0
  %4910 = vmatpush1.msra.mxu0 0.0
  %4911 = vmatprep.subr.mxu0 0.0
  %4912 = vmatpush1.msra.mxu0 0.0
  %4913 = vmatprep.subr.mxu0 0.0
  %4914 = vmatpush1.msra.mxu0 0.0
  %4915 = vmatprep.subr.mxu0 0.0
  %4916 = vmatpush1.msra.mxu0 0.0
  %4917 = vmatprep.subr.mxu0 0.0
  %4918 = vmatpush1.msra.mxu0 0.0
  %4919 = vmatprep.subr.mxu0 0.0
  %4920 = vmatpush1.msra.mxu0 0.0
  %4921 = vmatprep.subr.mxu0 0.0
  %4922 = vmatpush1.msra.mxu0 0.0
  %4923 = vmatprep.subr.mxu0 0.0
  %4924 = vmatpush1.msra.mxu0 0.0
  %4925 = vmatprep.subr.mxu0 0.0
  %4926 = vmatpush1.msra.mxu0 0.0
  %4927 = vmatprep.subr.mxu0 0.0
  %4928 = vmatpush1.msra.mxu0 0.0
  %4929 = vmatprep.subr.mxu0 0.0
  %4930 = vmatpush1.msra.mxu0 0.0
  %4931 = vmatprep.subr.mxu0 %v4899
  %4932 = vmatpush1.msra.mxu0 %v4897
  %4933 = vmatprep.subr.mxu0 0.0
  %4934 = vmatpush2.msra.mxu0 0.0
  %4935 = vmatprep.subr.mxu0 0.0
  %4936 = vmatpush2.msra.mxu0 0.0
  %4937 = vmatprep.subr.mxu0 0.0
  %4938 = vmatpush2.msra.mxu0 0.0
  %4939 = vmatprep.subr.mxu0 0.0
  %4940 = vmatpush2.msra.mxu0 0.0
  %4941 = vmatprep.subr.mxu0 0.0
  %4942 = vmatpush2.msra.mxu0 0.0
  %4943 = vmatprep.subr.mxu0 0.0
  %4944 = vmatpush2.msra.mxu0 0.0
  %4945 = vmatprep.subr.mxu0 0.0
  %4946 = vmatpush2.msra.mxu0 0.0
  %4947 = vmatprep.subr.mxu0 0.0
  %4948 = vmatpush2.msra.mxu0 0.0
  %4949 = vmatprep.subr.mxu0 0.0
  %4950 = vmatpush2.msra.mxu0 0.0
  %4951 = vmatprep.subr.mxu0 0.0
  %4952 = vmatpush2.msra.mxu0 0.0
  %4953 = vmatprep.subr.mxu0 0.0
  %4954 = vmatpush2.msra.mxu0 0.0
  %4955 = vmatprep.subr.mxu0 0.0
  %4956 = vmatpush2.msra.mxu0 0.0
  %4957 = vmatprep.subr.mxu0 0.0
  %4958 = vmatpush2.msra.mxu0 0.0
  %4959 = vmatprep.subr.mxu0 0.0
  %4960 = vmatpush2.msra.mxu0 0.0
  %4961 = vmatprep.subr.mxu0 0.0
  %4962 = vmatpush2.msra.mxu0 0.0
  %4963 = vmatprep.subr.mxu0 0.0
  %4964 = vmatpush2.msra.mxu0 0.0
  %4965 = vmatprep.mubr.f32.mxu0 0.0
  %4966 = vmatmul.mubr.f32.gmra.mxu0 %v4886
  %v4967 = vpop.f32.mrf.mxu0
  %v4968 = vadd.f32 0.0, %v4967
  %v4969 = vpop.f32.mrf.mxu0
  %v4970 = vadd.f32 0.0, %v4969
  %4971 = vmatprep.mubr.f32.mxu0 0.0
  %4972 = vmatmul.mubr.f32.gmra.mxu0 %v4889
  %v4973 = vpop.f32.mrf.mxu0
  %v4974 = vadd.f32 0.0, %v4973
  %v4975 = vpop.f32.mrf.mxu0
  %v4976 = vadd.f32 0.0, %v4975
  %4977 = vmatprep.mubr.f32.mxu0 0.0
  %4978 = vmatmul.mubr.f32.gmra.mxu0 %v4892
  %v4979 = vpop.f32.mrf.mxu0
  %v4980 = vadd.f32 0.0, %v4979
  %v4981 = vpop.f32.mrf.mxu0
  %v4982 = vadd.f32 0.0, %v4981
  %4983 = vmatprep.mubr.f32.mxu0 0.0
  %4984 = vmatmul.mubr.f32.gmra.mxu0 %v4895
  %v4985 = vpop.f32.mrf.mxu0
  %v4986 = vadd.f32 0.0, %v4985
  %v4987 = vpop.f32.mrf.mxu0
  %v4988 = vadd.f32 0.0, %v4987
  %4989 = vdwg.mxu0
  %v4990 = vadd.f32 %v4859, %v4968
  %v4991 = vadd.f32 %v4860, %v4970
  %v4992 = vadd.f32 %v4861, %v4974
  %v4993 = vadd.f32 %v4862, %v4976
  %v4994 = vadd.f32 %v4863, %v4980
  %v4995 = vadd.f32 %v4864, %v4982
  %v4996 = vadd.f32 %v4865, %v4986
  %v4997 = vadd.f32 %v4866, %v4988
  %v4998 = vld [vmem:[%s1031] sm:$0xff]
  %v4999 = vld [vmem:[%s1031 + $0x8] sm:$0xff]
  %v5000 = vld [vmem:[%s1031 + $0x10] sm:$0xff]
  %v5001 = vld [vmem:[%s1031 + $0x18] sm:$0xff]
  %5005 = vrot.lane.b32.xlu0 %v4733, 112
  %v5006 = vpop.permute.xlu0 %5005
  %5007 = vrot.lane.b32.xlu0 %v4734, 112
  %v5008 = vpop.permute.xlu0 %5007
  %5009 = vrot.lane.b32.xlu0 %v4735, 112
  %v5010 = vpop.permute.xlu0 %5009
  %v5011 = vsel %vm1045, %v5006, %v5008
  %v5012 = vsel %vm1045, %v5008, %v5010
  %v5014 = vsel %vm120, %v4998, 0
  %v5017 = vsel %vm120, %v4999, 0
  %v5020 = vsel %vm120, %v5000, 0
  %v5023 = vsel %vm120, %v5001, 0
  %v5025 = vsel %vm133, %v5011, 0
  %v5027 = vsel %vm133, %v5012, 0
  %5029 = vmatprep.subr.mxu0 0.0
  %5030 = vmatpush1.msra.mxu0 0.0
  %5031 = vmatprep.subr.mxu0 0.0
  %5032 = vmatpush1.msra.mxu0 0.0
  %5033 = vmatprep.subr.mxu0 0.0
  %5034 = vmatpush1.msra.mxu0 0.0
  %5035 = vmatprep.subr.mxu0 0.0
  %5036 = vmatpush1.msra.mxu0 0.0
  %5037 = vmatprep.subr.mxu0 0.0
  %5038 = vmatpush1.msra.mxu0 0.0
  %5039 = vmatprep.subr.mxu0 0.0
  %5040 = vmatpush1.msra.mxu0 0.0
  %5041 = vmatprep.subr.mxu0 0.0
  %5042 = vmatpush1.msra.mxu0 0.0
  %5043 = vmatprep.subr.mxu0 0.0
  %5044 = vmatpush1.msra.mxu0 0.0
  %5045 = vmatprep.subr.mxu0 0.0
  %5046 = vmatpush1.msra.mxu0 0.0
  %5047 = vmatprep.subr.mxu0 0.0
  %5048 = vmatpush1.msra.mxu0 0.0
  %5049 = vmatprep.subr.mxu0 0.0
  %5050 = vmatpush1.msra.mxu0 0.0
  %5051 = vmatprep.subr.mxu0 0.0
  %5052 = vmatpush1.msra.mxu0 0.0
  %5053 = vmatprep.subr.mxu0 0.0
  %5054 = vmatpush1.msra.mxu0 0.0
  %5055 = vmatprep.subr.mxu0 0.0
  %5056 = vmatpush1.msra.mxu0 0.0
  %5057 = vmatprep.subr.mxu0 0.0
  %5058 = vmatpush1.msra.mxu0 0.0
  %5059 = vmatprep.subr.mxu0 %v5027
  %5060 = vmatpush1.msra.mxu0 %v5025
  %5061 = vmatprep.subr.mxu0 0.0
  %5062 = vmatpush2.msra.mxu0 0.0
  %5063 = vmatprep.subr.mxu0 0.0
  %5064 = vmatpush2.msra.mxu0 0.0
  %5065 = vmatprep.subr.mxu0 0.0
  %5066 = vmatpush2.msra.mxu0 0.0
  %5067 = vmatprep.subr.mxu0 0.0
  %5068 = vmatpush2.msra.mxu0 0.0
  %5069 = vmatprep.subr.mxu0 0.0
  %5070 = vmatpush2.msra.mxu0 0.0
  %5071 = vmatprep.subr.mxu0 0.0
  %5072 = vmatpush2.msra.mxu0 0.0
  %5073 = vmatprep.subr.mxu0 0.0
  %5074 = vmatpush2.msra.mxu0 0.0
  %5075 = vmatprep.subr.mxu0 0.0
  %5076 = vmatpush2.msra.mxu0 0.0
  %5077 = vmatprep.subr.mxu0 0.0
  %5078 = vmatpush2.msra.mxu0 0.0
  %5079 = vmatprep.subr.mxu0 0.0
  %5080 = vmatpush2.msra.mxu0 0.0
  %5081 = vmatprep.subr.mxu0 0.0
  %5082 = vmatpush2.msra.mxu0 0.0
  %5083 = vmatprep.subr.mxu0 0.0
  %5084 = vmatpush2.msra.mxu0 0.0
  %5085 = vmatprep.subr.mxu0 0.0
  %5086 = vmatpush2.msra.mxu0 0.0
  %5087 = vmatprep.subr.mxu0 0.0
  %5088 = vmatpush2.msra.mxu0 0.0
  %5089 = vmatprep.subr.mxu0 0.0
  %5090 = vmatpush2.msra.mxu0 0.0
  %5091 = vmatprep.subr.mxu0 0.0
  %5092 = vmatpush2.msra.mxu0 0.0
  %5093 = vmatprep.mubr.f32.mxu0 0.0
  %5094 = vmatmul.mubr.f32.gmra.mxu0 %v5014
  %v5095 = vpop.f32.mrf.mxu0
  %v5096 = vadd.f32 0.0, %v5095
  %v5097 = vpop.f32.mrf.mxu0
  %v5098 = vadd.f32 0.0, %v5097
  %5099 = vmatprep.mubr.f32.mxu0 0.0
  %5100 = vmatmul.mubr.f32.gmra.mxu0 %v5017
  %v5101 = vpop.f32.mrf.mxu0
  %v5102 = vadd.f32 0.0, %v5101
  %v5103 = vpop.f32.mrf.mxu0
  %v5104 = vadd.f32 0.0, %v5103
  %5105 = vmatprep.mubr.f32.mxu0 0.0
  %5106 = vmatmul.mubr.f32.gmra.mxu0 %v5020
  %v5107 = vpop.f32.mrf.mxu0
  %v5108 = vadd.f32 0.0, %v5107
  %v5109 = vpop.f32.mrf.mxu0
  %v5110 = vadd.f32 0.0, %v5109
  %5111 = vmatprep.mubr.f32.mxu0 0.0
  %5112 = vmatmul.mubr.f32.gmra.mxu0 %v5023
  %v5113 = vpop.f32.mrf.mxu0
  %v5114 = vadd.f32 0.0, %v5113
  %v5115 = vpop.f32.mrf.mxu0
  %v5116 = vadd.f32 0.0, %v5115
  %5117 = vdwg.mxu0
  %v5118 = vadd.f32 %v4990, %v5096
  %v5119 = vadd.f32 %v4991, %v5098
  %v5120 = vadd.f32 %v4992, %v5102
  %v5121 = vadd.f32 %v4993, %v5104
  %v5122 = vadd.f32 %v4994, %v5108
  %v5123 = vadd.f32 %v4995, %v5110
  %v5124 = vadd.f32 %v4996, %v5114
  %v5125 = vadd.f32 %v4997, %v5116
  %v5126 = vmul.f32 %v4733, %v1162
  %v5127 = vmul.f32 %v4734, %v1165
  %v5128 = vmul.f32 %v4735, %v1164
  %v5129 = vld [vmem:[%s1172] sm:$0xff]
  %v5130 = vld [vmem:[%s1172 + $0x8] sm:$0xff]
  %v5131 = vld [vmem:[%s1172 + $0x10] sm:$0xff]
  %v5132 = vld [vmem:[%s1172 + $0x18] sm:$0xff]
  %5136 = vrot.lane.b32.xlu0 %v5126, 111
  %v5137 = vpop.permute.xlu0 %5136
  %5138 = vrot.lane.b32.xlu0 %v5127, 111
  %v5139 = vpop.permute.xlu0 %5138
  %5140 = vrot.lane.b32.xlu0 %v5128, 111
  %v5141 = vpop.permute.xlu0 %5140
  %v5142 = vsel %vm91, %v5137, %v5139
  %v5143 = vsel %vm91, %v5139, %v5141
  %v5145 = vsel %vm120, %v5129, 0
  %v5148 = vsel %vm120, %v5130, 0
  %v5151 = vsel %vm120, %v5131, 0
  %v5154 = vsel %vm120, %v5132, 0
  %v5156 = vsel %vm133, %v5142, 0
  %v5158 = vsel %vm133, %v5143, 0
  %5160 = vmatprep.subr.mxu0 0.0
  %5161 = vmatpush1.msra.mxu0 0.0
  %5162 = vmatprep.subr.mxu0 0.0
  %5163 = vmatpush1.msra.mxu0 0.0
  %5164 = vmatprep.subr.mxu0 0.0
  %5165 = vmatpush1.msra.mxu0 0.0
  %5166 = vmatprep.subr.mxu0 0.0
  %5167 = vmatpush1.msra.mxu0 0.0
  %5168 = vmatprep.subr.mxu0 0.0
  %5169 = vmatpush1.msra.mxu0 0.0
  %5170 = vmatprep.subr.mxu0 0.0
  %5171 = vmatpush1.msra.mxu0 0.0
  %5172 = vmatprep.subr.mxu0 0.0
  %5173 = vmatpush1.msra.mxu0 0.0
  %5174 = vmatprep.subr.mxu0 0.0
  %5175 = vmatpush1.msra.mxu0 0.0
  %5176 = vmatprep.subr.mxu0 0.0
  %5177 = vmatpush1.msra.mxu0 0.0
  %5178 = vmatprep.subr.mxu0 0.0
  %5179 = vmatpush1.msra.mxu0 0.0
  %5180 = vmatprep.subr.mxu0 0.0
  %5181 = vmatpush1.msra.mxu0 0.0
  %5182 = vmatprep.subr.mxu0 0.0
  %5183 = vmatpush1.msra.mxu0 0.0
  %5184 = vmatprep.subr.mxu0 0.0
  %5185 = vmatpush1.msra.mxu0 0.0
  %5186 = vmatprep.subr.mxu0 0.0
  %5187 = vmatpush1.msra.mxu0 0.0
  %5188 = vmatprep.subr.mxu0 0.0
  %5189 = vmatpush1.msra.mxu0 0.0
  %5190 = vmatprep.subr.mxu0 %v5158
  %5191 = vmatpush1.msra.mxu0 %v5156
  %5192 = vmatprep.subr.mxu0 0.0
  %5193 = vmatpush2.msra.mxu0 0.0
  %5194 = vmatprep.subr.mxu0 0.0
  %5195 = vmatpush2.msra.mxu0 0.0
  %5196 = vmatprep.subr.mxu0 0.0
  %5197 = vmatpush2.msra.mxu0 0.0
  %5198 = vmatprep.subr.mxu0 0.0
  %5199 = vmatpush2.msra.mxu0 0.0
  %5200 = vmatprep.subr.mxu0 0.0
  %5201 = vmatpush2.msra.mxu0 0.0
  %5202 = vmatprep.subr.mxu0 0.0
  %5203 = vmatpush2.msra.mxu0 0.0
  %5204 = vmatprep.subr.mxu0 0.0
  %5205 = vmatpush2.msra.mxu0 0.0
  %5206 = vmatprep.subr.mxu0 0.0
  %5207 = vmatpush2.msra.mxu0 0.0
  %5208 = vmatprep.subr.mxu0 0.0
  %5209 = vmatpush2.msra.mxu0 0.0
  %5210 = vmatprep.subr.mxu0 0.0
  %5211 = vmatpush2.msra.mxu0 0.0
  %5212 = vmatprep.subr.mxu0 0.0
  %5213 = vmatpush2.msra.mxu0 0.0
  %5214 = vmatprep.subr.mxu0 0.0
  %5215 = vmatpush2.msra.mxu0 0.0
  %5216 = vmatprep.subr.mxu0 0.0
  %5217 = vmatpush2.msra.mxu0 0.0
  %5218 = vmatprep.subr.mxu0 0.0
  %5219 = vmatpush2.msra.mxu0 0.0
  %5220 = vmatprep.subr.mxu0 0.0
  %5221 = vmatpush2.msra.mxu0 0.0
  %5222 = vmatprep.subr.mxu0 0.0
  %5223 = vmatpush2.msra.mxu0 0.0
  %5224 = vmatprep.mubr.f32.mxu0 0.0
  %5225 = vmatmul.mubr.f32.gmra.mxu0 %v5145
  %v5226 = vpop.f32.mrf.mxu0
  %v5227 = vadd.f32 0.0, %v5226
  %v5228 = vpop.f32.mrf.mxu0
  %v5229 = vadd.f32 0.0, %v5228
  %5230 = vmatprep.mubr.f32.mxu0 0.0
  %5231 = vmatmul.mubr.f32.gmra.mxu0 %v5148
  %v5232 = vpop.f32.mrf.mxu0
  %v5233 = vadd.f32 0.0, %v5232
  %v5234 = vpop.f32.mrf.mxu0
  %v5235 = vadd.f32 0.0, %v5234
  %5236 = vmatprep.mubr.f32.mxu0 0.0
  %5237 = vmatmul.mubr.f32.gmra.mxu0 %v5151
  %v5238 = vpop.f32.mrf.mxu0
  %v5239 = vadd.f32 0.0, %v5238
  %v5240 = vpop.f32.mrf.mxu0
  %v5241 = vadd.f32 0.0, %v5240
  %5242 = vmatprep.mubr.f32.mxu0 0.0
  %5243 = vmatmul.mubr.f32.gmra.mxu0 %v5154
  %v5244 = vpop.f32.mrf.mxu0
  %v5245 = vadd.f32 0.0, %v5244
  %v5246 = vpop.f32.mrf.mxu0
  %v5247 = vadd.f32 0.0, %v5246
  %5248 = vdwg.mxu0
  %v5249 = vadd.f32 %v5118, %v5227
  %v5250 = vadd.f32 %v5119, %v5229
  %v5251 = vadd.f32 %v5120, %v5233
  %v5252 = vadd.f32 %v5121, %v5235
  %v5253 = vadd.f32 %v5122, %v5239
  %v5254 = vadd.f32 %v5123, %v5241
  %v5255 = vadd.f32 %v5124, %v5245
  %v5256 = vadd.f32 %v5125, %v5247
  %vm5257 = vcmp.gt.f32.partialorder %v5249, 0.0
  %vm5258 = vcmp.gt.f32.partialorder %v5250, 0.0
  %vm5259 = vcmp.gt.f32.partialorder %v5251, 0.0
  %vm5260 = vcmp.gt.f32.partialorder %v5252, 0.0
  %vm5261 = vcmp.gt.f32.partialorder %v5253, 0.0
  %vm5262 = vcmp.gt.f32.partialorder %v5254, 0.0
  %vm5263 = vcmp.gt.f32.partialorder %v5255, 0.0
  %vm5264 = vcmp.gt.f32.partialorder %v5256, 0.0
  %v5265 = vmul.f32 %v5249, 0.01
  %v5266 = vmul.f32 %v5250, 0.01
  %v5267 = vmul.f32 %v5251, 0.01
  %v5268 = vmul.f32 %v5252, 0.01
  %v5269 = vmul.f32 %v5253, 0.01
  %v5270 = vmul.f32 %v5254, 0.01
  %v5271 = vmul.f32 %v5255, 0.01
  %v5272 = vmul.f32 %v5256, 0.01
  %v5273 = vsel %vm5257, %v5249, %v5265
  %v5274 = vsel %vm5258, %v5250, %v5266
  %v5275 = vsel %vm5259, %v5251, %v5267
  %v5276 = vsel %vm5260, %v5252, %v5268
  %v5277 = vsel %vm5261, %v5253, %v5269
  %v5278 = vsel %vm5262, %v5254, %v5270
  %v5279 = vsel %vm5263, %v5255, %v5271
  %v5280 = vsel %vm5264, %v5256, %v5272
  %5281 = vst [vmem:[#allocation2 + $0x8] sm:$0xff] %v5273
  %5282 = vst [vmem:[#allocation2 + $0x10] sm:$0xff] %v5274
  %5283 = vst [vmem:[#allocation2 + $0x28] sm:$0xff] %v5275
  %5284 = vst [vmem:[#allocation2 + $0x30] sm:$0xff] %v5276
  %5285 = vst [vmem:[#allocation2 + $0x48] sm:$0xff] %v5277
  %5286 = vst [vmem:[#allocation2 + $0x50] sm:$0xff] %v5278
  %5287 = vst [vmem:[#allocation2 + $0x68] sm:$0xff] %v5279
  %5288 = vst [vmem:[#allocation2 + $0x70] sm:$0xff] %v5280
  %v5289 = vld [vmem:[#allocation2] sm:$0xff]
  %v5290 = vld [vmem:[#allocation2 + $0x8] sm:$0xff]
  %v5291 = vld [vmem:[#allocation2 + $0x10] sm:$0xff]
  %v5292 = vld [vmem:[#allocation2 + $0x20] sm:$0xff]
  %v5293 = vld [vmem:[#allocation2 + $0x28] sm:$0xff]
  %v5294 = vld [vmem:[#allocation2 + $0x30] sm:$0xff]
  %v5295 = vld [vmem:[#allocation2 + $0x40] sm:$0xff]
  %v5296 = vld [vmem:[#allocation2 + $0x48] sm:$0xff]
  %v5297 = vld [vmem:[#allocation2 + $0x50] sm:$0xff]
  %v5298 = vld [vmem:[#allocation2 + $0x60] sm:$0xff]
  %v5299 = vld [vmem:[#allocation2 + $0x68] sm:$0xff]
  %v5300 = vld [vmem:[#allocation2 + $0x70] sm:$0xff]
  %v5301 = vmul.f32 %v5289, %v88
  %v5302 = vmul.f32 %v5290, %v92
  %v5303 = vmul.f32 %v5291, %v90
  %v5304 = vmul.f32 %v5292, %v88
  %v5305 = vmul.f32 %v5293, %v92
  %v5306 = vmul.f32 %v5294, %v90
  %v5307 = vmul.f32 %v5295, %v88
  %v5308 = vmul.f32 %v5296, %v92
  %v5309 = vmul.f32 %v5297, %v90
  %v5310 = vmul.f32 %v5298, %v88
  %v5311 = vmul.f32 %v5299, %v92
  %v5312 = vmul.f32 %v5300, %v90
  %v5313 = vld [vmem:[%s2] sm:$0xff]
  %v5314 = vld [vmem:[%s2 + $0x8] sm:$0xff]
  %v5315 = vld [vmem:[%s2 + $0x10] sm:$0xff]
  %v5316 = vld [vmem:[%s2 + $0x18] sm:$0xff]
  %v5317 = vld [vmem:[%s1361] sm:$0xff]
  %v5318 = vld [vmem:[%s1361 + $0x8] sm:$0xff]
  %v5319 = vld [vmem:[%s1361 + $0x10] sm:$0xff]
  %v5320 = vld [vmem:[%s1361 + $0x18] sm:$0xff]
  %5333 = vrot.lane.b32.xlu0 %v5289, 16
  %v5334 = vpop.permute.xlu0 %5333
  %5335 = vrot.lane.b32.xlu0 %v5290, 16
  %v5336 = vpop.permute.xlu0 %5335
  %5337 = vrot.lane.b32.xlu0 %v5291, 16
  %v5338 = vpop.permute.xlu0 %5337
  %5339 = vrot.lane.b32.xlu0 %v5292, 16
  %v5340 = vpop.permute.xlu0 %5339
  %5341 = vrot.lane.b32.xlu0 %v5293, 16
  %v5342 = vpop.permute.xlu0 %5341
  %5343 = vrot.lane.b32.xlu0 %v5294, 16
  %v5344 = vpop.permute.xlu0 %5343
  %5345 = vrot.lane.b32.xlu0 %v5295, 16
  %v5346 = vpop.permute.xlu0 %5345
  %5347 = vrot.lane.b32.xlu0 %v5296, 16
  %v5348 = vpop.permute.xlu0 %5347
  %5349 = vrot.lane.b32.xlu0 %v5297, 16
  %v5350 = vpop.permute.xlu0 %5349
  %5351 = vrot.lane.b32.xlu0 %v5298, 16
  %v5352 = vpop.permute.xlu0 %5351
  %5353 = vrot.lane.b32.xlu0 %v5299, 16
  %v5354 = vpop.permute.xlu0 %5353
  %5355 = vrot.lane.b32.xlu0 %v5300, 16
  %v5356 = vpop.permute.xlu0 %5355
  %v5357 = vsel %vm117, %v5334, %v5336
  %v5358 = vsel %vm117, %v5336, %v5338
  %v5359 = vsel %vm117, %v5340, %v5342
  %v5360 = vsel %vm117, %v5342, %v5344
  %v5361 = vsel %vm117, %v5346, %v5348
  %v5362 = vsel %vm117, %v5348, %v5350
  %v5363 = vsel %vm117, %v5352, %v5354
  %v5364 = vsel %vm117, %v5354, %v5356
  %v5374 = vsel %vm1418, %v5317, 0
  %v5377 = vsel %vm1418, %v5318, 0
  %v5380 = vsel %vm1418, %v5319, 0
  %v5383 = vsel %vm1418, %v5320, 0
  %5385 = vmatprep.subr.mxu0 0.0
  %5386 = vmatpush1.msra.mxu0 0.0
  %5387 = vmatprep.subr.mxu0 0.0
  %5388 = vmatpush1.msra.mxu0 0.0
  %5389 = vmatprep.subr.mxu0 0.0
  %5390 = vmatpush1.msra.mxu0 0.0
  %5391 = vmatprep.subr.mxu0 0.0
  %5392 = vmatpush1.msra.mxu0 0.0
  %5393 = vmatprep.subr.mxu0 0.0
  %5394 = vmatpush1.msra.mxu0 0.0
  %5395 = vmatprep.subr.mxu0 0.0
  %5396 = vmatpush1.msra.mxu0 0.0
  %5397 = vmatprep.subr.mxu0 0.0
  %5398 = vmatpush1.msra.mxu0 0.0
  %5399 = vmatprep.subr.mxu0 0.0
  %5400 = vmatpush1.msra.mxu0 0.0
  %5401 = vmatprep.subr.mxu0 0.0
  %5402 = vmatpush1.msra.mxu0 0.0
  %5403 = vmatprep.subr.mxu0 0.0
  %5404 = vmatpush1.msra.mxu0 0.0
  %5405 = vmatprep.subr.mxu0 0.0
  %5406 = vmatpush1.msra.mxu0 0.0
  %5407 = vmatprep.subr.mxu0 0.0
  %5408 = vmatpush1.msra.mxu0 0.0
  %5409 = vmatprep.subr.mxu0 %v5364
  %5410 = vmatpush1.msra.mxu0 %v5363
  %5411 = vmatprep.subr.mxu0 %v5362
  %5412 = vmatpush1.msra.mxu0 %v5361
  %5413 = vmatprep.subr.mxu0 %v5360
  %5414 = vmatpush1.msra.mxu0 %v5359
  %5415 = vmatprep.subr.mxu0 %v5358
  %5416 = vmatpush1.msra.mxu0 %v5357
  %5417 = vmatprep.subr.mxu0 0.0
  %5418 = vmatpush2.msra.mxu0 0.0
  %5419 = vmatprep.subr.mxu0 0.0
  %5420 = vmatpush2.msra.mxu0 0.0
  %5421 = vmatprep.subr.mxu0 0.0
  %5422 = vmatpush2.msra.mxu0 0.0
  %5423 = vmatprep.subr.mxu0 0.0
  %5424 = vmatpush2.msra.mxu0 0.0
  %5425 = vmatprep.subr.mxu0 0.0
  %5426 = vmatpush2.msra.mxu0 0.0
  %5427 = vmatprep.subr.mxu0 0.0
  %5428 = vmatpush2.msra.mxu0 0.0
  %5429 = vmatprep.subr.mxu0 0.0
  %5430 = vmatpush2.msra.mxu0 0.0
  %5431 = vmatprep.subr.mxu0 0.0
  %5432 = vmatpush2.msra.mxu0 0.0
  %5433 = vmatprep.subr.mxu0 0.0
  %5434 = vmatpush2.msra.mxu0 0.0
  %5435 = vmatprep.subr.mxu0 0.0
  %5436 = vmatpush2.msra.mxu0 0.0
  %5437 = vmatprep.subr.mxu0 0.0
  %5438 = vmatpush2.msra.mxu0 0.0
  %5439 = vmatprep.subr.mxu0 0.0
  %5440 = vmatpush2.msra.mxu0 0.0
  %5441 = vmatprep.subr.mxu0 0.0
  %5442 = vmatpush2.msra.mxu0 0.0
  %5443 = vmatprep.subr.mxu0 0.0
  %5444 = vmatpush2.msra.mxu0 0.0
  %5445 = vmatprep.subr.mxu0 0.0
  %5446 = vmatpush2.msra.mxu0 0.0
  %5447 = vmatprep.subr.mxu0 0.0
  %5448 = vmatpush2.msra.mxu0 0.0
  %5449 = vmatprep.mubr.f32.mxu0 0.0
  %5450 = vmatmul.mubr.f32.gmra.mxu0 %v5374
  %v5451 = vpop.f32.mrf.mxu0
  %v5452 = vadd.f32 0.0, %v5451
  %v5453 = vpop.f32.mrf.mxu0
  %v5454 = vadd.f32 0.0, %v5453
  %5455 = vmatprep.mubr.f32.mxu0 0.0
  %5456 = vmatmul.mubr.f32.gmra.mxu0 %v5377
  %v5457 = vpop.f32.mrf.mxu0
  %v5458 = vadd.f32 0.0, %v5457
  %v5459 = vpop.f32.mrf.mxu0
  %v5460 = vadd.f32 0.0, %v5459
  %5461 = vmatprep.mubr.f32.mxu0 0.0
  %5462 = vmatmul.mubr.f32.gmra.mxu0 %v5380
  %v5463 = vpop.f32.mrf.mxu0
  %v5464 = vadd.f32 0.0, %v5463
  %v5465 = vpop.f32.mrf.mxu0
  %v5466 = vadd.f32 0.0, %v5465
  %5467 = vmatprep.mubr.f32.mxu0 0.0
  %5468 = vmatmul.mubr.f32.gmra.mxu0 %v5383
  %v5469 = vpop.f32.mrf.mxu0
  %v5470 = vadd.f32 0.0, %v5469
  %v5471 = vpop.f32.mrf.mxu0
  %v5472 = vadd.f32 0.0, %v5471
  %5473 = vdwg.mxu0
  %5486 = vrot.lane.b32.xlu0 %v5301, 17
  %v5487 = vpop.permute.xlu0 %5486
  %5488 = vrot.lane.b32.xlu0 %v5302, 17
  %v5489 = vpop.permute.xlu0 %5488
  %5490 = vrot.lane.b32.xlu0 %v5303, 17
  %v5491 = vpop.permute.xlu0 %5490
  %5492 = vrot.lane.b32.xlu0 %v5304, 17
  %v5493 = vpop.permute.xlu0 %5492
  %5494 = vrot.lane.b32.xlu0 %v5305, 17
  %v5495 = vpop.permute.xlu0 %5494
  %5496 = vrot.lane.b32.xlu0 %v5306, 17
  %v5497 = vpop.permute.xlu0 %5496
  %5498 = vrot.lane.b32.xlu0 %v5307, 17
  %v5499 = vpop.permute.xlu0 %5498
  %5500 = vrot.lane.b32.xlu0 %v5308, 17
  %v5501 = vpop.permute.xlu0 %5500
  %5502 = vrot.lane.b32.xlu0 %v5309, 17
  %v5503 = vpop.permute.xlu0 %5502
  %5504 = vrot.lane.b32.xlu0 %v5310, 17
  %v5505 = vpop.permute.xlu0 %5504
  %5506 = vrot.lane.b32.xlu0 %v5311, 17
  %v5507 = vpop.permute.xlu0 %5506
  %5508 = vrot.lane.b32.xlu0 %v5312, 17
  %v5509 = vpop.permute.xlu0 %5508
  %v5510 = vsel %vm236, %v5487, %v5489
  %v5511 = vsel %vm236, %v5489, %v5491
  %v5512 = vsel %vm236, %v5493, %v5495
  %v5513 = vsel %vm236, %v5495, %v5497
  %v5514 = vsel %vm236, %v5499, %v5501
  %v5515 = vsel %vm236, %v5501, %v5503
  %v5516 = vsel %vm236, %v5505, %v5507
  %v5517 = vsel %vm236, %v5507, %v5509
  %v5527 = vsel %vm1418, %v5313, 0
  %v5530 = vsel %vm1418, %v5314, 0
  %v5533 = vsel %vm1418, %v5315, 0
  %v5536 = vsel %vm1418, %v5316, 0
  %5538 = vmatprep.subr.mxu0 0.0
  %5539 = vmatpush1.msra.mxu0 0.0
  %5540 = vmatprep.subr.mxu0 0.0
  %5541 = vmatpush1.msra.mxu0 0.0
  %5542 = vmatprep.subr.mxu0 0.0
  %5543 = vmatpush1.msra.mxu0 0.0
  %5544 = vmatprep.subr.mxu0 0.0
  %5545 = vmatpush1.msra.mxu0 0.0
  %5546 = vmatprep.subr.mxu0 0.0
  %5547 = vmatpush1.msra.mxu0 0.0
  %5548 = vmatprep.subr.mxu0 0.0
  %5549 = vmatpush1.msra.mxu0 0.0
  %5550 = vmatprep.subr.mxu0 0.0
  %5551 = vmatpush1.msra.mxu0 0.0
  %5552 = vmatprep.subr.mxu0 0.0
  %5553 = vmatpush1.msra.mxu0 0.0
  %5554 = vmatprep.subr.mxu0 0.0
  %5555 = vmatpush1.msra.mxu0 0.0
  %5556 = vmatprep.subr.mxu0 0.0
  %5557 = vmatpush1.msra.mxu0 0.0
  %5558 = vmatprep.subr.mxu0 0.0
  %5559 = vmatpush1.msra.mxu0 0.0
  %5560 = vmatprep.subr.mxu0 0.0
  %5561 = vmatpush1.msra.mxu0 0.0
  %5562 = vmatprep.subr.mxu0 %v5517
  %5563 = vmatpush1.msra.mxu0 %v5516
  %5564 = vmatprep.subr.mxu0 %v5515
  %5565 = vmatpush1.msra.mxu0 %v5514
  %5566 = vmatprep.subr.mxu0 %v5513
  %5567 = vmatpush1.msra.mxu0 %v5512
  %5568 = vmatprep.subr.mxu0 %v5511
  %5569 = vmatpush1.msra.mxu0 %v5510
  %5570 = vmatprep.subr.mxu0 0.0
  %5571 = vmatpush2.msra.mxu0 0.0
  %5572 = vmatprep.subr.mxu0 0.0
  %5573 = vmatpush2.msra.mxu0 0.0
  %5574 = vmatprep.subr.mxu0 0.0
  %5575 = vmatpush2.msra.mxu0 0.0
  %5576 = vmatprep.subr.mxu0 0.0
  %5577 = vmatpush2.msra.mxu0 0.0
  %5578 = vmatprep.subr.mxu0 0.0
  %5579 = vmatpush2.msra.mxu0 0.0
  %5580 = vmatprep.subr.mxu0 0.0
  %5581 = vmatpush2.msra.mxu0 0.0
  %5582 = vmatprep.subr.mxu0 0.0
  %5583 = vmatpush2.msra.mxu0 0.0
  %5584 = vmatprep.subr.mxu0 0.0
  %5585 = vmatpush2.msra.mxu0 0.0
  %5586 = vmatprep.subr.mxu0 0.0
  %5587 = vmatpush2.msra.mxu0 0.0
  %5588 = vmatprep.subr.mxu0 0.0
  %5589 = vmatpush2.msra.mxu0 0.0
  %5590 = vmatprep.subr.mxu0 0.0
  %5591 = vmatpush2.msra.mxu0 0.0
  %5592 = vmatprep.subr.mxu0 0.0
  %5593 = vmatpush2.msra.mxu0 0.0
  %5594 = vmatprep.subr.mxu0 0.0
  %5595 = vmatpush2.msra.mxu0 0.0
  %5596 = vmatprep.subr.mxu0 0.0
  %5597 = vmatpush2.msra.mxu0 0.0
  %5598 = vmatprep.subr.mxu0 0.0
  %5599 = vmatpush2.msra.mxu0 0.0
  %5600 = vmatprep.subr.mxu0 0.0
  %5601 = vmatpush2.msra.mxu0 0.0
  %5602 = vmatprep.mubr.f32.mxu0 0.0
  %5603 = vmatmul.mubr.f32.gmra.mxu0 %v5527
  %v5604 = vpop.f32.mrf.mxu0
  %v5605 = vadd.f32 %v5452, %v5604
  %v5606 = vpop.f32.mrf.mxu0
  %v5607 = vadd.f32 %v5454, %v5606
  %5608 = vmatprep.mubr.f32.mxu0 0.0
  %5609 = vmatmul.mubr.f32.gmra.mxu0 %v5530
  %v5610 = vpop.f32.mrf.mxu0
  %v5611 = vadd.f32 %v5458, %v5610
  %v5612 = vpop.f32.mrf.mxu0
  %v5613 = vadd.f32 %v5460, %v5612
  %5614 = vmatprep.mubr.f32.mxu0 0.0
  %5615 = vmatmul.mubr.f32.gmra.mxu0 %v5533
  %v5616 = vpop.f32.mrf.mxu0
  %v5617 = vadd.f32 %v5464, %v5616
  %v5618 = vpop.f32.mrf.mxu0
  %v5619 = vadd.f32 %v5466, %v5618
  %5620 = vmatprep.mubr.f32.mxu0 0.0
  %5621 = vmatmul.mubr.f32.gmra.mxu0 %v5536
  %v5622 = vpop.f32.mrf.mxu0
  %v5623 = vadd.f32 %v5470, %v5622
  %v5624 = vpop.f32.mrf.mxu0
  %v5625 = vadd.f32 %v5472, %v5624
  %5626 = vdwg.mxu0
  %v5627 = vmul.f32 %v5289, %v347
  %v5628 = vmul.f32 %v5290, %v351
  %v5629 = vmul.f32 %v5291, %v349
  %v5630 = vmul.f32 %v5292, %v347
  %v5631 = vmul.f32 %v5293, %v351
  %v5632 = vmul.f32 %v5294, %v349
  %v5633 = vmul.f32 %v5295, %v347
  %v5634 = vmul.f32 %v5296, %v351
  %v5635 = vmul.f32 %v5297, %v349
  %v5636 = vmul.f32 %v5298, %v347
  %v5637 = vmul.f32 %v5299, %v351
  %v5638 = vmul.f32 %v5300, %v349
  %v5639 = vld [vmem:[%s1685] sm:$0xff]
  %v5640 = vld [vmem:[%s1685 + $0x8] sm:$0xff]
  %v5641 = vld [vmem:[%s1685 + $0x10] sm:$0xff]
  %v5642 = vld [vmem:[%s1685 + $0x18] sm:$0xff]
  %5655 = vrot.lane.b32.xlu0 %v5627, 15
  %v5656 = vpop.permute.xlu0 %5655
  %5657 = vrot.lane.b32.xlu0 %v5628, 15
  %v5658 = vpop.permute.xlu0 %5657
  %5659 = vrot.lane.b32.xlu0 %v5629, 15
  %v5660 = vpop.permute.xlu0 %5659
  %5661 = vrot.lane.b32.xlu0 %v5630, 15
  %v5662 = vpop.permute.xlu0 %5661
  %5663 = vrot.lane.b32.xlu0 %v5631, 15
  %v5664 = vpop.permute.xlu0 %5663
  %5665 = vrot.lane.b32.xlu0 %v5632, 15
  %v5666 = vpop.permute.xlu0 %5665
  %5667 = vrot.lane.b32.xlu0 %v5633, 15
  %v5668 = vpop.permute.xlu0 %5667
  %5669 = vrot.lane.b32.xlu0 %v5634, 15
  %v5670 = vpop.permute.xlu0 %5669
  %5671 = vrot.lane.b32.xlu0 %v5635, 15
  %v5672 = vpop.permute.xlu0 %5671
  %5673 = vrot.lane.b32.xlu0 %v5636, 15
  %v5674 = vpop.permute.xlu0 %5673
  %5675 = vrot.lane.b32.xlu0 %v5637, 15
  %v5676 = vpop.permute.xlu0 %5675
  %5677 = vrot.lane.b32.xlu0 %v5638, 15
  %v5678 = vpop.permute.xlu0 %5677
  %v5679 = vsel %vm372, %v5656, %v5658
  %v5680 = vsel %vm372, %v5658, %v5660
  %v5681 = vsel %vm372, %v5662, %v5664
  %v5682 = vsel %vm372, %v5664, %v5666
  %v5683 = vsel %vm372, %v5668, %v5670
  %v5684 = vsel %vm372, %v5670, %v5672
  %v5685 = vsel %vm372, %v5674, %v5676
  %v5686 = vsel %vm372, %v5676, %v5678
  %v5696 = vsel %vm1418, %v5639, 0
  %v5699 = vsel %vm1418, %v5640, 0
  %v5702 = vsel %vm1418, %v5641, 0
  %v5705 = vsel %vm1418, %v5642, 0
  %5707 = vmatprep.subr.mxu0 0.0
  %5708 = vmatpush1.msra.mxu0 0.0
  %5709 = vmatprep.subr.mxu0 0.0
  %5710 = vmatpush1.msra.mxu0 0.0
  %5711 = vmatprep.subr.mxu0 0.0
  %5712 = vmatpush1.msra.mxu0 0.0
  %5713 = vmatprep.subr.mxu0 0.0
  %5714 = vmatpush1.msra.mxu0 0.0
  %5715 = vmatprep.subr.mxu0 0.0
  %5716 = vmatpush1.msra.mxu0 0.0
  %5717 = vmatprep.subr.mxu0 0.0
  %5718 = vmatpush1.msra.mxu0 0.0
  %5719 = vmatprep.subr.mxu0 0.0
  %5720 = vmatpush1.msra.mxu0 0.0
  %5721 = vmatprep.subr.mxu0 0.0
  %5722 = vmatpush1.msra.mxu0 0.0
  %5723 = vmatprep.subr.mxu0 0.0
  %5724 = vmatpush1.msra.mxu0 0.0
  %5725 = vmatprep.subr.mxu0 0.0
  %5726 = vmatpush1.msra.mxu0 0.0
  %5727 = vmatprep.subr.mxu0 0.0
  %5728 = vmatpush1.msra.mxu0 0.0
  %5729 = vmatprep.subr.mxu0 0.0
  %5730 = vmatpush1.msra.mxu0 0.0
  %5731 = vmatprep.subr.mxu0 %v5686
  %5732 = vmatpush1.msra.mxu0 %v5685
  %5733 = vmatprep.subr.mxu0 %v5684
  %5734 = vmatpush1.msra.mxu0 %v5683
  %5735 = vmatprep.subr.mxu0 %v5682
  %5736 = vmatpush1.msra.mxu0 %v5681
  %5737 = vmatprep.subr.mxu0 %v5680
  %5738 = vmatpush1.msra.mxu0 %v5679
  %5739 = vmatprep.subr.mxu0 0.0
  %5740 = vmatpush2.msra.mxu0 0.0
  %5741 = vmatprep.subr.mxu0 0.0
  %5742 = vmatpush2.msra.mxu0 0.0
  %5743 = vmatprep.subr.mxu0 0.0
  %5744 = vmatpush2.msra.mxu0 0.0
  %5745 = vmatprep.subr.mxu0 0.0
  %5746 = vmatpush2.msra.mxu0 0.0
  %5747 = vmatprep.subr.mxu0 0.0
  %5748 = vmatpush2.msra.mxu0 0.0
  %5749 = vmatprep.subr.mxu0 0.0
  %5750 = vmatpush2.msra.mxu0 0.0
  %5751 = vmatprep.subr.mxu0 0.0
  %5752 = vmatpush2.msra.mxu0 0.0
  %5753 = vmatprep.subr.mxu0 0.0
  %5754 = vmatpush2.msra.mxu0 0.0
  %5755 = vmatprep.subr.mxu0 0.0
  %5756 = vmatpush2.msra.mxu0 0.0
  %5757 = vmatprep.subr.mxu0 0.0
  %5758 = vmatpush2.msra.mxu0 0.0
  %5759 = vmatprep.subr.mxu0 0.0
  %5760 = vmatpush2.msra.mxu0 0.0
  %5761 = vmatprep.subr.mxu0 0.0
  %5762 = vmatpush2.msra.mxu0 0.0
  %5763 = vmatprep.subr.mxu0 0.0
  %5764 = vmatpush2.msra.mxu0 0.0
  %5765 = vmatprep.subr.mxu0 0.0
  %5766 = vmatpush2.msra.mxu0 0.0
  %5767 = vmatprep.subr.mxu0 0.0
  %5768 = vmatpush2.msra.mxu0 0.0
  %5769 = vmatprep.subr.mxu0 0.0
  %5770 = vmatpush2.msra.mxu0 0.0
  %5771 = vmatprep.mubr.f32.mxu0 0.0
  %5772 = vmatmul.mubr.f32.gmra.mxu0 %v5696
  %v5773 = vpop.f32.mrf.mxu0
  %v5774 = vadd.f32 0.0, %v5773
  %v5775 = vpop.f32.mrf.mxu0
  %v5776 = vadd.f32 0.0, %v5775
  %5777 = vmatprep.mubr.f32.mxu0 0.0
  %5778 = vmatmul.mubr.f32.gmra.mxu0 %v5699
  %v5779 = vpop.f32.mrf.mxu0
  %v5780 = vadd.f32 0.0, %v5779
  %v5781 = vpop.f32.mrf.mxu0
  %v5782 = vadd.f32 0.0, %v5781
  %5783 = vmatprep.mubr.f32.mxu0 0.0
  %5784 = vmatmul.mubr.f32.gmra.mxu0 %v5702
  %v5785 = vpop.f32.mrf.mxu0
  %v5786 = vadd.f32 0.0, %v5785
  %v5787 = vpop.f32.mrf.mxu0
  %v5788 = vadd.f32 0.0, %v5787
  %5789 = vmatprep.mubr.f32.mxu0 0.0
  %5790 = vmatmul.mubr.f32.gmra.mxu0 %v5705
  %v5791 = vpop.f32.mrf.mxu0
  %v5792 = vadd.f32 0.0, %v5791
  %v5793 = vpop.f32.mrf.mxu0
  %v5794 = vadd.f32 0.0, %v5793
  %5795 = vdwg.mxu0
  %v5796 = vadd.f32 %v5605, %v5774
  %v5797 = vadd.f32 %v5607, %v5776
  %v5798 = vadd.f32 %v5611, %v5780
  %v5799 = vadd.f32 %v5613, %v5782
  %v5800 = vadd.f32 %v5617, %v5786
  %v5801 = vadd.f32 %v5619, %v5788
  %v5802 = vadd.f32 %v5623, %v5792
  %v5803 = vadd.f32 %v5625, %v5794
  %v5804 = vmul.f32 %v5289, %v489
  %v5805 = vmul.f32 %v5290, %v493
  %v5806 = vmul.f32 %v5291, %v491
  %v5807 = vmul.f32 %v5292, %v489
  %v5808 = vmul.f32 %v5293, %v493
  %v5809 = vmul.f32 %v5294, %v491
  %v5810 = vmul.f32 %v5295, %v489
  %v5811 = vmul.f32 %v5296, %v493
  %v5812 = vmul.f32 %v5297, %v491
  %v5813 = vmul.f32 %v5298, %v489
  %v5814 = vmul.f32 %v5299, %v493
  %v5815 = vmul.f32 %v5300, %v491
  %v5816 = vld [vmem:[%s1863] sm:$0xff]
  %v5817 = vld [vmem:[%s1863 + $0x8] sm:$0xff]
  %v5818 = vld [vmem:[%s1863 + $0x10] sm:$0xff]
  %v5819 = vld [vmem:[%s1863 + $0x18] sm:$0xff]
  %5832 = vrot.lane.b32.xlu0 %v5804, 1
  %v5833 = vpop.permute.xlu0 %5832
  %5834 = vrot.lane.b32.xlu0 %v5805, 1
  %v5835 = vpop.permute.xlu0 %5834
  %5836 = vrot.lane.b32.xlu0 %v5806, 1
  %v5837 = vpop.permute.xlu0 %5836
  %5838 = vrot.lane.b32.xlu0 %v5807, 1
  %v5839 = vpop.permute.xlu0 %5838
  %5840 = vrot.lane.b32.xlu0 %v5808, 1
  %v5841 = vpop.permute.xlu0 %5840
  %5842 = vrot.lane.b32.xlu0 %v5809, 1
  %v5843 = vpop.permute.xlu0 %5842
  %5844 = vrot.lane.b32.xlu0 %v5810, 1
  %v5845 = vpop.permute.xlu0 %5844
  %5846 = vrot.lane.b32.xlu0 %v5811, 1
  %v5847 = vpop.permute.xlu0 %5846
  %5848 = vrot.lane.b32.xlu0 %v5812, 1
  %v5849 = vpop.permute.xlu0 %5848
  %5850 = vrot.lane.b32.xlu0 %v5813, 1
  %v5851 = vpop.permute.xlu0 %5850
  %5852 = vrot.lane.b32.xlu0 %v5814, 1
  %v5853 = vpop.permute.xlu0 %5852
  %5854 = vrot.lane.b32.xlu0 %v5815, 1
  %v5855 = vpop.permute.xlu0 %5854
  %v5856 = vsel %vm514, %v5833, %v5835
  %v5857 = vsel %vm514, %v5835, %v5837
  %v5858 = vsel %vm514, %v5839, %v5841
  %v5859 = vsel %vm514, %v5841, %v5843
  %v5860 = vsel %vm514, %v5845, %v5847
  %v5861 = vsel %vm514, %v5847, %v5849
  %v5862 = vsel %vm514, %v5851, %v5853
  %v5863 = vsel %vm514, %v5853, %v5855
  %v5873 = vsel %vm1418, %v5816, 0
  %v5876 = vsel %vm1418, %v5817, 0
  %v5879 = vsel %vm1418, %v5818, 0
  %v5882 = vsel %vm1418, %v5819, 0
  %5884 = vmatprep.subr.mxu0 0.0
  %5885 = vmatpush1.msra.mxu0 0.0
  %5886 = vmatprep.subr.mxu0 0.0
  %5887 = vmatpush1.msra.mxu0 0.0
  %5888 = vmatprep.subr.mxu0 0.0
  %5889 = vmatpush1.msra.mxu0 0.0
  %5890 = vmatprep.subr.mxu0 0.0
  %5891 = vmatpush1.msra.mxu0 0.0
  %5892 = vmatprep.subr.mxu0 0.0
  %5893 = vmatpush1.msra.mxu0 0.0
  %5894 = vmatprep.subr.mxu0 0.0
  %5895 = vmatpush1.msra.mxu0 0.0
  %5896 = vmatprep.subr.mxu0 0.0
  %5897 = vmatpush1.msra.mxu0 0.0
  %5898 = vmatprep.subr.mxu0 0.0
  %5899 = vmatpush1.msra.mxu0 0.0
  %5900 = vmatprep.subr.mxu0 0.0
  %5901 = vmatpush1.msra.mxu0 0.0
  %5902 = vmatprep.subr.mxu0 0.0
  %5903 = vmatpush1.msra.mxu0 0.0
  %5904 = vmatprep.subr.mxu0 0.0
  %5905 = vmatpush1.msra.mxu0 0.0
  %5906 = vmatprep.subr.mxu0 0.0
  %5907 = vmatpush1.msra.mxu0 0.0
  %5908 = vmatprep.subr.mxu0 %v5863
  %5909 = vmatpush1.msra.mxu0 %v5862
  %5910 = vmatprep.subr.mxu0 %v5861
  %5911 = vmatpush1.msra.mxu0 %v5860
  %5912 = vmatprep.subr.mxu0 %v5859
  %5913 = vmatpush1.msra.mxu0 %v5858
  %5914 = vmatprep.subr.mxu0 %v5857
  %5915 = vmatpush1.msra.mxu0 %v5856
  %5916 = vmatprep.subr.mxu0 0.0
  %5917 = vmatpush2.msra.mxu0 0.0
  %5918 = vmatprep.subr.mxu0 0.0
  %5919 = vmatpush2.msra.mxu0 0.0
  %5920 = vmatprep.subr.mxu0 0.0
  %5921 = vmatpush2.msra.mxu0 0.0
  %5922 = vmatprep.subr.mxu0 0.0
  %5923 = vmatpush2.msra.mxu0 0.0
  %5924 = vmatprep.subr.mxu0 0.0
  %5925 = vmatpush2.msra.mxu0 0.0
  %5926 = vmatprep.subr.mxu0 0.0
  %5927 = vmatpush2.msra.mxu0 0.0
  %5928 = vmatprep.subr.mxu0 0.0
  %5929 = vmatpush2.msra.mxu0 0.0
  %5930 = vmatprep.subr.mxu0 0.0
  %5931 = vmatpush2.msra.mxu0 0.0
  %5932 = vmatprep.subr.mxu0 0.0
  %5933 = vmatpush2.msra.mxu0 0.0
  %5934 = vmatprep.subr.mxu0 0.0
  %5935 = vmatpush2.msra.mxu0 0.0
  %5936 = vmatprep.subr.mxu0 0.0
  %5937 = vmatpush2.msra.mxu0 0.0
  %5938 = vmatprep.subr.mxu0 0.0
  %5939 = vmatpush2.msra.mxu0 0.0
  %5940 = vmatprep.subr.mxu0 0.0
  %5941 = vmatpush2.msra.mxu0 0.0
  %5942 = vmatprep.subr.mxu0 0.0
  %5943 = vmatpush2.msra.mxu0 0.0
  %5944 = vmatprep.subr.mxu0 0.0
  %5945 = vmatpush2.msra.mxu0 0.0
  %5946 = vmatprep.subr.mxu0 0.0
  %5947 = vmatpush2.msra.mxu0 0.0
  %5948 = vmatprep.mubr.f32.mxu0 0.0
  %5949 = vmatmul.mubr.f32.gmra.mxu0 %v5873
  %v5950 = vpop.f32.mrf.mxu0
  %v5951 = vadd.f32 0.0, %v5950
  %v5952 = vpop.f32.mrf.mxu0
  %v5953 = vadd.f32 0.0, %v5952
  %5954 = vmatprep.mubr.f32.mxu0 0.0
  %5955 = vmatmul.mubr.f32.gmra.mxu0 %v5876
  %v5956 = vpop.f32.mrf.mxu0
  %v5957 = vadd.f32 0.0, %v5956
  %v5958 = vpop.f32.mrf.mxu0
  %v5959 = vadd.f32 0.0, %v5958
  %5960 = vmatprep.mubr.f32.mxu0 0.0
  %5961 = vmatmul.mubr.f32.gmra.mxu0 %v5879
  %v5962 = vpop.f32.mrf.mxu0
  %v5963 = vadd.f32 0.0, %v5962
  %v5964 = vpop.f32.mrf.mxu0
  %v5965 = vadd.f32 0.0, %v5964
  %5966 = vmatprep.mubr.f32.mxu0 0.0
  %5967 = vmatmul.mubr.f32.gmra.mxu0 %v5882
  %v5968 = vpop.f32.mrf.mxu0
  %v5969 = vadd.f32 0.0, %v5968
  %v5970 = vpop.f32.mrf.mxu0
  %v5971 = vadd.f32 0.0, %v5970
  %5972 = vdwg.mxu0
  %v5973 = vadd.f32 %v5796, %v5951
  %v5974 = vadd.f32 %v5797, %v5953
  %v5975 = vadd.f32 %v5798, %v5957
  %v5976 = vadd.f32 %v5799, %v5959
  %v5977 = vadd.f32 %v5800, %v5963
  %v5978 = vadd.f32 %v5801, %v5965
  %v5979 = vadd.f32 %v5802, %v5969
  %v5980 = vadd.f32 %v5803, %v5971
  %v5981 = vld [vmem:[%s2029] sm:$0xff]
  %v5982 = vld [vmem:[%s2029 + $0x8] sm:$0xff]
  %v5983 = vld [vmem:[%s2029 + $0x10] sm:$0xff]
  %v5984 = vld [vmem:[%s2029 + $0x18] sm:$0xff]
  %v5986 = vsel %vm1418, %v5981, 0
  %v5989 = vsel %vm1418, %v5982, 0
  %v5992 = vsel %vm1418, %v5983, 0
  %v5995 = vsel %vm1418, %v5984, 0
  %5997 = vmatprep.subr.mxu0 0.0
  %5998 = vmatpush1.msra.mxu0 0.0
  %5999 = vmatprep.subr.mxu0 0.0
  %6000 = vmatpush1.msra.mxu0 0.0
  %6001 = vmatprep.subr.mxu0 0.0
  %6002 = vmatpush1.msra.mxu0 0.0
  %6003 = vmatprep.subr.mxu0 0.0
  %6004 = vmatpush1.msra.mxu0 0.0
  %6005 = vmatprep.subr.mxu0 0.0
  %6006 = vmatpush1.msra.mxu0 0.0
  %6007 = vmatprep.subr.mxu0 0.0
  %6008 = vmatpush1.msra.mxu0 0.0
  %6009 = vmatprep.subr.mxu0 0.0
  %6010 = vmatpush1.msra.mxu0 0.0
  %6011 = vmatprep.subr.mxu0 0.0
  %6012 = vmatpush1.msra.mxu0 0.0
  %6013 = vmatprep.subr.mxu0 0.0
  %6014 = vmatpush1.msra.mxu0 0.0
  %6015 = vmatprep.subr.mxu0 0.0
  %6016 = vmatpush1.msra.mxu0 0.0
  %6017 = vmatprep.subr.mxu0 0.0
  %6018 = vmatpush1.msra.mxu0 0.0
  %6019 = vmatprep.subr.mxu0 0.0
  %6020 = vmatpush1.msra.mxu0 0.0
  %6021 = vmatprep.subr.mxu0 %v5300
  %6022 = vmatpush1.msra.mxu0 %v5299
  %6023 = vmatprep.subr.mxu0 %v5297
  %6024 = vmatpush1.msra.mxu0 %v5296
  %6025 = vmatprep.subr.mxu0 %v5294
  %6026 = vmatpush1.msra.mxu0 %v5293
  %6027 = vmatprep.subr.mxu0 %v5291
  %6028 = vmatpush1.msra.mxu0 %v5290
  %6029 = vmatprep.subr.mxu0 0.0
  %6030 = vmatpush2.msra.mxu0 0.0
  %6031 = vmatprep.subr.mxu0 0.0
  %6032 = vmatpush2.msra.mxu0 0.0
  %6033 = vmatprep.subr.mxu0 0.0
  %6034 = vmatpush2.msra.mxu0 0.0
  %6035 = vmatprep.subr.mxu0 0.0
  %6036 = vmatpush2.msra.mxu0 0.0
  %6037 = vmatprep.subr.mxu0 0.0
  %6038 = vmatpush2.msra.mxu0 0.0
  %6039 = vmatprep.subr.mxu0 0.0
  %6040 = vmatpush2.msra.mxu0 0.0
  %6041 = vmatprep.subr.mxu0 0.0
  %6042 = vmatpush2.msra.mxu0 0.0
  %6043 = vmatprep.subr.mxu0 0.0
  %6044 = vmatpush2.msra.mxu0 0.0
  %6045 = vmatprep.subr.mxu0 0.0
  %6046 = vmatpush2.msra.mxu0 0.0
  %6047 = vmatprep.subr.mxu0 0.0
  %6048 = vmatpush2.msra.mxu0 0.0
  %6049 = vmatprep.subr.mxu0 0.0
  %6050 = vmatpush2.msra.mxu0 0.0
  %6051 = vmatprep.subr.mxu0 0.0
  %6052 = vmatpush2.msra.mxu0 0.0
  %6053 = vmatprep.subr.mxu0 0.0
  %6054 = vmatpush2.msra.mxu0 0.0
  %6055 = vmatprep.subr.mxu0 0.0
  %6056 = vmatpush2.msra.mxu0 0.0
  %6057 = vmatprep.subr.mxu0 0.0
  %6058 = vmatpush2.msra.mxu0 0.0
  %6059 = vmatprep.subr.mxu0 0.0
  %6060 = vmatpush2.msra.mxu0 0.0
  %6061 = vmatprep.mubr.f32.mxu0 0.0
  %6062 = vmatmul.mubr.f32.gmra.mxu0 %v5986
  %v6063 = vpop.f32.mrf.mxu0
  %v6064 = vadd.f32 0.0, %v6063
  %v6065 = vpop.f32.mrf.mxu0
  %v6066 = vadd.f32 0.0, %v6065
  %6067 = vmatprep.mubr.f32.mxu0 0.0
  %6068 = vmatmul.mubr.f32.gmra.mxu0 %v5989
  %v6069 = vpop.f32.mrf.mxu0
  %v6070 = vadd.f32 0.0, %v6069
  %v6071 = vpop.f32.mrf.mxu0
  %v6072 = vadd.f32 0.0, %v6071
  %6073 = vmatprep.mubr.f32.mxu0 0.0
  %6074 = vmatmul.mubr.f32.gmra.mxu0 %v5992
  %v6075 = vpop.f32.mrf.mxu0
  %v6076 = vadd.f32 0.0, %v6075
  %v6077 = vpop.f32.mrf.mxu0
  %v6078 = vadd.f32 0.0, %v6077
  %6079 = vmatprep.mubr.f32.mxu0 0.0
  %6080 = vmatmul.mubr.f32.gmra.mxu0 %v5995
  %v6081 = vpop.f32.mrf.mxu0
  %v6082 = vadd.f32 0.0, %v6081
  %v6083 = vpop.f32.mrf.mxu0
  %v6084 = vadd.f32 0.0, %v6083
  %6085 = vdwg.mxu0
  %v6086 = vadd.f32 %v5973, %v6064
  %v6087 = vadd.f32 %v5974, %v6066
  %v6088 = vadd.f32 %v5975, %v6070
  %v6089 = vadd.f32 %v5976, %v6072
  %v6090 = vadd.f32 %v5977, %v6076
  %v6091 = vadd.f32 %v5978, %v6078
  %v6092 = vadd.f32 %v5979, %v6082
  %v6093 = vadd.f32 %v5980, %v6084
  %v6094 = vld [vmem:[#allocation2 + $0x8] sm:$0xff]
  %v6095 = vld [vmem:[#allocation2 + $0x10] sm:$0xff]
  %v6096 = vld [vmem:[#allocation2 + $0x18] sm:$0xff]
  %v6097 = vld [vmem:[#allocation2 + $0x28] sm:$0xff]
  %v6098 = vld [vmem:[#allocation2 + $0x30] sm:$0xff]
  %v6099 = vld [vmem:[#allocation2 + $0x38] sm:$0xff]
  %v6100 = vld [vmem:[#allocation2 + $0x48] sm:$0xff]
  %v6101 = vld [vmem:[#allocation2 + $0x50] sm:$0xff]
  %v6102 = vld [vmem:[#allocation2 + $0x58] sm:$0xff]
  %v6103 = vld [vmem:[#allocation2 + $0x68] sm:$0xff]
  %v6104 = vld [vmem:[#allocation2 + $0x70] sm:$0xff]
  %v6105 = vld [vmem:[#allocation2 + $0x78] sm:$0xff]
  %v6106 = vmul.f32 %v6094, %v752
  %v6107 = vmul.f32 %v6095, %v755
  %v6108 = vmul.f32 %v6096, %v754
  %v6109 = vmul.f32 %v6097, %v752
  %v6110 = vmul.f32 %v6098, %v755
  %v6111 = vmul.f32 %v6099, %v754
  %v6112 = vmul.f32 %v6100, %v752
  %v6113 = vmul.f32 %v6101, %v755
  %v6114 = vmul.f32 %v6102, %v754
  %v6115 = vmul.f32 %v6103, %v752
  %v6116 = vmul.f32 %v6104, %v755
  %v6117 = vmul.f32 %v6105, %v754
  %v6118 = vld [vmem:[%s2167] sm:$0xff]
  %v6119 = vld [vmem:[%s2167 + $0x8] sm:$0xff]
  %v6120 = vld [vmem:[%s2167 + $0x10] sm:$0xff]
  %v6121 = vld [vmem:[%s2167 + $0x18] sm:$0xff]
  %6134 = vrot.lane.b32.xlu0 %v6106, 127
  %v6135 = vpop.permute.xlu0 %6134
  %6136 = vrot.lane.b32.xlu0 %v6107, 127
  %v6137 = vpop.permute.xlu0 %6136
  %6138 = vrot.lane.b32.xlu0 %v6108, 127
  %v6139 = vpop.permute.xlu0 %6138
  %6140 = vrot.lane.b32.xlu0 %v6109, 127
  %v6141 = vpop.permute.xlu0 %6140
  %6142 = vrot.lane.b32.xlu0 %v6110, 127
  %v6143 = vpop.permute.xlu0 %6142
  %6144 = vrot.lane.b32.xlu0 %v6111, 127
  %v6145 = vpop.permute.xlu0 %6144
  %6146 = vrot.lane.b32.xlu0 %v6112, 127
  %v6147 = vpop.permute.xlu0 %6146
  %6148 = vrot.lane.b32.xlu0 %v6113, 127
  %v6149 = vpop.permute.xlu0 %6148
  %6150 = vrot.lane.b32.xlu0 %v6114, 127
  %v6151 = vpop.permute.xlu0 %6150
  %6152 = vrot.lane.b32.xlu0 %v6115, 127
  %v6153 = vpop.permute.xlu0 %6152
  %6154 = vrot.lane.b32.xlu0 %v6116, 127
  %v6155 = vpop.permute.xlu0 %6154
  %6156 = vrot.lane.b32.xlu0 %v6117, 127
  %v6157 = vpop.permute.xlu0 %6156
  %v6158 = vsel %vm492, %v6135, %v6137
  %v6159 = vsel %vm492, %v6137, %v6139
  %v6160 = vsel %vm492, %v6141, %v6143
  %v6161 = vsel %vm492, %v6143, %v6145
  %v6162 = vsel %vm492, %v6147, %v6149
  %v6163 = vsel %vm492, %v6149, %v6151
  %v6164 = vsel %vm492, %v6153, %v6155
  %v6165 = vsel %vm492, %v6155, %v6157
  %v6175 = vsel %vm1418, %v6118, 0
  %v6178 = vsel %vm1418, %v6119, 0
  %v6181 = vsel %vm1418, %v6120, 0
  %v6184 = vsel %vm1418, %v6121, 0
  %6186 = vmatprep.subr.mxu0 0.0
  %6187 = vmatpush1.msra.mxu0 0.0
  %6188 = vmatprep.subr.mxu0 0.0
  %6189 = vmatpush1.msra.mxu0 0.0
  %6190 = vmatprep.subr.mxu0 0.0
  %6191 = vmatpush1.msra.mxu0 0.0
  %6192 = vmatprep.subr.mxu0 0.0
  %6193 = vmatpush1.msra.mxu0 0.0
  %6194 = vmatprep.subr.mxu0 0.0
  %6195 = vmatpush1.msra.mxu0 0.0
  %6196 = vmatprep.subr.mxu0 0.0
  %6197 = vmatpush1.msra.mxu0 0.0
  %6198 = vmatprep.subr.mxu0 0.0
  %6199 = vmatpush1.msra.mxu0 0.0
  %6200 = vmatprep.subr.mxu0 0.0
  %6201 = vmatpush1.msra.mxu0 0.0
  %6202 = vmatprep.subr.mxu0 0.0
  %6203 = vmatpush1.msra.mxu0 0.0
  %6204 = vmatprep.subr.mxu0 0.0
  %6205 = vmatpush1.msra.mxu0 0.0
  %6206 = vmatprep.subr.mxu0 0.0
  %6207 = vmatpush1.msra.mxu0 0.0
  %6208 = vmatprep.subr.mxu0 0.0
  %6209 = vmatpush1.msra.mxu0 0.0
  %6210 = vmatprep.subr.mxu0 %v6165
  %6211 = vmatpush1.msra.mxu0 %v6164
  %6212 = vmatprep.subr.mxu0 %v6163
  %6213 = vmatpush1.msra.mxu0 %v6162
  %6214 = vmatprep.subr.mxu0 %v6161
  %6215 = vmatpush1.msra.mxu0 %v6160
  %6216 = vmatprep.subr.mxu0 %v6159
  %6217 = vmatpush1.msra.mxu0 %v6158
  %6218 = vmatprep.subr.mxu0 0.0
  %6219 = vmatpush2.msra.mxu0 0.0
  %6220 = vmatprep.subr.mxu0 0.0
  %6221 = vmatpush2.msra.mxu0 0.0
  %6222 = vmatprep.subr.mxu0 0.0
  %6223 = vmatpush2.msra.mxu0 0.0
  %6224 = vmatprep.subr.mxu0 0.0
  %6225 = vmatpush2.msra.mxu0 0.0
  %6226 = vmatprep.subr.mxu0 0.0
  %6227 = vmatpush2.msra.mxu0 0.0
  %6228 = vmatprep.subr.mxu0 0.0
  %6229 = vmatpush2.msra.mxu0 0.0
  %6230 = vmatprep.subr.mxu0 0.0
  %6231 = vmatpush2.msra.mxu0 0.0
  %6232 = vmatprep.subr.mxu0 0.0
  %6233 = vmatpush2.msra.mxu0 0.0
  %6234 = vmatprep.subr.mxu0 0.0
  %6235 = vmatpush2.msra.mxu0 0.0
  %6236 = vmatprep.subr.mxu0 0.0
  %6237 = vmatpush2.msra.mxu0 0.0
  %6238 = vmatprep.subr.mxu0 0.0
  %6239 = vmatpush2.msra.mxu0 0.0
  %6240 = vmatprep.subr.mxu0 0.0
  %6241 = vmatpush2.msra.mxu0 0.0
  %6242 = vmatprep.subr.mxu0 0.0
  %6243 = vmatpush2.msra.mxu0 0.0
  %6244 = vmatprep.subr.mxu0 0.0
  %6245 = vmatpush2.msra.mxu0 0.0
  %6246 = vmatprep.subr.mxu0 0.0
  %6247 = vmatpush2.msra.mxu0 0.0
  %6248 = vmatprep.subr.mxu0 0.0
  %6249 = vmatpush2.msra.mxu0 0.0
  %6250 = vmatprep.mubr.f32.mxu0 0.0
  %6251 = vmatmul.mubr.f32.gmra.mxu0 %v6175
  %v6252 = vpop.f32.mrf.mxu0
  %v6253 = vadd.f32 0.0, %v6252
  %v6254 = vpop.f32.mrf.mxu0
  %v6255 = vadd.f32 0.0, %v6254
  %6256 = vmatprep.mubr.f32.mxu0 0.0
  %6257 = vmatmul.mubr.f32.gmra.mxu0 %v6178
  %v6258 = vpop.f32.mrf.mxu0
  %v6259 = vadd.f32 0.0, %v6258
  %v6260 = vpop.f32.mrf.mxu0
  %v6261 = vadd.f32 0.0, %v6260
  %6262 = vmatprep.mubr.f32.mxu0 0.0
  %6263 = vmatmul.mubr.f32.gmra.mxu0 %v6181
  %v6264 = vpop.f32.mrf.mxu0
  %v6265 = vadd.f32 0.0, %v6264
  %v6266 = vpop.f32.mrf.mxu0
  %v6267 = vadd.f32 0.0, %v6266
  %6268 = vmatprep.mubr.f32.mxu0 0.0
  %6269 = vmatmul.mubr.f32.gmra.mxu0 %v6184
  %v6270 = vpop.f32.mrf.mxu0
  %v6271 = vadd.f32 0.0, %v6270
  %v6272 = vpop.f32.mrf.mxu0
  %v6273 = vadd.f32 0.0, %v6272
  %6274 = vdwg.mxu0
  %v6275 = vadd.f32 %v6086, %v6253
  %v6276 = vadd.f32 %v6087, %v6255
  %v6277 = vadd.f32 %v6088, %v6259
  %v6278 = vadd.f32 %v6089, %v6261
  %v6279 = vadd.f32 %v6090, %v6265
  %v6280 = vadd.f32 %v6091, %v6267
  %v6281 = vadd.f32 %v6092, %v6271
  %v6282 = vadd.f32 %v6093, %v6273
  %v6283 = vmul.f32 %v6094, %v892
  %v6284 = vmul.f32 %v6095, %v895
  %v6285 = vmul.f32 %v6096, %v894
  %v6286 = vmul.f32 %v6097, %v892
  %v6287 = vmul.f32 %v6098, %v895
  %v6288 = vmul.f32 %v6099, %v894
  %v6289 = vmul.f32 %v6100, %v892
  %v6290 = vmul.f32 %v6101, %v895
  %v6291 = vmul.f32 %v6102, %v894
  %v6292 = vmul.f32 %v6103, %v892
  %v6293 = vmul.f32 %v6104, %v895
  %v6294 = vmul.f32 %v6105, %v894
  %v6295 = vld [vmem:[%s2345] sm:$0xff]
  %v6296 = vld [vmem:[%s2345 + $0x8] sm:$0xff]
  %v6297 = vld [vmem:[%s2345 + $0x10] sm:$0xff]
  %v6298 = vld [vmem:[%s2345 + $0x18] sm:$0xff]
  %6311 = vrot.lane.b32.xlu0 %v6283, 113
  %v6312 = vpop.permute.xlu0 %6311
  %6313 = vrot.lane.b32.xlu0 %v6284, 113
  %v6314 = vpop.permute.xlu0 %6313
  %6315 = vrot.lane.b32.xlu0 %v6285, 113
  %v6316 = vpop.permute.xlu0 %6315
  %6317 = vrot.lane.b32.xlu0 %v6286, 113
  %v6318 = vpop.permute.xlu0 %6317
  %6319 = vrot.lane.b32.xlu0 %v6287, 113
  %v6320 = vpop.permute.xlu0 %6319
  %6321 = vrot.lane.b32.xlu0 %v6288, 113
  %v6322 = vpop.permute.xlu0 %6321
  %6323 = vrot.lane.b32.xlu0 %v6289, 113
  %v6324 = vpop.permute.xlu0 %6323
  %6325 = vrot.lane.b32.xlu0 %v6290, 113
  %v6326 = vpop.permute.xlu0 %6325
  %6327 = vrot.lane.b32.xlu0 %v6291, 113
  %v6328 = vpop.permute.xlu0 %6327
  %6329 = vrot.lane.b32.xlu0 %v6292, 113
  %v6330 = vpop.permute.xlu0 %6329
  %6331 = vrot.lane.b32.xlu0 %v6293, 113
  %v6332 = vpop.permute.xlu0 %6331
  %6333 = vrot.lane.b32.xlu0 %v6294, 113
  %v6334 = vpop.permute.xlu0 %6333
  %v6335 = vsel %vm350, %v6312, %v6314
  %v6336 = vsel %vm350, %v6314, %v6316
  %v6337 = vsel %vm350, %v6318, %v6320
  %v6338 = vsel %vm350, %v6320, %v6322
  %v6339 = vsel %vm350, %v6324, %v6326
  %v6340 = vsel %vm350, %v6326, %v6328
  %v6341 = vsel %vm350, %v6330, %v6332
  %v6342 = vsel %vm350, %v6332, %v6334
  %v6352 = vsel %vm1418, %v6295, 0
  %v6355 = vsel %vm1418, %v6296, 0
  %v6358 = vsel %vm1418, %v6297, 0
  %v6361 = vsel %vm1418, %v6298, 0
  %6363 = vmatprep.subr.mxu0 0.0
  %6364 = vmatpush1.msra.mxu0 0.0
  %6365 = vmatprep.subr.mxu0 0.0
  %6366 = vmatpush1.msra.mxu0 0.0
  %6367 = vmatprep.subr.mxu0 0.0
  %6368 = vmatpush1.msra.mxu0 0.0
  %6369 = vmatprep.subr.mxu0 0.0
  %6370 = vmatpush1.msra.mxu0 0.0
  %6371 = vmatprep.subr.mxu0 0.0
  %6372 = vmatpush1.msra.mxu0 0.0
  %6373 = vmatprep.subr.mxu0 0.0
  %6374 = vmatpush1.msra.mxu0 0.0
  %6375 = vmatprep.subr.mxu0 0.0
  %6376 = vmatpush1.msra.mxu0 0.0
  %6377 = vmatprep.subr.mxu0 0.0
  %6378 = vmatpush1.msra.mxu0 0.0
  %6379 = vmatprep.subr.mxu0 0.0
  %6380 = vmatpush1.msra.mxu0 0.0
  %6381 = vmatprep.subr.mxu0 0.0
  %6382 = vmatpush1.msra.mxu0 0.0
  %6383 = vmatprep.subr.mxu0 0.0
  %6384 = vmatpush1.msra.mxu0 0.0
  %6385 = vmatprep.subr.mxu0 0.0
  %6386 = vmatpush1.msra.mxu0 0.0
  %6387 = vmatprep.subr.mxu0 %v6342
  %6388 = vmatpush1.msra.mxu0 %v6341
  %6389 = vmatprep.subr.mxu0 %v6340
  %6390 = vmatpush1.msra.mxu0 %v6339
  %6391 = vmatprep.subr.mxu0 %v6338
  %6392 = vmatpush1.msra.mxu0 %v6337
  %6393 = vmatprep.subr.mxu0 %v6336
  %6394 = vmatpush1.msra.mxu0 %v6335
  %6395 = vmatprep.subr.mxu0 0.0
  %6396 = vmatpush2.msra.mxu0 0.0
  %6397 = vmatprep.subr.mxu0 0.0
  %6398 = vmatpush2.msra.mxu0 0.0
  %6399 = vmatprep.subr.mxu0 0.0
  %6400 = vmatpush2.msra.mxu0 0.0
  %6401 = vmatprep.subr.mxu0 0.0
  %6402 = vmatpush2.msra.mxu0 0.0
  %6403 = vmatprep.subr.mxu0 0.0
  %6404 = vmatpush2.msra.mxu0 0.0
  %6405 = vmatprep.subr.mxu0 0.0
  %6406 = vmatpush2.msra.mxu0 0.0
  %6407 = vmatprep.subr.mxu0 0.0
  %6408 = vmatpush2.msra.mxu0 0.0
  %6409 = vmatprep.subr.mxu0 0.0
  %6410 = vmatpush2.msra.mxu0 0.0
  %6411 = vmatprep.subr.mxu0 0.0
  %6412 = vmatpush2.msra.mxu0 0.0
  %6413 = vmatprep.subr.mxu0 0.0
  %6414 = vmatpush2.msra.mxu0 0.0
  %6415 = vmatprep.subr.mxu0 0.0
  %6416 = vmatpush2.msra.mxu0 0.0
  %6417 = vmatprep.subr.mxu0 0.0
  %6418 = vmatpush2.msra.mxu0 0.0
  %6419 = vmatprep.subr.mxu0 0.0
  %6420 = vmatpush2.msra.mxu0 0.0
  %6421 = vmatprep.subr.mxu0 0.0
  %6422 = vmatpush2.msra.mxu0 0.0
  %6423 = vmatprep.subr.mxu0 0.0
  %6424 = vmatpush2.msra.mxu0 0.0
  %6425 = vmatprep.subr.mxu0 0.0
  %6426 = vmatpush2.msra.mxu0 0.0
  %6427 = vmatprep.mubr.f32.mxu0 0.0
  %6428 = vmatmul.mubr.f32.gmra.mxu0 %v6352
  %v6429 = vpop.f32.mrf.mxu0
  %v6430 = vadd.f32 0.0, %v6429
  %v6431 = vpop.f32.mrf.mxu0
  %v6432 = vadd.f32 0.0, %v6431
  %6433 = vmatprep.mubr.f32.mxu0 0.0
  %6434 = vmatmul.mubr.f32.gmra.mxu0 %v6355
  %v6435 = vpop.f32.mrf.mxu0
  %v6436 = vadd.f32 0.0, %v6435
  %v6437 = vpop.f32.mrf.mxu0
  %v6438 = vadd.f32 0.0, %v6437
  %6439 = vmatprep.mubr.f32.mxu0 0.0
  %6440 = vmatmul.mubr.f32.gmra.mxu0 %v6358
  %v6441 = vpop.f32.mrf.mxu0
  %v6442 = vadd.f32 0.0, %v6441
  %v6443 = vpop.f32.mrf.mxu0
  %v6444 = vadd.f32 0.0, %v6443
  %6445 = vmatprep.mubr.f32.mxu0 0.0
  %6446 = vmatmul.mubr.f32.gmra.mxu0 %v6361
  %v6447 = vpop.f32.mrf.mxu0
  %v6448 = vadd.f32 0.0, %v6447
  %v6449 = vpop.f32.mrf.mxu0
  %v6450 = vadd.f32 0.0, %v6449
  %6451 = vdwg.mxu0
  %v6452 = vadd.f32 %v6275, %v6430
  %v6453 = vadd.f32 %v6276, %v6432
  %v6454 = vadd.f32 %v6277, %v6436
  %v6455 = vadd.f32 %v6278, %v6438
  %v6456 = vadd.f32 %v6279, %v6442
  %v6457 = vadd.f32 %v6280, %v6444
  %v6458 = vadd.f32 %v6281, %v6448
  %v6459 = vadd.f32 %v6282, %v6450
  %v6460 = vld [vmem:[%s2511] sm:$0xff]
  %v6461 = vld [vmem:[%s2511 + $0x8] sm:$0xff]
  %v6462 = vld [vmem:[%s2511 + $0x10] sm:$0xff]
  %v6463 = vld [vmem:[%s2511 + $0x18] sm:$0xff]
  %6476 = vrot.lane.b32.xlu0 %v6094, 112
  %v6477 = vpop.permute.xlu0 %6476
  %6478 = vrot.lane.b32.xlu0 %v6095, 112
  %v6479 = vpop.permute.xlu0 %6478
  %6480 = vrot.lane.b32.xlu0 %v6096, 112
  %v6481 = vpop.permute.xlu0 %6480
  %6482 = vrot.lane.b32.xlu0 %v6097, 112
  %v6483 = vpop.permute.xlu0 %6482
  %6484 = vrot.lane.b32.xlu0 %v6098, 112
  %v6485 = vpop.permute.xlu0 %6484
  %6486 = vrot.lane.b32.xlu0 %v6099, 112
  %v6487 = vpop.permute.xlu0 %6486
  %6488 = vrot.lane.b32.xlu0 %v6100, 112
  %v6489 = vpop.permute.xlu0 %6488
  %6490 = vrot.lane.b32.xlu0 %v6101, 112
  %v6491 = vpop.permute.xlu0 %6490
  %6492 = vrot.lane.b32.xlu0 %v6102, 112
  %v6493 = vpop.permute.xlu0 %6492
  %6494 = vrot.lane.b32.xlu0 %v6103, 112
  %v6495 = vpop.permute.xlu0 %6494
  %6496 = vrot.lane.b32.xlu0 %v6104, 112
  %v6497 = vpop.permute.xlu0 %6496
  %6498 = vrot.lane.b32.xlu0 %v6105, 112
  %v6499 = vpop.permute.xlu0 %6498
  %v6500 = vsel %vm1045, %v6477, %v6479
  %v6501 = vsel %vm1045, %v6479, %v6481
  %v6502 = vsel %vm1045, %v6483, %v6485
  %v6503 = vsel %vm1045, %v6485, %v6487
  %v6504 = vsel %vm1045, %v6489, %v6491
  %v6505 = vsel %vm1045, %v6491, %v6493
  %v6506 = vsel %vm1045, %v6495, %v6497
  %v6507 = vsel %vm1045, %v6497, %v6499
  %v6517 = vsel %vm1418, %v6460, 0
  %v6520 = vsel %vm1418, %v6461, 0
  %v6523 = vsel %vm1418, %v6462, 0
  %v6526 = vsel %vm1418, %v6463, 0
  %6528 = vmatprep.subr.mxu0 0.0
  %6529 = vmatpush1.msra.mxu0 0.0
  %6530 = vmatprep.subr.mxu0 0.0
  %6531 = vmatpush1.msra.mxu0 0.0
  %6532 = vmatprep.subr.mxu0 0.0
  %6533 = vmatpush1.msra.mxu0 0.0
  %6534 = vmatprep.subr.mxu0 0.0
  %6535 = vmatpush1.msra.mxu0 0.0
  %6536 = vmatprep.subr.mxu0 0.0
  %6537 = vmatpush1.msra.mxu0 0.0
  %6538 = vmatprep.subr.mxu0 0.0
  %6539 = vmatpush1.msra.mxu0 0.0
  %6540 = vmatprep.subr.mxu0 0.0
  %6541 = vmatpush1.msra.mxu0 0.0
  %6542 = vmatprep.subr.mxu0 0.0
  %6543 = vmatpush1.msra.mxu0 0.0
  %6544 = vmatprep.subr.mxu0 0.0
  %6545 = vmatpush1.msra.mxu0 0.0
  %6546 = vmatprep.subr.mxu0 0.0
  %6547 = vmatpush1.msra.mxu0 0.0
  %6548 = vmatprep.subr.mxu0 0.0
  %6549 = vmatpush1.msra.mxu0 0.0
  %6550 = vmatprep.subr.mxu0 0.0
  %6551 = vmatpush1.msra.mxu0 0.0
  %6552 = vmatprep.subr.mxu0 %v6507
  %6553 = vmatpush1.msra.mxu0 %v6506
  %6554 = vmatprep.subr.mxu0 %v6505
  %6555 = vmatpush1.msra.mxu0 %v6504
  %6556 = vmatprep.subr.mxu0 %v6503
  %6557 = vmatpush1.msra.mxu0 %v6502
  %6558 = vmatprep.subr.mxu0 %v6501
  %6559 = vmatpush1.msra.mxu0 %v6500
  %6560 = vmatprep.subr.mxu0 0.0
  %6561 = vmatpush2.msra.mxu0 0.0
  %6562 = vmatprep.subr.mxu0 0.0
  %6563 = vmatpush2.msra.mxu0 0.0
  %6564 = vmatprep.subr.mxu0 0.0
  %6565 = vmatpush2.msra.mxu0 0.0
  %6566 = vmatprep.subr.mxu0 0.0
  %6567 = vmatpush2.msra.mxu0 0.0
  %6568 = vmatprep.subr.mxu0 0.0
  %6569 = vmatpush2.msra.mxu0 0.0
  %6570 = vmatprep.subr.mxu0 0.0
  %6571 = vmatpush2.msra.mxu0 0.0
  %6572 = vmatprep.subr.mxu0 0.0
  %6573 = vmatpush2.msra.mxu0 0.0
  %6574 = vmatprep.subr.mxu0 0.0
  %6575 = vmatpush2.msra.mxu0 0.0
  %6576 = vmatprep.subr.mxu0 0.0
  %6577 = vmatpush2.msra.mxu0 0.0
  %6578 = vmatprep.subr.mxu0 0.0
  %6579 = vmatpush2.msra.mxu0 0.0
  %6580 = vmatprep.subr.mxu0 0.0
  %6581 = vmatpush2.msra.mxu0 0.0
  %6582 = vmatprep.subr.mxu0 0.0
  %6583 = vmatpush2.msra.mxu0 0.0
  %6584 = vmatprep.subr.mxu0 0.0
  %6585 = vmatpush2.msra.mxu0 0.0
  %6586 = vmatprep.subr.mxu0 0.0
  %6587 = vmatpush2.msra.mxu0 0.0
  %6588 = vmatprep.subr.mxu0 0.0
  %6589 = vmatpush2.msra.mxu0 0.0
  %6590 = vmatprep.subr.mxu0 0.0
  %6591 = vmatpush2.msra.mxu0 0.0
  %6592 = vmatprep.mubr.f32.mxu0 0.0
  %6593 = vmatmul.mubr.f32.gmra.mxu0 %v6517
  %v6594 = vpop.f32.mrf.mxu0
  %v6595 = vadd.f32 0.0, %v6594
  %v6596 = vpop.f32.mrf.mxu0
  %v6597 = vadd.f32 0.0, %v6596
  %6598 = vmatprep.mubr.f32.mxu0 0.0
  %6599 = vmatmul.mubr.f32.gmra.mxu0 %v6520
  %v6600 = vpop.f32.mrf.mxu0
  %v6601 = vadd.f32 0.0, %v6600
  %v6602 = vpop.f32.mrf.mxu0
  %v6603 = vadd.f32 0.0, %v6602
  %6604 = vmatprep.mubr.f32.mxu0 0.0
  %6605 = vmatmul.mubr.f32.gmra.mxu0 %v6523
  %v6606 = vpop.f32.mrf.mxu0
  %v6607 = vadd.f32 0.0, %v6606
  %v6608 = vpop.f32.mrf.mxu0
  %v6609 = vadd.f32 0.0, %v6608
  %6610 = vmatprep.mubr.f32.mxu0 0.0
  %6611 = vmatmul.mubr.f32.gmra.mxu0 %v6526
  %v6612 = vpop.f32.mrf.mxu0
  %v6613 = vadd.f32 0.0, %v6612
  %v6614 = vpop.f32.mrf.mxu0
  %v6615 = vadd.f32 0.0, %v6614
  %6616 = vdwg.mxu0
  %v6617 = vadd.f32 %v6452, %v6595
  %v6618 = vadd.f32 %v6453, %v6597
  %v6619 = vadd.f32 %v6454, %v6601
  %v6620 = vadd.f32 %v6455, %v6603
  %v6621 = vadd.f32 %v6456, %v6607
  %v6622 = vadd.f32 %v6457, %v6609
  %v6623 = vadd.f32 %v6458, %v6613
  %v6624 = vadd.f32 %v6459, %v6615
  %v6625 = vmul.f32 %v6094, %v1162
  %v6626 = vmul.f32 %v6095, %v1165
  %v6627 = vmul.f32 %v6096, %v1164
  %v6628 = vmul.f32 %v6097, %v1162
  %v6629 = vmul.f32 %v6098, %v1165
  %v6630 = vmul.f32 %v6099, %v1164
  %v6631 = vmul.f32 %v6100, %v1162
  %v6632 = vmul.f32 %v6101, %v1165
  %v6633 = vmul.f32 %v6102, %v1164
  %v6634 = vmul.f32 %v6103, %v1162
  %v6635 = vmul.f32 %v6104, %v1165
  %v6636 = vmul.f32 %v6105, %v1164
  %v6637 = vld [vmem:[%s2689] sm:$0xff]
  %v6638 = vld [vmem:[%s2689 + $0x8] sm:$0xff]
  %v6639 = vld [vmem:[%s2689 + $0x10] sm:$0xff]
  %v6640 = vld [vmem:[%s2689 + $0x18] sm:$0xff]
  %6653 = vrot.lane.b32.xlu0 %v6625, 111
  %v6654 = vpop.permute.xlu0 %6653
  %6655 = vrot.lane.b32.xlu0 %v6626, 111
  %v6656 = vpop.permute.xlu0 %6655
  %6657 = vrot.lane.b32.xlu0 %v6627, 111
  %v6658 = vpop.permute.xlu0 %6657
  %6659 = vrot.lane.b32.xlu0 %v6628, 111
  %v6660 = vpop.permute.xlu0 %6659
  %6661 = vrot.lane.b32.xlu0 %v6629, 111
  %v6662 = vpop.permute.xlu0 %6661
  %6663 = vrot.lane.b32.xlu0 %v6630, 111
  %v6664 = vpop.permute.xlu0 %6663
  %6665 = vrot.lane.b32.xlu0 %v6631, 111
  %v6666 = vpop.permute.xlu0 %6665
  %6667 = vrot.lane.b32.xlu0 %v6632, 111
  %v6668 = vpop.permute.xlu0 %6667
  %6669 = vrot.lane.b32.xlu0 %v6633, 111
  %v6670 = vpop.permute.xlu0 %6669
  %6671 = vrot.lane.b32.xlu0 %v6634, 111
  %v6672 = vpop.permute.xlu0 %6671
  %6673 = vrot.lane.b32.xlu0 %v6635, 111
  %v6674 = vpop.permute.xlu0 %6673
  %6675 = vrot.lane.b32.xlu0 %v6636, 111
  %v6676 = vpop.permute.xlu0 %6675
  %v6677 = vsel %vm91, %v6654, %v6656
  %v6678 = vsel %vm91, %v6656, %v6658
  %v6679 = vsel %vm91, %v6660, %v6662
  %v6680 = vsel %vm91, %v6662, %v6664
  %v6681 = vsel %vm91, %v6666, %v6668
  %v6682 = vsel %vm91, %v6668, %v6670
  %v6683 = vsel %vm91, %v6672, %v6674
  %v6684 = vsel %vm91, %v6674, %v6676
  %v6694 = vsel %vm1418, %v6637, 0
  %v6697 = vsel %vm1418, %v6638, 0
  %v6700 = vsel %vm1418, %v6639, 0
  %v6703 = vsel %vm1418, %v6640, 0
  %6705 = vmatprep.subr.mxu0 0.0
  %6706 = vmatpush1.msra.mxu0 0.0
  %6707 = vmatprep.subr.mxu0 0.0
  %6708 = vmatpush1.msra.mxu0 0.0
  %6709 = vmatprep.subr.mxu0 0.0
  %6710 = vmatpush1.msra.mxu0 0.0
  %6711 = vmatprep.subr.mxu0 0.0
  %6712 = vmatpush1.msra.mxu0 0.0
  %6713 = vmatprep.subr.mxu0 0.0
  %6714 = vmatpush1.msra.mxu0 0.0
  %6715 = vmatprep.subr.mxu0 0.0
  %6716 = vmatpush1.msra.mxu0 0.0
  %6717 = vmatprep.subr.mxu0 0.0
  %6718 = vmatpush1.msra.mxu0 0.0
  %6719 = vmatprep.subr.mxu0 0.0
  %6720 = vmatpush1.msra.mxu0 0.0
  %6721 = vmatprep.subr.mxu0 0.0
  %6722 = vmatpush1.msra.mxu0 0.0
  %6723 = vmatprep.subr.mxu0 0.0
  %6724 = vmatpush1.msra.mxu0 0.0
  %6725 = vmatprep.subr.mxu0 0.0
  %6726 = vmatpush1.msra.mxu0 0.0
  %6727 = vmatprep.subr.mxu0 0.0
  %6728 = vmatpush1.msra.mxu0 0.0
  %6729 = vmatprep.subr.mxu0 %v6684
  %6730 = vmatpush1.msra.mxu0 %v6683
  %6731 = vmatprep.subr.mxu0 %v6682
  %6732 = vmatpush1.msra.mxu0 %v6681
  %6733 = vmatprep.subr.mxu0 %v6680
  %6734 = vmatpush1.msra.mxu0 %v6679
  %6735 = vmatprep.subr.mxu0 %v6678
  %6736 = vmatpush1.msra.mxu0 %v6677
  %6737 = vmatprep.subr.mxu0 0.0
  %6738 = vmatpush2.msra.mxu0 0.0
  %6739 = vmatprep.subr.mxu0 0.0
  %6740 = vmatpush2.msra.mxu0 0.0
  %6741 = vmatprep.subr.mxu0 0.0
  %6742 = vmatpush2.msra.mxu0 0.0
  %6743 = vmatprep.subr.mxu0 0.0
  %6744 = vmatpush2.msra.mxu0 0.0
  %6745 = vmatprep.subr.mxu0 0.0
  %6746 = vmatpush2.msra.mxu0 0.0
  %6747 = vmatprep.subr.mxu0 0.0
  %6748 = vmatpush2.msra.mxu0 0.0
  %6749 = vmatprep.subr.mxu0 0.0
  %6750 = vmatpush2.msra.mxu0 0.0
  %6751 = vmatprep.subr.mxu0 0.0
  %6752 = vmatpush2.msra.mxu0 0.0
  %6753 = vmatprep.subr.mxu0 0.0
  %6754 = vmatpush2.msra.mxu0 0.0
  %6755 = vmatprep.subr.mxu0 0.0
  %6756 = vmatpush2.msra.mxu0 0.0
  %6757 = vmatprep.subr.mxu0 0.0
  %6758 = vmatpush2.msra.mxu0 0.0
  %6759 = vmatprep.subr.mxu0 0.0
  %6760 = vmatpush2.msra.mxu0 0.0
  %6761 = vmatprep.subr.mxu0 0.0
  %6762 = vmatpush2.msra.mxu0 0.0
  %6763 = vmatprep.subr.mxu0 0.0
  %6764 = vmatpush2.msra.mxu0 0.0
  %6765 = vmatprep.subr.mxu0 0.0
  %6766 = vmatpush2.msra.mxu0 0.0
  %6767 = vmatprep.subr.mxu0 0.0
  %6768 = vmatpush2.msra.mxu0 0.0
  %6769 = vmatprep.mubr.f32.mxu0 0.0
  %6770 = vmatmul.mubr.f32.gmra.mxu0 %v6694
  %v6771 = vpop.f32.mrf.mxu0
  %v6772 = vadd.f32 0.0, %v6771
  %v6773 = vpop.f32.mrf.mxu0
  %v6774 = vadd.f32 0.0, %v6773
  %6775 = vmatprep.mubr.f32.mxu0 0.0
  %6776 = vmatmul.mubr.f32.gmra.mxu0 %v6697
  %v6777 = vpop.f32.mrf.mxu0
  %v6778 = vadd.f32 0.0, %v6777
  %v6779 = vpop.f32.mrf.mxu0
  %v6780 = vadd.f32 0.0, %v6779
  %6781 = vmatprep.mubr.f32.mxu0 0.0
  %6782 = vmatmul.mubr.f32.gmra.mxu0 %v6700
  %v6783 = vpop.f32.mrf.mxu0
  %v6784 = vadd.f32 0.0, %v6783
  %v6785 = vpop.f32.mrf.mxu0
  %v6786 = vadd.f32 0.0, %v6785
  %6787 = vmatprep.mubr.f32.mxu0 0.0
  %6788 = vmatmul.mubr.f32.gmra.mxu0 %v6703
  %v6789 = vpop.f32.mrf.mxu0
  %v6790 = vadd.f32 0.0, %v6789
  %v6791 = vpop.f32.mrf.mxu0
  %v6792 = vadd.f32 0.0, %v6791
  %6793 = vdwg.mxu0
  %v6794 = vadd.f32 %v6617, %v6772
  %v6795 = vadd.f32 %v6618, %v6774
  %v6796 = vadd.f32 %v6619, %v6778
  %v6797 = vadd.f32 %v6620, %v6780
  %v6798 = vadd.f32 %v6621, %v6784
  %v6799 = vadd.f32 %v6622, %v6786
  %v6800 = vadd.f32 %v6623, %v6790
  %v6801 = vadd.f32 %v6624, %v6792
  %vm6802 = vcmp.gt.f32.partialorder %v6794, 0.0
  %vm6803 = vcmp.gt.f32.partialorder %v6795, 0.0
  %vm6804 = vcmp.gt.f32.partialorder %v6796, 0.0
  %vm6805 = vcmp.gt.f32.partialorder %v6797, 0.0
  %vm6806 = vcmp.gt.f32.partialorder %v6798, 0.0
  %vm6807 = vcmp.gt.f32.partialorder %v6799, 0.0
  %vm6808 = vcmp.gt.f32.partialorder %v6800, 0.0
  %vm6809 = vcmp.gt.f32.partialorder %v6801, 0.0
  %v6810 = vmul.f32 %v6794, 0.01
  %v6811 = vmul.f32 %v6795, 0.01
  %v6812 = vmul.f32 %v6796, 0.01
  %v6813 = vmul.f32 %v6797, 0.01
  %v6814 = vmul.f32 %v6798, 0.01
  %v6815 = vmul.f32 %v6799, 0.01
  %v6816 = vmul.f32 %v6800, 0.01
  %v6817 = vmul.f32 %v6801, 0.01
  %v6818 = vsel %vm6802, %v6794, %v6810
  %v6819 = vsel %vm6803, %v6795, %v6811
  %v6820 = vsel %vm6804, %v6796, %v6812
  %v6821 = vsel %vm6805, %v6797, %v6813
  %v6822 = vsel %vm6806, %v6798, %v6814
  %v6823 = vsel %vm6807, %v6799, %v6815
  %v6824 = vsel %vm6808, %v6800, %v6816
  %v6825 = vsel %vm6809, %v6801, %v6817
  %6826 = vst [vmem:[#allocation2 + $0x8] sm:$0xff] %v6818
  %6827 = vst [vmem:[#allocation2 + $0x10] sm:$0xff] %v6819
  %6828 = vst [vmem:[#allocation2 + $0x28] sm:$0xff] %v6820
  %6829 = vst [vmem:[#allocation2 + $0x30] sm:$0xff] %v6821
  %6830 = vst [vmem:[#allocation2 + $0x48] sm:$0xff] %v6822
  %6831 = vst [vmem:[#allocation2 + $0x50] sm:$0xff] %v6823
  %6832 = vst [vmem:[#allocation2 + $0x68] sm:$0xff] %v6824
  %6833 = vst [vmem:[#allocation2 + $0x70] sm:$0xff] %v6825
  %v6834 = vld [vmem:[#allocation2] sm:$0xff]
  %v6835 = vld [vmem:[#allocation2 + $0x8] sm:$0xff]
  %v6836 = vld [vmem:[#allocation2 + $0x10] sm:$0xff]
  %v6837 = vld [vmem:[#allocation2 + $0x20] sm:$0xff]
  %v6838 = vld [vmem:[#allocation2 + $0x28] sm:$0xff]
  %v6839 = vld [vmem:[#allocation2 + $0x30] sm:$0xff]
  %v6840 = vld [vmem:[#allocation2 + $0x40] sm:$0xff]
  %v6841 = vld [vmem:[#allocation2 + $0x48] sm:$0xff]
  %v6842 = vld [vmem:[#allocation2 + $0x50] sm:$0xff]
  %v6843 = vld [vmem:[#allocation2 + $0x60] sm:$0xff]
  %v6844 = vld [vmem:[#allocation2 + $0x68] sm:$0xff]
  %v6845 = vld [vmem:[#allocation2 + $0x70] sm:$0xff]
  %v6846 = vmul.f32 %v6834, %v88
  %v6847 = vmul.f32 %v6835, %v92
  %v6848 = vmul.f32 %v6836, %v90
  %v6849 = vmul.f32 %v6837, %v88
  %v6850 = vmul.f32 %v6838, %v92
  %v6851 = vmul.f32 %v6839, %v90
  %v6852 = vmul.f32 %v6840, %v88
  %v6853 = vmul.f32 %v6841, %v92
  %v6854 = vmul.f32 %v6842, %v90
  %v6855 = vmul.f32 %v6843, %v88
  %v6856 = vmul.f32 %v6844, %v92
  %v6857 = vmul.f32 %v6845, %v90
  %v6858 = vld [vmem:[%s3] sm:$0xf]
  %v6859 = vld [vmem:[%s2912] sm:$0xf]
  %6872 = vrot.lane.b32.xlu0 %v6834, 16
  %v6873 = vpop.permute.xlu0 %6872
  %6874 = vrot.lane.b32.xlu0 %v6835, 16
  %v6875 = vpop.permute.xlu0 %6874
  %6876 = vrot.lane.b32.xlu0 %v6836, 16
  %v6877 = vpop.permute.xlu0 %6876
  %6878 = vrot.lane.b32.xlu0 %v6837, 16
  %v6879 = vpop.permute.xlu0 %6878
  %6880 = vrot.lane.b32.xlu0 %v6838, 16
  %v6881 = vpop.permute.xlu0 %6880
  %6882 = vrot.lane.b32.xlu0 %v6839, 16
  %v6883 = vpop.permute.xlu0 %6882
  %6884 = vrot.lane.b32.xlu0 %v6840, 16
  %v6885 = vpop.permute.xlu0 %6884
  %6886 = vrot.lane.b32.xlu0 %v6841, 16
  %v6887 = vpop.permute.xlu0 %6886
  %6888 = vrot.lane.b32.xlu0 %v6842, 16
  %v6889 = vpop.permute.xlu0 %6888
  %6890 = vrot.lane.b32.xlu0 %v6843, 16
  %v6891 = vpop.permute.xlu0 %6890
  %6892 = vrot.lane.b32.xlu0 %v6844, 16
  %v6893 = vpop.permute.xlu0 %6892
  %6894 = vrot.lane.b32.xlu0 %v6845, 16
  %v6895 = vpop.permute.xlu0 %6894
  %v6896 = vsel %vm117, %v6873, %v6875
  %v6897 = vsel %vm117, %v6875, %v6877
  %v6898 = vsel %vm117, %v6879, %v6881
  %v6899 = vsel %vm117, %v6881, %v6883
  %v6900 = vsel %vm117, %v6885, %v6887
  %v6901 = vsel %vm117, %v6887, %v6889
  %v6902 = vsel %vm117, %v6891, %v6893
  %v6903 = vsel %vm117, %v6893, %v6895
  %v6913 = vsel %vm1418, %v6859, 0
  %6915 = vmatprep.subr.mxu0 0.0
  %6916 = vmatpush1.msra.mxu0 0.0
  %6917 = vmatprep.subr.mxu0 0.0
  %6918 = vmatpush1.msra.mxu0 0.0
  %6919 = vmatprep.subr.mxu0 0.0
  %6920 = vmatpush1.msra.mxu0 0.0
  %6921 = vmatprep.subr.mxu0 0.0
  %6922 = vmatpush1.msra.mxu0 0.0
  %6923 = vmatprep.subr.mxu0 0.0
  %6924 = vmatpush1.msra.mxu0 0.0
  %6925 = vmatprep.subr.mxu0 0.0
  %6926 = vmatpush1.msra.mxu0 0.0
  %6927 = vmatprep.subr.mxu0 0.0
  %6928 = vmatpush1.msra.mxu0 0.0
  %6929 = vmatprep.subr.mxu0 0.0
  %6930 = vmatpush1.msra.mxu0 0.0
  %6931 = vmatprep.subr.mxu0 0.0
  %6932 = vmatpush1.msra.mxu0 0.0
  %6933 = vmatprep.subr.mxu0 0.0
  %6934 = vmatpush1.msra.mxu0 0.0
  %6935 = vmatprep.subr.mxu0 0.0
  %6936 = vmatpush1.msra.mxu0 0.0
  %6937 = vmatprep.subr.mxu0 0.0
  %6938 = vmatpush1.msra.mxu0 0.0
  %6939 = vmatprep.subr.mxu0 %v6903
  %6940 = vmatpush1.msra.mxu0 %v6902
  %6941 = vmatprep.subr.mxu0 %v6901
  %6942 = vmatpush1.msra.mxu0 %v6900
  %6943 = vmatprep.subr.mxu0 %v6899
  %6944 = vmatpush1.msra.mxu0 %v6898
  %6945 = vmatprep.subr.mxu0 %v6897
  %6946 = vmatpush1.msra.mxu0 %v6896
  %6947 = vmatprep.subr.mxu0 0.0
  %6948 = vmatpush2.msra.mxu0 0.0
  %6949 = vmatprep.subr.mxu0 0.0
  %6950 = vmatpush2.msra.mxu0 0.0
  %6951 = vmatprep.subr.mxu0 0.0
  %6952 = vmatpush2.msra.mxu0 0.0
  %6953 = vmatprep.subr.mxu0 0.0
  %6954 = vmatpush2.msra.mxu0 0.0
  %6955 = vmatprep.subr.mxu0 0.0
  %6956 = vmatpush2.msra.mxu0 0.0
  %6957 = vmatprep.subr.mxu0 0.0
  %6958 = vmatpush2.msra.mxu0 0.0
  %6959 = vmatprep.subr.mxu0 0.0
  %6960 = vmatpush2.msra.mxu0 0.0
  %6961 = vmatprep.subr.mxu0 0.0
  %6962 = vmatpush2.msra.mxu0 0.0
  %6963 = vmatprep.subr.mxu0 0.0
  %6964 = vmatpush2.msra.mxu0 0.0
  %6965 = vmatprep.subr.mxu0 0.0
  %6966 = vmatpush2.msra.mxu0 0.0
  %6967 = vmatprep.subr.mxu0 0.0
  %6968 = vmatpush2.msra.mxu0 0.0
  %6969 = vmatprep.subr.mxu0 0.0
  %6970 = vmatpush2.msra.mxu0 0.0
  %6971 = vmatprep.subr.mxu0 0.0
  %6972 = vmatpush2.msra.mxu0 0.0
  %6973 = vmatprep.subr.mxu0 0.0
  %6974 = vmatpush2.msra.mxu0 0.0
  %6975 = vmatprep.subr.mxu0 0.0
  %6976 = vmatpush2.msra.mxu0 0.0
  %6977 = vmatprep.subr.mxu0 0.0
  %6978 = vmatpush2.msra.mxu0 0.0
  %6979 = vmatprep.mubr.f32.mxu0 0.0
  %6980 = vmatmul.mubr.f32.gmra.mxu0 %v6913
  %v6981 = vpop.f32.mrf.mxu0
  %v6982 = vadd.f32 0.0, %v6981
  %v6983 = vpop.f32.mrf.mxu0
  %v6984 = vadd.f32 0.0, %v6983
  %6985 = vdwg.mxu0
  %6998 = vrot.lane.b32.xlu0 %v6846, 17
  %v6999 = vpop.permute.xlu0 %6998
  %7000 = vrot.lane.b32.xlu0 %v6847, 17
  %v7001 = vpop.permute.xlu0 %7000
  %7002 = vrot.lane.b32.xlu0 %v6848, 17
  %v7003 = vpop.permute.xlu0 %7002
  %7004 = vrot.lane.b32.xlu0 %v6849, 17
  %v7005 = vpop.permute.xlu0 %7004
  %7006 = vrot.lane.b32.xlu0 %v6850, 17
  %v7007 = vpop.permute.xlu0 %7006
  %7008 = vrot.lane.b32.xlu0 %v6851, 17
  %v7009 = vpop.permute.xlu0 %7008
  %7010 = vrot.lane.b32.xlu0 %v6852, 17
  %v7011 = vpop.permute.xlu0 %7010
  %7012 = vrot.lane.b32.xlu0 %v6853, 17
  %v7013 = vpop.permute.xlu0 %7012
  %7014 = vrot.lane.b32.xlu0 %v6854, 17
  %v7015 = vpop.permute.xlu0 %7014
  %7016 = vrot.lane.b32.xlu0 %v6855, 17
  %v7017 = vpop.permute.xlu0 %7016
  %7018 = vrot.lane.b32.xlu0 %v6856, 17
  %v7019 = vpop.permute.xlu0 %7018
  %7020 = vrot.lane.b32.xlu0 %v6857, 17
  %v7021 = vpop.permute.xlu0 %7020
  %v7022 = vsel %vm236, %v6999, %v7001
  %v7023 = vsel %vm236, %v7001, %v7003
  %v7024 = vsel %vm236, %v7005, %v7007
  %v7025 = vsel %vm236, %v7007, %v7009
  %v7026 = vsel %vm236, %v7011, %v7013
  %v7027 = vsel %vm236, %v7013, %v7015
  %v7028 = vsel %vm236, %v7017, %v7019
  %v7029 = vsel %vm236, %v7019, %v7021
  %v7039 = vsel %vm1418, %v6858, 0
  %7041 = vmatprep.subr.mxu0 0.0
  %7042 = vmatpush1.msra.mxu0 0.0
  %7043 = vmatprep.subr.mxu0 0.0
  %7044 = vmatpush1.msra.mxu0 0.0
  %7045 = vmatprep.subr.mxu0 0.0
  %7046 = vmatpush1.msra.mxu0 0.0
  %7047 = vmatprep.subr.mxu0 0.0
  %7048 = vmatpush1.msra.mxu0 0.0
  %7049 = vmatprep.subr.mxu0 0.0
  %7050 = vmatpush1.msra.mxu0 0.0
  %7051 = vmatprep.subr.mxu0 0.0
  %7052 = vmatpush1.msra.mxu0 0.0
  %7053 = vmatprep.subr.mxu0 0.0
  %7054 = vmatpush1.msra.mxu0 0.0
  %7055 = vmatprep.subr.mxu0 0.0
  %7056 = vmatpush1.msra.mxu0 0.0
  %7057 = vmatprep.subr.mxu0 0.0
  %7058 = vmatpush1.msra.mxu0 0.0
  %7059 = vmatprep.subr.mxu0 0.0
  %7060 = vmatpush1.msra.mxu0 0.0
  %7061 = vmatprep.subr.mxu0 0.0
  %7062 = vmatpush1.msra.mxu0 0.0
  %7063 = vmatprep.subr.mxu0 0.0
  %7064 = vmatpush1.msra.mxu0 0.0
  %7065 = vmatprep.subr.mxu0 %v7029
  %7066 = vmatpush1.msra.mxu0 %v7028
  %7067 = vmatprep.subr.mxu0 %v7027
  %7068 = vmatpush1.msra.mxu0 %v7026
  %7069 = vmatprep.subr.mxu0 %v7025
  %7070 = vmatpush1.msra.mxu0 %v7024
  %7071 = vmatprep.subr.mxu0 %v7023
  %7072 = vmatpush1.msra.mxu0 %v7022
  %7073 = vmatprep.subr.mxu0 0.0
  %7074 = vmatpush2.msra.mxu0 0.0
  %7075 = vmatprep.subr.mxu0 0.0
  %7076 = vmatpush2.msra.mxu0 0.0
  %7077 = vmatprep.subr.mxu0 0.0
  %7078 = vmatpush2.msra.mxu0 0.0
  %7079 = vmatprep.subr.mxu0 0.0
  %7080 = vmatpush2.msra.mxu0 0.0
  %7081 = vmatprep.subr.mxu0 0.0
  %7082 = vmatpush2.msra.mxu0 0.0
  %7083 = vmatprep.subr.mxu0 0.0
  %7084 = vmatpush2.msra.mxu0 0.0
  %7085 = vmatprep.subr.mxu0 0.0
  %7086 = vmatpush2.msra.mxu0 0.0
  %7087 = vmatprep.subr.mxu0 0.0
  %7088 = vmatpush2.msra.mxu0 0.0
  %7089 = vmatprep.subr.mxu0 0.0
  %7090 = vmatpush2.msra.mxu0 0.0
  %7091 = vmatprep.subr.mxu0 0.0
  %7092 = vmatpush2.msra.mxu0 0.0
  %7093 = vmatprep.subr.mxu0 0.0
  %7094 = vmatpush2.msra.mxu0 0.0
  %7095 = vmatprep.subr.mxu0 0.0
  %7096 = vmatpush2.msra.mxu0 0.0
  %7097 = vmatprep.subr.mxu0 0.0
  %7098 = vmatpush2.msra.mxu0 0.0
  %7099 = vmatprep.subr.mxu0 0.0
  %7100 = vmatpush2.msra.mxu0 0.0
  %7101 = vmatprep.subr.mxu0 0.0
  %7102 = vmatpush2.msra.mxu0 0.0
  %7103 = vmatprep.subr.mxu0 0.0
  %7104 = vmatpush2.msra.mxu0 0.0
  %7105 = vmatprep.mubr.f32.mxu0 0.0
  %7106 = vmatmul.mubr.f32.gmra.mxu0 %v7039
  %v7107 = vpop.f32.mrf.mxu0
  %v7108 = vadd.f32 %v6982, %v7107
  %v7109 = vpop.f32.mrf.mxu0
  %v7110 = vadd.f32 %v6984, %v7109
  %7111 = vdwg.mxu0
  %v7112 = vmul.f32 %v6834, %v347
  %v7113 = vmul.f32 %v6835, %v351
  %v7114 = vmul.f32 %v6836, %v349
  %v7115 = vmul.f32 %v6837, %v347
  %v7116 = vmul.f32 %v6838, %v351
  %v7117 = vmul.f32 %v6839, %v349
  %v7118 = vmul.f32 %v6840, %v347
  %v7119 = vmul.f32 %v6841, %v351
  %v7120 = vmul.f32 %v6842, %v349
  %v7121 = vmul.f32 %v6843, %v347
  %v7122 = vmul.f32 %v6844, %v351
  %v7123 = vmul.f32 %v6845, %v349
  %v7124 = vld [vmem:[%s3178] sm:$0xf]
  %7137 = vrot.lane.b32.xlu0 %v7112, 15
  %v7138 = vpop.permute.xlu0 %7137
  %7139 = vrot.lane.b32.xlu0 %v7113, 15
  %v7140 = vpop.permute.xlu0 %7139
  %7141 = vrot.lane.b32.xlu0 %v7114, 15
  %v7142 = vpop.permute.xlu0 %7141
  %7143 = vrot.lane.b32.xlu0 %v7115, 15
  %v7144 = vpop.permute.xlu0 %7143
  %7145 = vrot.lane.b32.xlu0 %v7116, 15
  %v7146 = vpop.permute.xlu0 %7145
  %7147 = vrot.lane.b32.xlu0 %v7117, 15
  %v7148 = vpop.permute.xlu0 %7147
  %7149 = vrot.lane.b32.xlu0 %v7118, 15
  %v7150 = vpop.permute.xlu0 %7149
  %7151 = vrot.lane.b32.xlu0 %v7119, 15
  %v7152 = vpop.permute.xlu0 %7151
  %7153 = vrot.lane.b32.xlu0 %v7120, 15
  %v7154 = vpop.permute.xlu0 %7153
  %7155 = vrot.lane.b32.xlu0 %v7121, 15
  %v7156 = vpop.permute.xlu0 %7155
  %7157 = vrot.lane.b32.xlu0 %v7122, 15
  %v7158 = vpop.permute.xlu0 %7157
  %7159 = vrot.lane.b32.xlu0 %v7123, 15
  %v7160 = vpop.permute.xlu0 %7159
  %v7161 = vsel %vm372, %v7138, %v7140
  %v7162 = vsel %vm372, %v7140, %v7142
  %v7163 = vsel %vm372, %v7144, %v7146
  %v7164 = vsel %vm372, %v7146, %v7148
  %v7165 = vsel %vm372, %v7150, %v7152
  %v7166 = vsel %vm372, %v7152, %v7154
  %v7167 = vsel %vm372, %v7156, %v7158
  %v7168 = vsel %vm372, %v7158, %v7160
  %v7178 = vsel %vm1418, %v7124, 0
  %7180 = vmatprep.subr.mxu0 0.0
  %7181 = vmatpush1.msra.mxu0 0.0
  %7182 = vmatprep.subr.mxu0 0.0
  %7183 = vmatpush1.msra.mxu0 0.0
  %7184 = vmatprep.subr.mxu0 0.0
  %7185 = vmatpush1.msra.mxu0 0.0
  %7186 = vmatprep.subr.mxu0 0.0
  %7187 = vmatpush1.msra.mxu0 0.0
  %7188 = vmatprep.subr.mxu0 0.0
  %7189 = vmatpush1.msra.mxu0 0.0
  %7190 = vmatprep.subr.mxu0 0.0
  %7191 = vmatpush1.msra.mxu0 0.0
  %7192 = vmatprep.subr.mxu0 0.0
  %7193 = vmatpush1.msra.mxu0 0.0
  %7194 = vmatprep.subr.mxu0 0.0
  %7195 = vmatpush1.msra.mxu0 0.0
  %7196 = vmatprep.subr.mxu0 0.0
  %7197 = vmatpush1.msra.mxu0 0.0
  %7198 = vmatprep.subr.mxu0 0.0
  %7199 = vmatpush1.msra.mxu0 0.0
  %7200 = vmatprep.subr.mxu0 0.0
  %7201 = vmatpush1.msra.mxu0 0.0
  %7202 = vmatprep.subr.mxu0 0.0
  %7203 = vmatpush1.msra.mxu0 0.0
  %7204 = vmatprep.subr.mxu0 %v7168
  %7205 = vmatpush1.msra.mxu0 %v7167
  %7206 = vmatprep.subr.mxu0 %v7166
  %7207 = vmatpush1.msra.mxu0 %v7165
  %7208 = vmatprep.subr.mxu0 %v7164
  %7209 = vmatpush1.msra.mxu0 %v7163
  %7210 = vmatprep.subr.mxu0 %v7162
  %7211 = vmatpush1.msra.mxu0 %v7161
  %7212 = vmatprep.subr.mxu0 0.0
  %7213 = vmatpush2.msra.mxu0 0.0
  %7214 = vmatprep.subr.mxu0 0.0
  %7215 = vmatpush2.msra.mxu0 0.0
  %7216 = vmatprep.subr.mxu0 0.0
  %7217 = vmatpush2.msra.mxu0 0.0
  %7218 = vmatprep.subr.mxu0 0.0
  %7219 = vmatpush2.msra.mxu0 0.0
  %7220 = vmatprep.subr.mxu0 0.0
  %7221 = vmatpush2.msra.mxu0 0.0
  %7222 = vmatprep.subr.mxu0 0.0
  %7223 = vmatpush2.msra.mxu0 0.0
  %7224 = vmatprep.subr.mxu0 0.0
  %7225 = vmatpush2.msra.mxu0 0.0
  %7226 = vmatprep.subr.mxu0 0.0
  %7227 = vmatpush2.msra.mxu0 0.0
  %7228 = vmatprep.subr.mxu0 0.0
  %7229 = vmatpush2.msra.mxu0 0.0
  %7230 = vmatprep.subr.mxu0 0.0
  %7231 = vmatpush2.msra.mxu0 0.0
  %7232 = vmatprep.subr.mxu0 0.0
  %7233 = vmatpush2.msra.mxu0 0.0
  %7234 = vmatprep.subr.mxu0 0.0
  %7235 = vmatpush2.msra.mxu0 0.0
  %7236 = vmatprep.subr.mxu0 0.0
  %7237 = vmatpush2.msra.mxu0 0.0
  %7238 = vmatprep.subr.mxu0 0.0
  %7239 = vmatpush2.msra.mxu0 0.0
  %7240 = vmatprep.subr.mxu0 0.0
  %7241 = vmatpush2.msra.mxu0 0.0
  %7242 = vmatprep.subr.mxu0 0.0
  %7243 = vmatpush2.msra.mxu0 0.0
  %7244 = vmatprep.mubr.f32.mxu0 0.0
  %7245 = vmatmul.mubr.f32.gmra.mxu0 %v7178
  %v7246 = vpop.f32.mrf.mxu0
  %v7247 = vadd.f32 0.0, %v7246
  %v7248 = vpop.f32.mrf.mxu0
  %v7249 = vadd.f32 0.0, %v7248
  %7250 = vdwg.mxu0
  %v7251 = vadd.f32 %v7108, %v7247
  %v7252 = vadd.f32 %v7110, %v7249
  %v7253 = vmul.f32 %v6834, %v489
  %v7254 = vmul.f32 %v6835, %v493
  %v7255 = vmul.f32 %v6836, %v491
  %v7256 = vmul.f32 %v6837, %v489
  %v7257 = vmul.f32 %v6838, %v493
  %v7258 = vmul.f32 %v6839, %v491
  %v7259 = vmul.f32 %v6840, %v489
  %v7260 = vmul.f32 %v6841, %v493
  %v7261 = vmul.f32 %v6842, %v491
  %v7262 = vmul.f32 %v6843, %v489
  %v7263 = vmul.f32 %v6844, %v493
  %v7264 = vmul.f32 %v6845, %v491
  %v7265 = vld [vmem:[%s3320] sm:$0xf]
  %7278 = vrot.lane.b32.xlu0 %v7253, 1
  %v7279 = vpop.permute.xlu0 %7278
  %7280 = vrot.lane.b32.xlu0 %v7254, 1
  %v7281 = vpop.permute.xlu0 %7280
  %7282 = vrot.lane.b32.xlu0 %v7255, 1
  %v7283 = vpop.permute.xlu0 %7282
  %7284 = vrot.lane.b32.xlu0 %v7256, 1
  %v7285 = vpop.permute.xlu0 %7284
  %7286 = vrot.lane.b32.xlu0 %v7257, 1
  %v7287 = vpop.permute.xlu0 %7286
  %7288 = vrot.lane.b32.xlu0 %v7258, 1
  %v7289 = vpop.permute.xlu0 %7288
  %7290 = vrot.lane.b32.xlu0 %v7259, 1
  %v7291 = vpop.permute.xlu0 %7290
  %7292 = vrot.lane.b32.xlu0 %v7260, 1
  %v7293 = vpop.permute.xlu0 %7292
  %7294 = vrot.lane.b32.xlu0 %v7261, 1
  %v7295 = vpop.permute.xlu0 %7294
  %7296 = vrot.lane.b32.xlu0 %v7262, 1
  %v7297 = vpop.permute.xlu0 %7296
  %7298 = vrot.lane.b32.xlu0 %v7263, 1
  %v7299 = vpop.permute.xlu0 %7298
  %7300 = vrot.lane.b32.xlu0 %v7264, 1
  %v7301 = vpop.permute.xlu0 %7300
  %v7302 = vsel %vm514, %v7279, %v7281
  %v7303 = vsel %vm514, %v7281, %v7283
  %v7304 = vsel %vm514, %v7285, %v7287
  %v7305 = vsel %vm514, %v7287, %v7289
  %v7306 = vsel %vm514, %v7291, %v7293
  %v7307 = vsel %vm514, %v7293, %v7295
  %v7308 = vsel %vm514, %v7297, %v7299
  %v7309 = vsel %vm514, %v7299, %v7301
  %v7319 = vsel %vm1418, %v7265, 0
  %7321 = vmatprep.subr.mxu0 0.0
  %7322 = vmatpush1.msra.mxu0 0.0
  %7323 = vmatprep.subr.mxu0 0.0
  %7324 = vmatpush1.msra.mxu0 0.0
  %7325 = vmatprep.subr.mxu0 0.0
  %7326 = vmatpush1.msra.mxu0 0.0
  %7327 = vmatprep.subr.mxu0 0.0
  %7328 = vmatpush1.msra.mxu0 0.0
  %7329 = vmatprep.subr.mxu0 0.0
  %7330 = vmatpush1.msra.mxu0 0.0
  %7331 = vmatprep.subr.mxu0 0.0
  %7332 = vmatpush1.msra.mxu0 0.0
  %7333 = vmatprep.subr.mxu0 0.0
  %7334 = vmatpush1.msra.mxu0 0.0
  %7335 = vmatprep.subr.mxu0 0.0
  %7336 = vmatpush1.msra.mxu0 0.0
  %7337 = vmatprep.subr.mxu0 0.0
  %7338 = vmatpush1.msra.mxu0 0.0
  %7339 = vmatprep.subr.mxu0 0.0
  %7340 = vmatpush1.msra.mxu0 0.0
  %7341 = vmatprep.subr.mxu0 0.0
  %7342 = vmatpush1.msra.mxu0 0.0
  %7343 = vmatprep.subr.mxu0 0.0
  %7344 = vmatpush1.msra.mxu0 0.0
  %7345 = vmatprep.subr.mxu0 %v7309
  %7346 = vmatpush1.msra.mxu0 %v7308
  %7347 = vmatprep.subr.mxu0 %v7307
  %7348 = vmatpush1.msra.mxu0 %v7306
  %7349 = vmatprep.subr.mxu0 %v7305
  %7350 = vmatpush1.msra.mxu0 %v7304
  %7351 = vmatprep.subr.mxu0 %v7303
  %7352 = vmatpush1.msra.mxu0 %v7302
  %7353 = vmatprep.subr.mxu0 0.0
  %7354 = vmatpush2.msra.mxu0 0.0
  %7355 = vmatprep.subr.mxu0 0.0
  %7356 = vmatpush2.msra.mxu0 0.0
  %7357 = vmatprep.subr.mxu0 0.0
  %7358 = vmatpush2.msra.mxu0 0.0
  %7359 = vmatprep.subr.mxu0 0.0
  %7360 = vmatpush2.msra.mxu0 0.0
  %7361 = vmatprep.subr.mxu0 0.0
  %7362 = vmatpush2.msra.mxu0 0.0
  %7363 = vmatprep.subr.mxu0 0.0
  %7364 = vmatpush2.msra.mxu0 0.0
  %7365 = vmatprep.subr.mxu0 0.0
  %7366 = vmatpush2.msra.mxu0 0.0
  %7367 = vmatprep.subr.mxu0 0.0
  %7368 = vmatpush2.msra.mxu0 0.0
  %7369 = vmatprep.subr.mxu0 0.0
  %7370 = vmatpush2.msra.mxu0 0.0
  %7371 = vmatprep.subr.mxu0 0.0
  %7372 = vmatpush2.msra.mxu0 0.0
  %7373 = vmatprep.subr.mxu0 0.0
  %7374 = vmatpush2.msra.mxu0 0.0
  %7375 = vmatprep.subr.mxu0 0.0
  %7376 = vmatpush2.msra.mxu0 0.0
  %7377 = vmatprep.subr.mxu0 0.0
  %7378 = vmatpush2.msra.mxu0 0.0
  %7379 = vmatprep.subr.mxu0 0.0
  %7380 = vmatpush2.msra.mxu0 0.0
  %7381 = vmatprep.subr.mxu0 0.0
  %7382 = vmatpush2.msra.mxu0 0.0
  %7383 = vmatprep.subr.mxu0 0.0
  %7384 = vmatpush2.msra.mxu0 0.0
  %7385 = vmatprep.mubr.f32.mxu0 0.0
  %7386 = vmatmul.mubr.f32.gmra.mxu0 %v7319
  %v7387 = vpop.f32.mrf.mxu0
  %v7388 = vadd.f32 0.0, %v7387
  %v7389 = vpop.f32.mrf.mxu0
  %v7390 = vadd.f32 0.0, %v7389
  %7391 = vdwg.mxu0
  %v7392 = vadd.f32 %v7251, %v7388
  %v7393 = vadd.f32 %v7252, %v7390
  %v7394 = vld [vmem:[%s3450] sm:$0xf]
  %v7396 = vsel %vm1418, %v7394, 0
  %7398 = vmatprep.subr.mxu0 0.0
  %7399 = vmatpush1.msra.mxu0 0.0
  %7400 = vmatprep.subr.mxu0 0.0
  %7401 = vmatpush1.msra.mxu0 0.0
  %7402 = vmatprep.subr.mxu0 0.0
  %7403 = vmatpush1.msra.mxu0 0.0
  %7404 = vmatprep.subr.mxu0 0.0
  %7405 = vmatpush1.msra.mxu0 0.0
  %7406 = vmatprep.subr.mxu0 0.0
  %7407 = vmatpush1.msra.mxu0 0.0
  %7408 = vmatprep.subr.mxu0 0.0
  %7409 = vmatpush1.msra.mxu0 0.0
  %7410 = vmatprep.subr.mxu0 0.0
  %7411 = vmatpush1.msra.mxu0 0.0
  %7412 = vmatprep.subr.mxu0 0.0
  %7413 = vmatpush1.msra.mxu0 0.0
  %7414 = vmatprep.subr.mxu0 0.0
  %7415 = vmatpush1.msra.mxu0 0.0
  %7416 = vmatprep.subr.mxu0 0.0
  %7417 = vmatpush1.msra.mxu0 0.0
  %7418 = vmatprep.subr.mxu0 0.0
  %7419 = vmatpush1.msra.mxu0 0.0
  %7420 = vmatprep.subr.mxu0 0.0
  %7421 = vmatpush1.msra.mxu0 0.0
  %7422 = vmatprep.subr.mxu0 %v6845
  %7423 = vmatpush1.msra.mxu0 %v6844
  %7424 = vmatprep.subr.mxu0 %v6842
  %7425 = vmatpush1.msra.mxu0 %v6841
  %7426 = vmatprep.subr.mxu0 %v6839
  %7427 = vmatpush1.msra.mxu0 %v6838
  %7428 = vmatprep.subr.mxu0 %v6836
  %7429 = vmatpush1.msra.mxu0 %v6835
  %7430 = vmatprep.subr.mxu0 0.0
  %7431 = vmatpush2.msra.mxu0 0.0
  %7432 = vmatprep.subr.mxu0 0.0
  %7433 = vmatpush2.msra.mxu0 0.0
  %7434 = vmatprep.subr.mxu0 0.0
  %7435 = vmatpush2.msra.mxu0 0.0
  %7436 = vmatprep.subr.mxu0 0.0
  %7437 = vmatpush2.msra.mxu0 0.0
  %7438 = vmatprep.subr.mxu0 0.0
  %7439 = vmatpush2.msra.mxu0 0.0
  %7440 = vmatprep.subr.mxu0 0.0
  %7441 = vmatpush2.msra.mxu0 0.0
  %7442 = vmatprep.subr.mxu0 0.0
  %7443 = vmatpush2.msra.mxu0 0.0
  %7444 = vmatprep.subr.mxu0 0.0
  %7445 = vmatpush2.msra.mxu0 0.0
  %7446 = vmatprep.subr.mxu0 0.0
  %7447 = vmatpush2.msra.mxu0 0.0
  %7448 = vmatprep.subr.mxu0 0.0
  %7449 = vmatpush2.msra.mxu0 0.0
  %7450 = vmatprep.subr.mxu0 0.0
  %7451 = vmatpush2.msra.mxu0 0.0
  %7452 = vmatprep.subr.mxu0 0.0
  %7453 = vmatpush2.msra.mxu0 0.0
  %7454 = vmatprep.subr.mxu0 0.0
  %7455 = vmatpush2.msra.mxu0 0.0
  %7456 = vmatprep.subr.mxu0 0.0
  %7457 = vmatpush2.msra.mxu0 0.0
  %7458 = vmatprep.subr.mxu0 0.0
  %7459 = vmatpush2.msra.mxu0 0.0
  %7460 = vmatprep.subr.mxu0 0.0
  %7461 = vmatpush2.msra.mxu0 0.0
  %7462 = vmatprep.mubr.f32.mxu0 0.0
  %7463 = vmatmul.mubr.f32.gmra.mxu0 %v7396
  %v7464 = vpop.f32.mrf.mxu0
  %v7465 = vadd.f32 0.0, %v7464
  %v7466 = vpop.f32.mrf.mxu0
  %v7467 = vadd.f32 0.0, %v7466
  %7468 = vdwg.mxu0
  %v7469 = vadd.f32 %v7392, %v7465
  %v7470 = vadd.f32 %v7393, %v7467
  %v7471 = vld [vmem:[#allocation2 + $0x8] sm:$0xff]
  %v7472 = vld [vmem:[#allocation2 + $0x10] sm:$0xff]
  %v7473 = vld [vmem:[#allocation2 + $0x18] sm:$0xff]
  %v7474 = vld [vmem:[#allocation2 + $0x28] sm:$0xff]
  %v7475 = vld [vmem:[#allocation2 + $0x30] sm:$0xff]
  %v7476 = vld [vmem:[#allocation2 + $0x38] sm:$0xff]
  %v7477 = vld [vmem:[#allocation2 + $0x48] sm:$0xff]
  %v7478 = vld [vmem:[#allocation2 + $0x50] sm:$0xff]
  %v7479 = vld [vmem:[#allocation2 + $0x58] sm:$0xff]
  %v7480 = vld [vmem:[#allocation2 + $0x68] sm:$0xff]
  %v7481 = vld [vmem:[#allocation2 + $0x70] sm:$0xff]
  %v7482 = vld [vmem:[#allocation2 + $0x78] sm:$0xff]
  %v7483 = vmul.f32 %v7471, %v752
  %v7484 = vmul.f32 %v7472, %v755
  %v7485 = vmul.f32 %v7473, %v754
  %v7486 = vmul.f32 %v7474, %v752
  %v7487 = vmul.f32 %v7475, %v755
  %v7488 = vmul.f32 %v7476, %v754
  %v7489 = vmul.f32 %v7477, %v752
  %v7490 = vmul.f32 %v7478, %v755
  %v7491 = vmul.f32 %v7479, %v754
  %v7492 = vmul.f32 %v7480, %v752
  %v7493 = vmul.f32 %v7481, %v755
  %v7494 = vmul.f32 %v7482, %v754
  %v7495 = vld [vmem:[%s3552] sm:$0xf]
  %7508 = vrot.lane.b32.xlu0 %v7483, 127
  %v7509 = vpop.permute.xlu0 %7508
  %7510 = vrot.lane.b32.xlu0 %v7484, 127
  %v7511 = vpop.permute.xlu0 %7510
  %7512 = vrot.lane.b32.xlu0 %v7485, 127
  %v7513 = vpop.permute.xlu0 %7512
  %7514 = vrot.lane.b32.xlu0 %v7486, 127
  %v7515 = vpop.permute.xlu0 %7514
  %7516 = vrot.lane.b32.xlu0 %v7487, 127
  %v7517 = vpop.permute.xlu0 %7516
  %7518 = vrot.lane.b32.xlu0 %v7488, 127
  %v7519 = vpop.permute.xlu0 %7518
  %7520 = vrot.lane.b32.xlu0 %v7489, 127
  %v7521 = vpop.permute.xlu0 %7520
  %7522 = vrot.lane.b32.xlu0 %v7490, 127
  %v7523 = vpop.permute.xlu0 %7522
  %7524 = vrot.lane.b32.xlu0 %v7491, 127
  %v7525 = vpop.permute.xlu0 %7524
  %7526 = vrot.lane.b32.xlu0 %v7492, 127
  %v7527 = vpop.permute.xlu0 %7526
  %7528 = vrot.lane.b32.xlu0 %v7493, 127
  %v7529 = vpop.permute.xlu0 %7528
  %7530 = vrot.lane.b32.xlu0 %v7494, 127
  %v7531 = vpop.permute.xlu0 %7530
  %v7532 = vsel %vm492, %v7509, %v7511
  %v7533 = vsel %vm492, %v7511, %v7513
  %v7534 = vsel %vm492, %v7515, %v7517
  %v7535 = vsel %vm492, %v7517, %v7519
  %v7536 = vsel %vm492, %v7521, %v7523
  %v7537 = vsel %vm492, %v7523, %v7525
  %v7538 = vsel %vm492, %v7527, %v7529
  %v7539 = vsel %vm492, %v7529, %v7531
  %v7549 = vsel %vm1418, %v7495, 0
  %7551 = vmatprep.subr.mxu0 0.0
  %7552 = vmatpush1.msra.mxu0 0.0
  %7553 = vmatprep.subr.mxu0 0.0
  %7554 = vmatpush1.msra.mxu0 0.0
  %7555 = vmatprep.subr.mxu0 0.0
  %7556 = vmatpush1.msra.mxu0 0.0
  %7557 = vmatprep.subr.mxu0 0.0
  %7558 = vmatpush1.msra.mxu0 0.0
  %7559 = vmatprep.subr.mxu0 0.0
  %7560 = vmatpush1.msra.mxu0 0.0
  %7561 = vmatprep.subr.mxu0 0.0
  %7562 = vmatpush1.msra.mxu0 0.0
  %7563 = vmatprep.subr.mxu0 0.0
  %7564 = vmatpush1.msra.mxu0 0.0
  %7565 = vmatprep.subr.mxu0 0.0
  %7566 = vmatpush1.msra.mxu0 0.0
  %7567 = vmatprep.subr.mxu0 0.0
  %7568 = vmatpush1.msra.mxu0 0.0
  %7569 = vmatprep.subr.mxu0 0.0
  %7570 = vmatpush1.msra.mxu0 0.0
  %7571 = vmatprep.subr.mxu0 0.0
  %7572 = vmatpush1.msra.mxu0 0.0
  %7573 = vmatprep.subr.mxu0 0.0
  %7574 = vmatpush1.msra.mxu0 0.0
  %7575 = vmatprep.subr.mxu0 %v7539
  %7576 = vmatpush1.msra.mxu0 %v7538
  %7577 = vmatprep.subr.mxu0 %v7537
  %7578 = vmatpush1.msra.mxu0 %v7536
  %7579 = vmatprep.subr.mxu0 %v7535
  %7580 = vmatpush1.msra.mxu0 %v7534
  %7581 = vmatprep.subr.mxu0 %v7533
  %7582 = vmatpush1.msra.mxu0 %v7532
  %7583 = vmatprep.subr.mxu0 0.0
  %7584 = vmatpush2.msra.mxu0 0.0
  %7585 = vmatprep.subr.mxu0 0.0
  %7586 = vmatpush2.msra.mxu0 0.0
  %7587 = vmatprep.subr.mxu0 0.0
  %7588 = vmatpush2.msra.mxu0 0.0
  %7589 = vmatprep.subr.mxu0 0.0
  %7590 = vmatpush2.msra.mxu0 0.0
  %7591 = vmatprep.subr.mxu0 0.0
  %7592 = vmatpush2.msra.mxu0 0.0
  %7593 = vmatprep.subr.mxu0 0.0
  %7594 = vmatpush2.msra.mxu0 0.0
  %7595 = vmatprep.subr.mxu0 0.0
  %7596 = vmatpush2.msra.mxu0 0.0
  %7597 = vmatprep.subr.mxu0 0.0
  %7598 = vmatpush2.msra.mxu0 0.0
  %7599 = vmatprep.subr.mxu0 0.0
  %7600 = vmatpush2.msra.mxu0 0.0
  %7601 = vmatprep.subr.mxu0 0.0
  %7602 = vmatpush2.msra.mxu0 0.0
  %7603 = vmatprep.subr.mxu0 0.0
  %7604 = vmatpush2.msra.mxu0 0.0
  %7605 = vmatprep.subr.mxu0 0.0
  %7606 = vmatpush2.msra.mxu0 0.0
  %7607 = vmatprep.subr.mxu0 0.0
  %7608 = vmatpush2.msra.mxu0 0.0
  %7609 = vmatprep.subr.mxu0 0.0
  %7610 = vmatpush2.msra.mxu0 0.0
  %7611 = vmatprep.subr.mxu0 0.0
  %7612 = vmatpush2.msra.mxu0 0.0
  %7613 = vmatprep.subr.mxu0 0.0
  %7614 = vmatpush2.msra.mxu0 0.0
  %7615 = vmatprep.mubr.f32.mxu0 0.0
  %7616 = vmatmul.mubr.f32.gmra.mxu0 %v7549
  %v7617 = vpop.f32.mrf.mxu0
  %v7618 = vadd.f32 0.0, %v7617
  %v7619 = vpop.f32.mrf.mxu0
  %v7620 = vadd.f32 0.0, %v7619
  %7621 = vdwg.mxu0
  %v7622 = vadd.f32 %v7469, %v7618
  %v7623 = vadd.f32 %v7470, %v7620
  %v7624 = vmul.f32 %v7471, %v892
  %v7625 = vmul.f32 %v7472, %v895
  %v7626 = vmul.f32 %v7473, %v894
  %v7627 = vmul.f32 %v7474, %v892
  %v7628 = vmul.f32 %v7475, %v895
  %v7629 = vmul.f32 %v7476, %v894
  %v7630 = vmul.f32 %v7477, %v892
  %v7631 = vmul.f32 %v7478, %v895
  %v7632 = vmul.f32 %v7479, %v894
  %v7633 = vmul.f32 %v7480, %v892
  %v7634 = vmul.f32 %v7481, %v895
  %v7635 = vmul.f32 %v7482, %v894
  %v7636 = vld [vmem:[%s3694] sm:$0xf]
  %7649 = vrot.lane.b32.xlu0 %v7624, 113
  %v7650 = vpop.permute.xlu0 %7649
  %7651 = vrot.lane.b32.xlu0 %v7625, 113
  %v7652 = vpop.permute.xlu0 %7651
  %7653 = vrot.lane.b32.xlu0 %v7626, 113
  %v7654 = vpop.permute.xlu0 %7653
  %7655 = vrot.lane.b32.xlu0 %v7627, 113
  %v7656 = vpop.permute.xlu0 %7655
  %7657 = vrot.lane.b32.xlu0 %v7628, 113
  %v7658 = vpop.permute.xlu0 %7657
  %7659 = vrot.lane.b32.xlu0 %v7629, 113
  %v7660 = vpop.permute.xlu0 %7659
  %7661 = vrot.lane.b32.xlu0 %v7630, 113
  %v7662 = vpop.permute.xlu0 %7661
  %7663 = vrot.lane.b32.xlu0 %v7631, 113
  %v7664 = vpop.permute.xlu0 %7663
  %7665 = vrot.lane.b32.xlu0 %v7632, 113
  %v7666 = vpop.permute.xlu0 %7665
  %7667 = vrot.lane.b32.xlu0 %v7633, 113
  %v7668 = vpop.permute.xlu0 %7667
  %7669 = vrot.lane.b32.xlu0 %v7634, 113
  %v7670 = vpop.permute.xlu0 %7669
  %7671 = vrot.lane.b32.xlu0 %v7635, 113
  %v7672 = vpop.permute.xlu0 %7671
  %v7673 = vsel %vm350, %v7650, %v7652
  %v7674 = vsel %vm350, %v7652, %v7654
  %v7675 = vsel %vm350, %v7656, %v7658
  %v7676 = vsel %vm350, %v7658, %v7660
  %v7677 = vsel %vm350, %v7662, %v7664
  %v7678 = vsel %vm350, %v7664, %v7666
  %v7679 = vsel %vm350, %v7668, %v7670
  %v7680 = vsel %vm350, %v7670, %v7672
  %v7690 = vsel %vm1418, %v7636, 0
  %7692 = vmatprep.subr.mxu0 0.0
  %7693 = vmatpush1.msra.mxu0 0.0
  %7694 = vmatprep.subr.mxu0 0.0
  %7695 = vmatpush1.msra.mxu0 0.0
  %7696 = vmatprep.subr.mxu0 0.0
  %7697 = vmatpush1.msra.mxu0 0.0
  %7698 = vmatprep.subr.mxu0 0.0
  %7699 = vmatpush1.msra.mxu0 0.0
  %7700 = vmatprep.subr.mxu0 0.0
  %7701 = vmatpush1.msra.mxu0 0.0
  %7702 = vmatprep.subr.mxu0 0.0
  %7703 = vmatpush1.msra.mxu0 0.0
  %7704 = vmatprep.subr.mxu0 0.0
  %7705 = vmatpush1.msra.mxu0 0.0
  %7706 = vmatprep.subr.mxu0 0.0
  %7707 = vmatpush1.msra.mxu0 0.0
  %7708 = vmatprep.subr.mxu0 0.0
  %7709 = vmatpush1.msra.mxu0 0.0
  %7710 = vmatprep.subr.mxu0 0.0
  %7711 = vmatpush1.msra.mxu0 0.0
  %7712 = vmatprep.subr.mxu0 0.0
  %7713 = vmatpush1.msra.mxu0 0.0
  %7714 = vmatprep.subr.mxu0 0.0
  %7715 = vmatpush1.msra.mxu0 0.0
  %7716 = vmatprep.subr.mxu0 %v7680
  %7717 = vmatpush1.msra.mxu0 %v7679
  %7718 = vmatprep.subr.mxu0 %v7678
  %7719 = vmatpush1.msra.mxu0 %v7677
  %7720 = vmatprep.subr.mxu0 %v7676
  %7721 = vmatpush1.msra.mxu0 %v7675
  %7722 = vmatprep.subr.mxu0 %v7674
  %7723 = vmatpush1.msra.mxu0 %v7673
  %7724 = vmatprep.subr.mxu0 0.0
  %7725 = vmatpush2.msra.mxu0 0.0
  %7726 = vmatprep.subr.mxu0 0.0
  %7727 = vmatpush2.msra.mxu0 0.0
  %7728 = vmatprep.subr.mxu0 0.0
  %7729 = vmatpush2.msra.mxu0 0.0
  %7730 = vmatprep.subr.mxu0 0.0
  %7731 = vmatpush2.msra.mxu0 0.0
  %7732 = vmatprep.subr.mxu0 0.0
  %7733 = vmatpush2.msra.mxu0 0.0
  %7734 = vmatprep.subr.mxu0 0.0
  %7735 = vmatpush2.msra.mxu0 0.0
  %7736 = vmatprep.subr.mxu0 0.0
  %7737 = vmatpush2.msra.mxu0 0.0
  %7738 = vmatprep.subr.mxu0 0.0
  %7739 = vmatpush2.msra.mxu0 0.0
  %7740 = vmatprep.subr.mxu0 0.0
  %7741 = vmatpush2.msra.mxu0 0.0
  %7742 = vmatprep.subr.mxu0 0.0
  %7743 = vmatpush2.msra.mxu0 0.0
  %7744 = vmatprep.subr.mxu0 0.0
  %7745 = vmatpush2.msra.mxu0 0.0
  %7746 = vmatprep.subr.mxu0 0.0
  %7747 = vmatpush2.msra.mxu0 0.0
  %7748 = vmatprep.subr.mxu0 0.0
  %7749 = vmatpush2.msra.mxu0 0.0
  %7750 = vmatprep.subr.mxu0 0.0
  %7751 = vmatpush2.msra.mxu0 0.0
  %7752 = vmatprep.subr.mxu0 0.0
  %7753 = vmatpush2.msra.mxu0 0.0
  %7754 = vmatprep.subr.mxu0 0.0
  %7755 = vmatpush2.msra.mxu0 0.0
  %7756 = vmatprep.mubr.f32.mxu0 0.0
  %7757 = vmatmul.mubr.f32.gmra.mxu0 %v7690
  %v7758 = vpop.f32.mrf.mxu0
  %v7759 = vadd.f32 0.0, %v7758
  %v7760 = vpop.f32.mrf.mxu0
  %v7761 = vadd.f32 0.0, %v7760
  %7762 = vdwg.mxu0
  %v7763 = vadd.f32 %v7622, %v7759
  %v7764 = vadd.f32 %v7623, %v7761
  %v7765 = vld [vmem:[%s3824] sm:$0xf]
  %7778 = vrot.lane.b32.xlu0 %v7471, 112
  %v7779 = vpop.permute.xlu0 %7778
  %7780 = vrot.lane.b32.xlu0 %v7472, 112
  %v7781 = vpop.permute.xlu0 %7780
  %7782 = vrot.lane.b32.xlu0 %v7473, 112
  %v7783 = vpop.permute.xlu0 %7782
  %7784 = vrot.lane.b32.xlu0 %v7474, 112
  %v7785 = vpop.permute.xlu0 %7784
  %7786 = vrot.lane.b32.xlu0 %v7475, 112
  %v7787 = vpop.permute.xlu0 %7786
  %7788 = vrot.lane.b32.xlu0 %v7476, 112
  %v7789 = vpop.permute.xlu0 %7788
  %7790 = vrot.lane.b32.xlu0 %v7477, 112
  %v7791 = vpop.permute.xlu0 %7790
  %7792 = vrot.lane.b32.xlu0 %v7478, 112
  %v7793 = vpop.permute.xlu0 %7792
  %7794 = vrot.lane.b32.xlu0 %v7479, 112
  %v7795 = vpop.permute.xlu0 %7794
  %7796 = vrot.lane.b32.xlu0 %v7480, 112
  %v7797 = vpop.permute.xlu0 %7796
  %7798 = vrot.lane.b32.xlu0 %v7481, 112
  %v7799 = vpop.permute.xlu0 %7798
  %7800 = vrot.lane.b32.xlu0 %v7482, 112
  %v7801 = vpop.permute.xlu0 %7800
  %v7802 = vsel %vm1045, %v7779, %v7781
  %v7803 = vsel %vm1045, %v7781, %v7783
  %v7804 = vsel %vm1045, %v7785, %v7787
  %v7805 = vsel %vm1045, %v7787, %v7789
  %v7806 = vsel %vm1045, %v7791, %v7793
  %v7807 = vsel %vm1045, %v7793, %v7795
  %v7808 = vsel %vm1045, %v7797, %v7799
  %v7809 = vsel %vm1045, %v7799, %v7801
  %v7819 = vsel %vm1418, %v7765, 0
  %7821 = vmatprep.subr.mxu0 0.0
  %7822 = vmatpush1.msra.mxu0 0.0
  %7823 = vmatprep.subr.mxu0 0.0
  %7824 = vmatpush1.msra.mxu0 0.0
  %7825 = vmatprep.subr.mxu0 0.0
  %7826 = vmatpush1.msra.mxu0 0.0
  %7827 = vmatprep.subr.mxu0 0.0
  %7828 = vmatpush1.msra.mxu0 0.0
  %7829 = vmatprep.subr.mxu0 0.0
  %7830 = vmatpush1.msra.mxu0 0.0
  %7831 = vmatprep.subr.mxu0 0.0
  %7832 = vmatpush1.msra.mxu0 0.0
  %7833 = vmatprep.subr.mxu0 0.0
  %7834 = vmatpush1.msra.mxu0 0.0
  %7835 = vmatprep.subr.mxu0 0.0
  %7836 = vmatpush1.msra.mxu0 0.0
  %7837 = vmatprep.subr.mxu0 0.0
  %7838 = vmatpush1.msra.mxu0 0.0
  %7839 = vmatprep.subr.mxu0 0.0
  %7840 = vmatpush1.msra.mxu0 0.0
  %7841 = vmatprep.subr.mxu0 0.0
  %7842 = vmatpush1.msra.mxu0 0.0
  %7843 = vmatprep.subr.mxu0 0.0
  %7844 = vmatpush1.msra.mxu0 0.0
  %7845 = vmatprep.subr.mxu0 %v7809
  %7846 = vmatpush1.msra.mxu0 %v7808
  %7847 = vmatprep.subr.mxu0 %v7807
  %7848 = vmatpush1.msra.mxu0 %v7806
  %7849 = vmatprep.subr.mxu0 %v7805
  %7850 = vmatpush1.msra.mxu0 %v7804
  %7851 = vmatprep.subr.mxu0 %v7803
  %7852 = vmatpush1.msra.mxu0 %v7802
  %7853 = vmatprep.subr.mxu0 0.0
  %7854 = vmatpush2.msra.mxu0 0.0
  %7855 = vmatprep.subr.mxu0 0.0
  %7856 = vmatpush2.msra.mxu0 0.0
  %7857 = vmatprep.subr.mxu0 0.0
  %7858 = vmatpush2.msra.mxu0 0.0
  %7859 = vmatprep.subr.mxu0 0.0
  %7860 = vmatpush2.msra.mxu0 0.0
  %7861 = vmatprep.subr.mxu0 0.0
  %7862 = vmatpush2.msra.mxu0 0.0
  %7863 = vmatprep.subr.mxu0 0.0
  %7864 = vmatpush2.msra.mxu0 0.0
  %7865 = vmatprep.subr.mxu0 0.0
  %7866 = vmatpush2.msra.mxu0 0.0
  %7867 = vmatprep.subr.mxu0 0.0
  %7868 = vmatpush2.msra.mxu0 0.0
  %7869 = vmatprep.subr.mxu0 0.0
  %7870 = vmatpush2.msra.mxu0 0.0
  %7871 = vmatprep.subr.mxu0 0.0
  %7872 = vmatpush2.msra.mxu0 0.0
  %7873 = vmatprep.subr.mxu0 0.0
  %7874 = vmatpush2.msra.mxu0 0.0
  %7875 = vmatprep.subr.mxu0 0.0
  %7876 = vmatpush2.msra.mxu0 0.0
  %7877 = vmatprep.subr.mxu0 0.0
  %7878 = vmatpush2.msra.mxu0 0.0
  %7879 = vmatprep.subr.mxu0 0.0
  %7880 = vmatpush2.msra.mxu0 0.0
  %7881 = vmatprep.subr.mxu0 0.0
  %7882 = vmatpush2.msra.mxu0 0.0
  %7883 = vmatprep.subr.mxu0 0.0
  %7884 = vmatpush2.msra.mxu0 0.0
  %7885 = vmatprep.mubr.f32.mxu0 0.0
  %7886 = vmatmul.mubr.f32.gmra.mxu0 %v7819
  %v7887 = vpop.f32.mrf.mxu0
  %v7888 = vadd.f32 0.0, %v7887
  %v7889 = vpop.f32.mrf.mxu0
  %v7890 = vadd.f32 0.0, %v7889
  %7891 = vdwg.mxu0
  %v7892 = vadd.f32 %v7763, %v7888
  %v7893 = vadd.f32 %v7764, %v7890
  %v7894 = vmul.f32 %v7471, %v1162
  %v7895 = vmul.f32 %v7472, %v1165
  %v7896 = vmul.f32 %v7473, %v1164
  %v7897 = vmul.f32 %v7474, %v1162
  %v7898 = vmul.f32 %v7475, %v1165
  %v7899 = vmul.f32 %v7476, %v1164
  %v7900 = vmul.f32 %v7477, %v1162
  %v7901 = vmul.f32 %v7478, %v1165
  %v7902 = vmul.f32 %v7479, %v1164
  %v7903 = vmul.f32 %v7480, %v1162
  %v7904 = vmul.f32 %v7481, %v1165
  %v7905 = vmul.f32 %v7482, %v1164
  %v7906 = vld [vmem:[%s3966] sm:$0xf]
  %7919 = vrot.lane.b32.xlu0 %v7894, 111
  %v7920 = vpop.permute.xlu0 %7919
  %7921 = vrot.lane.b32.xlu0 %v7895, 111
  %v7922 = vpop.permute.xlu0 %7921
  %7923 = vrot.lane.b32.xlu0 %v7896, 111
  %v7924 = vpop.permute.xlu0 %7923
  %7925 = vrot.lane.b32.xlu0 %v7897, 111
  %v7926 = vpop.permute.xlu0 %7925
  %7927 = vrot.lane.b32.xlu0 %v7898, 111
  %v7928 = vpop.permute.xlu0 %7927
  %7929 = vrot.lane.b32.xlu0 %v7899, 111
  %v7930 = vpop.permute.xlu0 %7929
  %7931 = vrot.lane.b32.xlu0 %v7900, 111
  %v7932 = vpop.permute.xlu0 %7931
  %7933 = vrot.lane.b32.xlu0 %v7901, 111
  %v7934 = vpop.permute.xlu0 %7933
  %7935 = vrot.lane.b32.xlu0 %v7902, 111
  %v7936 = vpop.permute.xlu0 %7935
  %7937 = vrot.lane.b32.xlu0 %v7903, 111
  %v7938 = vpop.permute.xlu0 %7937
  %7939 = vrot.lane.b32.xlu0 %v7904, 111
  %v7940 = vpop.permute.xlu0 %7939
  %7941 = vrot.lane.b32.xlu0 %v7905, 111
  %v7942 = vpop.permute.xlu0 %7941
  %v7943 = vsel %vm91, %v7920, %v7922
  %v7944 = vsel %vm91, %v7922, %v7924
  %v7945 = vsel %vm91, %v7926, %v7928
  %v7946 = vsel %vm91, %v7928, %v7930
  %v7947 = vsel %vm91, %v7932, %v7934
  %v7948 = vsel %vm91, %v7934, %v7936
  %v7949 = vsel %vm91, %v7938, %v7940
  %v7950 = vsel %vm91, %v7940, %v7942
  %v7960 = vsel %vm1418, %v7906, 0
  %7962 = vmatprep.subr.mxu0 0.0
  %7963 = vmatpush1.msra.mxu0 0.0
  %7964 = vmatprep.subr.mxu0 0.0
  %7965 = vmatpush1.msra.mxu0 0.0
  %7966 = vmatprep.subr.mxu0 0.0
  %7967 = vmatpush1.msra.mxu0 0.0
  %7968 = vmatprep.subr.mxu0 0.0
  %7969 = vmatpush1.msra.mxu0 0.0
  %7970 = vmatprep.subr.mxu0 0.0
  %7971 = vmatpush1.msra.mxu0 0.0
  %7972 = vmatprep.subr.mxu0 0.0
  %7973 = vmatpush1.msra.mxu0 0.0
  %7974 = vmatprep.subr.mxu0 0.0
  %7975 = vmatpush1.msra.mxu0 0.0
  %7976 = vmatprep.subr.mxu0 0.0
  %7977 = vmatpush1.msra.mxu0 0.0
  %7978 = vmatprep.subr.mxu0 0.0
  %7979 = vmatpush1.msra.mxu0 0.0
  %7980 = vmatprep.subr.mxu0 0.0
  %7981 = vmatpush1.msra.mxu0 0.0
  %7982 = vmatprep.subr.mxu0 0.0
  %7983 = vmatpush1.msra.mxu0 0.0
  %7984 = vmatprep.subr.mxu0 0.0
  %7985 = vmatpush1.msra.mxu0 0.0
  %7986 = vmatprep.subr.mxu0 %v7950
  %7987 = vmatpush1.msra.mxu0 %v7949
  %7988 = vmatprep.subr.mxu0 %v7948
  %7989 = vmatpush1.msra.mxu0 %v7947
  %7990 = vmatprep.subr.mxu0 %v7946
  %7991 = vmatpush1.msra.mxu0 %v7945
  %7992 = vmatprep.subr.mxu0 %v7944
  %7993 = vmatpush1.msra.mxu0 %v7943
  %7994 = vmatprep.subr.mxu0 0.0
  %7995 = vmatpush2.msra.mxu0 0.0
  %7996 = vmatprep.subr.mxu0 0.0
  %7997 = vmatpush2.msra.mxu0 0.0
  %7998 = vmatprep.subr.mxu0 0.0
  %7999 = vmatpush2.msra.mxu0 0.0
  %8000 = vmatprep.subr.mxu0 0.0
  %8001 = vmatpush2.msra.mxu0 0.0
  %8002 = vmatprep.subr.mxu0 0.0
  %8003 = vmatpush2.msra.mxu0 0.0
  %8004 = vmatprep.subr.mxu0 0.0
  %8005 = vmatpush2.msra.mxu0 0.0
  %8006 = vmatprep.subr.mxu0 0.0
  %8007 = vmatpush2.msra.mxu0 0.0
  %8008 = vmatprep.subr.mxu0 0.0
  %8009 = vmatpush2.msra.mxu0 0.0
  %8010 = vmatprep.subr.mxu0 0.0
  %8011 = vmatpush2.msra.mxu0 0.0
  %8012 = vmatprep.subr.mxu0 0.0
  %8013 = vmatpush2.msra.mxu0 0.0
  %8014 = vmatprep.subr.mxu0 0.0
  %8015 = vmatpush2.msra.mxu0 0.0
  %8016 = vmatprep.subr.mxu0 0.0
  %8017 = vmatpush2.msra.mxu0 0.0
  %8018 = vmatprep.subr.mxu0 0.0
  %8019 = vmatpush2.msra.mxu0 0.0
  %8020 = vmatprep.subr.mxu0 0.0
  %8021 = vmatpush2.msra.mxu0 0.0
  %8022 = vmatprep.subr.mxu0 0.0
  %8023 = vmatpush2.msra.mxu0 0.0
  %8024 = vmatprep.subr.mxu0 0.0
  %8025 = vmatpush2.msra.mxu0 0.0
  %8026 = vmatprep.mubr.f32.mxu0 0.0
  %8027 = vmatmul.mubr.f32.gmra.mxu0 %v7960
  %v8028 = vpop.f32.mrf.mxu0
  %v8029 = vadd.f32 0.0, %v8028
  %v8030 = vpop.f32.mrf.mxu0
  %v8031 = vadd.f32 0.0, %v8030
  %8032 = vdwg.mxu0
  %v8033 = vadd.f32 %v7892, %v8029
  %v8034 = vadd.f32 %v7893, %v8031
  %v8037 = vcombine.low %v8033, %v8034
  %s8039 = scalar_lea.vmem %s4, 8
  %8040 = vst [vmem:[%s8039] sm:$0xff] %v8037
  // Predicated region
  $region18: #{timerevnet_forward.1} parent=0 // pred_check
    _
  $region19: #{timerevnet_forward.1} parent=0 // pred_check_branch
    %8042 = sbr.rel (0) target = $region21
  $region20: #{timerevnet_forward.1} parent=0 // pred_region
    _
  $region21: #{timerevnet_forward.1} parent=0 // pred_fallthru
    _
  // Predicated region
  $region22: #{timerevnet_forward.1} parent=0 // pred_check
    _
  $region23: #{timerevnet_forward.1} parent=0 // pred_check_branch
    %8044 = sbr.rel (0) target = $region25
  $region24: #{timerevnet_forward.1} parent=0 // pred_region
    _
  $region25: #{timerevnet_forward.1} parent=0 // pred_fallthru
    _

</llo_original>
